<compile_context>
chip_gen: v6e
topology: v6e:2x2x1
jax: 0.10.0
libtpu: 0.0.40
codegen_flags: <defaults>
</compile_context>

<pallas_src>
import functools

import jax
import jax.numpy as jnp
from jax import lax
from jax.experimental import pallas as pl
from jax.experimental.pallas import tpu as pltpu

CFG = dict(
    num_classes=8,          # S (label tokens) and final output dim
    embed_dim=32,           # E
    num_layers=2,
    num_heads=4,
    dim_feedforward=2048,   # hard-coded in the PyTorch module
    pe_h=16, pe_w=16,       # scaled-down stand-in for the 384x384 PE
    img_c=4, img_h=16, img_w=16,
    batch=2,
)
LN_EPS = 1e-5
BN_EPS = 1e-5


def _ctran_kernel(
    # inputs -------------------------------------------------------------
    x_ref,        # (B, Cin*H*W)      f32   flattened image
    wb_ref,       # (S, Cin*H*W, E)   bf16  synthetic backbone weight, per class
    bb_ref,       # (S, 1, E)         f32   backbone bias
    pet_ref,      # (pe_h*pe_w, E)    f32   positional encoding, flattened+transposed
    wred_ref,     # (S, pe_h*pe_w)    f32   linear_reduction weight (torch (N,K) layout)
    bred_ref,     # (S, 1)            f32   linear_reduction bias
    qkvw_ref,     # (L, E, 3E)        f32
    qkvb_ref,     # (L, 1, 3E)        f32
    outw_ref,     # (L, E, E)         f32
    outb_ref,     # (L, 1, E)         f32
    ln1w_ref, ln1b_ref,   # (L, 1, E) f32
    ff1w_ref,     # (L, E, F)         bf16
    ff1b_ref,     # (L, 1, F)         f32
    ff2w_ref,     # (L, F, E)         bf16
    ff2b_ref,     # (L, 1, E)         f32
    ln2w_ref, ln2b_ref,   # (L, 1, E) f32
    projw_ref,    # (2E, E)           f32
    projb_ref,    # (1, E)            f32
    bns_ref,      # (1, E)            f32   BatchNorm eval scale (broadcast row)
    bnt_ref,      # (1, E)            f32   BatchNorm eval shift (broadcast row)
    fcw_ref,      # (E, C)            f32
    fcb_ref,      # (1, C)            f32
    # outputs ------------------------------------------------------------
    o_ref,        # (B, C)            f32
    # scratch ------------------------------------------------------------
    tok_ref,      # (S*B, E)          f32   residual stream, (seq, batch) row order
    *, num_heads,
):
    f32 = jnp.float32
    B = x_ref.shape[0]
    S, _, E = wb_ref.shape
    L, _, F = ff1w_ref.shape
    H = num_heads
    Dh = E // H
    SB = S * B
    scale = 1.0 / float(Dh) ** 0.5
    NT = (((1,), (1,)), ((), ()))       # contract dim 1 of both operands: A @ B.T

    # ---- positional-encoding reduction: pe_t[s, e] = Wred[s] . PE[e, :] + bred[s]
    pe_t = jnp.dot(wred_ref[...], pet_ref[...],
                   preferred_element_type=f32) + bred_ref[...]         # (S, E)

    # ---- synthetic backbone + PE add, assembled in (seq, batch) token order
    x_img = x_ref[...].astype(jnp.bfloat16)                            # (B, Cin*H*W)
    for s in range(S):
        t = jnp.dot(x_img, wb_ref[s], preferred_element_type=f32)      # (B, E)
        t = t + bb_ref[s] + pe_t[s:s + 1, :]
        tok_ref[pl.ds(s * B, B), :] = t

    x = tok_ref[...]                                                   # (SB, E) f32

    # same-batch mask for (seq, batch)-ordered rows: row i belongs to batch i % B
    row = lax.broadcasted_iota(jnp.int32, (SB, SB), 0)
    col = lax.broadcasted_iota(jnp.int32, (SB, SB), 1)
    if (B & (B - 1)) == 0:
        same_batch = jnp.bitwise_and(row, B - 1) == jnp.bitwise_and(col, B - 1)
    else:
        same_batch = (row % B) == (col % B)

    def layer_norm(t, w, b):
        mu = jnp.mean(t, axis=-1, keepdims=True)
        var = jnp.mean((t - mu) ** 2, axis=-1, keepdims=True)
        return (t - mu) * lax.rsqrt(var + LN_EPS) * w + b

    for l in range(L):
        # --- multi-head self-attention (all batches & heads in one shot) ---
        qkv = jnp.dot(x, qkvw_ref[l], preferred_element_type=f32) + qkvb_ref[l]
        q, k, v = qkv[:, 0:E], qkv[:, E:2 * E], qkv[:, 2 * E:3 * E]
        wo = outw_ref[l]                                               # (E, E)
        attn = jnp.zeros((SB, E), f32)
        for h in range(H):
            hs = slice(h * Dh, (h + 1) * Dh)
            qh, kh, vh = q[:, hs], k[:, hs], v[:, hs]
            sc = lax.dot_general(qh, kh, NT, preferred_element_type=f32) * scale
            sc = jnp.where(same_batch, sc, -1e30)                      # block-diag per batch
            m = jnp.max(sc, axis=-1, keepdims=True)
            p = jnp.exp(sc - m)
            p = p * pl.reciprocal(jnp.sum(p, axis=-1, keepdims=True), approx=True)
            oh = jnp.dot(p, vh, preferred_element_type=f32)            # (SB, Dh)
            attn = attn + jnp.dot(oh, wo[hs, :], preferred_element_type=f32)
        x = layer_norm(x + attn + outb_ref[l], ln1w_ref[l], ln1b_ref[l])

        # --- feed-forward (bf16 MXU, f32 accumulation, VMEM-resident) ---
        h1 = jnp.dot(x.astype(jnp.bfloat16), ff1w_ref[l],
                     preferred_element_type=f32) + ff1b_ref[l]          # (SB, F)
        h1 = jnp.maximum(h1, 0.0)
        ff = jnp.dot(h1.astype(jnp.bfloat16), ff2w_ref[l],
                     preferred_element_type=f32) + ff2b_ref[l]          # (SB, E)
        x = layer_norm(x + ff, ln2w_ref[l], ln2b_ref[l])

    # ---- head: cat(x[0], x[-1]) -> proj -> BatchNorm1d(eval) -> fc ----
    first = x[0:B, :]                      # tokens (seq = 0,   all batches)
    last = x[SB - B:SB, :]                 # tokens (seq = S-1, all batches)
    wp = projw_ref[...]                    # (2E, E): rows [0:E] for x[0], [E:2E] for x[-1]
    xp = (jnp.dot(first, wp[0:E, :], preferred_element_type=f32)
          + jnp.dot(last, wp[E:2 * E, :], preferred_element_type=f32)
          + projb_ref[...])                # (B, E)
    xb = xp * bns_ref[...] + bnt_ref[...]  # eval-mode BatchNorm1d(1): scalar affine
    out = jnp.dot(xb, fcw_ref[...], preferred_element_type=f32) + fcb_ref[...]
    o_ref[...] = out.astype(o_ref.dtype)


def ctran_forward(params, x_img):
    B = x_img.shape[0]
    C, E = CFG["num_classes"], CFG["embed_dim"]
    x_flat = x_img.reshape(B, -1).astype(jnp.float32)

    # BatchNorm1d(1) eval-mode affine (scalar), precomputed outside the kernel
    # and broadcast once to a lane-friendly (1, E) row.
    bn_scale = params["bn_gamma"] * lax.rsqrt(params["bn_running_var"] + BN_EPS)
    bn_shift = params["bn_beta"] - params["bn_running_mean"] * bn_scale
    bns = jnp.broadcast_to(bn_scale.reshape(1, 1), (1, E)).astype(jnp.float32)
    bnt = jnp.broadcast_to(bn_shift.reshape(1, 1), (1, E)).astype(jnp.float32)

    kernel = functools.partial(_ctran_kernel, num_heads=CFG["num_heads"])
    return pl.pallas_call(
        kernel,
        out_shape=jax.ShapeDtypeStruct((B, C), jnp.float32),
        scratch_shapes=[pltpu.VMEM((C * B, E), jnp.float32)],
    )(
        x_flat,
        params["backbone_weight"], params["backbone_bias"],
        params["positional_encoding_t"],
        params["linear_reduction_weight"], params["linear_reduction_bias"],
        params["qkv_w"], params["qkv_b"], params["out_w"], params["out_b"],
        params["ln1_w"], params["ln1_b"],
        params["ff1_w"], params["ff1_b"], params["ff2_w"], params["ff2_b"],
        params["ln2_w"], params["ln2_b"],
        params["proj_w"], params["proj_b"], bns, bnt,
        params["fc_w"], params["fc_b"],
    )


def init_params(key):
    """Deterministic synthetic parameters, stored pre-transposed (in, out)."""
    C, E = CFG["num_classes"], CFG["embed_dim"]
    F, L = CFG["dim_feedforward"], CFG["num_layers"]
    in_feats = CFG["img_c"] * CFG["img_h"] * CFG["img_w"]
    pe_feats = CFG["pe_h"] * CFG["pe_w"]

    keys = iter(jax.random.split(key, 64))

    def nrm(shape, std=0.02, dtype=jnp.float32):
        return (jax.random.normal(next(keys), shape, jnp.float32) * std).astype(dtype)

    return dict(
        # synthetic backbone: flattened NCHW -> per-class (in_feats, E) blocks
        backbone_weight=nrm((C, in_feats, E), dtype=jnp.bfloat16),
        backbone_bias=nrm((C, 1, E)),
        # positional encoding, stored flattened + transposed: (pe_h*pe_w, E)
        positional_encoding_t=nrm((pe_feats, E)),          # nn.init.normal_(std=0.02)
        linear_reduction_weight=nrm((C, pe_feats)),
        linear_reduction_bias=nrm((C, 1)),
        # transformer layers, stacked along a leading layer axis
        qkv_w=nrm((L, E, 3 * E)), qkv_b=nrm((L, 1, 3 * E)),
        out_w=nrm((L, E, E)), out_b=nrm((L, 1, E)),
        ln1_w=jnp.ones((L, 1, E), jnp.float32), ln1_b=jnp.zeros((L, 1, E), jnp.float32),
        ff1_w=nrm((L, E, F), dtype=jnp.bfloat16), ff1_b=nrm((L, 1, F)),
        ff2_w=nrm((L, F, E), dtype=jnp.bfloat16), ff2_b=nrm((L, 1, E)),
        ln2_w=jnp.ones((L, 1, E), jnp.float32), ln2_b=jnp.zeros((L, 1, E), jnp.float32),
        proj_w=nrm((2 * E, E)), proj_b=nrm((1, E)),
        fc_w=nrm((E, C)), fc_b=nrm((1, C)),
        bn_gamma=jnp.ones((1,), jnp.float32), bn_beta=jnp.zeros((1,), jnp.float32),
        bn_running_mean=jnp.zeros((1,), jnp.float32),
        bn_running_var=jnp.ones((1,), jnp.float32),
    )


if __name__ == "__main__":
    key = jax.random.PRNGKey(0)
    k_param, k_x = jax.random.split(key)

    params = init_params(k_param)
    x = jax.random.normal(
        k_x, (CFG["batch"], CFG["img_c"], CFG["img_h"], CFG["img_w"]), jnp.float32
    )  # NCHW input, as in PyTorch

    forward = jax.jit(ctran_forward)
    out = forward(params, x)
    jax.block_until_ready(out)

    assert out.shape == (CFG["batch"], CFG["num_classes"]), out.shape
    assert out.dtype == jnp.float32
    print("KERNEL_OK")
</pallas_src>

<mosaic_0001>
module attributes {stable_mosaic.version = 11 : i64} {
  func.func @_ctran_kernel(%arg0: memref<2x1024xf32, #tpu.memory_space<vmem>>, %arg1: memref<8x1024x32xbf16, #tpu.memory_space<vmem>>, %arg2: memref<8x1x32xf32, #tpu.memory_space<vmem>>, %arg3: memref<256x32xf32, #tpu.memory_space<vmem>>, %arg4: memref<8x256xf32, #tpu.memory_space<vmem>>, %arg5: memref<8x1xf32, #tpu.memory_space<vmem>>, %arg6: memref<2x32x96xf32, #tpu.memory_space<vmem>>, %arg7: memref<2x1x96xf32, #tpu.memory_space<vmem>>, %arg8: memref<2x32x32xf32, #tpu.memory_space<vmem>>, %arg9: memref<2x1x32xf32, #tpu.memory_space<vmem>>, %arg10: memref<2x1x32xf32, #tpu.memory_space<vmem>>, %arg11: memref<2x1x32xf32, #tpu.memory_space<vmem>>, %arg12: memref<2x32x2048xbf16, #tpu.memory_space<vmem>>, %arg13: memref<2x1x2048xf32, #tpu.memory_space<vmem>>, %arg14: memref<2x2048x32xbf16, #tpu.memory_space<vmem>>, %arg15: memref<2x1x32xf32, #tpu.memory_space<vmem>>, %arg16: memref<2x1x32xf32, #tpu.memory_space<vmem>>, %arg17: memref<2x1x32xf32, #tpu.memory_space<vmem>>, %arg18: memref<64x32xf32, #tpu.memory_space<vmem>>, %arg19: memref<1x32xf32, #tpu.memory_space<vmem>>, %arg20: memref<1x32xf32, #tpu.memory_space<vmem>>, %arg21: memref<1x32xf32, #tpu.memory_space<vmem>>, %arg22: memref<32x8xf32, #tpu.memory_space<vmem>>, %arg23: memref<1x8xf32, #tpu.memory_space<vmem>>, %arg24: memref<2x8xf32, #tpu.memory_space<vmem>>, %arg25: memref<16x32xf32, #tpu.memory_space<vmem>>) attributes {dimension_semantics = [], scalar_prefetch = 0 : i64, scratch_operands = 1 : i64, tpu.core_type = #tpu.core_type<tc>} {
    %c0 = arith.constant 0 : index
    %c0_0 = arith.constant 0 : index
    %0 = vector.load %arg4[%c0, %c0_0] : memref<8x256xf32, #tpu.memory_space<vmem>>, vector<8x256xf32>
    %c0_1 = arith.constant 0 : index
    %c0_2 = arith.constant 0 : index
    %1 = vector.load %arg3[%c0_1, %c0_2] : memref<256x32xf32, #tpu.memory_space<vmem>>, vector<256x32xf32>
    %cst = arith.constant dense<0.000000e+00> : vector<8x32xf32>
    %2 = tpu.matmul %0, %1, %cst {dimension_numbers = #tpu.dot_dimension_numbers<[1], [0], [0], [1], [0, 0, 1, 1], [], []>} : vector<8x256xf32>, vector<256x32xf32>, vector<8x32xf32> -> vector<8x32xf32>
    %c0_3 = arith.constant 0 : index
    %c0_4 = arith.constant 0 : index
    %3 = vector.load %arg5[%c0_3, %c0_4] : memref<8x1xf32, #tpu.memory_space<vmem>>, vector<8x1xf32>
    %4 = vector.broadcast %3 : vector<8x1xf32> to vector<8x32xf32>
    %5 = arith.addf %2, %4 : vector<8x32xf32>
    %c0_5 = arith.constant 0 : index
    %c0_6 = arith.constant 0 : index
    %6 = vector.load %arg0[%c0_5, %c0_6] : memref<2x1024xf32, #tpu.memory_space<vmem>>, vector<2x1024xf32>
    %7 = arith.truncf %6 : vector<2x1024xf32> to vector<2x1024xbf16>
    %c0_7 = arith.constant 0 : index
    %c0_8 = arith.constant 0 : index
    %c0_9 = arith.constant 0 : index
    %8 = vector.load %arg1[%c0_7, %c0_8, %c0_9] : memref<8x1024x32xbf16, #tpu.memory_space<vmem>>, vector<1x1024x32xbf16>
    %9 = vector.shape_cast %8 : vector<1x1024x32xbf16> to vector<1024x32xbf16>
    %cst_10 = arith.constant dense<0.000000e+00> : vector<2x32xf32>
    %10 = tpu.matmul %7, %9, %cst_10 {dimension_numbers = #tpu.dot_dimension_numbers<[1], [0], [0], [1], [0, 0, 1, 1], [], []>} : vector<2x1024xbf16>, vector<1024x32xbf16>, vector<2x32xf32> -> vector<2x32xf32>
    %c0_11 = arith.constant 0 : index
    %c0_12 = arith.constant 0 : index
    %c0_13 = arith.constant 0 : index
    %11 = vector.load %arg2[%c0_11, %c0_12, %c0_13] : memref<8x1x32xf32, #tpu.memory_space<vmem>>, vector<1x1x32xf32>
    %12 = vector.shape_cast %11 : vector<1x1x32xf32> to vector<1x32xf32>
    %13 = vector.broadcast %12 : vector<1x32xf32> to vector<2x32xf32>
    %14 = arith.addf %10, %13 : vector<2x32xf32>
    %15 = vector.extract_strided_slice %5 {offsets = [0, 0], sizes = [1, 32], strides = [1, 1]} : vector<8x32xf32> to vector<1x32xf32>
    %16 = vector.broadcast %15 : vector<1x32xf32> to vector<2x32xf32>
    %17 = arith.addf %14, %16 : vector<2x32xf32>
    %c0_14 = arith.constant 0 : index
    %c0_15 = arith.constant 0 : index
    %18 = vector.load %arg25[%c0_14, %c0_15] : memref<16x32xf32, #tpu.memory_space<vmem>>, vector<2x32xf32>
    tpu.vector_store %arg25[%c0_14, %c0_15], %17 {strides = array<i32>} : memref<16x32xf32, #tpu.memory_space<vmem>>, vector<2x32xf32>,
    %c1 = arith.constant 1 : index
    %c0_16 = arith.constant 0 : index
    %c0_17 = arith.constant 0 : index
    %19 = vector.load %arg1[%c1, %c0_16, %c0_17] : memref<8x1024x32xbf16, #tpu.memory_space<vmem>>, vector<1x1024x32xbf16>
    %20 = vector.shape_cast %19 : vector<1x1024x32xbf16> to vector<1024x32xbf16>
    %cst_18 = arith.constant dense<0.000000e+00> : vector<2x32xf32>
    %21 = tpu.matmul %7, %20, %cst_18 {dimension_numbers = #tpu.dot_dimension_numbers<[1], [0], [0], [1], [0, 0, 1, 1], [], []>} : vector<2x1024xbf16>, vector<1024x32xbf16>, vector<2x32xf32> -> vector<2x32xf32>
    %c1_19 = arith.constant 1 : index
    %c0_20 = arith.constant 0 : index
    %c0_21 = arith.constant 0 : index
    %22 = vector.load %arg2[%c1_19, %c0_20, %c0_21] : memref<8x1x32xf32, #tpu.memory_space<vmem>>, vector<1x1x32xf32>
    %23 = vector.shape_cast %22 : vector<1x1x32xf32> to vector<1x32xf32>
    %24 = vector.broadcast %23 : vector<1x32xf32> to vector<2x32xf32>
    %25 = arith.addf %21, %24 : vector<2x32xf32>
    %26 = vector.extract_strided_slice %5 {offsets = [1, 0], sizes = [1, 32], strides = [1, 1]} : vector<8x32xf32> to vector<1x32xf32>
    %27 = vector.broadcast %26 : vector<1x32xf32> to vector<2x32xf32>
    %28 = arith.addf %25, %27 : vector<2x32xf32>
    %c2 = arith.constant 2 : index
    %c0_22 = arith.constant 0 : index
    %29 = vector.load %arg25[%c2, %c0_22] : memref<16x32xf32, #tpu.memory_space<vmem>>, vector<2x32xf32>
    tpu.vector_store %arg25[%c2, %c0_22], %28 {strides = array<i32>} : memref<16x32xf32, #tpu.memory_space<vmem>>, vector<2x32xf32>,
    %c2_23 = arith.constant 2 : index
    %c0_24 = arith.constant 0 : index
    %c0_25 = arith.constant 0 : index
    %30 = vector.load %arg1[%c2_23, %c0_24, %c0_25] : memref<8x1024x32xbf16, #tpu.memory_space<vmem>>, vector<1x1024x32xbf16>
    %31 = vector.shape_cast %30 : vector<1x1024x32xbf16> to vector<1024x32xbf16>
    %cst_26 = arith.constant dense<0.000000e+00> : vector<2x32xf32>
    %32 = tpu.matmul %7, %31, %cst_26 {dimension_numbers = #tpu.dot_dimension_numbers<[1], [0], [0], [1], [0, 0, 1, 1], [], []>} : vector<2x1024xbf16>, vector<1024x32xbf16>, vector<2x32xf32> -> vector<2x32xf32>
    %c2_27 = arith.constant 2 : index
    %c0_28 = arith.constant 0 : index
    %c0_29 = arith.constant 0 : index
    %33 = vector.load %arg2[%c2_27, %c0_28, %c0_29] : memref<8x1x32xf32, #tpu.memory_space<vmem>>, vector<1x1x32xf32>
    %34 = vector.shape_cast %33 : vector<1x1x32xf32> to vector<1x32xf32>
    %35 = vector.broadcast %34 : vector<1x32xf32> to vector<2x32xf32>
    %36 = arith.addf %32, %35 : vector<2x32xf32>
    %37 = vector.extract_strided_slice %5 {offsets = [2, 0], sizes = [1, 32], strides = [1, 1]} : vector<8x32xf32> to vector<1x32xf32>
    %38 = vector.broadcast %37 : vector<1x32xf32> to vector<2x32xf32>
    %39 = arith.addf %36, %38 : vector<2x32xf32>
    %c4 = arith.constant 4 : index
    %c0_30 = arith.constant 0 : index
    %40 = vector.load %arg25[%c4, %c0_30] : memref<16x32xf32, #tpu.memory_space<vmem>>, vector<2x32xf32>
    tpu.vector_store %arg25[%c4, %c0_30], %39 {strides = array<i32>} : memref<16x32xf32, #tpu.memory_space<vmem>>, vector<2x32xf32>,
    %c3 = arith.constant 3 : index
    %c0_31 = arith.constant 0 : index
    %c0_32 = arith.constant 0 : index
    %41 = vector.load %arg1[%c3, %c0_31, %c0_32] : memref<8x1024x32xbf16, #tpu.memory_space<vmem>>, vector<1x1024x32xbf16>
    %42 = vector.shape_cast %41 : vector<1x1024x32xbf16> to vector<1024x32xbf16>
    %cst_33 = arith.constant dense<0.000000e+00> : vector<2x32xf32>
    %43 = tpu.matmul %7, %42, %cst_33 {dimension_numbers = #tpu.dot_dimension_numbers<[1], [0], [0], [1], [0, 0, 1, 1], [], []>} : vector<2x1024xbf16>, vector<1024x32xbf16>, vector<2x32xf32> -> vector<2x32xf32>
    %c3_34 = arith.constant 3 : index
    %c0_35 = arith.constant 0 : index
    %c0_36 = arith.constant 0 : index
    %44 = vector.load %arg2[%c3_34, %c0_35, %c0_36] : memref<8x1x32xf32, #tpu.memory_space<vmem>>, vector<1x1x32xf32>
    %45 = vector.shape_cast %44 : vector<1x1x32xf32> to vector<1x32xf32>
    %46 = vector.broadcast %45 : vector<1x32xf32> to vector<2x32xf32>
    %47 = arith.addf %43, %46 : vector<2x32xf32>
    %48 = vector.extract_strided_slice %5 {offsets = [3, 0], sizes = [1, 32], strides = [1, 1]} : vector<8x32xf32> to vector<1x32xf32>
    %49 = vector.broadcast %48 : vector<1x32xf32> to vector<2x32xf32>
    %50 = arith.addf %47, %49 : vector<2x32xf32>
    %c6 = arith.constant 6 : index
    %c0_37 = arith.constant 0 : index
    %51 = vector.load %arg25[%c6, %c0_37] : memref<16x32xf32, #tpu.memory_space<vmem>>, vector<2x32xf32>
    tpu.vector_store %arg25[%c6, %c0_37], %50 {strides = array<i32>} : memref<16x32xf32, #tpu.memory_space<vmem>>, vector<2x32xf32>,
    %c4_38 = arith.constant 4 : index
    %c0_39 = arith.constant 0 : index
    %c0_40 = arith.constant 0 : index
    %52 = vector.load %arg1[%c4_38, %c0_39, %c0_40] : memref<8x1024x32xbf16, #tpu.memory_space<vmem>>, vector<1x1024x32xbf16>
    %53 = vector.shape_cast %52 : vector<1x1024x32xbf16> to vector<1024x32xbf16>
    %cst_41 = arith.constant dense<0.000000e+00> : vector<2x32xf32>
    %54 = tpu.matmul %7, %53, %cst_41 {dimension_numbers = #tpu.dot_dimension_numbers<[1], [0], [0], [1], [0, 0, 1, 1], [], []>} : vector<2x1024xbf16>, vector<1024x32xbf16>, vector<2x32xf32> -> vector<2x32xf32>
    %c4_42 = arith.constant 4 : index
    %c0_43 = arith.constant 0 : index
    %c0_44 = arith.constant 0 : index
    %55 = vector.load %arg2[%c4_42, %c0_43, %c0_44] : memref<8x1x32xf32, #tpu.memory_space<vmem>>, vector<1x1x32xf32>
    %56 = vector.shape_cast %55 : vector<1x1x32xf32> to vector<1x32xf32>
    %57 = vector.broadcast %56 : vector<1x32xf32> to vector<2x32xf32>
    %58 = arith.addf %54, %57 : vector<2x32xf32>
    %59 = vector.extract_strided_slice %5 {offsets = [4, 0], sizes = [1, 32], strides = [1, 1]} : vector<8x32xf32> to vector<1x32xf32>
    %60 = vector.broadcast %59 : vector<1x32xf32> to vector<2x32xf32>
    %61 = arith.addf %58, %60 : vector<2x32xf32>
    %c8 = arith.constant 8 : index
    %c0_45 = arith.constant 0 : index
    %62 = vector.load %arg25[%c8, %c0_45] : memref<16x32xf32, #tpu.memory_space<vmem>>, vector<2x32xf32>
    tpu.vector_store %arg25[%c8, %c0_45], %61 {strides = array<i32>} : memref<16x32xf32, #tpu.memory_space<vmem>>, vector<2x32xf32>,
    %c5 = arith.constant 5 : index
    %c0_46 = arith.constant 0 : index
    %c0_47 = arith.constant 0 : index
    %63 = vector.load %arg1[%c5, %c0_46, %c0_47] : memref<8x1024x32xbf16, #tpu.memory_space<vmem>>, vector<1x1024x32xbf16>
    %64 = vector.shape_cast %63 : vector<1x1024x32xbf16> to vector<1024x32xbf16>
    %cst_48 = arith.constant dense<0.000000e+00> : vector<2x32xf32>
    %65 = tpu.matmul %7, %64, %cst_48 {dimension_numbers = #tpu.dot_dimension_numbers<[1], [0], [0], [1], [0, 0, 1, 1], [], []>} : vector<2x1024xbf16>, vector<1024x32xbf16>, vector<2x32xf32> -> vector<2x32xf32>
    %c5_49 = arith.constant 5 : index
    %c0_50 = arith.constant 0 : index
    %c0_51 = arith.constant 0 : index
    %66 = vector.load %arg2[%c5_49, %c0_50, %c0_51] : memref<8x1x32xf32, #tpu.memory_space<vmem>>, vector<1x1x32xf32>
    %67 = vector.shape_cast %66 : vector<1x1x32xf32> to vector<1x32xf32>
    %68 = vector.broadcast %67 : vector<1x32xf32> to vector<2x32xf32>
    %69 = arith.addf %65, %68 : vector<2x32xf32>
    %70 = vector.extract_strided_slice %5 {offsets = [5, 0], sizes = [1, 32], strides = [1, 1]} : vector<8x32xf32> to vector<1x32xf32>
    %71 = vector.broadcast %70 : vector<1x32xf32> to vector<2x32xf32>
    %72 = arith.addf %69, %71 : vector<2x32xf32>
    %c10 = arith.constant 10 : index
    %c0_52 = arith.constant 0 : index
    %73 = vector.load %arg25[%c10, %c0_52] : memref<16x32xf32, #tpu.memory_space<vmem>>, vector<2x32xf32>
    tpu.vector_store %arg25[%c10, %c0_52], %72 {strides = array<i32>} : memref<16x32xf32, #tpu.memory_space<vmem>>, vector<2x32xf32>,
    %c6_53 = arith.constant 6 : index
    %c0_54 = arith.constant 0 : index
    %c0_55 = arith.constant 0 : index
    %74 = vector.load %arg1[%c6_53, %c0_54, %c0_55] : memref<8x1024x32xbf16, #tpu.memory_space<vmem>>, vector<1x1024x32xbf16>
    %75 = vector.shape_cast %74 : vector<1x1024x32xbf16> to vector<1024x32xbf16>
    %cst_56 = arith.constant dense<0.000000e+00> : vector<2x32xf32>
    %76 = tpu.matmul %7, %75, %cst_56 {dimension_numbers = #tpu.dot_dimension_numbers<[1], [0], [0], [1], [0, 0, 1, 1], [], []>} : vector<2x1024xbf16>, vector<1024x32xbf16>, vector<2x32xf32> -> vector<2x32xf32>
    %c6_57 = arith.constant 6 : index
    %c0_58 = arith.constant 0 : index
    %c0_59 = arith.constant 0 : index
    %77 = vector.load %arg2[%c6_57, %c0_58, %c0_59] : memref<8x1x32xf32, #tpu.memory_space<vmem>>, vector<1x1x32xf32>
    %78 = vector.shape_cast %77 : vector<1x1x32xf32> to vector<1x32xf32>
    %79 = vector.broadcast %78 : vector<1x32xf32> to vector<2x32xf32>
    %80 = arith.addf %76, %79 : vector<2x32xf32>
    %81 = vector.extract_strided_slice %5 {offsets = [6, 0], sizes = [1, 32], strides = [1, 1]} : vector<8x32xf32> to vector<1x32xf32>
    %82 = vector.broadcast %81 : vector<1x32xf32> to vector<2x32xf32>
    %83 = arith.addf %80, %82 : vector<2x32xf32>
    %c12 = arith.constant 12 : index
    %c0_60 = arith.constant 0 : index
    %84 = vector.load %arg25[%c12, %c0_60] : memref<16x32xf32, #tpu.memory_space<vmem>>, vector<2x32xf32>
    tpu.vector_store %arg25[%c12, %c0_60], %83 {strides = array<i32>} : memref<16x32xf32, #tpu.memory_space<vmem>>, vector<2x32xf32>,
    %c7 = arith.constant 7 : index
    %c0_61 = arith.constant 0 : index
    %c0_62 = arith.constant 0 : index
    %85 = vector.load %arg1[%c7, %c0_61, %c0_62] : memref<8x1024x32xbf16, #tpu.memory_space<vmem>>, vector<1x1024x32xbf16>
    %86 = vector.shape_cast %85 : vector<1x1024x32xbf16> to vector<1024x32xbf16>
    %cst_63 = arith.constant dense<0.000000e+00> : vector<2x32xf32>
    %87 = tpu.matmul %7, %86, %cst_63 {dimension_numbers = #tpu.dot_dimension_numbers<[1], [0], [0], [1], [0, 0, 1, 1], [], []>} : vector<2x1024xbf16>, vector<1024x32xbf16>, vector<2x32xf32> -> vector<2x32xf32>
    %c7_64 = arith.constant 7 : index
    %c0_65 = arith.constant 0 : index
    %c0_66 = arith.constant 0 : index
    %88 = vector.load %arg2[%c7_64, %c0_65, %c0_66] : memref<8x1x32xf32, #tpu.memory_space<vmem>>, vector<1x1x32xf32>
    %89 = vector.shape_cast %88 : vector<1x1x32xf32> to vector<1x32xf32>
    %90 = vector.broadcast %89 : vector<1x32xf32> to vector<2x32xf32>
    %91 = arith.addf %87, %90 : vector<2x32xf32>
    %92 = vector.extract_strided_slice %5 {offsets = [7, 0], sizes = [1, 32], strides = [1, 1]} : vector<8x32xf32> to vector<1x32xf32>
    %93 = vector.broadcast %92 : vector<1x32xf32> to vector<2x32xf32>
    %94 = arith.addf %91, %93 : vector<2x32xf32>
    %c14 = arith.constant 14 : index
    %c0_67 = arith.constant 0 : index
    %95 = vector.load %arg25[%c14, %c0_67] : memref<16x32xf32, #tpu.memory_space<vmem>>, vector<2x32xf32>
    tpu.vector_store %arg25[%c14, %c0_67], %94 {strides = array<i32>} : memref<16x32xf32, #tpu.memory_space<vmem>>, vector<2x32xf32>,
    %c0_68 = arith.constant 0 : index
    %c0_69 = arith.constant 0 : index
    %96 = vector.load %arg25[%c0_68, %c0_69] : memref<16x32xf32, #tpu.memory_space<vmem>>, vector<16x32xf32>
    %97 = tpu.iota {dimensions = array<i32: 0>} : vector<16x16xi32>
    %98 = tpu.iota {dimensions = array<i32: 1>} : vector<16x16xi32>
    %c1_i32 = arith.constant 1 : i32
    %99 = vector.broadcast %c1_i32 : i32 to vector<16x16xi32>
    %100 = arith.andi %97, %99 : vector<16x16xi32>
    %c1_i32_70 = arith.constant 1 : i32
    %101 = vector.broadcast %c1_i32_70 : i32 to vector<16x16xi32>
    %102 = arith.andi %98, %101 : vector<16x16xi32>
    %103 = arith.cmpi eq, %100, %102 : vector<16x16xi32>
    %c0_71 = arith.constant 0 : index
    %c0_72 = arith.constant 0 : index
    %c0_73 = arith.constant 0 : index
    %104 = vector.load %arg6[%c0_71, %c0_72, %c0_73] : memref<2x32x96xf32, #tpu.memory_space<vmem>>, vector<1x32x96xf32>
    %105 = vector.shape_cast %104 : vector<1x32x96xf32> to vector<32x96xf32>
    %cst_74 = arith.constant dense<0.000000e+00> : vector<16x96xf32>
    %106 = tpu.matmul %96, %105, %cst_74 {dimension_numbers = #tpu.dot_dimension_numbers<[1], [0], [0], [1], [0, 0, 1, 1], [], []>} : vector<16x32xf32>, vector<32x96xf32>, vector<16x96xf32> -> vector<16x96xf32>
    %c0_75 = arith.constant 0 : index
    %c0_76 = arith.constant 0 : index
    %c0_77 = arith.constant 0 : index
    %107 = vector.load %arg7[%c0_75, %c0_76, %c0_77] : memref<2x1x96xf32, #tpu.memory_space<vmem>>, vector<1x1x96xf32>
    %108 = vector.shape_cast %107 : vector<1x1x96xf32> to vector<1x96xf32>
    %109 = vector.broadcast %108 : vector<1x96xf32> to vector<16x96xf32>
    %110 = arith.addf %106, %109 : vector<16x96xf32>
    %111 = vector.extract_strided_slice %110 {offsets = [0, 0], sizes = [16, 32], strides = [1, 1]} : vector<16x96xf32> to vector<16x32xf32>
    %112 = vector.extract_strided_slice %110 {offsets = [0, 32], sizes = [16, 32], strides = [1, 1]} : vector<16x96xf32> to vector<16x32xf32>
    %113 = vector.extract_strided_slice %110 {offsets = [0, 64], sizes = [16, 32], strides = [1, 1]} : vector<16x96xf32> to vector<16x32xf32>
    %c0_78 = arith.constant 0 : index
    %c0_79 = arith.constant 0 : index
    %c0_80 = arith.constant 0 : index
    %114 = vector.load %arg8[%c0_78, %c0_79, %c0_80] : memref<2x32x32xf32, #tpu.memory_space<vmem>>, vector<1x32x32xf32>
    %115 = vector.shape_cast %114 : vector<1x32x32xf32> to vector<32x32xf32>
    %cst_81 = arith.constant 0.000000e+00 : f32
    %116 = vector.broadcast %cst_81 : f32 to vector<16x32xf32>
    %117 = vector.extract_strided_slice %111 {offsets = [0, 0], sizes = [16, 8], strides = [1, 1]} : vector<16x32xf32> to vector<16x8xf32>
    %118 = vector.extract_strided_slice %112 {offsets = [0, 0], sizes = [16, 8], strides = [1, 1]} : vector<16x32xf32> to vector<16x8xf32>
    %119 = vector.extract_strided_slice %113 {offsets = [0, 0], sizes = [16, 8], strides = [1, 1]} : vector<16x32xf32> to vector<16x8xf32>
    %cst_82 = arith.constant dense<0.000000e+00> : vector<16x16xf32>
    %120 = tpu.matmul %117, %118, %cst_82 {dimension_numbers = #tpu.dot_dimension_numbers<[1], [1], [0], [0], [0, 0, 1, 0], [], []>} : vector<16x8xf32>, vector<16x8xf32>, vector<16x16xf32> -> vector<16x16xf32>
    %cst_83 = arith.constant 0.353553385 : f32
    %121 = vector.broadcast %cst_83 : f32 to vector<16x16xf32>
    %122 = arith.mulf %120, %121 : vector<16x16xf32>
    %cst_84 = arith.constant -1.000000e+30 : f32
    %123 = vector.broadcast %cst_84 : f32 to vector<16x16xf32>
    %124 = arith.select %103, %122, %123 : vector<16x16xi1>, vector<16x16xf32>
    %cst_85 = arith.constant dense<0xFF800000> : vector<16xf32>
    %125 = vector.multi_reduction <maximumf>, %124, %cst_85 [1] : vector<16x16xf32> to vector<16xf32>
    %126 = vector.shape_cast %125 : vector<16xf32> to vector<16x1xf32>
    %127 = vector.broadcast %126 : vector<16x1xf32> to vector<16x16xf32>
    %128 = arith.subf %124, %127 : vector<16x16xf32>
    %129 = math.exp %128 : vector<16x16xf32>
    %cst_86 = arith.constant dense<0.000000e+00> : vector<16xf32>
    %130 = vector.multi_reduction <add>, %129, %cst_86 [1] : vector<16x16xf32> to vector<16xf32>
    %131 = vector.shape_cast %130 : vector<16xf32> to vector<16x1xf32>
    %132 = tpu.reciprocal %131 {approx = true} : vector<16x1xf32> -> vector<16x1xf32>
    %133 = vector.broadcast %132 : vector<16x1xf32> to vector<16x16xf32>
    %134 = arith.mulf %129, %133 : vector<16x16xf32>
    %cst_87 = arith.constant dense<0.000000e+00> : vector<16x8xf32>
    %135 = tpu.matmul %134, %119, %cst_87 {dimension_numbers = #tpu.dot_dimension_numbers<[1], [0], [0], [1], [0, 0, 1, 1], [], []>} : vector<16x16xf32>, vector<16x8xf32>, vector<16x8xf32> -> vector<16x8xf32>
    %136 = vector.extract_strided_slice %115 {offsets = [0, 0], sizes = [8, 32], strides = [1, 1]} : vector<32x32xf32> to vector<8x32xf32>
    %cst_88 = arith.constant dense<0.000000e+00> : vector<16x32xf32>
    %137 = tpu.matmul %135, %136, %cst_88 {dimension_numbers = #tpu.dot_dimension_numbers<[1], [0], [0], [1], [0, 0, 1, 1], [], []>} : vector<16x8xf32>, vector<8x32xf32>, vector<16x32xf32> -> vector<16x32xf32>
    %138 = arith.addf %116, %137 : vector<16x32xf32>
    %139 = vector.extract_strided_slice %111 {offsets = [0, 8], sizes = [16, 8], strides = [1, 1]} : vector<16x32xf32> to vector<16x8xf32>
    %140 = vector.extract_strided_slice %112 {offsets = [0, 8], sizes = [16, 8], strides = [1, 1]} : vector<16x32xf32> to vector<16x8xf32>
    %141 = vector.extract_strided_slice %113 {offsets = [0, 8], sizes = [16, 8], strides = [1, 1]} : vector<16x32xf32> to vector<16x8xf32>
    %cst_89 = arith.constant dense<0.000000e+00> : vector<16x16xf32>
    %142 = tpu.matmul %139, %140, %cst_89 {dimension_numbers = #tpu.dot_dimension_numbers<[1], [1], [0], [0], [0, 0, 1, 0], [], []>} : vector<16x8xf32>, vector<16x8xf32>, vector<16x16xf32> -> vector<16x16xf32>
    %cst_90 = arith.constant 0.353553385 : f32
    %143 = vector.broadcast %cst_90 : f32 to vector<16x16xf32>
    %144 = arith.mulf %142, %143 : vector<16x16xf32>
    %cst_91 = arith.constant -1.000000e+30 : f32
    %145 = vector.broadcast %cst_91 : f32 to vector<16x16xf32>
    %146 = arith.select %103, %144, %145 : vector<16x16xi1>, vector<16x16xf32>
    %cst_92 = arith.constant dense<0xFF800000> : vector<16xf32>
    %147 = vector.multi_reduction <maximumf>, %146, %cst_92 [1] : vector<16x16xf32> to vector<16xf32>
    %148 = vector.shape_cast %147 : vector<16xf32> to vector<16x1xf32>
    %149 = vector.broadcast %148 : vector<16x1xf32> to vector<16x16xf32>
    %150 = arith.subf %146, %149 : vector<16x16xf32>
    %151 = math.exp %150 : vector<16x16xf32>
    %cst_93 = arith.constant dense<0.000000e+00> : vector<16xf32>
    %152 = vector.multi_reduction <add>, %151, %cst_93 [1] : vector<16x16xf32> to vector<16xf32>
    %153 = vector.shape_cast %152 : vector<16xf32> to vector<16x1xf32>
    %154 = tpu.reciprocal %153 {approx = true} : vector<16x1xf32> -> vector<16x1xf32>
    %155 = vector.broadcast %154 : vector<16x1xf32> to vector<16x16xf32>
    %156 = arith.mulf %151, %155 : vector<16x16xf32>
    %cst_94 = arith.constant dense<0.000000e+00> : vector<16x8xf32>
    %157 = tpu.matmul %156, %141, %cst_94 {dimension_numbers = #tpu.dot_dimension_numbers<[1], [0], [0], [1], [0, 0, 1, 1], [], []>} : vector<16x16xf32>, vector<16x8xf32>, vector<16x8xf32> -> vector<16x8xf32>
    %158 = vector.extract_strided_slice %115 {offsets = [8, 0], sizes = [8, 32], strides = [1, 1]} : vector<32x32xf32> to vector<8x32xf32>
    %cst_95 = arith.constant dense<0.000000e+00> : vector<16x32xf32>
    %159 = tpu.matmul %157, %158, %cst_95 {dimension_numbers = #tpu.dot_dimension_numbers<[1], [0], [0], [1], [0, 0, 1, 1], [], []>} : vector<16x8xf32>, vector<8x32xf32>, vector<16x32xf32> -> vector<16x32xf32>
    %160 = arith.addf %138, %159 : vector<16x32xf32>
    %161 = vector.extract_strided_slice %111 {offsets = [0, 16], sizes = [16, 8], strides = [1, 1]} : vector<16x32xf32> to vector<16x8xf32>
    %162 = vector.extract_strided_slice %112 {offsets = [0, 16], sizes = [16, 8], strides = [1, 1]} : vector<16x32xf32> to vector<16x8xf32>
    %163 = vector.extract_strided_slice %113 {offsets = [0, 16], sizes = [16, 8], strides = [1, 1]} : vector<16x32xf32> to vector<16x8xf32>
    %cst_96 = arith.constant dense<0.000000e+00> : vector<16x16xf32>
    %164 = tpu.matmul %161, %162, %cst_96 {dimension_numbers = #tpu.dot_dimension_numbers<[1], [1], [0], [0], [0, 0, 1, 0], [], []>} : vector<16x8xf32>, vector<16x8xf32>, vector<16x16xf32> -> vector<16x16xf32>
    %cst_97 = arith.constant 0.353553385 : f32
    %165 = vector.broadcast %cst_97 : f32 to vector<16x16xf32>
    %166 = arith.mulf %164, %165 : vector<16x16xf32>
    %cst_98 = arith.constant -1.000000e+30 : f32
    %167 = vector.broadcast %cst_98 : f32 to vector<16x16xf32>
    %168 = arith.select %103, %166, %167 : vector<16x16xi1>, vector<16x16xf32>
    %cst_99 = arith.constant dense<0xFF800000> : vector<16xf32>
    %169 = vector.multi_reduction <maximumf>, %168, %cst_99 [1] : vector<16x16xf32> to vector<16xf32>
    %170 = vector.shape_cast %169 : vector<16xf32> to vector<16x1xf32>
    %171 = vector.broadcast %170 : vector<16x1xf32> to vector<16x16xf32>
    %172 = arith.subf %168, %171 : vector<16x16xf32>
    %173 = math.exp %172 : vector<16x16xf32>
    %cst_100 = arith.constant dense<0.000000e+00> : vector<16xf32>
    %174 = vector.multi_reduction <add>, %173, %cst_100 [1] : vector<16x16xf32> to vector<16xf32>
    %175 = vector.shape_cast %174 : vector<16xf32> to vector<16x1xf32>
    %176 = tpu.reciprocal %175 {approx = true} : vector<16x1xf32> -> vector<16x1xf32>
    %177 = vector.broadcast %176 : vector<16x1xf32> to vector<16x16xf32>
    %178 = arith.mulf %173, %177 : vector<16x16xf32>
    %cst_101 = arith.constant dense<0.000000e+00> : vector<16x8xf32>
    %179 = tpu.matmul %178, %163, %cst_101 {dimension_numbers = #tpu.dot_dimension_numbers<[1], [0], [0], [1], [0, 0, 1, 1], [], []>} : vector<16x16xf32>, vector<16x8xf32>, vector<16x8xf32> -> vector<16x8xf32>
    %180 = vector.extract_strided_slice %115 {offsets = [16, 0], sizes = [8, 32], strides = [1, 1]} : vector<32x32xf32> to vector<8x32xf32>
    %cst_102 = arith.constant dense<0.000000e+00> : vector<16x32xf32>
    %181 = tpu.matmul %179, %180, %cst_102 {dimension_numbers = #tpu.dot_dimension_numbers<[1], [0], [0], [1], [0, 0, 1, 1], [], []>} : vector<16x8xf32>, vector<8x32xf32>, vector<16x32xf32> -> vector<16x32xf32>
    %182 = arith.addf %160, %181 : vector<16x32xf32>
    %183 = vector.extract_strided_slice %111 {offsets = [0, 24], sizes = [16, 8], strides = [1, 1]} : vector<16x32xf32> to vector<16x8xf32>
    %184 = vector.extract_strided_slice %112 {offsets = [0, 24], sizes = [16, 8], strides = [1, 1]} : vector<16x32xf32> to vector<16x8xf32>
    %185 = vector.extract_strided_slice %113 {offsets = [0, 24], sizes = [16, 8], strides = [1, 1]} : vector<16x32xf32> to vector<16x8xf32>
    %cst_103 = arith.constant dense<0.000000e+00> : vector<16x16xf32>
    %186 = tpu.matmul %183, %184, %cst_103 {dimension_numbers = #tpu.dot_dimension_numbers<[1], [1], [0], [0], [0, 0, 1, 0], [], []>} : vector<16x8xf32>, vector<16x8xf32>, vector<16x16xf32> -> vector<16x16xf32>
    %cst_104 = arith.constant 0.353553385 : f32
    %187 = vector.broadcast %cst_104 : f32 to vector<16x16xf32>
    %188 = arith.mulf %186, %187 : vector<16x16xf32>
    %cst_105 = arith.constant -1.000000e+30 : f32
    %189 = vector.broadcast %cst_105 : f32 to vector<16x16xf32>
    %190 = arith.select %103, %188, %189 : vector<16x16xi1>, vector<16x16xf32>
    %cst_106 = arith.constant dense<0xFF800000> : vector<16xf32>
    %191 = vector.multi_reduction <maximumf>, %190, %cst_106 [1] : vector<16x16xf32> to vector<16xf32>
    %192 = vector.shape_cast %191 : vector<16xf32> to vector<16x1xf32>
    %193 = vector.broadcast %192 : vector<16x1xf32> to vector<16x16xf32>
    %194 = arith.subf %190, %193 : vector<16x16xf32>
    %195 = math.exp %194 : vector<16x16xf32>
    %cst_107 = arith.constant dense<0.000000e+00> : vector<16xf32>
    %196 = vector.multi_reduction <add>, %195, %cst_107 [1] : vector<16x16xf32> to vector<16xf32>
    %197 = vector.shape_cast %196 : vector<16xf32> to vector<16x1xf32>
    %198 = tpu.reciprocal %197 {approx = true} : vector<16x1xf32> -> vector<16x1xf32>
    %199 = vector.broadcast %198 : vector<16x1xf32> to vector<16x16xf32>
    %200 = arith.mulf %195, %199 : vector<16x16xf32>
    %cst_108 = arith.constant dense<0.000000e+00> : vector<16x8xf32>
    %201 = tpu.matmul %200, %185, %cst_108 {dimension_numbers = #tpu.dot_dimension_numbers<[1], [0], [0], [1], [0, 0, 1, 1], [], []>} : vector<16x16xf32>, vector<16x8xf32>, vector<16x8xf32> -> vector<16x8xf32>
    %202 = vector.extract_strided_slice %115 {offsets = [24, 0], sizes = [8, 32], strides = [1, 1]} : vector<32x32xf32> to vector<8x32xf32>
    %cst_109 = arith.constant dense<0.000000e+00> : vector<16x32xf32>
    %203 = tpu.matmul %201, %202, %cst_109 {dimension_numbers = #tpu.dot_dimension_numbers<[1], [0], [0], [1], [0, 0, 1, 1], [], []>} : vector<16x8xf32>, vector<8x32xf32>, vector<16x32xf32> -> vector<16x32xf32>
    %204 = arith.addf %182, %203 : vector<16x32xf32>
    %205 = arith.addf %96, %204 : vector<16x32xf32>
    %c0_110 = arith.constant 0 : index
    %c0_111 = arith.constant 0 : index
    %c0_112 = arith.constant 0 : index
    %206 = vector.load %arg9[%c0_110, %c0_111, %c0_112] : memref<2x1x32xf32, #tpu.memory_space<vmem>>, vector<1x1x32xf32>
    %207 = vector.shape_cast %206 : vector<1x1x32xf32> to vector<1x32xf32>
    %208 = vector.broadcast %207 : vector<1x32xf32> to vector<16x32xf32>
    %209 = arith.addf %205, %208 : vector<16x32xf32>
    %c0_113 = arith.constant 0 : index
    %c0_114 = arith.constant 0 : index
    %c0_115 = arith.constant 0 : index
    %210 = vector.load %arg10[%c0_113, %c0_114, %c0_115] : memref<2x1x32xf32, #tpu.memory_space<vmem>>, vector<1x1x32xf32>
    %211 = vector.shape_cast %210 : vector<1x1x32xf32> to vector<1x32xf32>
    %c0_116 = arith.constant 0 : index
    %c0_117 = arith.constant 0 : index
    %c0_118 = arith.constant 0 : index
    %212 = vector.load %arg11[%c0_116, %c0_117, %c0_118] : memref<2x1x32xf32, #tpu.memory_space<vmem>>, vector<1x1x32xf32>
    %213 = vector.shape_cast %212 : vector<1x1x32xf32> to vector<1x32xf32>
    %cst_119 = arith.constant dense<0.000000e+00> : vector<16xf32>
    %214 = vector.multi_reduction <add>, %209, %cst_119 [1] : vector<16x32xf32> to vector<16xf32>
    %215 = vector.shape_cast %214 : vector<16xf32> to vector<16x1xf32>
    %cst_120 = arith.constant 3.200000e+01 : f32
    %216 = vector.broadcast %cst_120 : f32 to vector<16x1xf32>
    %217 = arith.divf %215, %216 : vector<16x1xf32>
    %218 = vector.broadcast %217 : vector<16x1xf32> to vector<16x32xf32>
    %219 = arith.subf %209, %218 : vector<16x32xf32>
    %220 = arith.mulf %219, %219 : vector<16x32xf32>
    %cst_121 = arith.constant dense<0.000000e+00> : vector<16xf32>
    %221 = vector.multi_reduction <add>, %220, %cst_121 [1] : vector<16x32xf32> to vector<16xf32>
    %222 = vector.shape_cast %221 : vector<16xf32> to vector<16x1xf32>
    %cst_122 = arith.constant 3.200000e+01 : f32
    %223 = vector.broadcast %cst_122 : f32 to vector<16x1xf32>
    %224 = arith.divf %222, %223 : vector<16x1xf32>
    %225 = vector.broadcast %217 : vector<16x1xf32> to vector<16x32xf32>
    %226 = arith.subf %209, %225 : vector<16x32xf32>
    %cst_123 = arith.constant 9.99999974E-6 : f32
    %227 = vector.broadcast %cst_123 : f32 to vector<16x1xf32>
    %228 = arith.addf %224, %227 : vector<16x1xf32>
    %229 = math.rsqrt %228 : vector<16x1xf32>
    %230 = vector.broadcast %229 : vector<16x1xf32> to vector<16x32xf32>
    %231 = arith.mulf %226, %230 : vector<16x32xf32>
    %232 = vector.broadcast %211 : vector<1x32xf32> to vector<16x32xf32>
    %233 = arith.mulf %231, %232 : vector<16x32xf32>
    %234 = vector.broadcast %213 : vector<1x32xf32> to vector<16x32xf32>
    %235 = arith.addf %233, %234 : vector<16x32xf32>
    %236 = arith.truncf %235 : vector<16x32xf32> to vector<16x32xbf16>
    %c0_124 = arith.constant 0 : index
    %c0_125 = arith.constant 0 : index
    %c0_126 = arith.constant 0 : index
    %237 = vector.load %arg12[%c0_124, %c0_125, %c0_126] : memref<2x32x2048xbf16, #tpu.memory_space<vmem>>, vector<1x32x2048xbf16>
    %238 = vector.shape_cast %237 : vector<1x32x2048xbf16> to vector<32x2048xbf16>
    %cst_127 = arith.constant dense<0.000000e+00> : vector<16x2048xf32>
    %239 = tpu.matmul %236, %238, %cst_127 {dimension_numbers = #tpu.dot_dimension_numbers<[1], [0], [0], [1], [0, 0, 1, 1], [], []>} : vector<16x32xbf16>, vector<32x2048xbf16>, vector<16x2048xf32> -> vector<16x2048xf32>
    %c0_128 = arith.constant 0 : index
    %c0_129 = arith.constant 0 : index
    %c0_130 = arith.constant 0 : index
    %240 = vector.load %arg13[%c0_128, %c0_129, %c0_130] : memref<2x1x2048xf32, #tpu.memory_space<vmem>>, vector<1x1x2048xf32>
    %241 = vector.shape_cast %240 : vector<1x1x2048xf32> to vector<1x2048xf32>
    %242 = vector.broadcast %241 : vector<1x2048xf32> to vector<16x2048xf32>
    %243 = arith.addf %239, %242 : vector<16x2048xf32>
    %cst_131 = arith.constant 0.000000e+00 : f32
    %244 = vector.broadcast %cst_131 : f32 to vector<16x2048xf32>
    %245 = arith.maximumf %243, %244 : vector<16x2048xf32>
    %246 = arith.truncf %245 : vector<16x2048xf32> to vector<16x2048xbf16>
    %c0_132 = arith.constant 0 : index
    %c0_133 = arith.constant 0 : index
    %c0_134 = arith.constant 0 : index
    %247 = vector.load %arg14[%c0_132, %c0_133, %c0_134] : memref<2x2048x32xbf16, #tpu.memory_space<vmem>>, vector<1x2048x32xbf16>
    %248 = vector.shape_cast %247 : vector<1x2048x32xbf16> to vector<2048x32xbf16>
    %cst_135 = arith.constant dense<0.000000e+00> : vector<16x32xf32>
    %249 = tpu.matmul %246, %248, %cst_135 {dimension_numbers = #tpu.dot_dimension_numbers<[1], [0], [0], [1], [0, 0, 1, 1], [], []>} : vector<16x2048xbf16>, vector<2048x32xbf16>, vector<16x32xf32> -> vector<16x32xf32>
    %c0_136 = arith.constant 0 : index
    %c0_137 = arith.constant 0 : index
    %c0_138 = arith.constant 0 : index
    %250 = vector.load %arg15[%c0_136, %c0_137, %c0_138] : memref<2x1x32xf32, #tpu.memory_space<vmem>>, vector<1x1x32xf32>
    %251 = vector.shape_cast %250 : vector<1x1x32xf32> to vector<1x32xf32>
    %252 = vector.broadcast %251 : vector<1x32xf32> to vector<16x32xf32>
    %253 = arith.addf %249, %252 : vector<16x32xf32>
    %254 = arith.addf %235, %253 : vector<16x32xf32>
    %c0_139 = arith.constant 0 : index
    %c0_140 = arith.constant 0 : index
    %c0_141 = arith.constant 0 : index
    %255 = vector.load %arg16[%c0_139, %c0_140, %c0_141] : memref<2x1x32xf32, #tpu.memory_space<vmem>>, vector<1x1x32xf32>
    %256 = vector.shape_cast %255 : vector<1x1x32xf32> to vector<1x32xf32>
    %c0_142 = arith.constant 0 : index
    %c0_143 = arith.constant 0 : index
    %c0_144 = arith.constant 0 : index
    %257 = vector.load %arg17[%c0_142, %c0_143, %c0_144] : memref<2x1x32xf32, #tpu.memory_space<vmem>>, vector<1x1x32xf32>
    %258 = vector.shape_cast %257 : vector<1x1x32xf32> to vector<1x32xf32>
    %cst_145 = arith.constant dense<0.000000e+00> : vector<16xf32>
    %259 = vector.multi_reduction <add>, %254, %cst_145 [1] : vector<16x32xf32> to vector<16xf32>
    %260 = vector.shape_cast %259 : vector<16xf32> to vector<16x1xf32>
    %cst_146 = arith.constant 3.200000e+01 : f32
    %261 = vector.broadcast %cst_146 : f32 to vector<16x1xf32>
    %262 = arith.divf %260, %261 : vector<16x1xf32>
    %263 = vector.broadcast %262 : vector<16x1xf32> to vector<16x32xf32>
    %264 = arith.subf %254, %263 : vector<16x32xf32>
    %265 = arith.mulf %264, %264 : vector<16x32xf32>
    %cst_147 = arith.constant dense<0.000000e+00> : vector<16xf32>
    %266 = vector.multi_reduction <add>, %265, %cst_147 [1] : vector<16x32xf32> to vector<16xf32>
    %267 = vector.shape_cast %266 : vector<16xf32> to vector<16x1xf32>
    %cst_148 = arith.constant 3.200000e+01 : f32
    %268 = vector.broadcast %cst_148 : f32 to vector<16x1xf32>
    %269 = arith.divf %267, %268 : vector<16x1xf32>
    %270 = vector.broadcast %262 : vector<16x1xf32> to vector<16x32xf32>
    %271 = arith.subf %254, %270 : vector<16x32xf32>
    %cst_149 = arith.constant 9.99999974E-6 : f32
    %272 = vector.broadcast %cst_149 : f32 to vector<16x1xf32>
    %273 = arith.addf %269, %272 : vector<16x1xf32>
    %274 = math.rsqrt %273 : vector<16x1xf32>
    %275 = vector.broadcast %274 : vector<16x1xf32> to vector<16x32xf32>
    %276 = arith.mulf %271, %275 : vector<16x32xf32>
    %277 = vector.broadcast %256 : vector<1x32xf32> to vector<16x32xf32>
    %278 = arith.mulf %276, %277 : vector<16x32xf32>
    %279 = vector.broadcast %258 : vector<1x32xf32> to vector<16x32xf32>
    %280 = arith.addf %278, %279 : vector<16x32xf32>
    %c1_150 = arith.constant 1 : index
    %c0_151 = arith.constant 0 : index
    %c0_152 = arith.constant 0 : index
    %281 = vector.load %arg6[%c1_150, %c0_151, %c0_152] : memref<2x32x96xf32, #tpu.memory_space<vmem>>, vector<1x32x96xf32>
    %282 = vector.shape_cast %281 : vector<1x32x96xf32> to vector<32x96xf32>
    %cst_153 = arith.constant dense<0.000000e+00> : vector<16x96xf32>
    %283 = tpu.matmul %280, %282, %cst_153 {dimension_numbers = #tpu.dot_dimension_numbers<[1], [0], [0], [1], [0, 0, 1, 1], [], []>} : vector<16x32xf32>, vector<32x96xf32>, vector<16x96xf32> -> vector<16x96xf32>
    %c1_154 = arith.constant 1 : index
    %c0_155 = arith.constant 0 : index
    %c0_156 = arith.constant 0 : index
    %284 = vector.load %arg7[%c1_154, %c0_155, %c0_156] : memref<2x1x96xf32, #tpu.memory_space<vmem>>, vector<1x1x96xf32>
    %285 = vector.shape_cast %284 : vector<1x1x96xf32> to vector<1x96xf32>
    %286 = vector.broadcast %285 : vector<1x96xf32> to vector<16x96xf32>
    %287 = arith.addf %283, %286 : vector<16x96xf32>
    %288 = vector.extract_strided_slice %287 {offsets = [0, 0], sizes = [16, 32], strides = [1, 1]} : vector<16x96xf32> to vector<16x32xf32>
    %289 = vector.extract_strided_slice %287 {offsets = [0, 32], sizes = [16, 32], strides = [1, 1]} : vector<16x96xf32> to vector<16x32xf32>
    %290 = vector.extract_strided_slice %287 {offsets = [0, 64], sizes = [16, 32], strides = [1, 1]} : vector<16x96xf32> to vector<16x32xf32>
    %c1_157 = arith.constant 1 : index
    %c0_158 = arith.constant 0 : index
    %c0_159 = arith.constant 0 : index
    %291 = vector.load %arg8[%c1_157, %c0_158, %c0_159] : memref<2x32x32xf32, #tpu.memory_space<vmem>>, vector<1x32x32xf32>
    %292 = vector.shape_cast %291 : vector<1x32x32xf32> to vector<32x32xf32>
    %cst_160 = arith.constant 0.000000e+00 : f32
    %293 = vector.broadcast %cst_160 : f32 to vector<16x32xf32>
    %294 = vector.extract_strided_slice %288 {offsets = [0, 0], sizes = [16, 8], strides = [1, 1]} : vector<16x32xf32> to vector<16x8xf32>
    %295 = vector.extract_strided_slice %289 {offsets = [0, 0], sizes = [16, 8], strides = [1, 1]} : vector<16x32xf32> to vector<16x8xf32>
    %296 = vector.extract_strided_slice %290 {offsets = [0, 0], sizes = [16, 8], strides = [1, 1]} : vector<16x32xf32> to vector<16x8xf32>
    %cst_161 = arith.constant dense<0.000000e+00> : vector<16x16xf32>
    %297 = tpu.matmul %294, %295, %cst_161 {dimension_numbers = #tpu.dot_dimension_numbers<[1], [1], [0], [0], [0, 0, 1, 0], [], []>} : vector<16x8xf32>, vector<16x8xf32>, vector<16x16xf32> -> vector<16x16xf32>
    %cst_162 = arith.constant 0.353553385 : f32
    %298 = vector.broadcast %cst_162 : f32 to vector<16x16xf32>
    %299 = arith.mulf %297, %298 : vector<16x16xf32>
    %cst_163 = arith.constant -1.000000e+30 : f32
    %300 = vector.broadcast %cst_163 : f32 to vector<16x16xf32>
    %301 = arith.select %103, %299, %300 : vector<16x16xi1>, vector<16x16xf32>
    %cst_164 = arith.constant dense<0xFF800000> : vector<16xf32>
    %302 = vector.multi_reduction <maximumf>, %301, %cst_164 [1] : vector<16x16xf32> to vector<16xf32>
    %303 = vector.shape_cast %302 : vector<16xf32> to vector<16x1xf32>
    %304 = vector.broadcast %303 : vector<16x1xf32> to vector<16x16xf32>
    %305 = arith.subf %301, %304 : vector<16x16xf32>
    %306 = math.exp %305 : vector<16x16xf32>
    %cst_165 = arith.constant dense<0.000000e+00> : vector<16xf32>
    %307 = vector.multi_reduction <add>, %306, %cst_165 [1] : vector<16x16xf32> to vector<16xf32>
    %308 = vector.shape_cast %307 : vector<16xf32> to vector<16x1xf32>
    %309 = tpu.reciprocal %308 {approx = true} : vector<16x1xf32> -> vector<16x1xf32>
    %310 = vector.broadcast %309 : vector<16x1xf32> to vector<16x16xf32>
    %311 = arith.mulf %306, %310 : vector<16x16xf32>
    %cst_166 = arith.constant dense<0.000000e+00> : vector<16x8xf32>
    %312 = tpu.matmul %311, %296, %cst_166 {dimension_numbers = #tpu.dot_dimension_numbers<[1], [0], [0], [1], [0, 0, 1, 1], [], []>} : vector<16x16xf32>, vector<16x8xf32>, vector<16x8xf32> -> vector<16x8xf32>
    %313 = vector.extract_strided_slice %292 {offsets = [0, 0], sizes = [8, 32], strides = [1, 1]} : vector<32x32xf32> to vector<8x32xf32>
    %cst_167 = arith.constant dense<0.000000e+00> : vector<16x32xf32>
    %314 = tpu.matmul %312, %313, %cst_167 {dimension_numbers = #tpu.dot_dimension_numbers<[1], [0], [0], [1], [0, 0, 1, 1], [], []>} : vector<16x8xf32>, vector<8x32xf32>, vector<16x32xf32> -> vector<16x32xf32>
    %315 = arith.addf %293, %314 : vector<16x32xf32>
    %316 = vector.extract_strided_slice %288 {offsets = [0, 8], sizes = [16, 8], strides = [1, 1]} : vector<16x32xf32> to vector<16x8xf32>
    %317 = vector.extract_strided_slice %289 {offsets = [0, 8], sizes = [16, 8], strides = [1, 1]} : vector<16x32xf32> to vector<16x8xf32>
    %318 = vector.extract_strided_slice %290 {offsets = [0, 8], sizes = [16, 8], strides = [1, 1]} : vector<16x32xf32> to vector<16x8xf32>
    %cst_168 = arith.constant dense<0.000000e+00> : vector<16x16xf32>
    %319 = tpu.matmul %316, %317, %cst_168 {dimension_numbers = #tpu.dot_dimension_numbers<[1], [1], [0], [0], [0, 0, 1, 0], [], []>} : vector<16x8xf32>, vector<16x8xf32>, vector<16x16xf32> -> vector<16x16xf32>
    %cst_169 = arith.constant 0.353553385 : f32
    %320 = vector.broadcast %cst_169 : f32 to vector<16x16xf32>
    %321 = arith.mulf %319, %320 : vector<16x16xf32>
    %cst_170 = arith.constant -1.000000e+30 : f32
    %322 = vector.broadcast %cst_170 : f32 to vector<16x16xf32>
    %323 = arith.select %103, %321, %322 : vector<16x16xi1>, vector<16x16xf32>
    %cst_171 = arith.constant dense<0xFF800000> : vector<16xf32>
    %324 = vector.multi_reduction <maximumf>, %323, %cst_171 [1] : vector<16x16xf32> to vector<16xf32>
    %325 = vector.shape_cast %324 : vector<16xf32> to vector<16x1xf32>
    %326 = vector.broadcast %325 : vector<16x1xf32> to vector<16x16xf32>
    %327 = arith.subf %323, %326 : vector<16x16xf32>
    %328 = math.exp %327 : vector<16x16xf32>
    %cst_172 = arith.constant dense<0.000000e+00> : vector<16xf32>
    %329 = vector.multi_reduction <add>, %328, %cst_172 [1] : vector<16x16xf32> to vector<16xf32>
    %330 = vector.shape_cast %329 : vector<16xf32> to vector<16x1xf32>
    %331 = tpu.reciprocal %330 {approx = true} : vector<16x1xf32> -> vector<16x1xf32>
    %332 = vector.broadcast %331 : vector<16x1xf32> to vector<16x16xf32>
    %333 = arith.mulf %328, %332 : vector<16x16xf32>
    %cst_173 = arith.constant dense<0.000000e+00> : vector<16x8xf32>
    %334 = tpu.matmul %333, %318, %cst_173 {dimension_numbers = #tpu.dot_dimension_numbers<[1], [0], [0], [1], [0, 0, 1, 1], [], []>} : vector<16x16xf32>, vector<16x8xf32>, vector<16x8xf32> -> vector<16x8xf32>
    %335 = vector.extract_strided_slice %292 {offsets = [8, 0], sizes = [8, 32], strides = [1, 1]} : vector<32x32xf32> to vector<8x32xf32>
    %cst_174 = arith.constant dense<0.000000e+00> : vector<16x32xf32>
    %336 = tpu.matmul %334, %335, %cst_174 {dimension_numbers = #tpu.dot_dimension_numbers<[1], [0], [0], [1], [0, 0, 1, 1], [], []>} : vector<16x8xf32>, vector<8x32xf32>, vector<16x32xf32> -> vector<16x32xf32>
    %337 = arith.addf %315, %336 : vector<16x32xf32>
    %338 = vector.extract_strided_slice %288 {offsets = [0, 16], sizes = [16, 8], strides = [1, 1]} : vector<16x32xf32> to vector<16x8xf32>
    %339 = vector.extract_strided_slice %289 {offsets = [0, 16], sizes = [16, 8], strides = [1, 1]} : vector<16x32xf32> to vector<16x8xf32>
    %340 = vector.extract_strided_slice %290 {offsets = [0, 16], sizes = [16, 8], strides = [1, 1]} : vector<16x32xf32> to vector<16x8xf32>
    %cst_175 = arith.constant dense<0.000000e+00> : vector<16x16xf32>
    %341 = tpu.matmul %338, %339, %cst_175 {dimension_numbers = #tpu.dot_dimension_numbers<[1], [1], [0], [0], [0, 0, 1, 0], [], []>} : vector<16x8xf32>, vector<16x8xf32>, vector<16x16xf32> -> vector<16x16xf32>
    %cst_176 = arith.constant 0.353553385 : f32
    %342 = vector.broadcast %cst_176 : f32 to vector<16x16xf32>
    %343 = arith.mulf %341, %342 : vector<16x16xf32>
    %cst_177 = arith.constant -1.000000e+30 : f32
    %344 = vector.broadcast %cst_177 : f32 to vector<16x16xf32>
    %345 = arith.select %103, %343, %344 : vector<16x16xi1>, vector<16x16xf32>
    %cst_178 = arith.constant dense<0xFF800000> : vector<16xf32>
    %346 = vector.multi_reduction <maximumf>, %345, %cst_178 [1] : vector<16x16xf32> to vector<16xf32>
    %347 = vector.shape_cast %346 : vector<16xf32> to vector<16x1xf32>
    %348 = vector.broadcast %347 : vector<16x1xf32> to vector<16x16xf32>
    %349 = arith.subf %345, %348 : vector<16x16xf32>
    %350 = math.exp %349 : vector<16x16xf32>
    %cst_179 = arith.constant dense<0.000000e+00> : vector<16xf32>
    %351 = vector.multi_reduction <add>, %350, %cst_179 [1] : vector<16x16xf32> to vector<16xf32>
    %352 = vector.shape_cast %351 : vector<16xf32> to vector<16x1xf32>
    %353 = tpu.reciprocal %352 {approx = true} : vector<16x1xf32> -> vector<16x1xf32>
    %354 = vector.broadcast %353 : vector<16x1xf32> to vector<16x16xf32>
    %355 = arith.mulf %350, %354 : vector<16x16xf32>
    %cst_180 = arith.constant dense<0.000000e+00> : vector<16x8xf32>
    %356 = tpu.matmul %355, %340, %cst_180 {dimension_numbers = #tpu.dot_dimension_numbers<[1], [0], [0], [1], [0, 0, 1, 1], [], []>} : vector<16x16xf32>, vector<16x8xf32>, vector<16x8xf32> -> vector<16x8xf32>
    %357 = vector.extract_strided_slice %292 {offsets = [16, 0], sizes = [8, 32], strides = [1, 1]} : vector<32x32xf32> to vector<8x32xf32>
    %cst_181 = arith.constant dense<0.000000e+00> : vector<16x32xf32>
    %358 = tpu.matmul %356, %357, %cst_181 {dimension_numbers = #tpu.dot_dimension_numbers<[1], [0], [0], [1], [0, 0, 1, 1], [], []>} : vector<16x8xf32>, vector<8x32xf32>, vector<16x32xf32> -> vector<16x32xf32>
    %359 = arith.addf %337, %358 : vector<16x32xf32>
    %360 = vector.extract_strided_slice %288 {offsets = [0, 24], sizes = [16, 8], strides = [1, 1]} : vector<16x32xf32> to vector<16x8xf32>
    %361 = vector.extract_strided_slice %289 {offsets = [0, 24], sizes = [16, 8], strides = [1, 1]} : vector<16x32xf32> to vector<16x8xf32>
    %362 = vector.extract_strided_slice %290 {offsets = [0, 24], sizes = [16, 8], strides = [1, 1]} : vector<16x32xf32> to vector<16x8xf32>
    %cst_182 = arith.constant dense<0.000000e+00> : vector<16x16xf32>
    %363 = tpu.matmul %360, %361, %cst_182 {dimension_numbers = #tpu.dot_dimension_numbers<[1], [1], [0], [0], [0, 0, 1, 0], [], []>} : vector<16x8xf32>, vector<16x8xf32>, vector<16x16xf32> -> vector<16x16xf32>
    %cst_183 = arith.constant 0.353553385 : f32
    %364 = vector.broadcast %cst_183 : f32 to vector<16x16xf32>
    %365 = arith.mulf %363, %364 : vector<16x16xf32>
    %cst_184 = arith.constant -1.000000e+30 : f32
    %366 = vector.broadcast %cst_184 : f32 to vector<16x16xf32>
    %367 = arith.select %103, %365, %366 : vector<16x16xi1>, vector<16x16xf32>
    %cst_185 = arith.constant dense<0xFF800000> : vector<16xf32>
    %368 = vector.multi_reduction <maximumf>, %367, %cst_185 [1] : vector<16x16xf32> to vector<16xf32>
    %369 = vector.shape_cast %368 : vector<16xf32> to vector<16x1xf32>
    %370 = vector.broadcast %369 : vector<16x1xf32> to vector<16x16xf32>
    %371 = arith.subf %367, %370 : vector<16x16xf32>
    %372 = math.exp %371 : vector<16x16xf32>
    %cst_186 = arith.constant dense<0.000000e+00> : vector<16xf32>
    %373 = vector.multi_reduction <add>, %372, %cst_186 [1] : vector<16x16xf32> to vector<16xf32>
    %374 = vector.shape_cast %373 : vector<16xf32> to vector<16x1xf32>
    %375 = tpu.reciprocal %374 {approx = true} : vector<16x1xf32> -> vector<16x1xf32>
    %376 = vector.broadcast %375 : vector<16x1xf32> to vector<16x16xf32>
    %377 = arith.mulf %372, %376 : vector<16x16xf32>
    %cst_187 = arith.constant dense<0.000000e+00> : vector<16x8xf32>
    %378 = tpu.matmul %377, %362, %cst_187 {dimension_numbers = #tpu.dot_dimension_numbers<[1], [0], [0], [1], [0, 0, 1, 1], [], []>} : vector<16x16xf32>, vector<16x8xf32>, vector<16x8xf32> -> vector<16x8xf32>
    %379 = vector.extract_strided_slice %292 {offsets = [24, 0], sizes = [8, 32], strides = [1, 1]} : vector<32x32xf32> to vector<8x32xf32>
    %cst_188 = arith.constant dense<0.000000e+00> : vector<16x32xf32>
    %380 = tpu.matmul %378, %379, %cst_188 {dimension_numbers = #tpu.dot_dimension_numbers<[1], [0], [0], [1], [0, 0, 1, 1], [], []>} : vector<16x8xf32>, vector<8x32xf32>, vector<16x32xf32> -> vector<16x32xf32>
    %381 = arith.addf %359, %380 : vector<16x32xf32>
    %382 = arith.addf %280, %381 : vector<16x32xf32>
    %c1_189 = arith.constant 1 : index
    %c0_190 = arith.constant 0 : index
    %c0_191 = arith.constant 0 : index
    %383 = vector.load %arg9[%c1_189, %c0_190, %c0_191] : memref<2x1x32xf32, #tpu.memory_space<vmem>>, vector<1x1x32xf32>
    %384 = vector.shape_cast %383 : vector<1x1x32xf32> to vector<1x32xf32>
    %385 = vector.broadcast %384 : vector<1x32xf32> to vector<16x32xf32>
    %386 = arith.addf %382, %385 : vector<16x32xf32>
    %c1_192 = arith.constant 1 : index
    %c0_193 = arith.constant 0 : index
    %c0_194 = arith.constant 0 : index
    %387 = vector.load %arg10[%c1_192, %c0_193, %c0_194] : memref<2x1x32xf32, #tpu.memory_space<vmem>>, vector<1x1x32xf32>
    %388 = vector.shape_cast %387 : vector<1x1x32xf32> to vector<1x32xf32>
    %c1_195 = arith.constant 1 : index
    %c0_196 = arith.constant 0 : index
    %c0_197 = arith.constant 0 : index
    %389 = vector.load %arg11[%c1_195, %c0_196, %c0_197] : memref<2x1x32xf32, #tpu.memory_space<vmem>>, vector<1x1x32xf32>
    %390 = vector.shape_cast %389 : vector<1x1x32xf32> to vector<1x32xf32>
    %cst_198 = arith.constant dense<0.000000e+00> : vector<16xf32>
    %391 = vector.multi_reduction <add>, %386, %cst_198 [1] : vector<16x32xf32> to vector<16xf32>
    %392 = vector.shape_cast %391 : vector<16xf32> to vector<16x1xf32>
    %cst_199 = arith.constant 3.200000e+01 : f32
    %393 = vector.broadcast %cst_199 : f32 to vector<16x1xf32>
    %394 = arith.divf %392, %393 : vector<16x1xf32>
    %395 = vector.broadcast %394 : vector<16x1xf32> to vector<16x32xf32>
    %396 = arith.subf %386, %395 : vector<16x32xf32>
    %397 = arith.mulf %396, %396 : vector<16x32xf32>
    %cst_200 = arith.constant dense<0.000000e+00> : vector<16xf32>
    %398 = vector.multi_reduction <add>, %397, %cst_200 [1] : vector<16x32xf32> to vector<16xf32>
    %399 = vector.shape_cast %398 : vector<16xf32> to vector<16x1xf32>
    %cst_201 = arith.constant 3.200000e+01 : f32
    %400 = vector.broadcast %cst_201 : f32 to vector<16x1xf32>
    %401 = arith.divf %399, %400 : vector<16x1xf32>
    %402 = vector.broadcast %394 : vector<16x1xf32> to vector<16x32xf32>
    %403 = arith.subf %386, %402 : vector<16x32xf32>
    %cst_202 = arith.constant 9.99999974E-6 : f32
    %404 = vector.broadcast %cst_202 : f32 to vector<16x1xf32>
    %405 = arith.addf %401, %404 : vector<16x1xf32>
    %406 = math.rsqrt %405 : vector<16x1xf32>
    %407 = vector.broadcast %406 : vector<16x1xf32> to vector<16x32xf32>
    %408 = arith.mulf %403, %407 : vector<16x32xf32>
    %409 = vector.broadcast %388 : vector<1x32xf32> to vector<16x32xf32>
    %410 = arith.mulf %408, %409 : vector<16x32xf32>
    %411 = vector.broadcast %390 : vector<1x32xf32> to vector<16x32xf32>
    %412 = arith.addf %410, %411 : vector<16x32xf32>
    %413 = arith.truncf %412 : vector<16x32xf32> to vector<16x32xbf16>
    %c1_203 = arith.constant 1 : index
    %c0_204 = arith.constant 0 : index
    %c0_205 = arith.constant 0 : index
    %414 = vector.load %arg12[%c1_203, %c0_204, %c0_205] : memref<2x32x2048xbf16, #tpu.memory_space<vmem>>, vector<1x32x2048xbf16>
    %415 = vector.shape_cast %414 : vector<1x32x2048xbf16> to vector<32x2048xbf16>
    %cst_206 = arith.constant dense<0.000000e+00> : vector<16x2048xf32>
    %416 = tpu.matmul %413, %415, %cst_206 {dimension_numbers = #tpu.dot_dimension_numbers<[1], [0], [0], [1], [0, 0, 1, 1], [], []>} : vector<16x32xbf16>, vector<32x2048xbf16>, vector<16x2048xf32> -> vector<16x2048xf32>
    %c1_207 = arith.constant 1 : index
    %c0_208 = arith.constant 0 : index
    %c0_209 = arith.constant 0 : index
    %417 = vector.load %arg13[%c1_207, %c0_208, %c0_209] : memref<2x1x2048xf32, #tpu.memory_space<vmem>>, vector<1x1x2048xf32>
    %418 = vector.shape_cast %417 : vector<1x1x2048xf32> to vector<1x2048xf32>
    %419 = vector.broadcast %418 : vector<1x2048xf32> to vector<16x2048xf32>
    %420 = arith.addf %416, %419 : vector<16x2048xf32>
    %cst_210 = arith.constant 0.000000e+00 : f32
    %421 = vector.broadcast %cst_210 : f32 to vector<16x2048xf32>
    %422 = arith.maximumf %420, %421 : vector<16x2048xf32>
    %423 = arith.truncf %422 : vector<16x2048xf32> to vector<16x2048xbf16>
    %c1_211 = arith.constant 1 : index
    %c0_212 = arith.constant 0 : index
    %c0_213 = arith.constant 0 : index
    %424 = vector.load %arg14[%c1_211, %c0_212, %c0_213] : memref<2x2048x32xbf16, #tpu.memory_space<vmem>>, vector<1x2048x32xbf16>
    %425 = vector.shape_cast %424 : vector<1x2048x32xbf16> to vector<2048x32xbf16>
    %cst_214 = arith.constant dense<0.000000e+00> : vector<16x32xf32>
    %426 = tpu.matmul %423, %425, %cst_214 {dimension_numbers = #tpu.dot_dimension_numbers<[1], [0], [0], [1], [0, 0, 1, 1], [], []>} : vector<16x2048xbf16>, vector<2048x32xbf16>, vector<16x32xf32> -> vector<16x32xf32>
    %c1_215 = arith.constant 1 : index
    %c0_216 = arith.constant 0 : index
    %c0_217 = arith.constant 0 : index
    %427 = vector.load %arg15[%c1_215, %c0_216, %c0_217] : memref<2x1x32xf32, #tpu.memory_space<vmem>>, vector<1x1x32xf32>
    %428 = vector.shape_cast %427 : vector<1x1x32xf32> to vector<1x32xf32>
    %429 = vector.broadcast %428 : vector<1x32xf32> to vector<16x32xf32>
    %430 = arith.addf %426, %429 : vector<16x32xf32>
    %431 = arith.addf %412, %430 : vector<16x32xf32>
    %c1_218 = arith.constant 1 : index
    %c0_219 = arith.constant 0 : index
    %c0_220 = arith.constant 0 : index
    %432 = vector.load %arg16[%c1_218, %c0_219, %c0_220] : memref<2x1x32xf32, #tpu.memory_space<vmem>>, vector<1x1x32xf32>
    %433 = vector.shape_cast %432 : vector<1x1x32xf32> to vector<1x32xf32>
    %c1_221 = arith.constant 1 : index
    %c0_222 = arith.constant 0 : index
    %c0_223 = arith.constant 0 : index
    %434 = vector.load %arg17[%c1_221, %c0_222, %c0_223] : memref<2x1x32xf32, #tpu.memory_space<vmem>>, vector<1x1x32xf32>
    %435 = vector.shape_cast %434 : vector<1x1x32xf32> to vector<1x32xf32>
    %cst_224 = arith.constant dense<0.000000e+00> : vector<16xf32>
    %436 = vector.multi_reduction <add>, %431, %cst_224 [1] : vector<16x32xf32> to vector<16xf32>
    %437 = vector.shape_cast %436 : vector<16xf32> to vector<16x1xf32>
    %cst_225 = arith.constant 3.200000e+01 : f32
    %438 = vector.broadcast %cst_225 : f32 to vector<16x1xf32>
    %439 = arith.divf %437, %438 : vector<16x1xf32>
    %440 = vector.broadcast %439 : vector<16x1xf32> to vector<16x32xf32>
    %441 = arith.subf %431, %440 : vector<16x32xf32>
    %442 = arith.mulf %441, %441 : vector<16x32xf32>
    %cst_226 = arith.constant dense<0.000000e+00> : vector<16xf32>
    %443 = vector.multi_reduction <add>, %442, %cst_226 [1] : vector<16x32xf32> to vector<16xf32>
    %444 = vector.shape_cast %443 : vector<16xf32> to vector<16x1xf32>
    %cst_227 = arith.constant 3.200000e+01 : f32
    %445 = vector.broadcast %cst_227 : f32 to vector<16x1xf32>
    %446 = arith.divf %444, %445 : vector<16x1xf32>
    %447 = vector.broadcast %439 : vector<16x1xf32> to vector<16x32xf32>
    %448 = arith.subf %431, %447 : vector<16x32xf32>
    %cst_228 = arith.constant 9.99999974E-6 : f32
    %449 = vector.broadcast %cst_228 : f32 to vector<16x1xf32>
    %450 = arith.addf %446, %449 : vector<16x1xf32>
    %451 = math.rsqrt %450 : vector<16x1xf32>
    %452 = vector.broadcast %451 : vector<16x1xf32> to vector<16x32xf32>
    %453 = arith.mulf %448, %452 : vector<16x32xf32>
    %454 = vector.broadcast %433 : vector<1x32xf32> to vector<16x32xf32>
    %455 = arith.mulf %453, %454 : vector<16x32xf32>
    %456 = vector.broadcast %435 : vector<1x32xf32> to vector<16x32xf32>
    %457 = arith.addf %455, %456 : vector<16x32xf32>
    %458 = vector.extract_strided_slice %457 {offsets = [0, 0], sizes = [2, 32], strides = [1, 1]} : vector<16x32xf32> to vector<2x32xf32>
    %459 = vector.extract_strided_slice %457 {offsets = [14, 0], sizes = [2, 32], strides = [1, 1]} : vector<16x32xf32> to vector<2x32xf32>
    %c0_229 = arith.constant 0 : index
    %c0_230 = arith.constant 0 : index
    %460 = vector.load %arg18[%c0_229, %c0_230] : memref<64x32xf32, #tpu.memory_space<vmem>>, vector<64x32xf32>
    %461 = vector.extract_strided_slice %460 {offsets = [0, 0], sizes = [32, 32], strides = [1, 1]} : vector<64x32xf32> to vector<32x32xf32>
    %cst_231 = arith.constant dense<0.000000e+00> : vector<2x32xf32>
    %462 = tpu.matmul %458, %461, %cst_231 {dimension_numbers = #tpu.dot_dimension_numbers<[1], [0], [0], [1], [0, 0, 1, 1], [], []>} : vector<2x32xf32>, vector<32x32xf32>, vector<2x32xf32> -> vector<2x32xf32>
    %463 = vector.extract_strided_slice %460 {offsets = [32, 0], sizes = [32, 32], strides = [1, 1]} : vector<64x32xf32> to vector<32x32xf32>
    %cst_232 = arith.constant dense<0.000000e+00> : vector<2x32xf32>
    %464 = tpu.matmul %459, %463, %cst_232 {dimension_numbers = #tpu.dot_dimension_numbers<[1], [0], [0], [1], [0, 0, 1, 1], [], []>} : vector<2x32xf32>, vector<32x32xf32>, vector<2x32xf32> -> vector<2x32xf32>
    %465 = arith.addf %462, %464 : vector<2x32xf32>
    %c0_233 = arith.constant 0 : index
    %c0_234 = arith.constant 0 : index
    %466 = vector.load %arg19[%c0_233, %c0_234] : memref<1x32xf32, #tpu.memory_space<vmem>>, vector<1x32xf32>
    %467 = vector.broadcast %466 : vector<1x32xf32> to vector<2x32xf32>
    %468 = arith.addf %465, %467 : vector<2x32xf32>
    %c0_235 = arith.constant 0 : index
    %c0_236 = arith.constant 0 : index
    %469 = vector.load %arg20[%c0_235, %c0_236] : memref<1x32xf32, #tpu.memory_space<vmem>>, vector<1x32xf32>
    %470 = vector.broadcast %469 : vector<1x32xf32> to vector<2x32xf32>
    %471 = arith.mulf %468, %470 : vector<2x32xf32>
    %c0_237 = arith.constant 0 : index
    %c0_238 = arith.constant 0 : index
    %472 = vector.load %arg21[%c0_237, %c0_238] : memref<1x32xf32, #tpu.memory_space<vmem>>, vector<1x32xf32>
    %473 = vector.broadcast %472 : vector<1x32xf32> to vector<2x32xf32>
    %474 = arith.addf %471, %473 : vector<2x32xf32>
    %c0_239 = arith.constant 0 : index
    %c0_240 = arith.constant 0 : index
    %475 = vector.load %arg22[%c0_239, %c0_240] : memref<32x8xf32, #tpu.memory_space<vmem>>, vector<32x8xf32>
    %cst_241 = arith.constant dense<0.000000e+00> : vector<2x8xf32>
    %476 = tpu.matmul %474, %475, %cst_241 {dimension_numbers = #tpu.dot_dimension_numbers<[1], [0], [0], [1], [0, 0, 1, 1], [], []>} : vector<2x32xf32>, vector<32x8xf32>, vector<2x8xf32> -> vector<2x8xf32>
    %c0_242 = arith.constant 0 : index
    %c0_243 = arith.constant 0 : index
    %477 = vector.load %arg23[%c0_242, %c0_243] : memref<1x8xf32, #tpu.memory_space<vmem>>, vector<1x8xf32>
    %478 = vector.broadcast %477 : vector<1x8xf32> to vector<2x8xf32>
    %479 = arith.addf %476, %478 : vector<2x8xf32>
    %c0_244 = arith.constant 0 : index
    %c0_245 = arith.constant 0 : index
    %480 = vector.load %arg24[%c0_244, %c0_245] : memref<2x8xf32, #tpu.memory_space<vmem>>, vector<2x8xf32>
    tpu.vector_store %arg24[%c0_244, %c0_245], %479 {strides = array<i32>} : memref<2x8xf32, #tpu.memory_space<vmem>>, vector<2x8xf32>,
    return
  }
}

</mosaic_0001>

<llo_original>
// kernel: ctran_forward.1
$region0: #{ctran_forward.1}
  #allocation0 [shape = 'u32[]', space=smem, size = 0x4, offset = 0x4, fixed_abs, tag = 'smem constant byte address 0x4 - core index']
  #allocation1 [shape = 'u32[144,128]{1,0:T(1,128)}', space=vmem, size = 0x12000, scoped, tag = 'internal scratch']
  #allocation2 [shape = 'f32[16,32]{1,0:T(8,128)}', space=vmem, size = 0x2000, scoped, tag = 'scratch operand']
  %s0 = inlined_call_operand.vmem [shape: f32[2,1024], index: 0, kind: input, shape index: {}]
  %s1 = inlined_call_operand.vmem [shape: bf16[8,1024,32], index: 1, kind: input, shape index: {}]
  %s2 = inlined_call_operand.vmem [shape: f32[8,1,32], index: 2, kind: input, shape index: {}]
  %s3 = inlined_call_operand.vmem [shape: f32[256,32], index: 3, kind: input, shape index: {}]
  %s4 = inlined_call_operand.vmem [shape: f32[8,256], index: 4, kind: input, shape index: {}]
  %s5 = inlined_call_operand.vmem [shape: f32[8,1], index: 5, kind: input, shape index: {}]
  %s6 = inlined_call_operand.vmem [shape: f32[2,32,96], index: 6, kind: input, shape index: {}]
  %s7 = inlined_call_operand.vmem [shape: f32[2,1,96], index: 7, kind: input, shape index: {}]
  %s8 = inlined_call_operand.vmem [shape: f32[2,32,32], index: 8, kind: input, shape index: {}]
  %s9 = inlined_call_operand.vmem [shape: f32[2,1,32], index: 9, kind: input, shape index: {}]
  %s10 = inlined_call_operand.vmem [shape: f32[2,1,32], index: 10, kind: input, shape index: {}]
  %s11 = inlined_call_operand.vmem [shape: f32[2,1,32], index: 11, kind: input, shape index: {}]
  %s12 = inlined_call_operand.vmem [shape: bf16[2,32,2048], index: 12, kind: input, shape index: {}]
  %s13 = inlined_call_operand.vmem [shape: f32[2,1,2048], index: 13, kind: input, shape index: {}]
  %s14 = inlined_call_operand.vmem [shape: bf16[2,2048,32], index: 14, kind: input, shape index: {}]
  %s15 = inlined_call_operand.vmem [shape: f32[2,1,32], index: 15, kind: input, shape index: {}]
  %s16 = inlined_call_operand.vmem [shape: f32[2,1,32], index: 16, kind: input, shape index: {}]
  %s17 = inlined_call_operand.vmem [shape: f32[2,1,32], index: 17, kind: input, shape index: {}]
  %s18 = inlined_call_operand.vmem [shape: f32[64,32], index: 18, kind: input, shape index: {}]
  %s19 = inlined_call_operand.vmem [shape: f32[1,32], index: 19, kind: input, shape index: {}]
  %s20 = inlined_call_operand.vmem [shape: f32[1,32], index: 20, kind: input, shape index: {}]
  %s21 = inlined_call_operand.vmem [shape: f32[1,32], index: 21, kind: input, shape index: {}]
  %s22 = inlined_call_operand.vmem [shape: f32[32,8], index: 22, kind: input, shape index: {}]
  %s23 = inlined_call_operand.vmem [shape: f32[1,8], index: 23, kind: input, shape index: {}]
  %s24 = inlined_call_operand.hbm [shape: f32[2,8], index: 24, kind: output, shape index: {}]
  %s25 = sld [smem:[#allocation0]]
  $region106: #{ctran_forward.1} parent=0
    _
  %s27 = ssub.s32 1, %s25
  %s28 = scalar_select 0, %s27, %s25
  $region1: #{ctran_forward.1} parent=0
    #allocation3 [shape = 'u8[1024]{0}', space=vmem, size = 0x400, scoped, tag = 'output window, operand 0, single buffered']
    #allocation4 [shape = 's32[1]{0}', space=sflag, size = 0x4, scoped, tag = 'scoped memory for ctran_forward.1']
    %29 = vsyncpa [#allocation4], 0
    // Predicated region
    $region2: #{ctran_forward.1} parent=1 // pred_check
      _
    $region3: #{ctran_forward.1} parent=1 // pred_check_branch
      %31 = sbr.rel (0) target = $region5
    $region4: #{ctran_forward.1} parent=1 // pred_region
      _
    $region5: #{ctran_forward.1} parent=1 // pred_fallthru
      _
    // Predicated region
    $region6: #{ctran_forward.1} parent=1 // pred_check
      _
    $region7: #{ctran_forward.1} parent=1 // pred_check_branch
      %33 = sbr.rel (0) target = $region9
    $region8: #{ctran_forward.1} parent=1 // pred_region
      _
    $region9: #{ctran_forward.1} parent=1 // pred_fallthru
      _
    // Predicated region
    $region10: #{ctran_forward.1} parent=1 // pred_check
      _
    $region11: #{ctran_forward.1} parent=1 // pred_check_branch
      %35 = sbr.rel (0) target = $region13
    $region12: #{ctran_forward.1} parent=1 // pred_region
      _
    $region13: #{ctran_forward.1} parent=1 // pred_fallthru
      _
    // Predicated region
    $region14: #{ctran_forward.1} parent=1 // pred_check
      _
    $region15: #{ctran_forward.1} parent=1 // pred_check_branch
      %37 = sbr.rel (0) target = $region17
    $region16: #{ctran_forward.1} parent=1 // pred_region
      _
    $region17: #{ctran_forward.1} parent=1 // pred_fallthru
      _
    // Predicated region
    $region18: #{ctran_forward.1} parent=1 // pred_check
      _
    $region19: #{ctran_forward.1} parent=1 // pred_check_branch
      %39 = sbr.rel (0) target = $region21
    $region20: #{ctran_forward.1} parent=1 // pred_region
      _
    $region21: #{ctran_forward.1} parent=1 // pred_fallthru
      _
    // Predicated region
    $region22: #{ctran_forward.1} parent=1 // pred_check
      _
    $region23: #{ctran_forward.1} parent=1 // pred_check_branch
      %41 = sbr.rel (0) target = $region25
    $region24: #{ctran_forward.1} parent=1 // pred_region
      _
    $region25: #{ctran_forward.1} parent=1 // pred_fallthru
      _
    // Predicated region
    $region26: #{ctran_forward.1} parent=1 // pred_check
      _
    $region27: #{ctran_forward.1} parent=1 // pred_check_branch
      %43 = sbr.rel (0) target = $region29
    $region28: #{ctran_forward.1} parent=1 // pred_region
      _
    $region29: #{ctran_forward.1} parent=1 // pred_fallthru
      _
    // Predicated region
    $region30: #{ctran_forward.1} parent=1 // pred_check
      _
    $region31: #{ctran_forward.1} parent=1 // pred_check_branch
      %45 = sbr.rel (0) target = $region33
    $region32: #{ctran_forward.1} parent=1 // pred_region
      _
    $region33: #{ctran_forward.1} parent=1 // pred_fallthru
      _
    // Predicated region
    $region34: #{ctran_forward.1} parent=1 // pred_check
      _
    $region35: #{ctran_forward.1} parent=1 // pred_check_branch
      %47 = sbr.rel (0) target = $region37
    $region36: #{ctran_forward.1} parent=1 // pred_region
      _
    $region37: #{ctran_forward.1} parent=1 // pred_fallthru
      _
    // Predicated region
    $region38: #{ctran_forward.1} parent=1 // pred_check
      _
    $region39: #{ctran_forward.1} parent=1 // pred_check_branch
      %49 = sbr.rel (0) target = $region41
    $region40: #{ctran_forward.1} parent=1 // pred_region
      _
    $region41: #{ctran_forward.1} parent=1 // pred_fallthru
      _
    // Predicated region
    $region42: #{ctran_forward.1} parent=1 // pred_check
      _
    $region43: #{ctran_forward.1} parent=1 // pred_check_branch
      %51 = sbr.rel (0) target = $region45
    $region44: #{ctran_forward.1} parent=1 // pred_region
      _
    $region45: #{ctran_forward.1} parent=1 // pred_fallthru
      _
    // Predicated region
    $region46: #{ctran_forward.1} parent=1 // pred_check
      _
    $region47: #{ctran_forward.1} parent=1 // pred_check_branch
      %53 = sbr.rel (0) target = $region49
    $region48: #{ctran_forward.1} parent=1 // pred_region
      _
    $region49: #{ctran_forward.1} parent=1 // pred_fallthru
      _
    // Predicated region
    $region50: #{ctran_forward.1} parent=1 // pred_check
      _
    $region51: #{ctran_forward.1} parent=1 // pred_check_branch
      %55 = sbr.rel (0) target = $region53
    $region52: #{ctran_forward.1} parent=1 // pred_region
      _
    $region53: #{ctran_forward.1} parent=1 // pred_fallthru
      _
    // Predicated region
    $region54: #{ctran_forward.1} parent=1 // pred_check
      _
    $region55: #{ctran_forward.1} parent=1 // pred_check_branch
      %57 = sbr.rel (0) target = $region57
    $region56: #{ctran_forward.1} parent=1 // pred_region
      _
    $region57: #{ctran_forward.1} parent=1 // pred_fallthru
      _
    // Predicated region
    $region58: #{ctran_forward.1} parent=1 // pred_check
      _
    $region59: #{ctran_forward.1} parent=1 // pred_check_branch
      %59 = sbr.rel (0) target = $region61
    $region60: #{ctran_forward.1} parent=1 // pred_region
      _
    $region61: #{ctran_forward.1} parent=1 // pred_fallthru
      _
    // Predicated region
    $region62: #{ctran_forward.1} parent=1 // pred_check
      _
    $region63: #{ctran_forward.1} parent=1 // pred_check_branch
      %61 = sbr.rel (0) target = $region65
    $region64: #{ctran_forward.1} parent=1 // pred_region
      _
    $region65: #{ctran_forward.1} parent=1 // pred_fallthru
      _
    // Predicated region
    $region66: #{ctran_forward.1} parent=1 // pred_check
      _
    $region67: #{ctran_forward.1} parent=1 // pred_check_branch
      %63 = sbr.rel (0) target = $region69
    $region68: #{ctran_forward.1} parent=1 // pred_region
      _
    $region69: #{ctran_forward.1} parent=1 // pred_fallthru
      _
    // Predicated region
    $region70: #{ctran_forward.1} parent=1 // pred_check
      _
    $region71: #{ctran_forward.1} parent=1 // pred_check_branch
      %65 = sbr.rel (0) target = $region73
    $region72: #{ctran_forward.1} parent=1 // pred_region
      _
    $region73: #{ctran_forward.1} parent=1 // pred_fallthru
      _
    // Predicated region
    $region74: #{ctran_forward.1} parent=1 // pred_check
      _
    $region75: #{ctran_forward.1} parent=1 // pred_check_branch
      %67 = sbr.rel (0) target = $region77
    $region76: #{ctran_forward.1} parent=1 // pred_region
      _
    $region77: #{ctran_forward.1} parent=1 // pred_fallthru
      _
    // Predicated region
    $region78: #{ctran_forward.1} parent=1 // pred_check
      _
    $region79: #{ctran_forward.1} parent=1 // pred_check_branch
      %69 = sbr.rel (0) target = $region81
    $region80: #{ctran_forward.1} parent=1 // pred_region
      _
    $region81: #{ctran_forward.1} parent=1 // pred_fallthru
      _
    // Predicated region
    $region82: #{ctran_forward.1} parent=1 // pred_check
      _
    $region83: #{ctran_forward.1} parent=1 // pred_check_branch
      %71 = sbr.rel (0) target = $region85
    $region84: #{ctran_forward.1} parent=1 // pred_region
      _
    $region85: #{ctran_forward.1} parent=1 // pred_fallthru
      _
    // Predicated region
    $region86: #{ctran_forward.1} parent=1 // pred_check
      _
    $region87: #{ctran_forward.1} parent=1 // pred_check_branch
      %73 = sbr.rel (0) target = $region89
    $region88: #{ctran_forward.1} parent=1 // pred_region
      _
    $region89: #{ctran_forward.1} parent=1 // pred_fallthru
      _
    // Predicated region
    $region90: #{ctran_forward.1} parent=1 // pred_check
      _
    $region91: #{ctran_forward.1} parent=1 // pred_check_branch
      %75 = sbr.rel (0) target = $region93
    $region92: #{ctran_forward.1} parent=1 // pred_region
      _
    $region93: #{ctran_forward.1} parent=1 // pred_fallthru
      _
    // Predicated region
    $region94: #{ctran_forward.1} parent=1 // pred_check
      _
    $region95: #{ctran_forward.1} parent=1 // pred_check_branch
      %77 = sbr.rel (0) target = $region97
    $region96: #{ctran_forward.1} parent=1 // pred_region
      _
    $region97: #{ctran_forward.1} parent=1 // pred_fallthru
      _
    %v79 = vld [vmem:[%s4] sm:$0xff]
    %v80 = vld [vmem:[%s4 + $0x8] sm:$0xff]
    %v81 = vld [vmem:[%s3] sm:$0xff]
    %v82 = vld [vmem:[%s3 + $0x8] sm:$0xff]
    %v83 = vld [vmem:[%s3 + $0x10] sm:$0xff]
    %v84 = vld [vmem:[%s3 + $0x18] sm:$0xff]
    %v85 = vld [vmem:[%s3 + $0x20] sm:$0xff]
    %v86 = vld [vmem:[%s3 + $0x28] sm:$0xff]
    %v87 = vld [vmem:[%s3 + $0x30] sm:$0xff]
    %v88 = vld [vmem:[%s3 + $0x38] sm:$0xff]
    %v89 = vld [vmem:[%s3 + $0x40] sm:$0xff]
    %v90 = vld [vmem:[%s3 + $0x48] sm:$0xff]
    %v91 = vld [vmem:[%s3 + $0x50] sm:$0xff]
    %v92 = vld [vmem:[%s3 + $0x58] sm:$0xff]
    %v93 = vld [vmem:[%s3 + $0x60] sm:$0xff]
    %v94 = vld [vmem:[%s3 + $0x68] sm:$0xff]
    %v95 = vld [vmem:[%s3 + $0x70] sm:$0xff]
    %v96 = vld [vmem:[%s3 + $0x78] sm:$0xff]
    %v97 = vld [vmem:[%s3 + $0x80] sm:$0xff]
    %v98 = vld [vmem:[%s3 + $0x88] sm:$0xff]
    %v99 = vld [vmem:[%s3 + $0x90] sm:$0xff]
    %v100 = vld [vmem:[%s3 + $0x98] sm:$0xff]
    %v101 = vld [vmem:[%s3 + $0xa0] sm:$0xff]
    %v102 = vld [vmem:[%s3 + $0xa8] sm:$0xff]
    %v103 = vld [vmem:[%s3 + $0xb0] sm:$0xff]
    %v104 = vld [vmem:[%s3 + $0xb8] sm:$0xff]
    %v105 = vld [vmem:[%s3 + $0xc0] sm:$0xff]
    %v106 = vld [vmem:[%s3 + $0xc8] sm:$0xff]
    %v107 = vld [vmem:[%s3 + $0xd0] sm:$0xff]
    %v108 = vld [vmem:[%s3 + $0xd8] sm:$0xff]
    %v109 = vld [vmem:[%s3 + $0xe0] sm:$0xff]
    %v110 = vld [vmem:[%s3 + $0xe8] sm:$0xff]
    %v111 = vld [vmem:[%s3 + $0xf0] sm:$0xff]
    %v112 = vld [vmem:[%s3 + $0xf8] sm:$0xff]
    %v113 = vld [vmem:[%s5] sm:$0xff]
    %115 = vset.pattern.permute.xlu0 0
    %116 = vperm.xlu0 %115, %v113
    %v117 = vpop.permute.xlu0 %116
    %119 = vmatprep.subr.mxu0 0.0
    %120 = vmatpush1.msra.mxu0 %v96
    %121 = vmatprep.subr.mxu0 0.0
    %122 = vmatpush1.msra.mxu0 %v95
    %123 = vmatprep.subr.mxu0 0.0
    %124 = vmatpush1.msra.mxu0 %v94
    %125 = vmatprep.subr.mxu0 0.0
    %126 = vmatpush1.msra.mxu0 %v93
    %127 = vmatprep.subr.mxu0 0.0
    %128 = vmatpush1.msra.mxu0 %v92
    %129 = vmatprep.subr.mxu0 0.0
    %130 = vmatpush1.msra.mxu0 %v91
    %131 = vmatprep.subr.mxu0 0.0
    %132 = vmatpush1.msra.mxu0 %v90
    %133 = vmatprep.subr.mxu0 0.0
    %134 = vmatpush1.msra.mxu0 %v89
    %135 = vmatprep.subr.mxu0 0.0
    %136 = vmatpush1.msra.mxu0 %v88
    %137 = vmatprep.subr.mxu0 0.0
    %138 = vmatpush1.msra.mxu0 %v87
    %139 = vmatprep.subr.mxu0 0.0
    %140 = vmatpush1.msra.mxu0 %v86
    %141 = vmatprep.subr.mxu0 0.0
    %142 = vmatpush1.msra.mxu0 %v85
    %143 = vmatprep.subr.mxu0 0.0
    %144 = vmatpush1.msra.mxu0 %v84
    %145 = vmatprep.subr.mxu0 0.0
    %146 = vmatpush1.msra.mxu0 %v83
    %147 = vmatprep.subr.mxu0 0.0
    %148 = vmatpush1.msra.mxu0 %v82
    %149 = vmatprep.subr.mxu0 0.0
    %150 = vmatpush1.msra.mxu0 %v81
    %151 = vmatprep.subr.mxu0 0.0
    %152 = vmatpush2.msra.mxu0 %v112
    %153 = vmatprep.subr.mxu0 0.0
    %154 = vmatpush2.msra.mxu0 %v111
    %155 = vmatprep.subr.mxu0 0.0
    %156 = vmatpush2.msra.mxu0 %v110
    %157 = vmatprep.subr.mxu0 0.0
    %158 = vmatpush2.msra.mxu0 %v109
    %159 = vmatprep.subr.mxu0 0.0
    %160 = vmatpush2.msra.mxu0 %v108
    %161 = vmatprep.subr.mxu0 0.0
    %162 = vmatpush2.msra.mxu0 %v107
    %163 = vmatprep.subr.mxu0 0.0
    %164 = vmatpush2.msra.mxu0 %v106
    %165 = vmatprep.subr.mxu0 0.0
    %166 = vmatpush2.msra.mxu0 %v105
    %167 = vmatprep.subr.mxu0 0.0
    %168 = vmatpush2.msra.mxu0 %v104
    %169 = vmatprep.subr.mxu0 0.0
    %170 = vmatpush2.msra.mxu0 %v103
    %171 = vmatprep.subr.mxu0 0.0
    %172 = vmatpush2.msra.mxu0 %v102
    %173 = vmatprep.subr.mxu0 0.0
    %174 = vmatpush2.msra.mxu0 %v101
    %175 = vmatprep.subr.mxu0 0.0
    %176 = vmatpush2.msra.mxu0 %v100
    %177 = vmatprep.subr.mxu0 0.0
    %178 = vmatpush2.msra.mxu0 %v99
    %179 = vmatprep.subr.mxu0 0.0
    %180 = vmatpush2.msra.mxu0 %v98
    %181 = vmatprep.subr.mxu0 0.0
    %182 = vmatpush2.msra.mxu0 %v97
    %183 = vmatprep.mubr.f32.mxu0 %v80
    %184 = vmatmul.mubr.f32.gmra.mxu0 %v79
    %v185 = vpop.f32.mrf.mxu0
    %v186 = vadd.f32 %v117, %v185
    %v187 = vpop.f32.mrf.mxu0
    %188 = vdwg.mxu0
    %v189 = vld [vmem:[%s0] sm:$0xff]
    %v190 = vld [vmem:[%s0 + $0x8] sm:$0xff]
    %v193 = vcombine.high %v189, %v189
    %v195 = vunpack.c.l.s4 1983009808
    %v196 = vunpack.c.0.s8 %v195
    %v197 = vlaneseq
    %v198 = vshrl.u32 %v197, 7
    %v199 = vsub.s32 %v196, %v198
    %v200 = vrot.slane %v189, %v199
    %v202 = vunpack.c.l.s4 1983009808
    %v203 = vunpack.c.0.s8 %v202
    %v204 = vlaneseq
    %v205 = vshrl.u32 %v204, 7
    %v206 = vsub.s32 %v203, %v205
    %v207 = vrot.slane %v193, %v206
    %v208 = vcombine.high %v200, %v200
    %v209 = vcombine.high %v207, %v207
    %v210 = vcombine.high %v190, %v190
    %v212 = vunpack.c.l.s4 1983009808
    %v213 = vunpack.c.0.s8 %v212
    %v214 = vlaneseq
    %v215 = vshrl.u32 %v214, 7
    %v216 = vsub.s32 %v213, %v215
    %v217 = vrot.slane %v190, %v216
    %v219 = vunpack.c.l.s4 1983009808
    %v220 = vunpack.c.0.s8 %v219
    %v221 = vlaneseq
    %v222 = vshrl.u32 %v221, 7
    %v223 = vsub.s32 %v220, %v222
    %v224 = vrot.slane %v210, %v223
    %v225 = vcombine.high %v217, %v217
    %v226 = vcombine.high %v224, %v224
    %v235 = vpack.c.bf16 %v200, %v200
    %v236 = vpack.c.bf16 %v208, %v208
    %v237 = vpack.c.bf16 %v207, %v207
    %v238 = vpack.c.bf16 %v209, %v209
    %v239 = vpack.c.bf16 %v217, %v217
    %v240 = vpack.c.bf16 %v225, %v225
    %v241 = vpack.c.bf16 %v224, %v224
    %v242 = vpack.c.bf16 %v226, %v226
    %v243 = vld [vmem:[%s1] sm:$0xf]
    %v244 = vld [vmem:[%s1 + $0x4] sm:$0xf]
    %v245 = vld [vmem:[%s1 + $0x8] sm:$0xf]
    %v246 = vld [vmem:[%s1 + $0xc] sm:$0xf]
    %v247 = vld [vmem:[%s1 + $0x10] sm:$0xf]
    %v248 = vld [vmem:[%s1 + $0x14] sm:$0xf]
    %v249 = vld [vmem:[%s1 + $0x18] sm:$0xf]
    %v250 = vld [vmem:[%s1 + $0x1c] sm:$0xf]
    %v251 = vld [vmem:[%s1 + $0x20] sm:$0xf]
    %v252 = vld [vmem:[%s1 + $0x24] sm:$0xf]
    %v253 = vld [vmem:[%s1 + $0x28] sm:$0xf]
    %v254 = vld [vmem:[%s1 + $0x2c] sm:$0xf]
    %v255 = vld [vmem:[%s1 + $0x30] sm:$0xf]
    %v256 = vld [vmem:[%s1 + $0x34] sm:$0xf]
    %v257 = vld [vmem:[%s1 + $0x38] sm:$0xf]
    %v258 = vld [vmem:[%s1 + $0x3c] sm:$0xf]
    %v259 = vld [vmem:[%s1 + $0x40] sm:$0xf]
    %v260 = vld [vmem:[%s1 + $0x44] sm:$0xf]
    %v261 = vld [vmem:[%s1 + $0x48] sm:$0xf]
    %v262 = vld [vmem:[%s1 + $0x4c] sm:$0xf]
    %v263 = vld [vmem:[%s1 + $0x50] sm:$0xf]
    %v264 = vld [vmem:[%s1 + $0x54] sm:$0xf]
    %v265 = vld [vmem:[%s1 + $0x58] sm:$0xf]
    %v266 = vld [vmem:[%s1 + $0x5c] sm:$0xf]
    %v267 = vld [vmem:[%s1 + $0x60] sm:$0xf]
    %v268 = vld [vmem:[%s1 + $0x64] sm:$0xf]
    %v269 = vld [vmem:[%s1 + $0x68] sm:$0xf]
    %v270 = vld [vmem:[%s1 + $0x6c] sm:$0xf]
    %v271 = vld [vmem:[%s1 + $0x70] sm:$0xf]
    %v272 = vld [vmem:[%s1 + $0x74] sm:$0xf]
    %v273 = vld [vmem:[%s1 + $0x78] sm:$0xf]
    %v274 = vld [vmem:[%s1 + $0x7c] sm:$0xf]
    %v275 = vld [vmem:[%s1 + $0x80] sm:$0xf]
    %v276 = vld [vmem:[%s1 + $0x84] sm:$0xf]
    %v277 = vld [vmem:[%s1 + $0x88] sm:$0xf]
    %v278 = vld [vmem:[%s1 + $0x8c] sm:$0xf]
    %v279 = vld [vmem:[%s1 + $0x90] sm:$0xf]
    %v280 = vld [vmem:[%s1 + $0x94] sm:$0xf]
    %v281 = vld [vmem:[%s1 + $0x98] sm:$0xf]
    %v282 = vld [vmem:[%s1 + $0x9c] sm:$0xf]
    %v283 = vld [vmem:[%s1 + $0xa0] sm:$0xf]
    %v284 = vld [vmem:[%s1 + $0xa4] sm:$0xf]
    %v285 = vld [vmem:[%s1 + $0xa8] sm:$0xf]
    %v286 = vld [vmem:[%s1 + $0xac] sm:$0xf]
    %v287 = vld [vmem:[%s1 + $0xb0] sm:$0xf]
    %v288 = vld [vmem:[%s1 + $0xb4] sm:$0xf]
    %v289 = vld [vmem:[%s1 + $0xb8] sm:$0xf]
    %v290 = vld [vmem:[%s1 + $0xbc] sm:$0xf]
    %v291 = vld [vmem:[%s1 + $0xc0] sm:$0xf]
    %v292 = vld [vmem:[%s1 + $0xc4] sm:$0xf]
    %v293 = vld [vmem:[%s1 + $0xc8] sm:$0xf]
    %v294 = vld [vmem:[%s1 + $0xcc] sm:$0xf]
    %v295 = vld [vmem:[%s1 + $0xd0] sm:$0xf]
    %v296 = vld [vmem:[%s1 + $0xd4] sm:$0xf]
    %v297 = vld [vmem:[%s1 + $0xd8] sm:$0xf]
    %v298 = vld [vmem:[%s1 + $0xdc] sm:$0xf]
    %v299 = vld [vmem:[%s1 + $0xe0] sm:$0xf]
    %v300 = vld [vmem:[%s1 + $0xe4] sm:$0xf]
    %v301 = vld [vmem:[%s1 + $0xe8] sm:$0xf]
    %v302 = vld [vmem:[%s1 + $0xec] sm:$0xf]
    %v303 = vld [vmem:[%s1 + $0xf0] sm:$0xf]
    %v304 = vld [vmem:[%s1 + $0xf4] sm:$0xf]
    %v305 = vld [vmem:[%s1 + $0xf8] sm:$0xf]
    %v306 = vld [vmem:[%s1 + $0xfc] sm:$0xf]
    %v307 = vld [vmem:[%s1 + $0x100] sm:$0xf]
    %v308 = vld [vmem:[%s1 + $0x104] sm:$0xf]
    %v309 = vld [vmem:[%s1 + $0x108] sm:$0xf]
    %v310 = vld [vmem:[%s1 + $0x10c] sm:$0xf]
    %v311 = vld [vmem:[%s1 + $0x110] sm:$0xf]
    %v312 = vld [vmem:[%s1 + $0x114] sm:$0xf]
    %v313 = vld [vmem:[%s1 + $0x118] sm:$0xf]
    %v314 = vld [vmem:[%s1 + $0x11c] sm:$0xf]
    %v315 = vld [vmem:[%s1 + $0x120] sm:$0xf]
    %v316 = vld [vmem:[%s1 + $0x124] sm:$0xf]
    %v317 = vld [vmem:[%s1 + $0x128] sm:$0xf]
    %v318 = vld [vmem:[%s1 + $0x12c] sm:$0xf]
    %v319 = vld [vmem:[%s1 + $0x130] sm:$0xf]
    %v320 = vld [vmem:[%s1 + $0x134] sm:$0xf]
    %v321 = vld [vmem:[%s1 + $0x138] sm:$0xf]
    %v322 = vld [vmem:[%s1 + $0x13c] sm:$0xf]
    %v323 = vld [vmem:[%s1 + $0x140] sm:$0xf]
    %v324 = vld [vmem:[%s1 + $0x144] sm:$0xf]
    %v325 = vld [vmem:[%s1 + $0x148] sm:$0xf]
    %v326 = vld [vmem:[%s1 + $0x14c] sm:$0xf]
    %v327 = vld [vmem:[%s1 + $0x150] sm:$0xf]
    %v328 = vld [vmem:[%s1 + $0x154] sm:$0xf]
    %v329 = vld [vmem:[%s1 + $0x158] sm:$0xf]
    %v330 = vld [vmem:[%s1 + $0x15c] sm:$0xf]
    %v331 = vld [vmem:[%s1 + $0x160] sm:$0xf]
    %v332 = vld [vmem:[%s1 + $0x164] sm:$0xf]
    %v333 = vld [vmem:[%s1 + $0x168] sm:$0xf]
    %v334 = vld [vmem:[%s1 + $0x16c] sm:$0xf]
    %v335 = vld [vmem:[%s1 + $0x170] sm:$0xf]
    %v336 = vld [vmem:[%s1 + $0x174] sm:$0xf]
    %v337 = vld [vmem:[%s1 + $0x178] sm:$0xf]
    %v338 = vld [vmem:[%s1 + $0x17c] sm:$0xf]
    %v339 = vld [vmem:[%s1 + $0x180] sm:$0xf]
    %v340 = vld [vmem:[%s1 + $0x184] sm:$0xf]
    %v341 = vld [vmem:[%s1 + $0x188] sm:$0xf]
    %v342 = vld [vmem:[%s1 + $0x18c] sm:$0xf]
    %v343 = vld [vmem:[%s1 + $0x190] sm:$0xf]
    %v344 = vld [vmem:[%s1 + $0x194] sm:$0xf]
    %v345 = vld [vmem:[%s1 + $0x198] sm:$0xf]
    %v346 = vld [vmem:[%s1 + $0x19c] sm:$0xf]
    %v347 = vld [vmem:[%s1 + $0x1a0] sm:$0xf]
    %v348 = vld [vmem:[%s1 + $0x1a4] sm:$0xf]
    %v349 = vld [vmem:[%s1 + $0x1a8] sm:$0xf]
    %v350 = vld [vmem:[%s1 + $0x1ac] sm:$0xf]
    %v351 = vld [vmem:[%s1 + $0x1b0] sm:$0xf]
    %v352 = vld [vmem:[%s1 + $0x1b4] sm:$0xf]
    %v353 = vld [vmem:[%s1 + $0x1b8] sm:$0xf]
    %v354 = vld [vmem:[%s1 + $0x1bc] sm:$0xf]
    %v355 = vld [vmem:[%s1 + $0x1c0] sm:$0xf]
    %v356 = vld [vmem:[%s1 + $0x1c4] sm:$0xf]
    %v357 = vld [vmem:[%s1 + $0x1c8] sm:$0xf]
    %v358 = vld [vmem:[%s1 + $0x1cc] sm:$0xf]
    %v359 = vld [vmem:[%s1 + $0x1d0] sm:$0xf]
    %v360 = vld [vmem:[%s1 + $0x1d4] sm:$0xf]
    %v361 = vld [vmem:[%s1 + $0x1d8] sm:$0xf]
    %v362 = vld [vmem:[%s1 + $0x1dc] sm:$0xf]
    %v363 = vld [vmem:[%s1 + $0x1e0] sm:$0xf]
    %v364 = vld [vmem:[%s1 + $0x1e4] sm:$0xf]
    %v365 = vld [vmem:[%s1 + $0x1e8] sm:$0xf]
    %v366 = vld [vmem:[%s1 + $0x1ec] sm:$0xf]
    %v367 = vld [vmem:[%s1 + $0x1f0] sm:$0xf]
    %v368 = vld [vmem:[%s1 + $0x1f4] sm:$0xf]
    %v369 = vld [vmem:[%s1 + $0x1f8] sm:$0xf]
    %v370 = vld [vmem:[%s1 + $0x1fc] sm:$0xf]
    %v371 = vld [vmem:[%s2] sm:$0x1]
    %v373 = vlaneseq
    %v374 = vshrl.u32 %v373, 7
    %v375 = vsub.s32 0, %v374
    %v376 = vrot.slane %v371, %v375
    %v506 = vunpack.c.l.b16 %v243
    %v507 = vunpack.c.l.b16 %v244
    %v508 = vunpack.c.l.b16 %v245
    %v509 = vunpack.c.l.b16 %v246
    %v510 = vunpack.c.l.b16 %v247
    %v511 = vunpack.c.l.b16 %v248
    %v512 = vunpack.c.l.b16 %v249
    %v513 = vunpack.c.l.b16 %v250
    %v514 = vunpack.c.l.b16 %v251
    %v515 = vunpack.c.l.b16 %v252
    %v516 = vunpack.c.l.b16 %v253
    %v517 = vunpack.c.l.b16 %v254
    %v518 = vunpack.c.l.b16 %v255
    %v519 = vunpack.c.l.b16 %v256
    %v520 = vunpack.c.l.b16 %v257
    %v521 = vunpack.c.l.b16 %v258
    %v522 = vunpack.c.l.b16 %v259
    %v523 = vunpack.c.l.b16 %v260
    %v524 = vunpack.c.l.b16 %v261
    %v525 = vunpack.c.l.b16 %v262
    %v526 = vunpack.c.l.b16 %v263
    %v527 = vunpack.c.l.b16 %v264
    %v528 = vunpack.c.l.b16 %v265
    %v529 = vunpack.c.l.b16 %v266
    %v530 = vunpack.c.l.b16 %v267
    %v531 = vunpack.c.l.b16 %v268
    %v532 = vunpack.c.l.b16 %v269
    %v533 = vunpack.c.l.b16 %v270
    %v534 = vunpack.c.l.b16 %v271
    %v535 = vunpack.c.l.b16 %v272
    %v536 = vunpack.c.l.b16 %v273
    %v537 = vunpack.c.l.b16 %v274
    %v538 = vunpack.c.l.b16 %v275
    %v539 = vunpack.c.l.b16 %v276
    %v540 = vunpack.c.l.b16 %v277
    %v541 = vunpack.c.l.b16 %v278
    %v542 = vunpack.c.l.b16 %v279
    %v543 = vunpack.c.l.b16 %v280
    %v544 = vunpack.c.l.b16 %v281
    %v545 = vunpack.c.l.b16 %v282
    %v546 = vunpack.c.l.b16 %v283
    %v547 = vunpack.c.l.b16 %v284
    %v548 = vunpack.c.l.b16 %v285
    %v549 = vunpack.c.l.b16 %v286
    %v550 = vunpack.c.l.b16 %v287
    %v551 = vunpack.c.l.b16 %v288
    %v552 = vunpack.c.l.b16 %v289
    %v553 = vunpack.c.l.b16 %v290
    %v554 = vunpack.c.l.b16 %v291
    %v555 = vunpack.c.l.b16 %v292
    %v556 = vunpack.c.l.b16 %v293
    %v557 = vunpack.c.l.b16 %v294
    %v558 = vunpack.c.l.b16 %v295
    %v559 = vunpack.c.l.b16 %v296
    %v560 = vunpack.c.l.b16 %v297
    %v561 = vunpack.c.l.b16 %v298
    %v562 = vunpack.c.l.b16 %v299
    %v563 = vunpack.c.l.b16 %v300
    %v564 = vunpack.c.l.b16 %v301
    %v565 = vunpack.c.l.b16 %v302
    %v566 = vunpack.c.l.b16 %v303
    %v567 = vunpack.c.l.b16 %v304
    %v568 = vunpack.c.l.b16 %v305
    %v569 = vunpack.c.l.b16 %v306
    %v570 = vunpack.c.l.b16 %v307
    %v571 = vunpack.c.l.b16 %v308
    %v572 = vunpack.c.l.b16 %v309
    %v573 = vunpack.c.l.b16 %v310
    %v574 = vunpack.c.l.b16 %v311
    %v575 = vunpack.c.l.b16 %v312
    %v576 = vunpack.c.l.b16 %v313
    %v577 = vunpack.c.l.b16 %v314
    %v578 = vunpack.c.l.b16 %v315
    %v579 = vunpack.c.l.b16 %v316
    %v580 = vunpack.c.l.b16 %v317
    %v581 = vunpack.c.l.b16 %v318
    %v582 = vunpack.c.l.b16 %v319
    %v583 = vunpack.c.l.b16 %v320
    %v584 = vunpack.c.l.b16 %v321
    %v585 = vunpack.c.l.b16 %v322
    %v586 = vunpack.c.l.b16 %v323
    %v587 = vunpack.c.l.b16 %v324
    %v588 = vunpack.c.l.b16 %v325
    %v589 = vunpack.c.l.b16 %v326
    %v590 = vunpack.c.l.b16 %v327
    %v591 = vunpack.c.l.b16 %v328
    %v592 = vunpack.c.l.b16 %v329
    %v593 = vunpack.c.l.b16 %v330
    %v594 = vunpack.c.l.b16 %v331
    %v595 = vunpack.c.l.b16 %v332
    %v596 = vunpack.c.l.b16 %v333
    %v597 = vunpack.c.l.b16 %v334
    %v598 = vunpack.c.l.b16 %v335
    %v599 = vunpack.c.l.b16 %v336
    %v600 = vunpack.c.l.b16 %v337
    %v601 = vunpack.c.l.b16 %v338
    %v602 = vunpack.c.l.b16 %v339
    %v603 = vunpack.c.l.b16 %v340
    %v604 = vunpack.c.l.b16 %v341
    %v605 = vunpack.c.l.b16 %v342
    %v606 = vunpack.c.l.b16 %v343
    %v607 = vunpack.c.l.b16 %v344
    %v608 = vunpack.c.l.b16 %v345
    %v609 = vunpack.c.l.b16 %v346
    %v610 = vunpack.c.l.b16 %v347
    %v611 = vunpack.c.l.b16 %v348
    %v612 = vunpack.c.l.b16 %v349
    %v613 = vunpack.c.l.b16 %v350
    %v614 = vunpack.c.l.b16 %v351
    %v615 = vunpack.c.l.b16 %v352
    %v616 = vunpack.c.l.b16 %v353
    %v617 = vunpack.c.l.b16 %v354
    %v618 = vunpack.c.l.b16 %v355
    %v619 = vunpack.c.l.b16 %v356
    %v620 = vunpack.c.l.b16 %v357
    %v621 = vunpack.c.l.b16 %v358
    %v622 = vunpack.c.l.b16 %v359
    %v623 = vunpack.c.l.b16 %v360
    %v624 = vunpack.c.l.b16 %v361
    %v625 = vunpack.c.l.b16 %v362
    %v626 = vunpack.c.l.b16 %v363
    %v627 = vunpack.c.l.b16 %v364
    %v628 = vunpack.c.l.b16 %v365
    %v629 = vunpack.c.l.b16 %v366
    %v630 = vunpack.c.l.b16 %v367
    %v631 = vunpack.c.l.b16 %v368
    %v632 = vunpack.c.l.b16 %v369
    %v633 = vunpack.c.l.b16 %v370
    %v634 = vpack.c.b16 %v507, %v506
    %v635 = vpack.c.b16 %v509, %v508
    %v636 = vpack.c.b16 %v511, %v510
    %v637 = vpack.c.b16 %v513, %v512
    %v638 = vpack.c.b16 %v515, %v514
    %v639 = vpack.c.b16 %v517, %v516
    %v640 = vpack.c.b16 %v519, %v518
    %v641 = vpack.c.b16 %v521, %v520
    %v642 = vpack.c.b16 %v523, %v522
    %v643 = vpack.c.b16 %v525, %v524
    %v644 = vpack.c.b16 %v527, %v526
    %v645 = vpack.c.b16 %v529, %v528
    %v646 = vpack.c.b16 %v531, %v530
    %v647 = vpack.c.b16 %v533, %v532
    %v648 = vpack.c.b16 %v535, %v534
    %v649 = vpack.c.b16 %v537, %v536
    %v650 = vpack.c.b16 %v539, %v538
    %v651 = vpack.c.b16 %v541, %v540
    %v652 = vpack.c.b16 %v543, %v542
    %v653 = vpack.c.b16 %v545, %v544
    %v654 = vpack.c.b16 %v547, %v546
    %v655 = vpack.c.b16 %v549, %v548
    %v656 = vpack.c.b16 %v551, %v550
    %v657 = vpack.c.b16 %v553, %v552
    %v658 = vpack.c.b16 %v555, %v554
    %v659 = vpack.c.b16 %v557, %v556
    %v660 = vpack.c.b16 %v559, %v558
    %v661 = vpack.c.b16 %v561, %v560
    %v662 = vpack.c.b16 %v563, %v562
    %v663 = vpack.c.b16 %v565, %v564
    %v664 = vpack.c.b16 %v567, %v566
    %v665 = vpack.c.b16 %v569, %v568
    %v666 = vpack.c.b16 %v571, %v570
    %v667 = vpack.c.b16 %v573, %v572
    %v668 = vpack.c.b16 %v575, %v574
    %v669 = vpack.c.b16 %v577, %v576
    %v670 = vpack.c.b16 %v579, %v578
    %v671 = vpack.c.b16 %v581, %v580
    %v672 = vpack.c.b16 %v583, %v582
    %v673 = vpack.c.b16 %v585, %v584
    %v674 = vpack.c.b16 %v587, %v586
    %v675 = vpack.c.b16 %v589, %v588
    %v676 = vpack.c.b16 %v591, %v590
    %v677 = vpack.c.b16 %v593, %v592
    %v678 = vpack.c.b16 %v595, %v594
    %v679 = vpack.c.b16 %v597, %v596
    %v680 = vpack.c.b16 %v599, %v598
    %v681 = vpack.c.b16 %v601, %v600
    %v682 = vpack.c.b16 %v603, %v602
    %v683 = vpack.c.b16 %v605, %v604
    %v684 = vpack.c.b16 %v607, %v606
    %v685 = vpack.c.b16 %v609, %v608
    %v686 = vpack.c.b16 %v611, %v610
    %v687 = vpack.c.b16 %v613, %v612
    %v688 = vpack.c.b16 %v615, %v614
    %v689 = vpack.c.b16 %v617, %v616
    %v690 = vpack.c.b16 %v619, %v618
    %v691 = vpack.c.b16 %v621, %v620
    %v692 = vpack.c.b16 %v623, %v622
    %v693 = vpack.c.b16 %v625, %v624
    %v694 = vpack.c.b16 %v627, %v626
    %v695 = vpack.c.b16 %v629, %v628
    %v696 = vpack.c.b16 %v631, %v630
    %v697 = vpack.c.b16 %v633, %v632
    %762 = vmatprep.subr.bf16.mxu0 0
    %763 = vmatpush1.bf16.msra.mxu0 %v641
    %764 = vmatprep.subr.bf16.mxu0 0
    %765 = vmatpush1.bf16.msra.mxu0 %v640
    %766 = vmatprep.subr.bf16.mxu0 0
    %767 = vmatpush1.bf16.msra.mxu0 %v639
    %768 = vmatprep.subr.bf16.mxu0 0
    %769 = vmatpush1.bf16.msra.mxu0 %v638
    %770 = vmatprep.subr.bf16.mxu0 0
    %771 = vmatpush1.bf16.msra.mxu0 %v637
    %772 = vmatprep.subr.bf16.mxu0 0
    %773 = vmatpush1.bf16.msra.mxu0 %v636
    %774 = vmatprep.subr.bf16.mxu0 0
    %775 = vmatpush1.bf16.msra.mxu0 %v635
    %776 = vmatprep.subr.bf16.mxu0 0
    %777 = vmatpush1.bf16.msra.mxu0 %v634
    %778 = vmatprep.subr.bf16.mxu0 0
    %779 = vmatpush2.bf16.msra.mxu0 %v649
    %780 = vmatprep.subr.bf16.mxu0 0
    %781 = vmatpush2.bf16.msra.mxu0 %v648
    %782 = vmatprep.subr.bf16.mxu0 0
    %783 = vmatpush2.bf16.msra.mxu0 %v647
    %784 = vmatprep.subr.bf16.mxu0 0
    %785 = vmatpush2.bf16.msra.mxu0 %v646
    %786 = vmatprep.subr.bf16.mxu0 0
    %787 = vmatpush2.bf16.msra.mxu0 %v645
    %788 = vmatprep.subr.bf16.mxu0 0
    %789 = vmatpush2.bf16.msra.mxu0 %v644
    %790 = vmatprep.subr.bf16.mxu0 0
    %791 = vmatpush2.bf16.msra.mxu0 %v643
    %792 = vmatprep.subr.bf16.mxu0 0
    %793 = vmatpush2.bf16.msra.mxu0 %v642
    %794 = vmatprep.mubr.bf16.mxu0 %v236
    %795 = vmatmul.mubr.bf16.gmra.mxu0 %v235
    %v796 = vpop.f32.mrf.mxu0
    %v797 = vadd.f32 %v376, %v796
    %v798 = vpop.f32.mrf.mxu0
    %v799 = vpop.f32.mrf.mxu0
    %v800 = vpop.f32.mrf.mxu0
    %801 = vdwg.mxu0
    %802 = vmatprep.subr.bf16.mxu0 0
    %803 = vmatpush1.bf16.msra.mxu0 %v657
    %804 = vmatprep.subr.bf16.mxu0 0
    %805 = vmatpush1.bf16.msra.mxu0 %v656
    %806 = vmatprep.subr.bf16.mxu0 0
    %807 = vmatpush1.bf16.msra.mxu0 %v655
    %808 = vmatprep.subr.bf16.mxu0 0
    %809 = vmatpush1.bf16.msra.mxu0 %v654
    %810 = vmatprep.subr.bf16.mxu0 0
    %811 = vmatpush1.bf16.msra.mxu0 %v653
    %812 = vmatprep.subr.bf16.mxu0 0
    %813 = vmatpush1.bf16.msra.mxu0 %v652
    %814 = vmatprep.subr.bf16.mxu0 0
    %815 = vmatpush1.bf16.msra.mxu0 %v651
    %816 = vmatprep.subr.bf16.mxu0 0
    %817 = vmatpush1.bf16.msra.mxu0 %v650
    %818 = vmatprep.subr.bf16.mxu0 0
    %819 = vmatpush2.bf16.msra.mxu0 %v665
    %820 = vmatprep.subr.bf16.mxu0 0
    %821 = vmatpush2.bf16.msra.mxu0 %v664
    %822 = vmatprep.subr.bf16.mxu0 0
    %823 = vmatpush2.bf16.msra.mxu0 %v663
    %824 = vmatprep.subr.bf16.mxu0 0
    %825 = vmatpush2.bf16.msra.mxu0 %v662
    %826 = vmatprep.subr.bf16.mxu0 0
    %827 = vmatpush2.bf16.msra.mxu0 %v661
    %828 = vmatprep.subr.bf16.mxu0 0
    %829 = vmatpush2.bf16.msra.mxu0 %v660
    %830 = vmatprep.subr.bf16.mxu0 0
    %831 = vmatpush2.bf16.msra.mxu0 %v659
    %832 = vmatprep.subr.bf16.mxu0 0
    %833 = vmatpush2.bf16.msra.mxu0 %v658
    %834 = vmatprep.mubr.bf16.mxu0 %v238
    %835 = vmatmul.mubr.bf16.gmra.mxu0 %v237
    %v836 = vpop.f32.mrf.mxu0
    %v837 = vadd.f32 %v797, %v836
    %v838 = vpop.f32.mrf.mxu0
    %v839 = vpop.f32.mrf.mxu0
    %v840 = vpop.f32.mrf.mxu0
    %841 = vdwg.mxu0
    %842 = vmatprep.subr.bf16.mxu0 0
    %843 = vmatpush1.bf16.msra.mxu0 %v673
    %844 = vmatprep.subr.bf16.mxu0 0
    %845 = vmatpush1.bf16.msra.mxu0 %v672
    %846 = vmatprep.subr.bf16.mxu0 0
    %847 = vmatpush1.bf16.msra.mxu0 %v671
    %848 = vmatprep.subr.bf16.mxu0 0
    %849 = vmatpush1.bf16.msra.mxu0 %v670
    %850 = vmatprep.subr.bf16.mxu0 0
    %851 = vmatpush1.bf16.msra.mxu0 %v669
    %852 = vmatprep.subr.bf16.mxu0 0
    %853 = vmatpush1.bf16.msra.mxu0 %v668
    %854 = vmatprep.subr.bf16.mxu0 0
    %855 = vmatpush1.bf16.msra.mxu0 %v667
    %856 = vmatprep.subr.bf16.mxu0 0
    %857 = vmatpush1.bf16.msra.mxu0 %v666
    %858 = vmatprep.subr.bf16.mxu0 0
    %859 = vmatpush2.bf16.msra.mxu0 %v681
    %860 = vmatprep.subr.bf16.mxu0 0
    %861 = vmatpush2.bf16.msra.mxu0 %v680
    %862 = vmatprep.subr.bf16.mxu0 0
    %863 = vmatpush2.bf16.msra.mxu0 %v679
    %864 = vmatprep.subr.bf16.mxu0 0
    %865 = vmatpush2.bf16.msra.mxu0 %v678
    %866 = vmatprep.subr.bf16.mxu0 0
    %867 = vmatpush2.bf16.msra.mxu0 %v677
    %868 = vmatprep.subr.bf16.mxu0 0
    %869 = vmatpush2.bf16.msra.mxu0 %v676
    %870 = vmatprep.subr.bf16.mxu0 0
    %871 = vmatpush2.bf16.msra.mxu0 %v675
    %872 = vmatprep.subr.bf16.mxu0 0
    %873 = vmatpush2.bf16.msra.mxu0 %v674
    %874 = vmatprep.mubr.bf16.mxu0 %v240
    %875 = vmatmul.mubr.bf16.gmra.mxu0 %v239
    %v876 = vpop.f32.mrf.mxu0
    %v877 = vadd.f32 %v837, %v876
    %v878 = vpop.f32.mrf.mxu0
    %v879 = vpop.f32.mrf.mxu0
    %v880 = vpop.f32.mrf.mxu0
    %881 = vdwg.mxu0
    %882 = vmatprep.subr.bf16.mxu0 0
    %883 = vmatpush1.bf16.msra.mxu0 %v689
    %884 = vmatprep.subr.bf16.mxu0 0
    %885 = vmatpush1.bf16.msra.mxu0 %v688
    %886 = vmatprep.subr.bf16.mxu0 0
    %887 = vmatpush1.bf16.msra.mxu0 %v687
    %888 = vmatprep.subr.bf16.mxu0 0
    %889 = vmatpush1.bf16.msra.mxu0 %v686
    %890 = vmatprep.subr.bf16.mxu0 0
    %891 = vmatpush1.bf16.msra.mxu0 %v685
    %892 = vmatprep.subr.bf16.mxu0 0
    %893 = vmatpush1.bf16.msra.mxu0 %v684
    %894 = vmatprep.subr.bf16.mxu0 0
    %895 = vmatpush1.bf16.msra.mxu0 %v683
    %896 = vmatprep.subr.bf16.mxu0 0
    %897 = vmatpush1.bf16.msra.mxu0 %v682
    %898 = vmatprep.subr.bf16.mxu0 0
    %899 = vmatpush2.bf16.msra.mxu0 %v697
    %900 = vmatprep.subr.bf16.mxu0 0
    %901 = vmatpush2.bf16.msra.mxu0 %v696
    %902 = vmatprep.subr.bf16.mxu0 0
    %903 = vmatpush2.bf16.msra.mxu0 %v695
    %904 = vmatprep.subr.bf16.mxu0 0
    %905 = vmatpush2.bf16.msra.mxu0 %v694
    %906 = vmatprep.subr.bf16.mxu0 0
    %907 = vmatpush2.bf16.msra.mxu0 %v693
    %908 = vmatprep.subr.bf16.mxu0 0
    %909 = vmatpush2.bf16.msra.mxu0 %v692
    %910 = vmatprep.subr.bf16.mxu0 0
    %911 = vmatpush2.bf16.msra.mxu0 %v691
    %912 = vmatprep.subr.bf16.mxu0 0
    %913 = vmatpush2.bf16.msra.mxu0 %v690
    %914 = vmatprep.mubr.bf16.mxu0 %v242
    %915 = vmatmul.mubr.bf16.gmra.mxu0 %v241
    %v916 = vpop.f32.mrf.mxu0
    %v917 = vadd.f32 %v877, %v916
    %v918 = vpop.f32.mrf.mxu0
    %v919 = vpop.f32.mrf.mxu0
    %v920 = vpop.f32.mrf.mxu0
    %921 = vdwg.mxu0
    %v922 = vlaneseq
    %v923 = vshrl.u32 %v922, 7
    %v924 = vsub.s32 0, %v923
    %v925 = vrot.slane %v186, %v924
    %v926 = vadd.f32 %v917, %v925
    %vm927 = vcmask 254976
    %928 = vst.msk [vmem:[#allocation2] sm:$0x3] %vm927, %v926
    %s929 = scalar_lea.vmem %s1, 512
    %v930 = vld [vmem:[%s929] sm:$0xf]
    %v931 = vld [vmem:[%s929 + $0x4] sm:$0xf]
    %v932 = vld [vmem:[%s929 + $0x8] sm:$0xf]
    %v933 = vld [vmem:[%s929 + $0xc] sm:$0xf]
    %v934 = vld [vmem:[%s929 + $0x10] sm:$0xf]
    %v935 = vld [vmem:[%s929 + $0x14] sm:$0xf]
    %v936 = vld [vmem:[%s929 + $0x18] sm:$0xf]
    %v937 = vld [vmem:[%s929 + $0x1c] sm:$0xf]
    %v938 = vld [vmem:[%s929 + $0x20] sm:$0xf]
    %v939 = vld [vmem:[%s929 + $0x24] sm:$0xf]
    %v940 = vld [vmem:[%s929 + $0x28] sm:$0xf]
    %v941 = vld [vmem:[%s929 + $0x2c] sm:$0xf]
    %v942 = vld [vmem:[%s929 + $0x30] sm:$0xf]
    %v943 = vld [vmem:[%s929 + $0x34] sm:$0xf]
    %v944 = vld [vmem:[%s929 + $0x38] sm:$0xf]
    %v945 = vld [vmem:[%s929 + $0x3c] sm:$0xf]
    %v946 = vld [vmem:[%s929 + $0x40] sm:$0xf]
    %v947 = vld [vmem:[%s929 + $0x44] sm:$0xf]
    %v948 = vld [vmem:[%s929 + $0x48] sm:$0xf]
    %v949 = vld [vmem:[%s929 + $0x4c] sm:$0xf]
    %v950 = vld [vmem:[%s929 + $0x50] sm:$0xf]
    %v951 = vld [vmem:[%s929 + $0x54] sm:$0xf]
    %v952 = vld [vmem:[%s929 + $0x58] sm:$0xf]
    %v953 = vld [vmem:[%s929 + $0x5c] sm:$0xf]
    %v954 = vld [vmem:[%s929 + $0x60] sm:$0xf]
    %v955 = vld [vmem:[%s929 + $0x64] sm:$0xf]
    %v956 = vld [vmem:[%s929 + $0x68] sm:$0xf]
    %v957 = vld [vmem:[%s929 + $0x6c] sm:$0xf]
    %v958 = vld [vmem:[%s929 + $0x70] sm:$0xf]
    %v959 = vld [vmem:[%s929 + $0x74] sm:$0xf]
    %v960 = vld [vmem:[%s929 + $0x78] sm:$0xf]
    %v961 = vld [vmem:[%s929 + $0x7c] sm:$0xf]
    %v962 = vld [vmem:[%s929 + $0x80] sm:$0xf]
    %v963 = vld [vmem:[%s929 + $0x84] sm:$0xf]
    %v964 = vld [vmem:[%s929 + $0x88] sm:$0xf]
    %v965 = vld [vmem:[%s929 + $0x8c] sm:$0xf]
    %v966 = vld [vmem:[%s929 + $0x90] sm:$0xf]
    %v967 = vld [vmem:[%s929 + $0x94] sm:$0xf]
    %v968 = vld [vmem:[%s929 + $0x98] sm:$0xf]
    %v969 = vld [vmem:[%s929 + $0x9c] sm:$0xf]
    %v970 = vld [vmem:[%s929 + $0xa0] sm:$0xf]
    %v971 = vld [vmem:[%s929 + $0xa4] sm:$0xf]
    %v972 = vld [vmem:[%s929 + $0xa8] sm:$0xf]
    %v973 = vld [vmem:[%s929 + $0xac] sm:$0xf]
    %v974 = vld [vmem:[%s929 + $0xb0] sm:$0xf]
    %v975 = vld [vmem:[%s929 + $0xb4] sm:$0xf]
    %v976 = vld [vmem:[%s929 + $0xb8] sm:$0xf]
    %v977 = vld [vmem:[%s929 + $0xbc] sm:$0xf]
    %v978 = vld [vmem:[%s929 + $0xc0] sm:$0xf]
    %v979 = vld [vmem:[%s929 + $0xc4] sm:$0xf]
    %v980 = vld [vmem:[%s929 + $0xc8] sm:$0xf]
    %v981 = vld [vmem:[%s929 + $0xcc] sm:$0xf]
    %v982 = vld [vmem:[%s929 + $0xd0] sm:$0xf]
    %v983 = vld [vmem:[%s929 + $0xd4] sm:$0xf]
    %v984 = vld [vmem:[%s929 + $0xd8] sm:$0xf]
    %v985 = vld [vmem:[%s929 + $0xdc] sm:$0xf]
    %v986 = vld [vmem:[%s929 + $0xe0] sm:$0xf]
    %v987 = vld [vmem:[%s929 + $0xe4] sm:$0xf]
    %v988 = vld [vmem:[%s929 + $0xe8] sm:$0xf]
    %v989 = vld [vmem:[%s929 + $0xec] sm:$0xf]
    %v990 = vld [vmem:[%s929 + $0xf0] sm:$0xf]
    %v991 = vld [vmem:[%s929 + $0xf4] sm:$0xf]
    %v992 = vld [vmem:[%s929 + $0xf8] sm:$0xf]
    %v993 = vld [vmem:[%s929 + $0xfc] sm:$0xf]
    %v994 = vld [vmem:[%s929 + $0x100] sm:$0xf]
    %v995 = vld [vmem:[%s929 + $0x104] sm:$0xf]
    %v996 = vld [vmem:[%s929 + $0x108] sm:$0xf]
    %v997 = vld [vmem:[%s929 + $0x10c] sm:$0xf]
    %v998 = vld [vmem:[%s929 + $0x110] sm:$0xf]
    %v999 = vld [vmem:[%s929 + $0x114] sm:$0xf]
    %v1000 = vld [vmem:[%s929 + $0x118] sm:$0xf]
    %v1001 = vld [vmem:[%s929 + $0x11c] sm:$0xf]
    %v1002 = vld [vmem:[%s929 + $0x120] sm:$0xf]
    %v1003 = vld [vmem:[%s929 + $0x124] sm:$0xf]
    %v1004 = vld [vmem:[%s929 + $0x128] sm:$0xf]
    %v1005 = vld [vmem:[%s929 + $0x12c] sm:$0xf]
    %v1006 = vld [vmem:[%s929 + $0x130] sm:$0xf]
    %v1007 = vld [vmem:[%s929 + $0x134] sm:$0xf]
    %v1008 = vld [vmem:[%s929 + $0x138] sm:$0xf]
    %v1009 = vld [vmem:[%s929 + $0x13c] sm:$0xf]
    %v1010 = vld [vmem:[%s929 + $0x140] sm:$0xf]
    %v1011 = vld [vmem:[%s929 + $0x144] sm:$0xf]
    %v1012 = vld [vmem:[%s929 + $0x148] sm:$0xf]
    %v1013 = vld [vmem:[%s929 + $0x14c] sm:$0xf]
    %v1014 = vld [vmem:[%s929 + $0x150] sm:$0xf]
    %v1015 = vld [vmem:[%s929 + $0x154] sm:$0xf]
    %v1016 = vld [vmem:[%s929 + $0x158] sm:$0xf]
    %v1017 = vld [vmem:[%s929 + $0x15c] sm:$0xf]
    %v1018 = vld [vmem:[%s929 + $0x160] sm:$0xf]
    %v1019 = vld [vmem:[%s929 + $0x164] sm:$0xf]
    %v1020 = vld [vmem:[%s929 + $0x168] sm:$0xf]
    %v1021 = vld [vmem:[%s929 + $0x16c] sm:$0xf]
    %v1022 = vld [vmem:[%s929 + $0x170] sm:$0xf]
    %v1023 = vld [vmem:[%s929 + $0x174] sm:$0xf]
    %v1024 = vld [vmem:[%s929 + $0x178] sm:$0xf]
    %v1025 = vld [vmem:[%s929 + $0x17c] sm:$0xf]
    %v1026 = vld [vmem:[%s929 + $0x180] sm:$0xf]
    %v1027 = vld [vmem:[%s929 + $0x184] sm:$0xf]
    %v1028 = vld [vmem:[%s929 + $0x188] sm:$0xf]
    %v1029 = vld [vmem:[%s929 + $0x18c] sm:$0xf]
    %v1030 = vld [vmem:[%s929 + $0x190] sm:$0xf]
    %v1031 = vld [vmem:[%s929 + $0x194] sm:$0xf]
    %v1032 = vld [vmem:[%s929 + $0x198] sm:$0xf]
    %v1033 = vld [vmem:[%s929 + $0x19c] sm:$0xf]
    %v1034 = vld [vmem:[%s929 + $0x1a0] sm:$0xf]
    %v1035 = vld [vmem:[%s929 + $0x1a4] sm:$0xf]
    %v1036 = vld [vmem:[%s929 + $0x1a8] sm:$0xf]
    %v1037 = vld [vmem:[%s929 + $0x1ac] sm:$0xf]
    %v1038 = vld [vmem:[%s929 + $0x1b0] sm:$0xf]
    %v1039 = vld [vmem:[%s929 + $0x1b4] sm:$0xf]
    %v1040 = vld [vmem:[%s929 + $0x1b8] sm:$0xf]
    %v1041 = vld [vmem:[%s929 + $0x1bc] sm:$0xf]
    %v1042 = vld [vmem:[%s929 + $0x1c0] sm:$0xf]
    %v1043 = vld [vmem:[%s929 + $0x1c4] sm:$0xf]
    %v1044 = vld [vmem:[%s929 + $0x1c8] sm:$0xf]
    %v1045 = vld [vmem:[%s929 + $0x1cc] sm:$0xf]
    %v1046 = vld [vmem:[%s929 + $0x1d0] sm:$0xf]
    %v1047 = vld [vmem:[%s929 + $0x1d4] sm:$0xf]
    %v1048 = vld [vmem:[%s929 + $0x1d8] sm:$0xf]
    %v1049 = vld [vmem:[%s929 + $0x1dc] sm:$0xf]
    %v1050 = vld [vmem:[%s929 + $0x1e0] sm:$0xf]
    %v1051 = vld [vmem:[%s929 + $0x1e4] sm:$0xf]
    %v1052 = vld [vmem:[%s929 + $0x1e8] sm:$0xf]
    %v1053 = vld [vmem:[%s929 + $0x1ec] sm:$0xf]
    %v1054 = vld [vmem:[%s929 + $0x1f0] sm:$0xf]
    %v1055 = vld [vmem:[%s929 + $0x1f4] sm:$0xf]
    %v1056 = vld [vmem:[%s929 + $0x1f8] sm:$0xf]
    %v1057 = vld [vmem:[%s929 + $0x1fc] sm:$0xf]
    %s1058 = scalar_lea.vmem %s2, 1
    %v1059 = vld [vmem:[%s1058] sm:$0x1]
    %v1061 = vlaneseq
    %v1062 = vshrl.u32 %v1061, 7
    %v1063 = vsub.s32 0, %v1062
    %v1064 = vrot.slane %v1059, %v1063
    %v1194 = vunpack.c.l.b16 %v930
    %v1195 = vunpack.c.l.b16 %v931
    %v1196 = vunpack.c.l.b16 %v932
    %v1197 = vunpack.c.l.b16 %v933
    %v1198 = vunpack.c.l.b16 %v934
    %v1199 = vunpack.c.l.b16 %v935
    %v1200 = vunpack.c.l.b16 %v936
    %v1201 = vunpack.c.l.b16 %v937
    %v1202 = vunpack.c.l.b16 %v938
    %v1203 = vunpack.c.l.b16 %v939
    %v1204 = vunpack.c.l.b16 %v940
    %v1205 = vunpack.c.l.b16 %v941
    %v1206 = vunpack.c.l.b16 %v942
    %v1207 = vunpack.c.l.b16 %v943
    %v1208 = vunpack.c.l.b16 %v944
    %v1209 = vunpack.c.l.b16 %v945
    %v1210 = vunpack.c.l.b16 %v946
    %v1211 = vunpack.c.l.b16 %v947
    %v1212 = vunpack.c.l.b16 %v948
    %v1213 = vunpack.c.l.b16 %v949
    %v1214 = vunpack.c.l.b16 %v950
    %v1215 = vunpack.c.l.b16 %v951
    %v1216 = vunpack.c.l.b16 %v952
    %v1217 = vunpack.c.l.b16 %v953
    %v1218 = vunpack.c.l.b16 %v954
    %v1219 = vunpack.c.l.b16 %v955
    %v1220 = vunpack.c.l.b16 %v956
    %v1221 = vunpack.c.l.b16 %v957
    %v1222 = vunpack.c.l.b16 %v958
    %v1223 = vunpack.c.l.b16 %v959
    %v1224 = vunpack.c.l.b16 %v960
    %v1225 = vunpack.c.l.b16 %v961
    %v1226 = vunpack.c.l.b16 %v962
    %v1227 = vunpack.c.l.b16 %v963
    %v1228 = vunpack.c.l.b16 %v964
    %v1229 = vunpack.c.l.b16 %v965
    %v1230 = vunpack.c.l.b16 %v966
    %v1231 = vunpack.c.l.b16 %v967
    %v1232 = vunpack.c.l.b16 %v968
    %v1233 = vunpack.c.l.b16 %v969
    %v1234 = vunpack.c.l.b16 %v970
    %v1235 = vunpack.c.l.b16 %v971
    %v1236 = vunpack.c.l.b16 %v972
    %v1237 = vunpack.c.l.b16 %v973
    %v1238 = vunpack.c.l.b16 %v974
    %v1239 = vunpack.c.l.b16 %v975
    %v1240 = vunpack.c.l.b16 %v976
    %v1241 = vunpack.c.l.b16 %v977
    %v1242 = vunpack.c.l.b16 %v978
    %v1243 = vunpack.c.l.b16 %v979
    %v1244 = vunpack.c.l.b16 %v980
    %v1245 = vunpack.c.l.b16 %v981
    %v1246 = vunpack.c.l.b16 %v982
    %v1247 = vunpack.c.l.b16 %v983
    %v1248 = vunpack.c.l.b16 %v984
    %v1249 = vunpack.c.l.b16 %v985
    %v1250 = vunpack.c.l.b16 %v986
    %v1251 = vunpack.c.l.b16 %v987
    %v1252 = vunpack.c.l.b16 %v988
    %v1253 = vunpack.c.l.b16 %v989
    %v1254 = vunpack.c.l.b16 %v990
    %v1255 = vunpack.c.l.b16 %v991
    %v1256 = vunpack.c.l.b16 %v992
    %v1257 = vunpack.c.l.b16 %v993
    %v1258 = vunpack.c.l.b16 %v994
    %v1259 = vunpack.c.l.b16 %v995
    %v1260 = vunpack.c.l.b16 %v996
    %v1261 = vunpack.c.l.b16 %v997
    %v1262 = vunpack.c.l.b16 %v998
    %v1263 = vunpack.c.l.b16 %v999
    %v1264 = vunpack.c.l.b16 %v1000
    %v1265 = vunpack.c.l.b16 %v1001
    %v1266 = vunpack.c.l.b16 %v1002
    %v1267 = vunpack.c.l.b16 %v1003
    %v1268 = vunpack.c.l.b16 %v1004
    %v1269 = vunpack.c.l.b16 %v1005
    %v1270 = vunpack.c.l.b16 %v1006
    %v1271 = vunpack.c.l.b16 %v1007
    %v1272 = vunpack.c.l.b16 %v1008
    %v1273 = vunpack.c.l.b16 %v1009
    %v1274 = vunpack.c.l.b16 %v1010
    %v1275 = vunpack.c.l.b16 %v1011
    %v1276 = vunpack.c.l.b16 %v1012
    %v1277 = vunpack.c.l.b16 %v1013
    %v1278 = vunpack.c.l.b16 %v1014
    %v1279 = vunpack.c.l.b16 %v1015
    %v1280 = vunpack.c.l.b16 %v1016
    %v1281 = vunpack.c.l.b16 %v1017
    %v1282 = vunpack.c.l.b16 %v1018
    %v1283 = vunpack.c.l.b16 %v1019
    %v1284 = vunpack.c.l.b16 %v1020
    %v1285 = vunpack.c.l.b16 %v1021
    %v1286 = vunpack.c.l.b16 %v1022
    %v1287 = vunpack.c.l.b16 %v1023
    %v1288 = vunpack.c.l.b16 %v1024
    %v1289 = vunpack.c.l.b16 %v1025
    %v1290 = vunpack.c.l.b16 %v1026
    %v1291 = vunpack.c.l.b16 %v1027
    %v1292 = vunpack.c.l.b16 %v1028
    %v1293 = vunpack.c.l.b16 %v1029
    %v1294 = vunpack.c.l.b16 %v1030
    %v1295 = vunpack.c.l.b16 %v1031
    %v1296 = vunpack.c.l.b16 %v1032
    %v1297 = vunpack.c.l.b16 %v1033
    %v1298 = vunpack.c.l.b16 %v1034
    %v1299 = vunpack.c.l.b16 %v1035
    %v1300 = vunpack.c.l.b16 %v1036
    %v1301 = vunpack.c.l.b16 %v1037
    %v1302 = vunpack.c.l.b16 %v1038
    %v1303 = vunpack.c.l.b16 %v1039
    %v1304 = vunpack.c.l.b16 %v1040
    %v1305 = vunpack.c.l.b16 %v1041
    %v1306 = vunpack.c.l.b16 %v1042
    %v1307 = vunpack.c.l.b16 %v1043
    %v1308 = vunpack.c.l.b16 %v1044
    %v1309 = vunpack.c.l.b16 %v1045
    %v1310 = vunpack.c.l.b16 %v1046
    %v1311 = vunpack.c.l.b16 %v1047
    %v1312 = vunpack.c.l.b16 %v1048
    %v1313 = vunpack.c.l.b16 %v1049
    %v1314 = vunpack.c.l.b16 %v1050
    %v1315 = vunpack.c.l.b16 %v1051
    %v1316 = vunpack.c.l.b16 %v1052
    %v1317 = vunpack.c.l.b16 %v1053
    %v1318 = vunpack.c.l.b16 %v1054
    %v1319 = vunpack.c.l.b16 %v1055
    %v1320 = vunpack.c.l.b16 %v1056
    %v1321 = vunpack.c.l.b16 %v1057
    %v1322 = vpack.c.b16 %v1195, %v1194
    %v1323 = vpack.c.b16 %v1197, %v1196
    %v1324 = vpack.c.b16 %v1199, %v1198
    %v1325 = vpack.c.b16 %v1201, %v1200
    %v1326 = vpack.c.b16 %v1203, %v1202
    %v1327 = vpack.c.b16 %v1205, %v1204
    %v1328 = vpack.c.b16 %v1207, %v1206
    %v1329 = vpack.c.b16 %v1209, %v1208
    %v1330 = vpack.c.b16 %v1211, %v1210
    %v1331 = vpack.c.b16 %v1213, %v1212
    %v1332 = vpack.c.b16 %v1215, %v1214
    %v1333 = vpack.c.b16 %v1217, %v1216
    %v1334 = vpack.c.b16 %v1219, %v1218
    %v1335 = vpack.c.b16 %v1221, %v1220
    %v1336 = vpack.c.b16 %v1223, %v1222
    %v1337 = vpack.c.b16 %v1225, %v1224
    %v1338 = vpack.c.b16 %v1227, %v1226
    %v1339 = vpack.c.b16 %v1229, %v1228
    %v1340 = vpack.c.b16 %v1231, %v1230
    %v1341 = vpack.c.b16 %v1233, %v1232
    %v1342 = vpack.c.b16 %v1235, %v1234
    %v1343 = vpack.c.b16 %v1237, %v1236
    %v1344 = vpack.c.b16 %v1239, %v1238
    %v1345 = vpack.c.b16 %v1241, %v1240
    %v1346 = vpack.c.b16 %v1243, %v1242
    %v1347 = vpack.c.b16 %v1245, %v1244
    %v1348 = vpack.c.b16 %v1247, %v1246
    %v1349 = vpack.c.b16 %v1249, %v1248
    %v1350 = vpack.c.b16 %v1251, %v1250
    %v1351 = vpack.c.b16 %v1253, %v1252
    %v1352 = vpack.c.b16 %v1255, %v1254
    %v1353 = vpack.c.b16 %v1257, %v1256
    %v1354 = vpack.c.b16 %v1259, %v1258
    %v1355 = vpack.c.b16 %v1261, %v1260
    %v1356 = vpack.c.b16 %v1263, %v1262
    %v1357 = vpack.c.b16 %v1265, %v1264
    %v1358 = vpack.c.b16 %v1267, %v1266
    %v1359 = vpack.c.b16 %v1269, %v1268
    %v1360 = vpack.c.b16 %v1271, %v1270
    %v1361 = vpack.c.b16 %v1273, %v1272
    %v1362 = vpack.c.b16 %v1275, %v1274
    %v1363 = vpack.c.b16 %v1277, %v1276
    %v1364 = vpack.c.b16 %v1279, %v1278
    %v1365 = vpack.c.b16 %v1281, %v1280
    %v1366 = vpack.c.b16 %v1283, %v1282
    %v1367 = vpack.c.b16 %v1285, %v1284
    %v1368 = vpack.c.b16 %v1287, %v1286
    %v1369 = vpack.c.b16 %v1289, %v1288
    %v1370 = vpack.c.b16 %v1291, %v1290
    %v1371 = vpack.c.b16 %v1293, %v1292
    %v1372 = vpack.c.b16 %v1295, %v1294
    %v1373 = vpack.c.b16 %v1297, %v1296
    %v1374 = vpack.c.b16 %v1299, %v1298
    %v1375 = vpack.c.b16 %v1301, %v1300
    %v1376 = vpack.c.b16 %v1303, %v1302
    %v1377 = vpack.c.b16 %v1305, %v1304
    %v1378 = vpack.c.b16 %v1307, %v1306
    %v1379 = vpack.c.b16 %v1309, %v1308
    %v1380 = vpack.c.b16 %v1311, %v1310
    %v1381 = vpack.c.b16 %v1313, %v1312
    %v1382 = vpack.c.b16 %v1315, %v1314
    %v1383 = vpack.c.b16 %v1317, %v1316
    %v1384 = vpack.c.b16 %v1319, %v1318
    %v1385 = vpack.c.b16 %v1321, %v1320
    %1450 = vmatprep.subr.bf16.mxu0 0
    %1451 = vmatpush1.bf16.msra.mxu0 %v1329
    %1452 = vmatprep.subr.bf16.mxu0 0
    %1453 = vmatpush1.bf16.msra.mxu0 %v1328
    %1454 = vmatprep.subr.bf16.mxu0 0
    %1455 = vmatpush1.bf16.msra.mxu0 %v1327
    %1456 = vmatprep.subr.bf16.mxu0 0
    %1457 = vmatpush1.bf16.msra.mxu0 %v1326
    %1458 = vmatprep.subr.bf16.mxu0 0
    %1459 = vmatpush1.bf16.msra.mxu0 %v1325
    %1460 = vmatprep.subr.bf16.mxu0 0
    %1461 = vmatpush1.bf16.msra.mxu0 %v1324
    %1462 = vmatprep.subr.bf16.mxu0 0
    %1463 = vmatpush1.bf16.msra.mxu0 %v1323
    %1464 = vmatprep.subr.bf16.mxu0 0
    %1465 = vmatpush1.bf16.msra.mxu0 %v1322
    %1466 = vmatprep.subr.bf16.mxu0 0
    %1467 = vmatpush2.bf16.msra.mxu0 %v1337
    %1468 = vmatprep.subr.bf16.mxu0 0
    %1469 = vmatpush2.bf16.msra.mxu0 %v1336
    %1470 = vmatprep.subr.bf16.mxu0 0
    %1471 = vmatpush2.bf16.msra.mxu0 %v1335
    %1472 = vmatprep.subr.bf16.mxu0 0
    %1473 = vmatpush2.bf16.msra.mxu0 %v1334
    %1474 = vmatprep.subr.bf16.mxu0 0
    %1475 = vmatpush2.bf16.msra.mxu0 %v1333
    %1476 = vmatprep.subr.bf16.mxu0 0
    %1477 = vmatpush2.bf16.msra.mxu0 %v1332
    %1478 = vmatprep.subr.bf16.mxu0 0
    %1479 = vmatpush2.bf16.msra.mxu0 %v1331
    %1480 = vmatprep.subr.bf16.mxu0 0
    %1481 = vmatpush2.bf16.msra.mxu0 %v1330
    %1482 = vmatprep.mubr.bf16.mxu0 %v236
    %1483 = vmatmul.mubr.bf16.gmra.mxu0 %v235
    %v1484 = vpop.f32.mrf.mxu0
    %v1485 = vadd.f32 %v1064, %v1484
    %v1486 = vpop.f32.mrf.mxu0
    %v1487 = vpop.f32.mrf.mxu0
    %v1488 = vpop.f32.mrf.mxu0
    %1489 = vdwg.mxu0
    %1490 = vmatprep.subr.bf16.mxu0 0
    %1491 = vmatpush1.bf16.msra.mxu0 %v1345
    %1492 = vmatprep.subr.bf16.mxu0 0
    %1493 = vmatpush1.bf16.msra.mxu0 %v1344
    %1494 = vmatprep.subr.bf16.mxu0 0
    %1495 = vmatpush1.bf16.msra.mxu0 %v1343
    %1496 = vmatprep.subr.bf16.mxu0 0
    %1497 = vmatpush1.bf16.msra.mxu0 %v1342
    %1498 = vmatprep.subr.bf16.mxu0 0
    %1499 = vmatpush1.bf16.msra.mxu0 %v1341
    %1500 = vmatprep.subr.bf16.mxu0 0
    %1501 = vmatpush1.bf16.msra.mxu0 %v1340
    %1502 = vmatprep.subr.bf16.mxu0 0
    %1503 = vmatpush1.bf16.msra.mxu0 %v1339
    %1504 = vmatprep.subr.bf16.mxu0 0
    %1505 = vmatpush1.bf16.msra.mxu0 %v1338
    %1506 = vmatprep.subr.bf16.mxu0 0
    %1507 = vmatpush2.bf16.msra.mxu0 %v1353
    %1508 = vmatprep.subr.bf16.mxu0 0
    %1509 = vmatpush2.bf16.msra.mxu0 %v1352
    %1510 = vmatprep.subr.bf16.mxu0 0
    %1511 = vmatpush2.bf16.msra.mxu0 %v1351
    %1512 = vmatprep.subr.bf16.mxu0 0
    %1513 = vmatpush2.bf16.msra.mxu0 %v1350
    %1514 = vmatprep.subr.bf16.mxu0 0
    %1515 = vmatpush2.bf16.msra.mxu0 %v1349
    %1516 = vmatprep.subr.bf16.mxu0 0
    %1517 = vmatpush2.bf16.msra.mxu0 %v1348
    %1518 = vmatprep.subr.bf16.mxu0 0
    %1519 = vmatpush2.bf16.msra.mxu0 %v1347
    %1520 = vmatprep.subr.bf16.mxu0 0
    %1521 = vmatpush2.bf16.msra.mxu0 %v1346
    %1522 = vmatprep.mubr.bf16.mxu0 %v238
    %1523 = vmatmul.mubr.bf16.gmra.mxu0 %v237
    %v1524 = vpop.f32.mrf.mxu0
    %v1525 = vadd.f32 %v1485, %v1524
    %v1526 = vpop.f32.mrf.mxu0
    %v1527 = vpop.f32.mrf.mxu0
    %v1528 = vpop.f32.mrf.mxu0
    %1529 = vdwg.mxu0
    %1530 = vmatprep.subr.bf16.mxu0 0
    %1531 = vmatpush1.bf16.msra.mxu0 %v1361
    %1532 = vmatprep.subr.bf16.mxu0 0
    %1533 = vmatpush1.bf16.msra.mxu0 %v1360
    %1534 = vmatprep.subr.bf16.mxu0 0
    %1535 = vmatpush1.bf16.msra.mxu0 %v1359
    %1536 = vmatprep.subr.bf16.mxu0 0
    %1537 = vmatpush1.bf16.msra.mxu0 %v1358
    %1538 = vmatprep.subr.bf16.mxu0 0
    %1539 = vmatpush1.bf16.msra.mxu0 %v1357
    %1540 = vmatprep.subr.bf16.mxu0 0
    %1541 = vmatpush1.bf16.msra.mxu0 %v1356
    %1542 = vmatprep.subr.bf16.mxu0 0
    %1543 = vmatpush1.bf16.msra.mxu0 %v1355
    %1544 = vmatprep.subr.bf16.mxu0 0
    %1545 = vmatpush1.bf16.msra.mxu0 %v1354
    %1546 = vmatprep.subr.bf16.mxu0 0
    %1547 = vmatpush2.bf16.msra.mxu0 %v1369
    %1548 = vmatprep.subr.bf16.mxu0 0
    %1549 = vmatpush2.bf16.msra.mxu0 %v1368
    %1550 = vmatprep.subr.bf16.mxu0 0
    %1551 = vmatpush2.bf16.msra.mxu0 %v1367
    %1552 = vmatprep.subr.bf16.mxu0 0
    %1553 = vmatpush2.bf16.msra.mxu0 %v1366
    %1554 = vmatprep.subr.bf16.mxu0 0
    %1555 = vmatpush2.bf16.msra.mxu0 %v1365
    %1556 = vmatprep.subr.bf16.mxu0 0
    %1557 = vmatpush2.bf16.msra.mxu0 %v1364
    %1558 = vmatprep.subr.bf16.mxu0 0
    %1559 = vmatpush2.bf16.msra.mxu0 %v1363
    %1560 = vmatprep.subr.bf16.mxu0 0
    %1561 = vmatpush2.bf16.msra.mxu0 %v1362
    %1562 = vmatprep.mubr.bf16.mxu0 %v240
    %1563 = vmatmul.mubr.bf16.gmra.mxu0 %v239
    %v1564 = vpop.f32.mrf.mxu0
    %v1565 = vadd.f32 %v1525, %v1564
    %v1566 = vpop.f32.mrf.mxu0
    %v1567 = vpop.f32.mrf.mxu0
    %v1568 = vpop.f32.mrf.mxu0
    %1569 = vdwg.mxu0
    %1570 = vmatprep.subr.bf16.mxu0 0
    %1571 = vmatpush1.bf16.msra.mxu0 %v1377
    %1572 = vmatprep.subr.bf16.mxu0 0
    %1573 = vmatpush1.bf16.msra.mxu0 %v1376
    %1574 = vmatprep.subr.bf16.mxu0 0
    %1575 = vmatpush1.bf16.msra.mxu0 %v1375
    %1576 = vmatprep.subr.bf16.mxu0 0
    %1577 = vmatpush1.bf16.msra.mxu0 %v1374
    %1578 = vmatprep.subr.bf16.mxu0 0
    %1579 = vmatpush1.bf16.msra.mxu0 %v1373
    %1580 = vmatprep.subr.bf16.mxu0 0
    %1581 = vmatpush1.bf16.msra.mxu0 %v1372
    %1582 = vmatprep.subr.bf16.mxu0 0
    %1583 = vmatpush1.bf16.msra.mxu0 %v1371
    %1584 = vmatprep.subr.bf16.mxu0 0
    %1585 = vmatpush1.bf16.msra.mxu0 %v1370
    %1586 = vmatprep.subr.bf16.mxu0 0
    %1587 = vmatpush2.bf16.msra.mxu0 %v1385
    %1588 = vmatprep.subr.bf16.mxu0 0
    %1589 = vmatpush2.bf16.msra.mxu0 %v1384
    %1590 = vmatprep.subr.bf16.mxu0 0
    %1591 = vmatpush2.bf16.msra.mxu0 %v1383
    %1592 = vmatprep.subr.bf16.mxu0 0
    %1593 = vmatpush2.bf16.msra.mxu0 %v1382
    %1594 = vmatprep.subr.bf16.mxu0 0
    %1595 = vmatpush2.bf16.msra.mxu0 %v1381
    %1596 = vmatprep.subr.bf16.mxu0 0
    %1597 = vmatpush2.bf16.msra.mxu0 %v1380
    %1598 = vmatprep.subr.bf16.mxu0 0
    %1599 = vmatpush2.bf16.msra.mxu0 %v1379
    %1600 = vmatprep.subr.bf16.mxu0 0
    %1601 = vmatpush2.bf16.msra.mxu0 %v1378
    %1602 = vmatprep.mubr.bf16.mxu0 %v242
    %1603 = vmatmul.mubr.bf16.gmra.mxu0 %v241
    %v1604 = vpop.f32.mrf.mxu0
    %v1605 = vadd.f32 %v1565, %v1604
    %v1606 = vpop.f32.mrf.mxu0
    %v1607 = vpop.f32.mrf.mxu0
    %v1608 = vpop.f32.mrf.mxu0
    %1609 = vdwg.mxu0
    %v1610 = vlaneseq
    %v1611 = vshrl.u32 %v1610, 7
    %v1612 = vsub.s32 1, %v1611
    %v1613 = vrot.slane %v186, %v1612
    %v1614 = vadd.f32 %v1605, %v1613
    %1615 = vst.msk [vmem:[#allocation2 + $0x2] sm:$0x3] %vm927, %v1614
    %s1616 = scalar_lea.vmem %s1, 1024
    %v1617 = vld [vmem:[%s1616] sm:$0xf]
    %v1618 = vld [vmem:[%s1616 + $0x4] sm:$0xf]
    %v1619 = vld [vmem:[%s1616 + $0x8] sm:$0xf]
    %v1620 = vld [vmem:[%s1616 + $0xc] sm:$0xf]
    %v1621 = vld [vmem:[%s1616 + $0x10] sm:$0xf]
    %v1622 = vld [vmem:[%s1616 + $0x14] sm:$0xf]
    %v1623 = vld [vmem:[%s1616 + $0x18] sm:$0xf]
    %v1624 = vld [vmem:[%s1616 + $0x1c] sm:$0xf]
    %v1625 = vld [vmem:[%s1616 + $0x20] sm:$0xf]
    %v1626 = vld [vmem:[%s1616 + $0x24] sm:$0xf]
    %v1627 = vld [vmem:[%s1616 + $0x28] sm:$0xf]
    %v1628 = vld [vmem:[%s1616 + $0x2c] sm:$0xf]
    %v1629 = vld [vmem:[%s1616 + $0x30] sm:$0xf]
    %v1630 = vld [vmem:[%s1616 + $0x34] sm:$0xf]
    %v1631 = vld [vmem:[%s1616 + $0x38] sm:$0xf]
    %v1632 = vld [vmem:[%s1616 + $0x3c] sm:$0xf]
    %v1633 = vld [vmem:[%s1616 + $0x40] sm:$0xf]
    %v1634 = vld [vmem:[%s1616 + $0x44] sm:$0xf]
    %v1635 = vld [vmem:[%s1616 + $0x48] sm:$0xf]
    %v1636 = vld [vmem:[%s1616 + $0x4c] sm:$0xf]
    %v1637 = vld [vmem:[%s1616 + $0x50] sm:$0xf]
    %v1638 = vld [vmem:[%s1616 + $0x54] sm:$0xf]
    %v1639 = vld [vmem:[%s1616 + $0x58] sm:$0xf]
    %v1640 = vld [vmem:[%s1616 + $0x5c] sm:$0xf]
    %v1641 = vld [vmem:[%s1616 + $0x60] sm:$0xf]
    %v1642 = vld [vmem:[%s1616 + $0x64] sm:$0xf]
    %v1643 = vld [vmem:[%s1616 + $0x68] sm:$0xf]
    %v1644 = vld [vmem:[%s1616 + $0x6c] sm:$0xf]
    %v1645 = vld [vmem:[%s1616 + $0x70] sm:$0xf]
    %v1646 = vld [vmem:[%s1616 + $0x74] sm:$0xf]
    %v1647 = vld [vmem:[%s1616 + $0x78] sm:$0xf]
    %v1648 = vld [vmem:[%s1616 + $0x7c] sm:$0xf]
    %v1649 = vld [vmem:[%s1616 + $0x80] sm:$0xf]
    %v1650 = vld [vmem:[%s1616 + $0x84] sm:$0xf]
    %v1651 = vld [vmem:[%s1616 + $0x88] sm:$0xf]
    %v1652 = vld [vmem:[%s1616 + $0x8c] sm:$0xf]
    %v1653 = vld [vmem:[%s1616 + $0x90] sm:$0xf]
    %v1654 = vld [vmem:[%s1616 + $0x94] sm:$0xf]
    %v1655 = vld [vmem:[%s1616 + $0x98] sm:$0xf]
    %v1656 = vld [vmem:[%s1616 + $0x9c] sm:$0xf]
    %v1657 = vld [vmem:[%s1616 + $0xa0] sm:$0xf]
    %v1658 = vld [vmem:[%s1616 + $0xa4] sm:$0xf]
    %v1659 = vld [vmem:[%s1616 + $0xa8] sm:$0xf]
    %v1660 = vld [vmem:[%s1616 + $0xac] sm:$0xf]
    %v1661 = vld [vmem:[%s1616 + $0xb0] sm:$0xf]
    %v1662 = vld [vmem:[%s1616 + $0xb4] sm:$0xf]
    %v1663 = vld [vmem:[%s1616 + $0xb8] sm:$0xf]
    %v1664 = vld [vmem:[%s1616 + $0xbc] sm:$0xf]
    %v1665 = vld [vmem:[%s1616 + $0xc0] sm:$0xf]
    %v1666 = vld [vmem:[%s1616 + $0xc4] sm:$0xf]
    %v1667 = vld [vmem:[%s1616 + $0xc8] sm:$0xf]
    %v1668 = vld [vmem:[%s1616 + $0xcc] sm:$0xf]
    %v1669 = vld [vmem:[%s1616 + $0xd0] sm:$0xf]
    %v1670 = vld [vmem:[%s1616 + $0xd4] sm:$0xf]
    %v1671 = vld [vmem:[%s1616 + $0xd8] sm:$0xf]
    %v1672 = vld [vmem:[%s1616 + $0xdc] sm:$0xf]
    %v1673 = vld [vmem:[%s1616 + $0xe0] sm:$0xf]
    %v1674 = vld [vmem:[%s1616 + $0xe4] sm:$0xf]
    %v1675 = vld [vmem:[%s1616 + $0xe8] sm:$0xf]
    %v1676 = vld [vmem:[%s1616 + $0xec] sm:$0xf]
    %v1677 = vld [vmem:[%s1616 + $0xf0] sm:$0xf]
    %v1678 = vld [vmem:[%s1616 + $0xf4] sm:$0xf]
    %v1679 = vld [vmem:[%s1616 + $0xf8] sm:$0xf]
    %v1680 = vld [vmem:[%s1616 + $0xfc] sm:$0xf]
    %v1681 = vld [vmem:[%s1616 + $0x100] sm:$0xf]
    %v1682 = vld [vmem:[%s1616 + $0x104] sm:$0xf]
    %v1683 = vld [vmem:[%s1616 + $0x108] sm:$0xf]
    %v1684 = vld [vmem:[%s1616 + $0x10c] sm:$0xf]
    %v1685 = vld [vmem:[%s1616 + $0x110] sm:$0xf]
    %v1686 = vld [vmem:[%s1616 + $0x114] sm:$0xf]
    %v1687 = vld [vmem:[%s1616 + $0x118] sm:$0xf]
    %v1688 = vld [vmem:[%s1616 + $0x11c] sm:$0xf]
    %v1689 = vld [vmem:[%s1616 + $0x120] sm:$0xf]
    %v1690 = vld [vmem:[%s1616 + $0x124] sm:$0xf]
    %v1691 = vld [vmem:[%s1616 + $0x128] sm:$0xf]
    %v1692 = vld [vmem:[%s1616 + $0x12c] sm:$0xf]
    %v1693 = vld [vmem:[%s1616 + $0x130] sm:$0xf]
    %v1694 = vld [vmem:[%s1616 + $0x134] sm:$0xf]
    %v1695 = vld [vmem:[%s1616 + $0x138] sm:$0xf]
    %v1696 = vld [vmem:[%s1616 + $0x13c] sm:$0xf]
    %v1697 = vld [vmem:[%s1616 + $0x140] sm:$0xf]
    %v1698 = vld [vmem:[%s1616 + $0x144] sm:$0xf]
    %v1699 = vld [vmem:[%s1616 + $0x148] sm:$0xf]
    %v1700 = vld [vmem:[%s1616 + $0x14c] sm:$0xf]
    %v1701 = vld [vmem:[%s1616 + $0x150] sm:$0xf]
    %v1702 = vld [vmem:[%s1616 + $0x154] sm:$0xf]
    %v1703 = vld [vmem:[%s1616 + $0x158] sm:$0xf]
    %v1704 = vld [vmem:[%s1616 + $0x15c] sm:$0xf]
    %v1705 = vld [vmem:[%s1616 + $0x160] sm:$0xf]
    %v1706 = vld [vmem:[%s1616 + $0x164] sm:$0xf]
    %v1707 = vld [vmem:[%s1616 + $0x168] sm:$0xf]
    %v1708 = vld [vmem:[%s1616 + $0x16c] sm:$0xf]
    %v1709 = vld [vmem:[%s1616 + $0x170] sm:$0xf]
    %v1710 = vld [vmem:[%s1616 + $0x174] sm:$0xf]
    %v1711 = vld [vmem:[%s1616 + $0x178] sm:$0xf]
    %v1712 = vld [vmem:[%s1616 + $0x17c] sm:$0xf]
    %v1713 = vld [vmem:[%s1616 + $0x180] sm:$0xf]
    %v1714 = vld [vmem:[%s1616 + $0x184] sm:$0xf]
    %v1715 = vld [vmem:[%s1616 + $0x188] sm:$0xf]
    %v1716 = vld [vmem:[%s1616 + $0x18c] sm:$0xf]
    %v1717 = vld [vmem:[%s1616 + $0x190] sm:$0xf]
    %v1718 = vld [vmem:[%s1616 + $0x194] sm:$0xf]
    %v1719 = vld [vmem:[%s1616 + $0x198] sm:$0xf]
    %v1720 = vld [vmem:[%s1616 + $0x19c] sm:$0xf]
    %v1721 = vld [vmem:[%s1616 + $0x1a0] sm:$0xf]
    %v1722 = vld [vmem:[%s1616 + $0x1a4] sm:$0xf]
    %v1723 = vld [vmem:[%s1616 + $0x1a8] sm:$0xf]
    %v1724 = vld [vmem:[%s1616 + $0x1ac] sm:$0xf]
    %v1725 = vld [vmem:[%s1616 + $0x1b0] sm:$0xf]
    %v1726 = vld [vmem:[%s1616 + $0x1b4] sm:$0xf]
    %v1727 = vld [vmem:[%s1616 + $0x1b8] sm:$0xf]
    %v1728 = vld [vmem:[%s1616 + $0x1bc] sm:$0xf]
    %v1729 = vld [vmem:[%s1616 + $0x1c0] sm:$0xf]
    %v1730 = vld [vmem:[%s1616 + $0x1c4] sm:$0xf]
    %v1731 = vld [vmem:[%s1616 + $0x1c8] sm:$0xf]
    %v1732 = vld [vmem:[%s1616 + $0x1cc] sm:$0xf]
    %v1733 = vld [vmem:[%s1616 + $0x1d0] sm:$0xf]
    %v1734 = vld [vmem:[%s1616 + $0x1d4] sm:$0xf]
    %v1735 = vld [vmem:[%s1616 + $0x1d8] sm:$0xf]
    %v1736 = vld [vmem:[%s1616 + $0x1dc] sm:$0xf]
    %v1737 = vld [vmem:[%s1616 + $0x1e0] sm:$0xf]
    %v1738 = vld [vmem:[%s1616 + $0x1e4] sm:$0xf]
    %v1739 = vld [vmem:[%s1616 + $0x1e8] sm:$0xf]
    %v1740 = vld [vmem:[%s1616 + $0x1ec] sm:$0xf]
    %v1741 = vld [vmem:[%s1616 + $0x1f0] sm:$0xf]
    %v1742 = vld [vmem:[%s1616 + $0x1f4] sm:$0xf]
    %v1743 = vld [vmem:[%s1616 + $0x1f8] sm:$0xf]
    %v1744 = vld [vmem:[%s1616 + $0x1fc] sm:$0xf]
    %s1745 = scalar_lea.vmem %s2, 2
    %v1746 = vld [vmem:[%s1745] sm:$0x1]
    %v1748 = vlaneseq
    %v1749 = vshrl.u32 %v1748, 7
    %v1750 = vsub.s32 0, %v1749
    %v1751 = vrot.slane %v1746, %v1750
    %v1881 = vunpack.c.l.b16 %v1617
    %v1882 = vunpack.c.l.b16 %v1618
    %v1883 = vunpack.c.l.b16 %v1619
    %v1884 = vunpack.c.l.b16 %v1620
    %v1885 = vunpack.c.l.b16 %v1621
    %v1886 = vunpack.c.l.b16 %v1622
    %v1887 = vunpack.c.l.b16 %v1623
    %v1888 = vunpack.c.l.b16 %v1624
    %v1889 = vunpack.c.l.b16 %v1625
    %v1890 = vunpack.c.l.b16 %v1626
    %v1891 = vunpack.c.l.b16 %v1627
    %v1892 = vunpack.c.l.b16 %v1628
    %v1893 = vunpack.c.l.b16 %v1629
    %v1894 = vunpack.c.l.b16 %v1630
    %v1895 = vunpack.c.l.b16 %v1631
    %v1896 = vunpack.c.l.b16 %v1632
    %v1897 = vunpack.c.l.b16 %v1633
    %v1898 = vunpack.c.l.b16 %v1634
    %v1899 = vunpack.c.l.b16 %v1635
    %v1900 = vunpack.c.l.b16 %v1636
    %v1901 = vunpack.c.l.b16 %v1637
    %v1902 = vunpack.c.l.b16 %v1638
    %v1903 = vunpack.c.l.b16 %v1639
    %v1904 = vunpack.c.l.b16 %v1640
    %v1905 = vunpack.c.l.b16 %v1641
    %v1906 = vunpack.c.l.b16 %v1642
    %v1907 = vunpack.c.l.b16 %v1643
    %v1908 = vunpack.c.l.b16 %v1644
    %v1909 = vunpack.c.l.b16 %v1645
    %v1910 = vunpack.c.l.b16 %v1646
    %v1911 = vunpack.c.l.b16 %v1647
    %v1912 = vunpack.c.l.b16 %v1648
    %v1913 = vunpack.c.l.b16 %v1649
    %v1914 = vunpack.c.l.b16 %v1650
    %v1915 = vunpack.c.l.b16 %v1651
    %v1916 = vunpack.c.l.b16 %v1652
    %v1917 = vunpack.c.l.b16 %v1653
    %v1918 = vunpack.c.l.b16 %v1654
    %v1919 = vunpack.c.l.b16 %v1655
    %v1920 = vunpack.c.l.b16 %v1656
    %v1921 = vunpack.c.l.b16 %v1657
    %v1922 = vunpack.c.l.b16 %v1658
    %v1923 = vunpack.c.l.b16 %v1659
    %v1924 = vunpack.c.l.b16 %v1660
    %v1925 = vunpack.c.l.b16 %v1661
    %v1926 = vunpack.c.l.b16 %v1662
    %v1927 = vunpack.c.l.b16 %v1663
    %v1928 = vunpack.c.l.b16 %v1664
    %v1929 = vunpack.c.l.b16 %v1665
    %v1930 = vunpack.c.l.b16 %v1666
    %v1931 = vunpack.c.l.b16 %v1667
    %v1932 = vunpack.c.l.b16 %v1668
    %v1933 = vunpack.c.l.b16 %v1669
    %v1934 = vunpack.c.l.b16 %v1670
    %v1935 = vunpack.c.l.b16 %v1671
    %v1936 = vunpack.c.l.b16 %v1672
    %v1937 = vunpack.c.l.b16 %v1673
    %v1938 = vunpack.c.l.b16 %v1674
    %v1939 = vunpack.c.l.b16 %v1675
    %v1940 = vunpack.c.l.b16 %v1676
    %v1941 = vunpack.c.l.b16 %v1677
    %v1942 = vunpack.c.l.b16 %v1678
    %v1943 = vunpack.c.l.b16 %v1679
    %v1944 = vunpack.c.l.b16 %v1680
    %v1945 = vunpack.c.l.b16 %v1681
    %v1946 = vunpack.c.l.b16 %v1682
    %v1947 = vunpack.c.l.b16 %v1683
    %v1948 = vunpack.c.l.b16 %v1684
    %v1949 = vunpack.c.l.b16 %v1685
    %v1950 = vunpack.c.l.b16 %v1686
    %v1951 = vunpack.c.l.b16 %v1687
    %v1952 = vunpack.c.l.b16 %v1688
    %v1953 = vunpack.c.l.b16 %v1689
    %v1954 = vunpack.c.l.b16 %v1690
    %v1955 = vunpack.c.l.b16 %v1691
    %v1956 = vunpack.c.l.b16 %v1692
    %v1957 = vunpack.c.l.b16 %v1693
    %v1958 = vunpack.c.l.b16 %v1694
    %v1959 = vunpack.c.l.b16 %v1695
    %v1960 = vunpack.c.l.b16 %v1696
    %v1961 = vunpack.c.l.b16 %v1697
    %v1962 = vunpack.c.l.b16 %v1698
    %v1963 = vunpack.c.l.b16 %v1699
    %v1964 = vunpack.c.l.b16 %v1700
    %v1965 = vunpack.c.l.b16 %v1701
    %v1966 = vunpack.c.l.b16 %v1702
    %v1967 = vunpack.c.l.b16 %v1703
    %v1968 = vunpack.c.l.b16 %v1704
    %v1969 = vunpack.c.l.b16 %v1705
    %v1970 = vunpack.c.l.b16 %v1706
    %v1971 = vunpack.c.l.b16 %v1707
    %v1972 = vunpack.c.l.b16 %v1708
    %v1973 = vunpack.c.l.b16 %v1709
    %v1974 = vunpack.c.l.b16 %v1710
    %v1975 = vunpack.c.l.b16 %v1711
    %v1976 = vunpack.c.l.b16 %v1712
    %v1977 = vunpack.c.l.b16 %v1713
    %v1978 = vunpack.c.l.b16 %v1714
    %v1979 = vunpack.c.l.b16 %v1715
    %v1980 = vunpack.c.l.b16 %v1716
    %v1981 = vunpack.c.l.b16 %v1717
    %v1982 = vunpack.c.l.b16 %v1718
    %v1983 = vunpack.c.l.b16 %v1719
    %v1984 = vunpack.c.l.b16 %v1720
    %v1985 = vunpack.c.l.b16 %v1721
    %v1986 = vunpack.c.l.b16 %v1722
    %v1987 = vunpack.c.l.b16 %v1723
    %v1988 = vunpack.c.l.b16 %v1724
    %v1989 = vunpack.c.l.b16 %v1725
    %v1990 = vunpack.c.l.b16 %v1726
    %v1991 = vunpack.c.l.b16 %v1727
    %v1992 = vunpack.c.l.b16 %v1728
    %v1993 = vunpack.c.l.b16 %v1729
    %v1994 = vunpack.c.l.b16 %v1730
    %v1995 = vunpack.c.l.b16 %v1731
    %v1996 = vunpack.c.l.b16 %v1732
    %v1997 = vunpack.c.l.b16 %v1733
    %v1998 = vunpack.c.l.b16 %v1734
    %v1999 = vunpack.c.l.b16 %v1735
    %v2000 = vunpack.c.l.b16 %v1736
    %v2001 = vunpack.c.l.b16 %v1737
    %v2002 = vunpack.c.l.b16 %v1738
    %v2003 = vunpack.c.l.b16 %v1739
    %v2004 = vunpack.c.l.b16 %v1740
    %v2005 = vunpack.c.l.b16 %v1741
    %v2006 = vunpack.c.l.b16 %v1742
    %v2007 = vunpack.c.l.b16 %v1743
    %v2008 = vunpack.c.l.b16 %v1744
    %v2009 = vpack.c.b16 %v1882, %v1881
    %v2010 = vpack.c.b16 %v1884, %v1883
    %v2011 = vpack.c.b16 %v1886, %v1885
    %v2012 = vpack.c.b16 %v1888, %v1887
    %v2013 = vpack.c.b16 %v1890, %v1889
    %v2014 = vpack.c.b16 %v1892, %v1891
    %v2015 = vpack.c.b16 %v1894, %v1893
    %v2016 = vpack.c.b16 %v1896, %v1895
    %v2017 = vpack.c.b16 %v1898, %v1897
    %v2018 = vpack.c.b16 %v1900, %v1899
    %v2019 = vpack.c.b16 %v1902, %v1901
    %v2020 = vpack.c.b16 %v1904, %v1903
    %v2021 = vpack.c.b16 %v1906, %v1905
    %v2022 = vpack.c.b16 %v1908, %v1907
    %v2023 = vpack.c.b16 %v1910, %v1909
    %v2024 = vpack.c.b16 %v1912, %v1911
    %v2025 = vpack.c.b16 %v1914, %v1913
    %v2026 = vpack.c.b16 %v1916, %v1915
    %v2027 = vpack.c.b16 %v1918, %v1917
    %v2028 = vpack.c.b16 %v1920, %v1919
    %v2029 = vpack.c.b16 %v1922, %v1921
    %v2030 = vpack.c.b16 %v1924, %v1923
    %v2031 = vpack.c.b16 %v1926, %v1925
    %v2032 = vpack.c.b16 %v1928, %v1927
    %v2033 = vpack.c.b16 %v1930, %v1929
    %v2034 = vpack.c.b16 %v1932, %v1931
    %v2035 = vpack.c.b16 %v1934, %v1933
    %v2036 = vpack.c.b16 %v1936, %v1935
    %v2037 = vpack.c.b16 %v1938, %v1937
    %v2038 = vpack.c.b16 %v1940, %v1939
    %v2039 = vpack.c.b16 %v1942, %v1941
    %v2040 = vpack.c.b16 %v1944, %v1943
    %v2041 = vpack.c.b16 %v1946, %v1945
    %v2042 = vpack.c.b16 %v1948, %v1947
    %v2043 = vpack.c.b16 %v1950, %v1949
    %v2044 = vpack.c.b16 %v1952, %v1951
    %v2045 = vpack.c.b16 %v1954, %v1953
    %v2046 = vpack.c.b16 %v1956, %v1955
    %v2047 = vpack.c.b16 %v1958, %v1957
    %v2048 = vpack.c.b16 %v1960, %v1959
    %v2049 = vpack.c.b16 %v1962, %v1961
    %v2050 = vpack.c.b16 %v1964, %v1963
    %v2051 = vpack.c.b16 %v1966, %v1965
    %v2052 = vpack.c.b16 %v1968, %v1967
    %v2053 = vpack.c.b16 %v1970, %v1969
    %v2054 = vpack.c.b16 %v1972, %v1971
    %v2055 = vpack.c.b16 %v1974, %v1973
    %v2056 = vpack.c.b16 %v1976, %v1975
    %v2057 = vpack.c.b16 %v1978, %v1977
    %v2058 = vpack.c.b16 %v1980, %v1979
    %v2059 = vpack.c.b16 %v1982, %v1981
    %v2060 = vpack.c.b16 %v1984, %v1983
    %v2061 = vpack.c.b16 %v1986, %v1985
    %v2062 = vpack.c.b16 %v1988, %v1987
    %v2063 = vpack.c.b16 %v1990, %v1989
    %v2064 = vpack.c.b16 %v1992, %v1991
    %v2065 = vpack.c.b16 %v1994, %v1993
    %v2066 = vpack.c.b16 %v1996, %v1995
    %v2067 = vpack.c.b16 %v1998, %v1997
    %v2068 = vpack.c.b16 %v2000, %v1999
    %v2069 = vpack.c.b16 %v2002, %v2001
    %v2070 = vpack.c.b16 %v2004, %v2003
    %v2071 = vpack.c.b16 %v2006, %v2005
    %v2072 = vpack.c.b16 %v2008, %v2007
    %2137 = vmatprep.subr.bf16.mxu0 0
    %2138 = vmatpush1.bf16.msra.mxu0 %v2016
    %2139 = vmatprep.subr.bf16.mxu0 0
    %2140 = vmatpush1.bf16.msra.mxu0 %v2015
    %2141 = vmatprep.subr.bf16.mxu0 0
    %2142 = vmatpush1.bf16.msra.mxu0 %v2014
    %2143 = vmatprep.subr.bf16.mxu0 0
    %2144 = vmatpush1.bf16.msra.mxu0 %v2013
    %2145 = vmatprep.subr.bf16.mxu0 0
    %2146 = vmatpush1.bf16.msra.mxu0 %v2012
    %2147 = vmatprep.subr.bf16.mxu0 0
    %2148 = vmatpush1.bf16.msra.mxu0 %v2011
    %2149 = vmatprep.subr.bf16.mxu0 0
    %2150 = vmatpush1.bf16.msra.mxu0 %v2010
    %2151 = vmatprep.subr.bf16.mxu0 0
    %2152 = vmatpush1.bf16.msra.mxu0 %v2009
    %2153 = vmatprep.subr.bf16.mxu0 0
    %2154 = vmatpush2.bf16.msra.mxu0 %v2024
    %2155 = vmatprep.subr.bf16.mxu0 0
    %2156 = vmatpush2.bf16.msra.mxu0 %v2023
    %2157 = vmatprep.subr.bf16.mxu0 0
    %2158 = vmatpush2.bf16.msra.mxu0 %v2022
    %2159 = vmatprep.subr.bf16.mxu0 0
    %2160 = vmatpush2.bf16.msra.mxu0 %v2021
    %2161 = vmatprep.subr.bf16.mxu0 0
    %2162 = vmatpush2.bf16.msra.mxu0 %v2020
    %2163 = vmatprep.subr.bf16.mxu0 0
    %2164 = vmatpush2.bf16.msra.mxu0 %v2019
    %2165 = vmatprep.subr.bf16.mxu0 0
    %2166 = vmatpush2.bf16.msra.mxu0 %v2018
    %2167 = vmatprep.subr.bf16.mxu0 0
    %2168 = vmatpush2.bf16.msra.mxu0 %v2017
    %2169 = vmatprep.mubr.bf16.mxu0 %v236
    %2170 = vmatmul.mubr.bf16.gmra.mxu0 %v235
    %v2171 = vpop.f32.mrf.mxu0
    %v2172 = vadd.f32 %v1751, %v2171
    %v2173 = vpop.f32.mrf.mxu0
    %v2174 = vpop.f32.mrf.mxu0
    %v2175 = vpop.f32.mrf.mxu0
    %2176 = vdwg.mxu0
    %2177 = vmatprep.subr.bf16.mxu0 0
    %2178 = vmatpush1.bf16.msra.mxu0 %v2032
    %2179 = vmatprep.subr.bf16.mxu0 0
    %2180 = vmatpush1.bf16.msra.mxu0 %v2031
    %2181 = vmatprep.subr.bf16.mxu0 0
    %2182 = vmatpush1.bf16.msra.mxu0 %v2030
    %2183 = vmatprep.subr.bf16.mxu0 0
    %2184 = vmatpush1.bf16.msra.mxu0 %v2029
    %2185 = vmatprep.subr.bf16.mxu0 0
    %2186 = vmatpush1.bf16.msra.mxu0 %v2028
    %2187 = vmatprep.subr.bf16.mxu0 0
    %2188 = vmatpush1.bf16.msra.mxu0 %v2027
    %2189 = vmatprep.subr.bf16.mxu0 0
    %2190 = vmatpush1.bf16.msra.mxu0 %v2026
    %2191 = vmatprep.subr.bf16.mxu0 0
    %2192 = vmatpush1.bf16.msra.mxu0 %v2025
    %2193 = vmatprep.subr.bf16.mxu0 0
    %2194 = vmatpush2.bf16.msra.mxu0 %v2040
    %2195 = vmatprep.subr.bf16.mxu0 0
    %2196 = vmatpush2.bf16.msra.mxu0 %v2039
    %2197 = vmatprep.subr.bf16.mxu0 0
    %2198 = vmatpush2.bf16.msra.mxu0 %v2038
    %2199 = vmatprep.subr.bf16.mxu0 0
    %2200 = vmatpush2.bf16.msra.mxu0 %v2037
    %2201 = vmatprep.subr.bf16.mxu0 0
    %2202 = vmatpush2.bf16.msra.mxu0 %v2036
    %2203 = vmatprep.subr.bf16.mxu0 0
    %2204 = vmatpush2.bf16.msra.mxu0 %v2035
    %2205 = vmatprep.subr.bf16.mxu0 0
    %2206 = vmatpush2.bf16.msra.mxu0 %v2034
    %2207 = vmatprep.subr.bf16.mxu0 0
    %2208 = vmatpush2.bf16.msra.mxu0 %v2033
    %2209 = vmatprep.mubr.bf16.mxu0 %v238
    %2210 = vmatmul.mubr.bf16.gmra.mxu0 %v237
    %v2211 = vpop.f32.mrf.mxu0
    %v2212 = vadd.f32 %v2172, %v2211
    %v2213 = vpop.f32.mrf.mxu0
    %v2214 = vpop.f32.mrf.mxu0
    %v2215 = vpop.f32.mrf.mxu0
    %2216 = vdwg.mxu0
    %2217 = vmatprep.subr.bf16.mxu0 0
    %2218 = vmatpush1.bf16.msra.mxu0 %v2048
    %2219 = vmatprep.subr.bf16.mxu0 0
    %2220 = vmatpush1.bf16.msra.mxu0 %v2047
    %2221 = vmatprep.subr.bf16.mxu0 0
    %2222 = vmatpush1.bf16.msra.mxu0 %v2046
    %2223 = vmatprep.subr.bf16.mxu0 0
    %2224 = vmatpush1.bf16.msra.mxu0 %v2045
    %2225 = vmatprep.subr.bf16.mxu0 0
    %2226 = vmatpush1.bf16.msra.mxu0 %v2044
    %2227 = vmatprep.subr.bf16.mxu0 0
    %2228 = vmatpush1.bf16.msra.mxu0 %v2043
    %2229 = vmatprep.subr.bf16.mxu0 0
    %2230 = vmatpush1.bf16.msra.mxu0 %v2042
    %2231 = vmatprep.subr.bf16.mxu0 0
    %2232 = vmatpush1.bf16.msra.mxu0 %v2041
    %2233 = vmatprep.subr.bf16.mxu0 0
    %2234 = vmatpush2.bf16.msra.mxu0 %v2056
    %2235 = vmatprep.subr.bf16.mxu0 0
    %2236 = vmatpush2.bf16.msra.mxu0 %v2055
    %2237 = vmatprep.subr.bf16.mxu0 0
    %2238 = vmatpush2.bf16.msra.mxu0 %v2054
    %2239 = vmatprep.subr.bf16.mxu0 0
    %2240 = vmatpush2.bf16.msra.mxu0 %v2053
    %2241 = vmatprep.subr.bf16.mxu0 0
    %2242 = vmatpush2.bf16.msra.mxu0 %v2052
    %2243 = vmatprep.subr.bf16.mxu0 0
    %2244 = vmatpush2.bf16.msra.mxu0 %v2051
    %2245 = vmatprep.subr.bf16.mxu0 0
    %2246 = vmatpush2.bf16.msra.mxu0 %v2050
    %2247 = vmatprep.subr.bf16.mxu0 0
    %2248 = vmatpush2.bf16.msra.mxu0 %v2049
    %2249 = vmatprep.mubr.bf16.mxu0 %v240
    %2250 = vmatmul.mubr.bf16.gmra.mxu0 %v239
    %v2251 = vpop.f32.mrf.mxu0
    %v2252 = vadd.f32 %v2212, %v2251
    %v2253 = vpop.f32.mrf.mxu0
    %v2254 = vpop.f32.mrf.mxu0
    %v2255 = vpop.f32.mrf.mxu0
    %2256 = vdwg.mxu0
    %2257 = vmatprep.subr.bf16.mxu0 0
    %2258 = vmatpush1.bf16.msra.mxu0 %v2064
    %2259 = vmatprep.subr.bf16.mxu0 0
    %2260 = vmatpush1.bf16.msra.mxu0 %v2063
    %2261 = vmatprep.subr.bf16.mxu0 0
    %2262 = vmatpush1.bf16.msra.mxu0 %v2062
    %2263 = vmatprep.subr.bf16.mxu0 0
    %2264 = vmatpush1.bf16.msra.mxu0 %v2061
    %2265 = vmatprep.subr.bf16.mxu0 0
    %2266 = vmatpush1.bf16.msra.mxu0 %v2060
    %2267 = vmatprep.subr.bf16.mxu0 0
    %2268 = vmatpush1.bf16.msra.mxu0 %v2059
    %2269 = vmatprep.subr.bf16.mxu0 0
    %2270 = vmatpush1.bf16.msra.mxu0 %v2058
    %2271 = vmatprep.subr.bf16.mxu0 0
    %2272 = vmatpush1.bf16.msra.mxu0 %v2057
    %2273 = vmatprep.subr.bf16.mxu0 0
    %2274 = vmatpush2.bf16.msra.mxu0 %v2072
    %2275 = vmatprep.subr.bf16.mxu0 0
    %2276 = vmatpush2.bf16.msra.mxu0 %v2071
    %2277 = vmatprep.subr.bf16.mxu0 0
    %2278 = vmatpush2.bf16.msra.mxu0 %v2070
    %2279 = vmatprep.subr.bf16.mxu0 0
    %2280 = vmatpush2.bf16.msra.mxu0 %v2069
    %2281 = vmatprep.subr.bf16.mxu0 0
    %2282 = vmatpush2.bf16.msra.mxu0 %v2068
    %2283 = vmatprep.subr.bf16.mxu0 0
    %2284 = vmatpush2.bf16.msra.mxu0 %v2067
    %2285 = vmatprep.subr.bf16.mxu0 0
    %2286 = vmatpush2.bf16.msra.mxu0 %v2066
    %2287 = vmatprep.subr.bf16.mxu0 0
    %2288 = vmatpush2.bf16.msra.mxu0 %v2065
    %2289 = vmatprep.mubr.bf16.mxu0 %v242
    %2290 = vmatmul.mubr.bf16.gmra.mxu0 %v241
    %v2291 = vpop.f32.mrf.mxu0
    %v2292 = vadd.f32 %v2252, %v2291
    %v2293 = vpop.f32.mrf.mxu0
    %v2294 = vpop.f32.mrf.mxu0
    %v2295 = vpop.f32.mrf.mxu0
    %2296 = vdwg.mxu0
    %v2297 = vlaneseq
    %v2298 = vshrl.u32 %v2297, 7
    %v2299 = vsub.s32 2, %v2298
    %v2300 = vrot.slane %v186, %v2299
    %v2301 = vadd.f32 %v2292, %v2300
    %2302 = vst.msk [vmem:[#allocation2 + $0x4] sm:$0x3] %vm927, %v2301
    %s2303 = scalar_lea.vmem %s1, 1536
    %v2304 = vld [vmem:[%s2303] sm:$0xf]
    %v2305 = vld [vmem:[%s2303 + $0x4] sm:$0xf]
    %v2306 = vld [vmem:[%s2303 + $0x8] sm:$0xf]
    %v2307 = vld [vmem:[%s2303 + $0xc] sm:$0xf]
    %v2308 = vld [vmem:[%s2303 + $0x10] sm:$0xf]
    %v2309 = vld [vmem:[%s2303 + $0x14] sm:$0xf]
    %v2310 = vld [vmem:[%s2303 + $0x18] sm:$0xf]
    %v2311 = vld [vmem:[%s2303 + $0x1c] sm:$0xf]
    %v2312 = vld [vmem:[%s2303 + $0x20] sm:$0xf]
    %v2313 = vld [vmem:[%s2303 + $0x24] sm:$0xf]
    %v2314 = vld [vmem:[%s2303 + $0x28] sm:$0xf]
    %v2315 = vld [vmem:[%s2303 + $0x2c] sm:$0xf]
    %v2316 = vld [vmem:[%s2303 + $0x30] sm:$0xf]
    %v2317 = vld [vmem:[%s2303 + $0x34] sm:$0xf]
    %v2318 = vld [vmem:[%s2303 + $0x38] sm:$0xf]
    %v2319 = vld [vmem:[%s2303 + $0x3c] sm:$0xf]
    %v2320 = vld [vmem:[%s2303 + $0x40] sm:$0xf]
    %v2321 = vld [vmem:[%s2303 + $0x44] sm:$0xf]
    %v2322 = vld [vmem:[%s2303 + $0x48] sm:$0xf]
    %v2323 = vld [vmem:[%s2303 + $0x4c] sm:$0xf]
    %v2324 = vld [vmem:[%s2303 + $0x50] sm:$0xf]
    %v2325 = vld [vmem:[%s2303 + $0x54] sm:$0xf]
    %v2326 = vld [vmem:[%s2303 + $0x58] sm:$0xf]
    %v2327 = vld [vmem:[%s2303 + $0x5c] sm:$0xf]
    %v2328 = vld [vmem:[%s2303 + $0x60] sm:$0xf]
    %v2329 = vld [vmem:[%s2303 + $0x64] sm:$0xf]
    %v2330 = vld [vmem:[%s2303 + $0x68] sm:$0xf]
    %v2331 = vld [vmem:[%s2303 + $0x6c] sm:$0xf]
    %v2332 = vld [vmem:[%s2303 + $0x70] sm:$0xf]
    %v2333 = vld [vmem:[%s2303 + $0x74] sm:$0xf]
    %v2334 = vld [vmem:[%s2303 + $0x78] sm:$0xf]
    %v2335 = vld [vmem:[%s2303 + $0x7c] sm:$0xf]
    %v2336 = vld [vmem:[%s2303 + $0x80] sm:$0xf]
    %v2337 = vld [vmem:[%s2303 + $0x84] sm:$0xf]
    %v2338 = vld [vmem:[%s2303 + $0x88] sm:$0xf]
    %v2339 = vld [vmem:[%s2303 + $0x8c] sm:$0xf]
    %v2340 = vld [vmem:[%s2303 + $0x90] sm:$0xf]
    %v2341 = vld [vmem:[%s2303 + $0x94] sm:$0xf]
    %v2342 = vld [vmem:[%s2303 + $0x98] sm:$0xf]
    %v2343 = vld [vmem:[%s2303 + $0x9c] sm:$0xf]
    %v2344 = vld [vmem:[%s2303 + $0xa0] sm:$0xf]
    %v2345 = vld [vmem:[%s2303 + $0xa4] sm:$0xf]
    %v2346 = vld [vmem:[%s2303 + $0xa8] sm:$0xf]
    %v2347 = vld [vmem:[%s2303 + $0xac] sm:$0xf]
    %v2348 = vld [vmem:[%s2303 + $0xb0] sm:$0xf]
    %v2349 = vld [vmem:[%s2303 + $0xb4] sm:$0xf]
    %v2350 = vld [vmem:[%s2303 + $0xb8] sm:$0xf]
    %v2351 = vld [vmem:[%s2303 + $0xbc] sm:$0xf]
    %v2352 = vld [vmem:[%s2303 + $0xc0] sm:$0xf]
    %v2353 = vld [vmem:[%s2303 + $0xc4] sm:$0xf]
    %v2354 = vld [vmem:[%s2303 + $0xc8] sm:$0xf]
    %v2355 = vld [vmem:[%s2303 + $0xcc] sm:$0xf]
    %v2356 = vld [vmem:[%s2303 + $0xd0] sm:$0xf]
    %v2357 = vld [vmem:[%s2303 + $0xd4] sm:$0xf]
    %v2358 = vld [vmem:[%s2303 + $0xd8] sm:$0xf]
    %v2359 = vld [vmem:[%s2303 + $0xdc] sm:$0xf]
    %v2360 = vld [vmem:[%s2303 + $0xe0] sm:$0xf]
    %v2361 = vld [vmem:[%s2303 + $0xe4] sm:$0xf]
    %v2362 = vld [vmem:[%s2303 + $0xe8] sm:$0xf]
    %v2363 = vld [vmem:[%s2303 + $0xec] sm:$0xf]
    %v2364 = vld [vmem:[%s2303 + $0xf0] sm:$0xf]
    %v2365 = vld [vmem:[%s2303 + $0xf4] sm:$0xf]
    %v2366 = vld [vmem:[%s2303 + $0xf8] sm:$0xf]
    %v2367 = vld [vmem:[%s2303 + $0xfc] sm:$0xf]
    %v2368 = vld [vmem:[%s2303 + $0x100] sm:$0xf]
    %v2369 = vld [vmem:[%s2303 + $0x104] sm:$0xf]
    %v2370 = vld [vmem:[%s2303 + $0x108] sm:$0xf]
    %v2371 = vld [vmem:[%s2303 + $0x10c] sm:$0xf]
    %v2372 = vld [vmem:[%s2303 + $0x110] sm:$0xf]
    %v2373 = vld [vmem:[%s2303 + $0x114] sm:$0xf]
    %v2374 = vld [vmem:[%s2303 + $0x118] sm:$0xf]
    %v2375 = vld [vmem:[%s2303 + $0x11c] sm:$0xf]
    %v2376 = vld [vmem:[%s2303 + $0x120] sm:$0xf]
    %v2377 = vld [vmem:[%s2303 + $0x124] sm:$0xf]
    %v2378 = vld [vmem:[%s2303 + $0x128] sm:$0xf]
    %v2379 = vld [vmem:[%s2303 + $0x12c] sm:$0xf]
    %v2380 = vld [vmem:[%s2303 + $0x130] sm:$0xf]
    %v2381 = vld [vmem:[%s2303 + $0x134] sm:$0xf]
    %v2382 = vld [vmem:[%s2303 + $0x138] sm:$0xf]
    %v2383 = vld [vmem:[%s2303 + $0x13c] sm:$0xf]
    %v2384 = vld [vmem:[%s2303 + $0x140] sm:$0xf]
    %v2385 = vld [vmem:[%s2303 + $0x144] sm:$0xf]
    %v2386 = vld [vmem:[%s2303 + $0x148] sm:$0xf]
    %v2387 = vld [vmem:[%s2303 + $0x14c] sm:$0xf]
    %v2388 = vld [vmem:[%s2303 + $0x150] sm:$0xf]
    %v2389 = vld [vmem:[%s2303 + $0x154] sm:$0xf]
    %v2390 = vld [vmem:[%s2303 + $0x158] sm:$0xf]
    %v2391 = vld [vmem:[%s2303 + $0x15c] sm:$0xf]
    %v2392 = vld [vmem:[%s2303 + $0x160] sm:$0xf]
    %v2393 = vld [vmem:[%s2303 + $0x164] sm:$0xf]
    %v2394 = vld [vmem:[%s2303 + $0x168] sm:$0xf]
    %v2395 = vld [vmem:[%s2303 + $0x16c] sm:$0xf]
    %v2396 = vld [vmem:[%s2303 + $0x170] sm:$0xf]
    %v2397 = vld [vmem:[%s2303 + $0x174] sm:$0xf]
    %v2398 = vld [vmem:[%s2303 + $0x178] sm:$0xf]
    %v2399 = vld [vmem:[%s2303 + $0x17c] sm:$0xf]
    %v2400 = vld [vmem:[%s2303 + $0x180] sm:$0xf]
    %v2401 = vld [vmem:[%s2303 + $0x184] sm:$0xf]
    %v2402 = vld [vmem:[%s2303 + $0x188] sm:$0xf]
    %v2403 = vld [vmem:[%s2303 + $0x18c] sm:$0xf]
    %v2404 = vld [vmem:[%s2303 + $0x190] sm:$0xf]
    %v2405 = vld [vmem:[%s2303 + $0x194] sm:$0xf]
    %v2406 = vld [vmem:[%s2303 + $0x198] sm:$0xf]
    %v2407 = vld [vmem:[%s2303 + $0x19c] sm:$0xf]
    %v2408 = vld [vmem:[%s2303 + $0x1a0] sm:$0xf]
    %v2409 = vld [vmem:[%s2303 + $0x1a4] sm:$0xf]
    %v2410 = vld [vmem:[%s2303 + $0x1a8] sm:$0xf]
    %v2411 = vld [vmem:[%s2303 + $0x1ac] sm:$0xf]
    %v2412 = vld [vmem:[%s2303 + $0x1b0] sm:$0xf]
    %v2413 = vld [vmem:[%s2303 + $0x1b4] sm:$0xf]
    %v2414 = vld [vmem:[%s2303 + $0x1b8] sm:$0xf]
    %v2415 = vld [vmem:[%s2303 + $0x1bc] sm:$0xf]
    %v2416 = vld [vmem:[%s2303 + $0x1c0] sm:$0xf]
    %v2417 = vld [vmem:[%s2303 + $0x1c4] sm:$0xf]
    %v2418 = vld [vmem:[%s2303 + $0x1c8] sm:$0xf]
    %v2419 = vld [vmem:[%s2303 + $0x1cc] sm:$0xf]
    %v2420 = vld [vmem:[%s2303 + $0x1d0] sm:$0xf]
    %v2421 = vld [vmem:[%s2303 + $0x1d4] sm:$0xf]
    %v2422 = vld [vmem:[%s2303 + $0x1d8] sm:$0xf]
    %v2423 = vld [vmem:[%s2303 + $0x1dc] sm:$0xf]
    %v2424 = vld [vmem:[%s2303 + $0x1e0] sm:$0xf]
    %v2425 = vld [vmem:[%s2303 + $0x1e4] sm:$0xf]
    %v2426 = vld [vmem:[%s2303 + $0x1e8] sm:$0xf]
    %v2427 = vld [vmem:[%s2303 + $0x1ec] sm:$0xf]
    %v2428 = vld [vmem:[%s2303 + $0x1f0] sm:$0xf]
    %v2429 = vld [vmem:[%s2303 + $0x1f4] sm:$0xf]
    %v2430 = vld [vmem:[%s2303 + $0x1f8] sm:$0xf]
    %v2431 = vld [vmem:[%s2303 + $0x1fc] sm:$0xf]
    %s2432 = scalar_lea.vmem %s2, 3
    %v2433 = vld [vmem:[%s2432] sm:$0x1]
    %v2435 = vlaneseq
    %v2436 = vshrl.u32 %v2435, 7
    %v2437 = vsub.s32 0, %v2436
    %v2438 = vrot.slane %v2433, %v2437
    %v2568 = vunpack.c.l.b16 %v2304
    %v2569 = vunpack.c.l.b16 %v2305
    %v2570 = vunpack.c.l.b16 %v2306
    %v2571 = vunpack.c.l.b16 %v2307
    %v2572 = vunpack.c.l.b16 %v2308
    %v2573 = vunpack.c.l.b16 %v2309
    %v2574 = vunpack.c.l.b16 %v2310
    %v2575 = vunpack.c.l.b16 %v2311
    %v2576 = vunpack.c.l.b16 %v2312
    %v2577 = vunpack.c.l.b16 %v2313
    %v2578 = vunpack.c.l.b16 %v2314
    %v2579 = vunpack.c.l.b16 %v2315
    %v2580 = vunpack.c.l.b16 %v2316
    %v2581 = vunpack.c.l.b16 %v2317
    %v2582 = vunpack.c.l.b16 %v2318
    %v2583 = vunpack.c.l.b16 %v2319
    %v2584 = vunpack.c.l.b16 %v2320
    %v2585 = vunpack.c.l.b16 %v2321
    %v2586 = vunpack.c.l.b16 %v2322
    %v2587 = vunpack.c.l.b16 %v2323
    %v2588 = vunpack.c.l.b16 %v2324
    %v2589 = vunpack.c.l.b16 %v2325
    %v2590 = vunpack.c.l.b16 %v2326
    %v2591 = vunpack.c.l.b16 %v2327
    %v2592 = vunpack.c.l.b16 %v2328
    %v2593 = vunpack.c.l.b16 %v2329
    %v2594 = vunpack.c.l.b16 %v2330
    %v2595 = vunpack.c.l.b16 %v2331
    %v2596 = vunpack.c.l.b16 %v2332
    %v2597 = vunpack.c.l.b16 %v2333
    %v2598 = vunpack.c.l.b16 %v2334
    %v2599 = vunpack.c.l.b16 %v2335
    %v2600 = vunpack.c.l.b16 %v2336
    %v2601 = vunpack.c.l.b16 %v2337
    %v2602 = vunpack.c.l.b16 %v2338
    %v2603 = vunpack.c.l.b16 %v2339
    %v2604 = vunpack.c.l.b16 %v2340
    %v2605 = vunpack.c.l.b16 %v2341
    %v2606 = vunpack.c.l.b16 %v2342
    %v2607 = vunpack.c.l.b16 %v2343
    %v2608 = vunpack.c.l.b16 %v2344
    %v2609 = vunpack.c.l.b16 %v2345
    %v2610 = vunpack.c.l.b16 %v2346
    %v2611 = vunpack.c.l.b16 %v2347
    %v2612 = vunpack.c.l.b16 %v2348
    %v2613 = vunpack.c.l.b16 %v2349
    %v2614 = vunpack.c.l.b16 %v2350
    %v2615 = vunpack.c.l.b16 %v2351
    %v2616 = vunpack.c.l.b16 %v2352
    %v2617 = vunpack.c.l.b16 %v2353
    %v2618 = vunpack.c.l.b16 %v2354
    %v2619 = vunpack.c.l.b16 %v2355
    %v2620 = vunpack.c.l.b16 %v2356
    %v2621 = vunpack.c.l.b16 %v2357
    %v2622 = vunpack.c.l.b16 %v2358
    %v2623 = vunpack.c.l.b16 %v2359
    %v2624 = vunpack.c.l.b16 %v2360
    %v2625 = vunpack.c.l.b16 %v2361
    %v2626 = vunpack.c.l.b16 %v2362
    %v2627 = vunpack.c.l.b16 %v2363
    %v2628 = vunpack.c.l.b16 %v2364
    %v2629 = vunpack.c.l.b16 %v2365
    %v2630 = vunpack.c.l.b16 %v2366
    %v2631 = vunpack.c.l.b16 %v2367
    %v2632 = vunpack.c.l.b16 %v2368
    %v2633 = vunpack.c.l.b16 %v2369
    %v2634 = vunpack.c.l.b16 %v2370
    %v2635 = vunpack.c.l.b16 %v2371
    %v2636 = vunpack.c.l.b16 %v2372
    %v2637 = vunpack.c.l.b16 %v2373
    %v2638 = vunpack.c.l.b16 %v2374
    %v2639 = vunpack.c.l.b16 %v2375
    %v2640 = vunpack.c.l.b16 %v2376
    %v2641 = vunpack.c.l.b16 %v2377
    %v2642 = vunpack.c.l.b16 %v2378
    %v2643 = vunpack.c.l.b16 %v2379
    %v2644 = vunpack.c.l.b16 %v2380
    %v2645 = vunpack.c.l.b16 %v2381
    %v2646 = vunpack.c.l.b16 %v2382
    %v2647 = vunpack.c.l.b16 %v2383
    %v2648 = vunpack.c.l.b16 %v2384
    %v2649 = vunpack.c.l.b16 %v2385
    %v2650 = vunpack.c.l.b16 %v2386
    %v2651 = vunpack.c.l.b16 %v2387
    %v2652 = vunpack.c.l.b16 %v2388
    %v2653 = vunpack.c.l.b16 %v2389
    %v2654 = vunpack.c.l.b16 %v2390
    %v2655 = vunpack.c.l.b16 %v2391
    %v2656 = vunpack.c.l.b16 %v2392
    %v2657 = vunpack.c.l.b16 %v2393
    %v2658 = vunpack.c.l.b16 %v2394
    %v2659 = vunpack.c.l.b16 %v2395
    %v2660 = vunpack.c.l.b16 %v2396
    %v2661 = vunpack.c.l.b16 %v2397
    %v2662 = vunpack.c.l.b16 %v2398
    %v2663 = vunpack.c.l.b16 %v2399
    %v2664 = vunpack.c.l.b16 %v2400
    %v2665 = vunpack.c.l.b16 %v2401
    %v2666 = vunpack.c.l.b16 %v2402
    %v2667 = vunpack.c.l.b16 %v2403
    %v2668 = vunpack.c.l.b16 %v2404
    %v2669 = vunpack.c.l.b16 %v2405
    %v2670 = vunpack.c.l.b16 %v2406
    %v2671 = vunpack.c.l.b16 %v2407
    %v2672 = vunpack.c.l.b16 %v2408
    %v2673 = vunpack.c.l.b16 %v2409
    %v2674 = vunpack.c.l.b16 %v2410
    %v2675 = vunpack.c.l.b16 %v2411
    %v2676 = vunpack.c.l.b16 %v2412
    %v2677 = vunpack.c.l.b16 %v2413
    %v2678 = vunpack.c.l.b16 %v2414
    %v2679 = vunpack.c.l.b16 %v2415
    %v2680 = vunpack.c.l.b16 %v2416
    %v2681 = vunpack.c.l.b16 %v2417
    %v2682 = vunpack.c.l.b16 %v2418
    %v2683 = vunpack.c.l.b16 %v2419
    %v2684 = vunpack.c.l.b16 %v2420
    %v2685 = vunpack.c.l.b16 %v2421
    %v2686 = vunpack.c.l.b16 %v2422
    %v2687 = vunpack.c.l.b16 %v2423
    %v2688 = vunpack.c.l.b16 %v2424
    %v2689 = vunpack.c.l.b16 %v2425
    %v2690 = vunpack.c.l.b16 %v2426
    %v2691 = vunpack.c.l.b16 %v2427
    %v2692 = vunpack.c.l.b16 %v2428
    %v2693 = vunpack.c.l.b16 %v2429
    %v2694 = vunpack.c.l.b16 %v2430
    %v2695 = vunpack.c.l.b16 %v2431
    %v2696 = vpack.c.b16 %v2569, %v2568
    %v2697 = vpack.c.b16 %v2571, %v2570
    %v2698 = vpack.c.b16 %v2573, %v2572
    %v2699 = vpack.c.b16 %v2575, %v2574
    %v2700 = vpack.c.b16 %v2577, %v2576
    %v2701 = vpack.c.b16 %v2579, %v2578
    %v2702 = vpack.c.b16 %v2581, %v2580
    %v2703 = vpack.c.b16 %v2583, %v2582
    %v2704 = vpack.c.b16 %v2585, %v2584
    %v2705 = vpack.c.b16 %v2587, %v2586
    %v2706 = vpack.c.b16 %v2589, %v2588
    %v2707 = vpack.c.b16 %v2591, %v2590
    %v2708 = vpack.c.b16 %v2593, %v2592
    %v2709 = vpack.c.b16 %v2595, %v2594
    %v2710 = vpack.c.b16 %v2597, %v2596
    %v2711 = vpack.c.b16 %v2599, %v2598
    %v2712 = vpack.c.b16 %v2601, %v2600
    %v2713 = vpack.c.b16 %v2603, %v2602
    %v2714 = vpack.c.b16 %v2605, %v2604
    %v2715 = vpack.c.b16 %v2607, %v2606
    %v2716 = vpack.c.b16 %v2609, %v2608
    %v2717 = vpack.c.b16 %v2611, %v2610
    %v2718 = vpack.c.b16 %v2613, %v2612
    %v2719 = vpack.c.b16 %v2615, %v2614
    %v2720 = vpack.c.b16 %v2617, %v2616
    %v2721 = vpack.c.b16 %v2619, %v2618
    %v2722 = vpack.c.b16 %v2621, %v2620
    %v2723 = vpack.c.b16 %v2623, %v2622
    %v2724 = vpack.c.b16 %v2625, %v2624
    %v2725 = vpack.c.b16 %v2627, %v2626
    %v2726 = vpack.c.b16 %v2629, %v2628
    %v2727 = vpack.c.b16 %v2631, %v2630
    %v2728 = vpack.c.b16 %v2633, %v2632
    %v2729 = vpack.c.b16 %v2635, %v2634
    %v2730 = vpack.c.b16 %v2637, %v2636
    %v2731 = vpack.c.b16 %v2639, %v2638
    %v2732 = vpack.c.b16 %v2641, %v2640
    %v2733 = vpack.c.b16 %v2643, %v2642
    %v2734 = vpack.c.b16 %v2645, %v2644
    %v2735 = vpack.c.b16 %v2647, %v2646
    %v2736 = vpack.c.b16 %v2649, %v2648
    %v2737 = vpack.c.b16 %v2651, %v2650
    %v2738 = vpack.c.b16 %v2653, %v2652
    %v2739 = vpack.c.b16 %v2655, %v2654
    %v2740 = vpack.c.b16 %v2657, %v2656
    %v2741 = vpack.c.b16 %v2659, %v2658
    %v2742 = vpack.c.b16 %v2661, %v2660
    %v2743 = vpack.c.b16 %v2663, %v2662
    %v2744 = vpack.c.b16 %v2665, %v2664
    %v2745 = vpack.c.b16 %v2667, %v2666
    %v2746 = vpack.c.b16 %v2669, %v2668
    %v2747 = vpack.c.b16 %v2671, %v2670
    %v2748 = vpack.c.b16 %v2673, %v2672
    %v2749 = vpack.c.b16 %v2675, %v2674
    %v2750 = vpack.c.b16 %v2677, %v2676
    %v2751 = vpack.c.b16 %v2679, %v2678
    %v2752 = vpack.c.b16 %v2681, %v2680
    %v2753 = vpack.c.b16 %v2683, %v2682
    %v2754 = vpack.c.b16 %v2685, %v2684
    %v2755 = vpack.c.b16 %v2687, %v2686
    %v2756 = vpack.c.b16 %v2689, %v2688
    %v2757 = vpack.c.b16 %v2691, %v2690
    %v2758 = vpack.c.b16 %v2693, %v2692
    %v2759 = vpack.c.b16 %v2695, %v2694
    %2824 = vmatprep.subr.bf16.mxu0 0
    %2825 = vmatpush1.bf16.msra.mxu0 %v2703
    %2826 = vmatprep.subr.bf16.mxu0 0
    %2827 = vmatpush1.bf16.msra.mxu0 %v2702
    %2828 = vmatprep.subr.bf16.mxu0 0
    %2829 = vmatpush1.bf16.msra.mxu0 %v2701
    %2830 = vmatprep.subr.bf16.mxu0 0
    %2831 = vmatpush1.bf16.msra.mxu0 %v2700
    %2832 = vmatprep.subr.bf16.mxu0 0
    %2833 = vmatpush1.bf16.msra.mxu0 %v2699
    %2834 = vmatprep.subr.bf16.mxu0 0
    %2835 = vmatpush1.bf16.msra.mxu0 %v2698
    %2836 = vmatprep.subr.bf16.mxu0 0
    %2837 = vmatpush1.bf16.msra.mxu0 %v2697
    %2838 = vmatprep.subr.bf16.mxu0 0
    %2839 = vmatpush1.bf16.msra.mxu0 %v2696
    %2840 = vmatprep.subr.bf16.mxu0 0
    %2841 = vmatpush2.bf16.msra.mxu0 %v2711
    %2842 = vmatprep.subr.bf16.mxu0 0
    %2843 = vmatpush2.bf16.msra.mxu0 %v2710
    %2844 = vmatprep.subr.bf16.mxu0 0
    %2845 = vmatpush2.bf16.msra.mxu0 %v2709
    %2846 = vmatprep.subr.bf16.mxu0 0
    %2847 = vmatpush2.bf16.msra.mxu0 %v2708
    %2848 = vmatprep.subr.bf16.mxu0 0
    %2849 = vmatpush2.bf16.msra.mxu0 %v2707
    %2850 = vmatprep.subr.bf16.mxu0 0
    %2851 = vmatpush2.bf16.msra.mxu0 %v2706
    %2852 = vmatprep.subr.bf16.mxu0 0
    %2853 = vmatpush2.bf16.msra.mxu0 %v2705
    %2854 = vmatprep.subr.bf16.mxu0 0
    %2855 = vmatpush2.bf16.msra.mxu0 %v2704
    %2856 = vmatprep.mubr.bf16.mxu0 %v236
    %2857 = vmatmul.mubr.bf16.gmra.mxu0 %v235
    %v2858 = vpop.f32.mrf.mxu0
    %v2859 = vadd.f32 %v2438, %v2858
    %v2860 = vpop.f32.mrf.mxu0
    %v2861 = vpop.f32.mrf.mxu0
    %v2862 = vpop.f32.mrf.mxu0
    %2863 = vdwg.mxu0
    %2864 = vmatprep.subr.bf16.mxu0 0
    %2865 = vmatpush1.bf16.msra.mxu0 %v2719
    %2866 = vmatprep.subr.bf16.mxu0 0
    %2867 = vmatpush1.bf16.msra.mxu0 %v2718
    %2868 = vmatprep.subr.bf16.mxu0 0
    %2869 = vmatpush1.bf16.msra.mxu0 %v2717
    %2870 = vmatprep.subr.bf16.mxu0 0
    %2871 = vmatpush1.bf16.msra.mxu0 %v2716
    %2872 = vmatprep.subr.bf16.mxu0 0
    %2873 = vmatpush1.bf16.msra.mxu0 %v2715
    %2874 = vmatprep.subr.bf16.mxu0 0
    %2875 = vmatpush1.bf16.msra.mxu0 %v2714
    %2876 = vmatprep.subr.bf16.mxu0 0
    %2877 = vmatpush1.bf16.msra.mxu0 %v2713
    %2878 = vmatprep.subr.bf16.mxu0 0
    %2879 = vmatpush1.bf16.msra.mxu0 %v2712
    %2880 = vmatprep.subr.bf16.mxu0 0
    %2881 = vmatpush2.bf16.msra.mxu0 %v2727
    %2882 = vmatprep.subr.bf16.mxu0 0
    %2883 = vmatpush2.bf16.msra.mxu0 %v2726
    %2884 = vmatprep.subr.bf16.mxu0 0
    %2885 = vmatpush2.bf16.msra.mxu0 %v2725
    %2886 = vmatprep.subr.bf16.mxu0 0
    %2887 = vmatpush2.bf16.msra.mxu0 %v2724
    %2888 = vmatprep.subr.bf16.mxu0 0
    %2889 = vmatpush2.bf16.msra.mxu0 %v2723
    %2890 = vmatprep.subr.bf16.mxu0 0
    %2891 = vmatpush2.bf16.msra.mxu0 %v2722
    %2892 = vmatprep.subr.bf16.mxu0 0
    %2893 = vmatpush2.bf16.msra.mxu0 %v2721
    %2894 = vmatprep.subr.bf16.mxu0 0
    %2895 = vmatpush2.bf16.msra.mxu0 %v2720
    %2896 = vmatprep.mubr.bf16.mxu0 %v238
    %2897 = vmatmul.mubr.bf16.gmra.mxu0 %v237
    %v2898 = vpop.f32.mrf.mxu0
    %v2899 = vadd.f32 %v2859, %v2898
    %v2900 = vpop.f32.mrf.mxu0
    %v2901 = vpop.f32.mrf.mxu0
    %v2902 = vpop.f32.mrf.mxu0
    %2903 = vdwg.mxu0
    %2904 = vmatprep.subr.bf16.mxu0 0
    %2905 = vmatpush1.bf16.msra.mxu0 %v2735
    %2906 = vmatprep.subr.bf16.mxu0 0
    %2907 = vmatpush1.bf16.msra.mxu0 %v2734
    %2908 = vmatprep.subr.bf16.mxu0 0
    %2909 = vmatpush1.bf16.msra.mxu0 %v2733
    %2910 = vmatprep.subr.bf16.mxu0 0
    %2911 = vmatpush1.bf16.msra.mxu0 %v2732
    %2912 = vmatprep.subr.bf16.mxu0 0
    %2913 = vmatpush1.bf16.msra.mxu0 %v2731
    %2914 = vmatprep.subr.bf16.mxu0 0
    %2915 = vmatpush1.bf16.msra.mxu0 %v2730
    %2916 = vmatprep.subr.bf16.mxu0 0
    %2917 = vmatpush1.bf16.msra.mxu0 %v2729
    %2918 = vmatprep.subr.bf16.mxu0 0
    %2919 = vmatpush1.bf16.msra.mxu0 %v2728
    %2920 = vmatprep.subr.bf16.mxu0 0
    %2921 = vmatpush2.bf16.msra.mxu0 %v2743
    %2922 = vmatprep.subr.bf16.mxu0 0
    %2923 = vmatpush2.bf16.msra.mxu0 %v2742
    %2924 = vmatprep.subr.bf16.mxu0 0
    %2925 = vmatpush2.bf16.msra.mxu0 %v2741
    %2926 = vmatprep.subr.bf16.mxu0 0
    %2927 = vmatpush2.bf16.msra.mxu0 %v2740
    %2928 = vmatprep.subr.bf16.mxu0 0
    %2929 = vmatpush2.bf16.msra.mxu0 %v2739
    %2930 = vmatprep.subr.bf16.mxu0 0
    %2931 = vmatpush2.bf16.msra.mxu0 %v2738
    %2932 = vmatprep.subr.bf16.mxu0 0
    %2933 = vmatpush2.bf16.msra.mxu0 %v2737
    %2934 = vmatprep.subr.bf16.mxu0 0
    %2935 = vmatpush2.bf16.msra.mxu0 %v2736
    %2936 = vmatprep.mubr.bf16.mxu0 %v240
    %2937 = vmatmul.mubr.bf16.gmra.mxu0 %v239
    %v2938 = vpop.f32.mrf.mxu0
    %v2939 = vadd.f32 %v2899, %v2938
    %v2940 = vpop.f32.mrf.mxu0
    %v2941 = vpop.f32.mrf.mxu0
    %v2942 = vpop.f32.mrf.mxu0
    %2943 = vdwg.mxu0
    %2944 = vmatprep.subr.bf16.mxu0 0
    %2945 = vmatpush1.bf16.msra.mxu0 %v2751
    %2946 = vmatprep.subr.bf16.mxu0 0
    %2947 = vmatpush1.bf16.msra.mxu0 %v2750
    %2948 = vmatprep.subr.bf16.mxu0 0
    %2949 = vmatpush1.bf16.msra.mxu0 %v2749
    %2950 = vmatprep.subr.bf16.mxu0 0
    %2951 = vmatpush1.bf16.msra.mxu0 %v2748
    %2952 = vmatprep.subr.bf16.mxu0 0
    %2953 = vmatpush1.bf16.msra.mxu0 %v2747
    %2954 = vmatprep.subr.bf16.mxu0 0
    %2955 = vmatpush1.bf16.msra.mxu0 %v2746
    %2956 = vmatprep.subr.bf16.mxu0 0
    %2957 = vmatpush1.bf16.msra.mxu0 %v2745
    %2958 = vmatprep.subr.bf16.mxu0 0
    %2959 = vmatpush1.bf16.msra.mxu0 %v2744
    %2960 = vmatprep.subr.bf16.mxu0 0
    %2961 = vmatpush2.bf16.msra.mxu0 %v2759
    %2962 = vmatprep.subr.bf16.mxu0 0
    %2963 = vmatpush2.bf16.msra.mxu0 %v2758
    %2964 = vmatprep.subr.bf16.mxu0 0
    %2965 = vmatpush2.bf16.msra.mxu0 %v2757
    %2966 = vmatprep.subr.bf16.mxu0 0
    %2967 = vmatpush2.bf16.msra.mxu0 %v2756
    %2968 = vmatprep.subr.bf16.mxu0 0
    %2969 = vmatpush2.bf16.msra.mxu0 %v2755
    %2970 = vmatprep.subr.bf16.mxu0 0
    %2971 = vmatpush2.bf16.msra.mxu0 %v2754
    %2972 = vmatprep.subr.bf16.mxu0 0
    %2973 = vmatpush2.bf16.msra.mxu0 %v2753
    %2974 = vmatprep.subr.bf16.mxu0 0
    %2975 = vmatpush2.bf16.msra.mxu0 %v2752
    %2976 = vmatprep.mubr.bf16.mxu0 %v242
    %2977 = vmatmul.mubr.bf16.gmra.mxu0 %v241
    %v2978 = vpop.f32.mrf.mxu0
    %v2979 = vadd.f32 %v2939, %v2978
    %v2980 = vpop.f32.mrf.mxu0
    %v2981 = vpop.f32.mrf.mxu0
    %v2982 = vpop.f32.mrf.mxu0
    %2983 = vdwg.mxu0
    %v2984 = vlaneseq
    %v2985 = vshrl.u32 %v2984, 7
    %v2986 = vsub.s32 3, %v2985
    %v2987 = vrot.slane %v186, %v2986
    %v2988 = vadd.f32 %v2979, %v2987
    %2989 = vst.msk [vmem:[#allocation2 + $0x6] sm:$0x3] %vm927, %v2988
    %s2990 = scalar_lea.vmem %s1, 2048
    %v2991 = vld [vmem:[%s2990] sm:$0xf]
    %v2992 = vld [vmem:[%s2990 + $0x4] sm:$0xf]
    %v2993 = vld [vmem:[%s2990 + $0x8] sm:$0xf]
    %v2994 = vld [vmem:[%s2990 + $0xc] sm:$0xf]
    %v2995 = vld [vmem:[%s2990 + $0x10] sm:$0xf]
    %v2996 = vld [vmem:[%s2990 + $0x14] sm:$0xf]
    %v2997 = vld [vmem:[%s2990 + $0x18] sm:$0xf]
    %v2998 = vld [vmem:[%s2990 + $0x1c] sm:$0xf]
    %v2999 = vld [vmem:[%s2990 + $0x20] sm:$0xf]
    %v3000 = vld [vmem:[%s2990 + $0x24] sm:$0xf]
    %v3001 = vld [vmem:[%s2990 + $0x28] sm:$0xf]
    %v3002 = vld [vmem:[%s2990 + $0x2c] sm:$0xf]
    %v3003 = vld [vmem:[%s2990 + $0x30] sm:$0xf]
    %v3004 = vld [vmem:[%s2990 + $0x34] sm:$0xf]
    %v3005 = vld [vmem:[%s2990 + $0x38] sm:$0xf]
    %v3006 = vld [vmem:[%s2990 + $0x3c] sm:$0xf]
    %v3007 = vld [vmem:[%s2990 + $0x40] sm:$0xf]
    %v3008 = vld [vmem:[%s2990 + $0x44] sm:$0xf]
    %v3009 = vld [vmem:[%s2990 + $0x48] sm:$0xf]
    %v3010 = vld [vmem:[%s2990 + $0x4c] sm:$0xf]
    %v3011 = vld [vmem:[%s2990 + $0x50] sm:$0xf]
    %v3012 = vld [vmem:[%s2990 + $0x54] sm:$0xf]
    %v3013 = vld [vmem:[%s2990 + $0x58] sm:$0xf]
    %v3014 = vld [vmem:[%s2990 + $0x5c] sm:$0xf]
    %v3015 = vld [vmem:[%s2990 + $0x60] sm:$0xf]
    %v3016 = vld [vmem:[%s2990 + $0x64] sm:$0xf]
    %v3017 = vld [vmem:[%s2990 + $0x68] sm:$0xf]
    %v3018 = vld [vmem:[%s2990 + $0x6c] sm:$0xf]
    %v3019 = vld [vmem:[%s2990 + $0x70] sm:$0xf]
    %v3020 = vld [vmem:[%s2990 + $0x74] sm:$0xf]
    %v3021 = vld [vmem:[%s2990 + $0x78] sm:$0xf]
    %v3022 = vld [vmem:[%s2990 + $0x7c] sm:$0xf]
    %v3023 = vld [vmem:[%s2990 + $0x80] sm:$0xf]
    %v3024 = vld [vmem:[%s2990 + $0x84] sm:$0xf]
    %v3025 = vld [vmem:[%s2990 + $0x88] sm:$0xf]
    %v3026 = vld [vmem:[%s2990 + $0x8c] sm:$0xf]
    %v3027 = vld [vmem:[%s2990 + $0x90] sm:$0xf]
    %v3028 = vld [vmem:[%s2990 + $0x94] sm:$0xf]
    %v3029 = vld [vmem:[%s2990 + $0x98] sm:$0xf]
    %v3030 = vld [vmem:[%s2990 + $0x9c] sm:$0xf]
    %v3031 = vld [vmem:[%s2990 + $0xa0] sm:$0xf]
    %v3032 = vld [vmem:[%s2990 + $0xa4] sm:$0xf]
    %v3033 = vld [vmem:[%s2990 + $0xa8] sm:$0xf]
    %v3034 = vld [vmem:[%s2990 + $0xac] sm:$0xf]
    %v3035 = vld [vmem:[%s2990 + $0xb0] sm:$0xf]
    %v3036 = vld [vmem:[%s2990 + $0xb4] sm:$0xf]
    %v3037 = vld [vmem:[%s2990 + $0xb8] sm:$0xf]
    %v3038 = vld [vmem:[%s2990 + $0xbc] sm:$0xf]
    %v3039 = vld [vmem:[%s2990 + $0xc0] sm:$0xf]
    %v3040 = vld [vmem:[%s2990 + $0xc4] sm:$0xf]
    %v3041 = vld [vmem:[%s2990 + $0xc8] sm:$0xf]
    %v3042 = vld [vmem:[%s2990 + $0xcc] sm:$0xf]
    %v3043 = vld [vmem:[%s2990 + $0xd0] sm:$0xf]
    %v3044 = vld [vmem:[%s2990 + $0xd4] sm:$0xf]
    %v3045 = vld [vmem:[%s2990 + $0xd8] sm:$0xf]
    %v3046 = vld [vmem:[%s2990 + $0xdc] sm:$0xf]
    %v3047 = vld [vmem:[%s2990 + $0xe0] sm:$0xf]
    %v3048 = vld [vmem:[%s2990 + $0xe4] sm:$0xf]
    %v3049 = vld [vmem:[%s2990 + $0xe8] sm:$0xf]
    %v3050 = vld [vmem:[%s2990 + $0xec] sm:$0xf]
    %v3051 = vld [vmem:[%s2990 + $0xf0] sm:$0xf]
    %v3052 = vld [vmem:[%s2990 + $0xf4] sm:$0xf]
    %v3053 = vld [vmem:[%s2990 + $0xf8] sm:$0xf]
    %v3054 = vld [vmem:[%s2990 + $0xfc] sm:$0xf]
    %v3055 = vld [vmem:[%s2990 + $0x100] sm:$0xf]
    %v3056 = vld [vmem:[%s2990 + $0x104] sm:$0xf]
    %v3057 = vld [vmem:[%s2990 + $0x108] sm:$0xf]
    %v3058 = vld [vmem:[%s2990 + $0x10c] sm:$0xf]
    %v3059 = vld [vmem:[%s2990 + $0x110] sm:$0xf]
    %v3060 = vld [vmem:[%s2990 + $0x114] sm:$0xf]
    %v3061 = vld [vmem:[%s2990 + $0x118] sm:$0xf]
    %v3062 = vld [vmem:[%s2990 + $0x11c] sm:$0xf]
    %v3063 = vld [vmem:[%s2990 + $0x120] sm:$0xf]
    %v3064 = vld [vmem:[%s2990 + $0x124] sm:$0xf]
    %v3065 = vld [vmem:[%s2990 + $0x128] sm:$0xf]
    %v3066 = vld [vmem:[%s2990 + $0x12c] sm:$0xf]
    %v3067 = vld [vmem:[%s2990 + $0x130] sm:$0xf]
    %v3068 = vld [vmem:[%s2990 + $0x134] sm:$0xf]
    %v3069 = vld [vmem:[%s2990 + $0x138] sm:$0xf]
    %v3070 = vld [vmem:[%s2990 + $0x13c] sm:$0xf]
    %v3071 = vld [vmem:[%s2990 + $0x140] sm:$0xf]
    %v3072 = vld [vmem:[%s2990 + $0x144] sm:$0xf]
    %v3073 = vld [vmem:[%s2990 + $0x148] sm:$0xf]
    %v3074 = vld [vmem:[%s2990 + $0x14c] sm:$0xf]
    %v3075 = vld [vmem:[%s2990 + $0x150] sm:$0xf]
    %v3076 = vld [vmem:[%s2990 + $0x154] sm:$0xf]
    %v3077 = vld [vmem:[%s2990 + $0x158] sm:$0xf]
    %v3078 = vld [vmem:[%s2990 + $0x15c] sm:$0xf]
    %v3079 = vld [vmem:[%s2990 + $0x160] sm:$0xf]
    %v3080 = vld [vmem:[%s2990 + $0x164] sm:$0xf]
    %v3081 = vld [vmem:[%s2990 + $0x168] sm:$0xf]
    %v3082 = vld [vmem:[%s2990 + $0x16c] sm:$0xf]
    %v3083 = vld [vmem:[%s2990 + $0x170] sm:$0xf]
    %v3084 = vld [vmem:[%s2990 + $0x174] sm:$0xf]
    %v3085 = vld [vmem:[%s2990 + $0x178] sm:$0xf]
    %v3086 = vld [vmem:[%s2990 + $0x17c] sm:$0xf]
    %v3087 = vld [vmem:[%s2990 + $0x180] sm:$0xf]
    %v3088 = vld [vmem:[%s2990 + $0x184] sm:$0xf]
    %v3089 = vld [vmem:[%s2990 + $0x188] sm:$0xf]
    %v3090 = vld [vmem:[%s2990 + $0x18c] sm:$0xf]
    %v3091 = vld [vmem:[%s2990 + $0x190] sm:$0xf]
    %v3092 = vld [vmem:[%s2990 + $0x194] sm:$0xf]
    %v3093 = vld [vmem:[%s2990 + $0x198] sm:$0xf]
    %v3094 = vld [vmem:[%s2990 + $0x19c] sm:$0xf]
    %v3095 = vld [vmem:[%s2990 + $0x1a0] sm:$0xf]
    %v3096 = vld [vmem:[%s2990 + $0x1a4] sm:$0xf]
    %v3097 = vld [vmem:[%s2990 + $0x1a8] sm:$0xf]
    %v3098 = vld [vmem:[%s2990 + $0x1ac] sm:$0xf]
    %v3099 = vld [vmem:[%s2990 + $0x1b0] sm:$0xf]
    %v3100 = vld [vmem:[%s2990 + $0x1b4] sm:$0xf]
    %v3101 = vld [vmem:[%s2990 + $0x1b8] sm:$0xf]
    %v3102 = vld [vmem:[%s2990 + $0x1bc] sm:$0xf]
    %v3103 = vld [vmem:[%s2990 + $0x1c0] sm:$0xf]
    %v3104 = vld [vmem:[%s2990 + $0x1c4] sm:$0xf]
    %v3105 = vld [vmem:[%s2990 + $0x1c8] sm:$0xf]
    %v3106 = vld [vmem:[%s2990 + $0x1cc] sm:$0xf]
    %v3107 = vld [vmem:[%s2990 + $0x1d0] sm:$0xf]
    %v3108 = vld [vmem:[%s2990 + $0x1d4] sm:$0xf]
    %v3109 = vld [vmem:[%s2990 + $0x1d8] sm:$0xf]
    %v3110 = vld [vmem:[%s2990 + $0x1dc] sm:$0xf]
    %v3111 = vld [vmem:[%s2990 + $0x1e0] sm:$0xf]
    %v3112 = vld [vmem:[%s2990 + $0x1e4] sm:$0xf]
    %v3113 = vld [vmem:[%s2990 + $0x1e8] sm:$0xf]
    %v3114 = vld [vmem:[%s2990 + $0x1ec] sm:$0xf]
    %v3115 = vld [vmem:[%s2990 + $0x1f0] sm:$0xf]
    %v3116 = vld [vmem:[%s2990 + $0x1f4] sm:$0xf]
    %v3117 = vld [vmem:[%s2990 + $0x1f8] sm:$0xf]
    %v3118 = vld [vmem:[%s2990 + $0x1fc] sm:$0xf]
    %s3119 = scalar_lea.vmem %s2, 4
    %v3120 = vld [vmem:[%s3119] sm:$0x1]
    %v3122 = vlaneseq
    %v3123 = vshrl.u32 %v3122, 7
    %v3124 = vsub.s32 0, %v3123
    %v3125 = vrot.slane %v3120, %v3124
    %v3255 = vunpack.c.l.b16 %v2991
    %v3256 = vunpack.c.l.b16 %v2992
    %v3257 = vunpack.c.l.b16 %v2993
    %v3258 = vunpack.c.l.b16 %v2994
    %v3259 = vunpack.c.l.b16 %v2995
    %v3260 = vunpack.c.l.b16 %v2996
    %v3261 = vunpack.c.l.b16 %v2997
    %v3262 = vunpack.c.l.b16 %v2998
    %v3263 = vunpack.c.l.b16 %v2999
    %v3264 = vunpack.c.l.b16 %v3000
    %v3265 = vunpack.c.l.b16 %v3001
    %v3266 = vunpack.c.l.b16 %v3002
    %v3267 = vunpack.c.l.b16 %v3003
    %v3268 = vunpack.c.l.b16 %v3004
    %v3269 = vunpack.c.l.b16 %v3005
    %v3270 = vunpack.c.l.b16 %v3006
    %v3271 = vunpack.c.l.b16 %v3007
    %v3272 = vunpack.c.l.b16 %v3008
    %v3273 = vunpack.c.l.b16 %v3009
    %v3274 = vunpack.c.l.b16 %v3010
    %v3275 = vunpack.c.l.b16 %v3011
    %v3276 = vunpack.c.l.b16 %v3012
    %v3277 = vunpack.c.l.b16 %v3013
    %v3278 = vunpack.c.l.b16 %v3014
    %v3279 = vunpack.c.l.b16 %v3015
    %v3280 = vunpack.c.l.b16 %v3016
    %v3281 = vunpack.c.l.b16 %v3017
    %v3282 = vunpack.c.l.b16 %v3018
    %v3283 = vunpack.c.l.b16 %v3019
    %v3284 = vunpack.c.l.b16 %v3020
    %v3285 = vunpack.c.l.b16 %v3021
    %v3286 = vunpack.c.l.b16 %v3022
    %v3287 = vunpack.c.l.b16 %v3023
    %v3288 = vunpack.c.l.b16 %v3024
    %v3289 = vunpack.c.l.b16 %v3025
    %v3290 = vunpack.c.l.b16 %v3026
    %v3291 = vunpack.c.l.b16 %v3027
    %v3292 = vunpack.c.l.b16 %v3028
    %v3293 = vunpack.c.l.b16 %v3029
    %v3294 = vunpack.c.l.b16 %v3030
    %v3295 = vunpack.c.l.b16 %v3031
    %v3296 = vunpack.c.l.b16 %v3032
    %v3297 = vunpack.c.l.b16 %v3033
    %v3298 = vunpack.c.l.b16 %v3034
    %v3299 = vunpack.c.l.b16 %v3035
    %v3300 = vunpack.c.l.b16 %v3036
    %v3301 = vunpack.c.l.b16 %v3037
    %v3302 = vunpack.c.l.b16 %v3038
    %v3303 = vunpack.c.l.b16 %v3039
    %v3304 = vunpack.c.l.b16 %v3040
    %v3305 = vunpack.c.l.b16 %v3041
    %v3306 = vunpack.c.l.b16 %v3042
    %v3307 = vunpack.c.l.b16 %v3043
    %v3308 = vunpack.c.l.b16 %v3044
    %v3309 = vunpack.c.l.b16 %v3045
    %v3310 = vunpack.c.l.b16 %v3046
    %v3311 = vunpack.c.l.b16 %v3047
    %v3312 = vunpack.c.l.b16 %v3048
    %v3313 = vunpack.c.l.b16 %v3049
    %v3314 = vunpack.c.l.b16 %v3050
    %v3315 = vunpack.c.l.b16 %v3051
    %v3316 = vunpack.c.l.b16 %v3052
    %v3317 = vunpack.c.l.b16 %v3053
    %v3318 = vunpack.c.l.b16 %v3054
    %v3319 = vunpack.c.l.b16 %v3055
    %v3320 = vunpack.c.l.b16 %v3056
    %v3321 = vunpack.c.l.b16 %v3057
    %v3322 = vunpack.c.l.b16 %v3058
    %v3323 = vunpack.c.l.b16 %v3059
    %v3324 = vunpack.c.l.b16 %v3060
    %v3325 = vunpack.c.l.b16 %v3061
    %v3326 = vunpack.c.l.b16 %v3062
    %v3327 = vunpack.c.l.b16 %v3063
    %v3328 = vunpack.c.l.b16 %v3064
    %v3329 = vunpack.c.l.b16 %v3065
    %v3330 = vunpack.c.l.b16 %v3066
    %v3331 = vunpack.c.l.b16 %v3067
    %v3332 = vunpack.c.l.b16 %v3068
    %v3333 = vunpack.c.l.b16 %v3069
    %v3334 = vunpack.c.l.b16 %v3070
    %v3335 = vunpack.c.l.b16 %v3071
    %v3336 = vunpack.c.l.b16 %v3072
    %v3337 = vunpack.c.l.b16 %v3073
    %v3338 = vunpack.c.l.b16 %v3074
    %v3339 = vunpack.c.l.b16 %v3075
    %v3340 = vunpack.c.l.b16 %v3076
    %v3341 = vunpack.c.l.b16 %v3077
    %v3342 = vunpack.c.l.b16 %v3078
    %v3343 = vunpack.c.l.b16 %v3079
    %v3344 = vunpack.c.l.b16 %v3080
    %v3345 = vunpack.c.l.b16 %v3081
    %v3346 = vunpack.c.l.b16 %v3082
    %v3347 = vunpack.c.l.b16 %v3083
    %v3348 = vunpack.c.l.b16 %v3084
    %v3349 = vunpack.c.l.b16 %v3085
    %v3350 = vunpack.c.l.b16 %v3086
    %v3351 = vunpack.c.l.b16 %v3087
    %v3352 = vunpack.c.l.b16 %v3088
    %v3353 = vunpack.c.l.b16 %v3089
    %v3354 = vunpack.c.l.b16 %v3090
    %v3355 = vunpack.c.l.b16 %v3091
    %v3356 = vunpack.c.l.b16 %v3092
    %v3357 = vunpack.c.l.b16 %v3093
    %v3358 = vunpack.c.l.b16 %v3094
    %v3359 = vunpack.c.l.b16 %v3095
    %v3360 = vunpack.c.l.b16 %v3096
    %v3361 = vunpack.c.l.b16 %v3097
    %v3362 = vunpack.c.l.b16 %v3098
    %v3363 = vunpack.c.l.b16 %v3099
    %v3364 = vunpack.c.l.b16 %v3100
    %v3365 = vunpack.c.l.b16 %v3101
    %v3366 = vunpack.c.l.b16 %v3102
    %v3367 = vunpack.c.l.b16 %v3103
    %v3368 = vunpack.c.l.b16 %v3104
    %v3369 = vunpack.c.l.b16 %v3105
    %v3370 = vunpack.c.l.b16 %v3106
    %v3371 = vunpack.c.l.b16 %v3107
    %v3372 = vunpack.c.l.b16 %v3108
    %v3373 = vunpack.c.l.b16 %v3109
    %v3374 = vunpack.c.l.b16 %v3110
    %v3375 = vunpack.c.l.b16 %v3111
    %v3376 = vunpack.c.l.b16 %v3112
    %v3377 = vunpack.c.l.b16 %v3113
    %v3378 = vunpack.c.l.b16 %v3114
    %v3379 = vunpack.c.l.b16 %v3115
    %v3380 = vunpack.c.l.b16 %v3116
    %v3381 = vunpack.c.l.b16 %v3117
    %v3382 = vunpack.c.l.b16 %v3118
    %v3383 = vpack.c.b16 %v3256, %v3255
    %v3384 = vpack.c.b16 %v3258, %v3257
    %v3385 = vpack.c.b16 %v3260, %v3259
    %v3386 = vpack.c.b16 %v3262, %v3261
    %v3387 = vpack.c.b16 %v3264, %v3263
    %v3388 = vpack.c.b16 %v3266, %v3265
    %v3389 = vpack.c.b16 %v3268, %v3267
    %v3390 = vpack.c.b16 %v3270, %v3269
    %v3391 = vpack.c.b16 %v3272, %v3271
    %v3392 = vpack.c.b16 %v3274, %v3273
    %v3393 = vpack.c.b16 %v3276, %v3275
    %v3394 = vpack.c.b16 %v3278, %v3277
    %v3395 = vpack.c.b16 %v3280, %v3279
    %v3396 = vpack.c.b16 %v3282, %v3281
    %v3397 = vpack.c.b16 %v3284, %v3283
    %v3398 = vpack.c.b16 %v3286, %v3285
    %v3399 = vpack.c.b16 %v3288, %v3287
    %v3400 = vpack.c.b16 %v3290, %v3289
    %v3401 = vpack.c.b16 %v3292, %v3291
    %v3402 = vpack.c.b16 %v3294, %v3293
    %v3403 = vpack.c.b16 %v3296, %v3295
    %v3404 = vpack.c.b16 %v3298, %v3297
    %v3405 = vpack.c.b16 %v3300, %v3299
    %v3406 = vpack.c.b16 %v3302, %v3301
    %v3407 = vpack.c.b16 %v3304, %v3303
    %v3408 = vpack.c.b16 %v3306, %v3305
    %v3409 = vpack.c.b16 %v3308, %v3307
    %v3410 = vpack.c.b16 %v3310, %v3309
    %v3411 = vpack.c.b16 %v3312, %v3311
    %v3412 = vpack.c.b16 %v3314, %v3313
    %v3413 = vpack.c.b16 %v3316, %v3315
    %v3414 = vpack.c.b16 %v3318, %v3317
    %v3415 = vpack.c.b16 %v3320, %v3319
    %v3416 = vpack.c.b16 %v3322, %v3321
    %v3417 = vpack.c.b16 %v3324, %v3323
    %v3418 = vpack.c.b16 %v3326, %v3325
    %v3419 = vpack.c.b16 %v3328, %v3327
    %v3420 = vpack.c.b16 %v3330, %v3329
    %v3421 = vpack.c.b16 %v3332, %v3331
    %v3422 = vpack.c.b16 %v3334, %v3333
    %v3423 = vpack.c.b16 %v3336, %v3335
    %v3424 = vpack.c.b16 %v3338, %v3337
    %v3425 = vpack.c.b16 %v3340, %v3339
    %v3426 = vpack.c.b16 %v3342, %v3341
    %v3427 = vpack.c.b16 %v3344, %v3343
    %v3428 = vpack.c.b16 %v3346, %v3345
    %v3429 = vpack.c.b16 %v3348, %v3347
    %v3430 = vpack.c.b16 %v3350, %v3349
    %v3431 = vpack.c.b16 %v3352, %v3351
    %v3432 = vpack.c.b16 %v3354, %v3353
    %v3433 = vpack.c.b16 %v3356, %v3355
    %v3434 = vpack.c.b16 %v3358, %v3357
    %v3435 = vpack.c.b16 %v3360, %v3359
    %v3436 = vpack.c.b16 %v3362, %v3361
    %v3437 = vpack.c.b16 %v3364, %v3363
    %v3438 = vpack.c.b16 %v3366, %v3365
    %v3439 = vpack.c.b16 %v3368, %v3367
    %v3440 = vpack.c.b16 %v3370, %v3369
    %v3441 = vpack.c.b16 %v3372, %v3371
    %v3442 = vpack.c.b16 %v3374, %v3373
    %v3443 = vpack.c.b16 %v3376, %v3375
    %v3444 = vpack.c.b16 %v3378, %v3377
    %v3445 = vpack.c.b16 %v3380, %v3379
    %v3446 = vpack.c.b16 %v3382, %v3381
    %3511 = vmatprep.subr.bf16.mxu0 0
    %3512 = vmatpush1.bf16.msra.mxu0 %v3390
    %3513 = vmatprep.subr.bf16.mxu0 0
    %3514 = vmatpush1.bf16.msra.mxu0 %v3389
    %3515 = vmatprep.subr.bf16.mxu0 0
    %3516 = vmatpush1.bf16.msra.mxu0 %v3388
    %3517 = vmatprep.subr.bf16.mxu0 0
    %3518 = vmatpush1.bf16.msra.mxu0 %v3387
    %3519 = vmatprep.subr.bf16.mxu0 0
    %3520 = vmatpush1.bf16.msra.mxu0 %v3386
    %3521 = vmatprep.subr.bf16.mxu0 0
    %3522 = vmatpush1.bf16.msra.mxu0 %v3385
    %3523 = vmatprep.subr.bf16.mxu0 0
    %3524 = vmatpush1.bf16.msra.mxu0 %v3384
    %3525 = vmatprep.subr.bf16.mxu0 0
    %3526 = vmatpush1.bf16.msra.mxu0 %v3383
    %3527 = vmatprep.subr.bf16.mxu0 0
    %3528 = vmatpush2.bf16.msra.mxu0 %v3398
    %3529 = vmatprep.subr.bf16.mxu0 0
    %3530 = vmatpush2.bf16.msra.mxu0 %v3397
    %3531 = vmatprep.subr.bf16.mxu0 0
    %3532 = vmatpush2.bf16.msra.mxu0 %v3396
    %3533 = vmatprep.subr.bf16.mxu0 0
    %3534 = vmatpush2.bf16.msra.mxu0 %v3395
    %3535 = vmatprep.subr.bf16.mxu0 0
    %3536 = vmatpush2.bf16.msra.mxu0 %v3394
    %3537 = vmatprep.subr.bf16.mxu0 0
    %3538 = vmatpush2.bf16.msra.mxu0 %v3393
    %3539 = vmatprep.subr.bf16.mxu0 0
    %3540 = vmatpush2.bf16.msra.mxu0 %v3392
    %3541 = vmatprep.subr.bf16.mxu0 0
    %3542 = vmatpush2.bf16.msra.mxu0 %v3391
    %3543 = vmatprep.mubr.bf16.mxu0 %v236
    %3544 = vmatmul.mubr.bf16.gmra.mxu0 %v235
    %v3545 = vpop.f32.mrf.mxu0
    %v3546 = vadd.f32 %v3125, %v3545
    %v3547 = vpop.f32.mrf.mxu0
    %v3548 = vpop.f32.mrf.mxu0
    %v3549 = vpop.f32.mrf.mxu0
    %3550 = vdwg.mxu0
    %3551 = vmatprep.subr.bf16.mxu0 0
    %3552 = vmatpush1.bf16.msra.mxu0 %v3406
    %3553 = vmatprep.subr.bf16.mxu0 0
    %3554 = vmatpush1.bf16.msra.mxu0 %v3405
    %3555 = vmatprep.subr.bf16.mxu0 0
    %3556 = vmatpush1.bf16.msra.mxu0 %v3404
    %3557 = vmatprep.subr.bf16.mxu0 0
    %3558 = vmatpush1.bf16.msra.mxu0 %v3403
    %3559 = vmatprep.subr.bf16.mxu0 0
    %3560 = vmatpush1.bf16.msra.mxu0 %v3402
    %3561 = vmatprep.subr.bf16.mxu0 0
    %3562 = vmatpush1.bf16.msra.mxu0 %v3401
    %3563 = vmatprep.subr.bf16.mxu0 0
    %3564 = vmatpush1.bf16.msra.mxu0 %v3400
    %3565 = vmatprep.subr.bf16.mxu0 0
    %3566 = vmatpush1.bf16.msra.mxu0 %v3399
    %3567 = vmatprep.subr.bf16.mxu0 0
    %3568 = vmatpush2.bf16.msra.mxu0 %v3414
    %3569 = vmatprep.subr.bf16.mxu0 0
    %3570 = vmatpush2.bf16.msra.mxu0 %v3413
    %3571 = vmatprep.subr.bf16.mxu0 0
    %3572 = vmatpush2.bf16.msra.mxu0 %v3412
    %3573 = vmatprep.subr.bf16.mxu0 0
    %3574 = vmatpush2.bf16.msra.mxu0 %v3411
    %3575 = vmatprep.subr.bf16.mxu0 0
    %3576 = vmatpush2.bf16.msra.mxu0 %v3410
    %3577 = vmatprep.subr.bf16.mxu0 0
    %3578 = vmatpush2.bf16.msra.mxu0 %v3409
    %3579 = vmatprep.subr.bf16.mxu0 0
    %3580 = vmatpush2.bf16.msra.mxu0 %v3408
    %3581 = vmatprep.subr.bf16.mxu0 0
    %3582 = vmatpush2.bf16.msra.mxu0 %v3407
    %3583 = vmatprep.mubr.bf16.mxu0 %v238
    %3584 = vmatmul.mubr.bf16.gmra.mxu0 %v237
    %v3585 = vpop.f32.mrf.mxu0
    %v3586 = vadd.f32 %v3546, %v3585
    %v3587 = vpop.f32.mrf.mxu0
    %v3588 = vpop.f32.mrf.mxu0
    %v3589 = vpop.f32.mrf.mxu0
    %3590 = vdwg.mxu0
    %3591 = vmatprep.subr.bf16.mxu0 0
    %3592 = vmatpush1.bf16.msra.mxu0 %v3422
    %3593 = vmatprep.subr.bf16.mxu0 0
    %3594 = vmatpush1.bf16.msra.mxu0 %v3421
    %3595 = vmatprep.subr.bf16.mxu0 0
    %3596 = vmatpush1.bf16.msra.mxu0 %v3420
    %3597 = vmatprep.subr.bf16.mxu0 0
    %3598 = vmatpush1.bf16.msra.mxu0 %v3419
    %3599 = vmatprep.subr.bf16.mxu0 0
    %3600 = vmatpush1.bf16.msra.mxu0 %v3418
    %3601 = vmatprep.subr.bf16.mxu0 0
    %3602 = vmatpush1.bf16.msra.mxu0 %v3417
    %3603 = vmatprep.subr.bf16.mxu0 0
    %3604 = vmatpush1.bf16.msra.mxu0 %v3416
    %3605 = vmatprep.subr.bf16.mxu0 0
    %3606 = vmatpush1.bf16.msra.mxu0 %v3415
    %3607 = vmatprep.subr.bf16.mxu0 0
    %3608 = vmatpush2.bf16.msra.mxu0 %v3430
    %3609 = vmatprep.subr.bf16.mxu0 0
    %3610 = vmatpush2.bf16.msra.mxu0 %v3429
    %3611 = vmatprep.subr.bf16.mxu0 0
    %3612 = vmatpush2.bf16.msra.mxu0 %v3428
    %3613 = vmatprep.subr.bf16.mxu0 0
    %3614 = vmatpush2.bf16.msra.mxu0 %v3427
    %3615 = vmatprep.subr.bf16.mxu0 0
    %3616 = vmatpush2.bf16.msra.mxu0 %v3426
    %3617 = vmatprep.subr.bf16.mxu0 0
    %3618 = vmatpush2.bf16.msra.mxu0 %v3425
    %3619 = vmatprep.subr.bf16.mxu0 0
    %3620 = vmatpush2.bf16.msra.mxu0 %v3424
    %3621 = vmatprep.subr.bf16.mxu0 0
    %3622 = vmatpush2.bf16.msra.mxu0 %v3423
    %3623 = vmatprep.mubr.bf16.mxu0 %v240
    %3624 = vmatmul.mubr.bf16.gmra.mxu0 %v239
    %v3625 = vpop.f32.mrf.mxu0
    %v3626 = vadd.f32 %v3586, %v3625
    %v3627 = vpop.f32.mrf.mxu0
    %v3628 = vpop.f32.mrf.mxu0
    %v3629 = vpop.f32.mrf.mxu0
    %3630 = vdwg.mxu0
    %3631 = vmatprep.subr.bf16.mxu0 0
    %3632 = vmatpush1.bf16.msra.mxu0 %v3438
    %3633 = vmatprep.subr.bf16.mxu0 0
    %3634 = vmatpush1.bf16.msra.mxu0 %v3437
    %3635 = vmatprep.subr.bf16.mxu0 0
    %3636 = vmatpush1.bf16.msra.mxu0 %v3436
    %3637 = vmatprep.subr.bf16.mxu0 0
    %3638 = vmatpush1.bf16.msra.mxu0 %v3435
    %3639 = vmatprep.subr.bf16.mxu0 0
    %3640 = vmatpush1.bf16.msra.mxu0 %v3434
    %3641 = vmatprep.subr.bf16.mxu0 0
    %3642 = vmatpush1.bf16.msra.mxu0 %v3433
    %3643 = vmatprep.subr.bf16.mxu0 0
    %3644 = vmatpush1.bf16.msra.mxu0 %v3432
    %3645 = vmatprep.subr.bf16.mxu0 0
    %3646 = vmatpush1.bf16.msra.mxu0 %v3431
    %3647 = vmatprep.subr.bf16.mxu0 0
    %3648 = vmatpush2.bf16.msra.mxu0 %v3446
    %3649 = vmatprep.subr.bf16.mxu0 0
    %3650 = vmatpush2.bf16.msra.mxu0 %v3445
    %3651 = vmatprep.subr.bf16.mxu0 0
    %3652 = vmatpush2.bf16.msra.mxu0 %v3444
    %3653 = vmatprep.subr.bf16.mxu0 0
    %3654 = vmatpush2.bf16.msra.mxu0 %v3443
    %3655 = vmatprep.subr.bf16.mxu0 0
    %3656 = vmatpush2.bf16.msra.mxu0 %v3442
    %3657 = vmatprep.subr.bf16.mxu0 0
    %3658 = vmatpush2.bf16.msra.mxu0 %v3441
    %3659 = vmatprep.subr.bf16.mxu0 0
    %3660 = vmatpush2.bf16.msra.mxu0 %v3440
    %3661 = vmatprep.subr.bf16.mxu0 0
    %3662 = vmatpush2.bf16.msra.mxu0 %v3439
    %3663 = vmatprep.mubr.bf16.mxu0 %v242
    %3664 = vmatmul.mubr.bf16.gmra.mxu0 %v241
    %v3665 = vpop.f32.mrf.mxu0
    %v3666 = vadd.f32 %v3626, %v3665
    %v3667 = vpop.f32.mrf.mxu0
    %v3668 = vpop.f32.mrf.mxu0
    %v3669 = vpop.f32.mrf.mxu0
    %3670 = vdwg.mxu0
    %v3671 = vlaneseq
    %v3672 = vshrl.u32 %v3671, 7
    %v3673 = vsub.s32 4, %v3672
    %v3674 = vrot.slane %v186, %v3673
    %v3675 = vadd.f32 %v3666, %v3674
    %3676 = vst.msk [vmem:[#allocation2 + $0x8] sm:$0x3] %vm927, %v3675
    %s3677 = scalar_lea.vmem %s1, 2560
    %v3678 = vld [vmem:[%s3677] sm:$0xf]
    %v3679 = vld [vmem:[%s3677 + $0x4] sm:$0xf]
    %v3680 = vld [vmem:[%s3677 + $0x8] sm:$0xf]
    %v3681 = vld [vmem:[%s3677 + $0xc] sm:$0xf]
    %v3682 = vld [vmem:[%s3677 + $0x10] sm:$0xf]
    %v3683 = vld [vmem:[%s3677 + $0x14] sm:$0xf]
    %v3684 = vld [vmem:[%s3677 + $0x18] sm:$0xf]
    %v3685 = vld [vmem:[%s3677 + $0x1c] sm:$0xf]
    %v3686 = vld [vmem:[%s3677 + $0x20] sm:$0xf]
    %v3687 = vld [vmem:[%s3677 + $0x24] sm:$0xf]
    %v3688 = vld [vmem:[%s3677 + $0x28] sm:$0xf]
    %v3689 = vld [vmem:[%s3677 + $0x2c] sm:$0xf]
    %v3690 = vld [vmem:[%s3677 + $0x30] sm:$0xf]
    %v3691 = vld [vmem:[%s3677 + $0x34] sm:$0xf]
    %v3692 = vld [vmem:[%s3677 + $0x38] sm:$0xf]
    %v3693 = vld [vmem:[%s3677 + $0x3c] sm:$0xf]
    %v3694 = vld [vmem:[%s3677 + $0x40] sm:$0xf]
    %v3695 = vld [vmem:[%s3677 + $0x44] sm:$0xf]
    %v3696 = vld [vmem:[%s3677 + $0x48] sm:$0xf]
    %v3697 = vld [vmem:[%s3677 + $0x4c] sm:$0xf]
    %v3698 = vld [vmem:[%s3677 + $0x50] sm:$0xf]
    %v3699 = vld [vmem:[%s3677 + $0x54] sm:$0xf]
    %v3700 = vld [vmem:[%s3677 + $0x58] sm:$0xf]
    %v3701 = vld [vmem:[%s3677 + $0x5c] sm:$0xf]
    %v3702 = vld [vmem:[%s3677 + $0x60] sm:$0xf]
    %v3703 = vld [vmem:[%s3677 + $0x64] sm:$0xf]
    %v3704 = vld [vmem:[%s3677 + $0x68] sm:$0xf]
    %v3705 = vld [vmem:[%s3677 + $0x6c] sm:$0xf]
    %v3706 = vld [vmem:[%s3677 + $0x70] sm:$0xf]
    %v3707 = vld [vmem:[%s3677 + $0x74] sm:$0xf]
    %v3708 = vld [vmem:[%s3677 + $0x78] sm:$0xf]
    %v3709 = vld [vmem:[%s3677 + $0x7c] sm:$0xf]
    %v3710 = vld [vmem:[%s3677 + $0x80] sm:$0xf]
    %v3711 = vld [vmem:[%s3677 + $0x84] sm:$0xf]
    %v3712 = vld [vmem:[%s3677 + $0x88] sm:$0xf]
    %v3713 = vld [vmem:[%s3677 + $0x8c] sm:$0xf]
    %v3714 = vld [vmem:[%s3677 + $0x90] sm:$0xf]
    %v3715 = vld [vmem:[%s3677 + $0x94] sm:$0xf]
    %v3716 = vld [vmem:[%s3677 + $0x98] sm:$0xf]
    %v3717 = vld [vmem:[%s3677 + $0x9c] sm:$0xf]
    %v3718 = vld [vmem:[%s3677 + $0xa0] sm:$0xf]
    %v3719 = vld [vmem:[%s3677 + $0xa4] sm:$0xf]
    %v3720 = vld [vmem:[%s3677 + $0xa8] sm:$0xf]
    %v3721 = vld [vmem:[%s3677 + $0xac] sm:$0xf]
    %v3722 = vld [vmem:[%s3677 + $0xb0] sm:$0xf]
    %v3723 = vld [vmem:[%s3677 + $0xb4] sm:$0xf]
    %v3724 = vld [vmem:[%s3677 + $0xb8] sm:$0xf]
    %v3725 = vld [vmem:[%s3677 + $0xbc] sm:$0xf]
    %v3726 = vld [vmem:[%s3677 + $0xc0] sm:$0xf]
    %v3727 = vld [vmem:[%s3677 + $0xc4] sm:$0xf]
    %v3728 = vld [vmem:[%s3677 + $0xc8] sm:$0xf]
    %v3729 = vld [vmem:[%s3677 + $0xcc] sm:$0xf]
    %v3730 = vld [vmem:[%s3677 + $0xd0] sm:$0xf]
    %v3731 = vld [vmem:[%s3677 + $0xd4] sm:$0xf]
    %v3732 = vld [vmem:[%s3677 + $0xd8] sm:$0xf]
    %v3733 = vld [vmem:[%s3677 + $0xdc] sm:$0xf]
    %v3734 = vld [vmem:[%s3677 + $0xe0] sm:$0xf]
    %v3735 = vld [vmem:[%s3677 + $0xe4] sm:$0xf]
    %v3736 = vld [vmem:[%s3677 + $0xe8] sm:$0xf]
    %v3737 = vld [vmem:[%s3677 + $0xec] sm:$0xf]
    %v3738 = vld [vmem:[%s3677 + $0xf0] sm:$0xf]
    %v3739 = vld [vmem:[%s3677 + $0xf4] sm:$0xf]
    %v3740 = vld [vmem:[%s3677 + $0xf8] sm:$0xf]
    %v3741 = vld [vmem:[%s3677 + $0xfc] sm:$0xf]
    %v3742 = vld [vmem:[%s3677 + $0x100] sm:$0xf]
    %v3743 = vld [vmem:[%s3677 + $0x104] sm:$0xf]
    %v3744 = vld [vmem:[%s3677 + $0x108] sm:$0xf]
    %v3745 = vld [vmem:[%s3677 + $0x10c] sm:$0xf]
    %v3746 = vld [vmem:[%s3677 + $0x110] sm:$0xf]
    %v3747 = vld [vmem:[%s3677 + $0x114] sm:$0xf]
    %v3748 = vld [vmem:[%s3677 + $0x118] sm:$0xf]
    %v3749 = vld [vmem:[%s3677 + $0x11c] sm:$0xf]
    %v3750 = vld [vmem:[%s3677 + $0x120] sm:$0xf]
    %v3751 = vld [vmem:[%s3677 + $0x124] sm:$0xf]
    %v3752 = vld [vmem:[%s3677 + $0x128] sm:$0xf]
    %v3753 = vld [vmem:[%s3677 + $0x12c] sm:$0xf]
    %v3754 = vld [vmem:[%s3677 + $0x130] sm:$0xf]
    %v3755 = vld [vmem:[%s3677 + $0x134] sm:$0xf]
    %v3756 = vld [vmem:[%s3677 + $0x138] sm:$0xf]
    %v3757 = vld [vmem:[%s3677 + $0x13c] sm:$0xf]
    %v3758 = vld [vmem:[%s3677 + $0x140] sm:$0xf]
    %v3759 = vld [vmem:[%s3677 + $0x144] sm:$0xf]
    %v3760 = vld [vmem:[%s3677 + $0x148] sm:$0xf]
    %v3761 = vld [vmem:[%s3677 + $0x14c] sm:$0xf]
    %v3762 = vld [vmem:[%s3677 + $0x150] sm:$0xf]
    %v3763 = vld [vmem:[%s3677 + $0x154] sm:$0xf]
    %v3764 = vld [vmem:[%s3677 + $0x158] sm:$0xf]
    %v3765 = vld [vmem:[%s3677 + $0x15c] sm:$0xf]
    %v3766 = vld [vmem:[%s3677 + $0x160] sm:$0xf]
    %v3767 = vld [vmem:[%s3677 + $0x164] sm:$0xf]
    %v3768 = vld [vmem:[%s3677 + $0x168] sm:$0xf]
    %v3769 = vld [vmem:[%s3677 + $0x16c] sm:$0xf]
    %v3770 = vld [vmem:[%s3677 + $0x170] sm:$0xf]
    %v3771 = vld [vmem:[%s3677 + $0x174] sm:$0xf]
    %v3772 = vld [vmem:[%s3677 + $0x178] sm:$0xf]
    %v3773 = vld [vmem:[%s3677 + $0x17c] sm:$0xf]
    %v3774 = vld [vmem:[%s3677 + $0x180] sm:$0xf]
    %v3775 = vld [vmem:[%s3677 + $0x184] sm:$0xf]
    %v3776 = vld [vmem:[%s3677 + $0x188] sm:$0xf]
    %v3777 = vld [vmem:[%s3677 + $0x18c] sm:$0xf]
    %v3778 = vld [vmem:[%s3677 + $0x190] sm:$0xf]
    %v3779 = vld [vmem:[%s3677 + $0x194] sm:$0xf]
    %v3780 = vld [vmem:[%s3677 + $0x198] sm:$0xf]
    %v3781 = vld [vmem:[%s3677 + $0x19c] sm:$0xf]
    %v3782 = vld [vmem:[%s3677 + $0x1a0] sm:$0xf]
    %v3783 = vld [vmem:[%s3677 + $0x1a4] sm:$0xf]
    %v3784 = vld [vmem:[%s3677 + $0x1a8] sm:$0xf]
    %v3785 = vld [vmem:[%s3677 + $0x1ac] sm:$0xf]
    %v3786 = vld [vmem:[%s3677 + $0x1b0] sm:$0xf]
    %v3787 = vld [vmem:[%s3677 + $0x1b4] sm:$0xf]
    %v3788 = vld [vmem:[%s3677 + $0x1b8] sm:$0xf]
    %v3789 = vld [vmem:[%s3677 + $0x1bc] sm:$0xf]
    %v3790 = vld [vmem:[%s3677 + $0x1c0] sm:$0xf]
    %v3791 = vld [vmem:[%s3677 + $0x1c4] sm:$0xf]
    %v3792 = vld [vmem:[%s3677 + $0x1c8] sm:$0xf]
    %v3793 = vld [vmem:[%s3677 + $0x1cc] sm:$0xf]
    %v3794 = vld [vmem:[%s3677 + $0x1d0] sm:$0xf]
    %v3795 = vld [vmem:[%s3677 + $0x1d4] sm:$0xf]
    %v3796 = vld [vmem:[%s3677 + $0x1d8] sm:$0xf]
    %v3797 = vld [vmem:[%s3677 + $0x1dc] sm:$0xf]
    %v3798 = vld [vmem:[%s3677 + $0x1e0] sm:$0xf]
    %v3799 = vld [vmem:[%s3677 + $0x1e4] sm:$0xf]
    %v3800 = vld [vmem:[%s3677 + $0x1e8] sm:$0xf]
    %v3801 = vld [vmem:[%s3677 + $0x1ec] sm:$0xf]
    %v3802 = vld [vmem:[%s3677 + $0x1f0] sm:$0xf]
    %v3803 = vld [vmem:[%s3677 + $0x1f4] sm:$0xf]
    %v3804 = vld [vmem:[%s3677 + $0x1f8] sm:$0xf]
    %v3805 = vld [vmem:[%s3677 + $0x1fc] sm:$0xf]
    %s3806 = scalar_lea.vmem %s2, 5
    %v3807 = vld [vmem:[%s3806] sm:$0x1]
    %v3809 = vlaneseq
    %v3810 = vshrl.u32 %v3809, 7
    %v3811 = vsub.s32 0, %v3810
    %v3812 = vrot.slane %v3807, %v3811
    %v3942 = vunpack.c.l.b16 %v3678
    %v3943 = vunpack.c.l.b16 %v3679
    %v3944 = vunpack.c.l.b16 %v3680
    %v3945 = vunpack.c.l.b16 %v3681
    %v3946 = vunpack.c.l.b16 %v3682
    %v3947 = vunpack.c.l.b16 %v3683
    %v3948 = vunpack.c.l.b16 %v3684
    %v3949 = vunpack.c.l.b16 %v3685
    %v3950 = vunpack.c.l.b16 %v3686
    %v3951 = vunpack.c.l.b16 %v3687
    %v3952 = vunpack.c.l.b16 %v3688
    %v3953 = vunpack.c.l.b16 %v3689
    %v3954 = vunpack.c.l.b16 %v3690
    %v3955 = vunpack.c.l.b16 %v3691
    %v3956 = vunpack.c.l.b16 %v3692
    %v3957 = vunpack.c.l.b16 %v3693
    %v3958 = vunpack.c.l.b16 %v3694
    %v3959 = vunpack.c.l.b16 %v3695
    %v3960 = vunpack.c.l.b16 %v3696
    %v3961 = vunpack.c.l.b16 %v3697
    %v3962 = vunpack.c.l.b16 %v3698
    %v3963 = vunpack.c.l.b16 %v3699
    %v3964 = vunpack.c.l.b16 %v3700
    %v3965 = vunpack.c.l.b16 %v3701
    %v3966 = vunpack.c.l.b16 %v3702
    %v3967 = vunpack.c.l.b16 %v3703
    %v3968 = vunpack.c.l.b16 %v3704
    %v3969 = vunpack.c.l.b16 %v3705
    %v3970 = vunpack.c.l.b16 %v3706
    %v3971 = vunpack.c.l.b16 %v3707
    %v3972 = vunpack.c.l.b16 %v3708
    %v3973 = vunpack.c.l.b16 %v3709
    %v3974 = vunpack.c.l.b16 %v3710
    %v3975 = vunpack.c.l.b16 %v3711
    %v3976 = vunpack.c.l.b16 %v3712
    %v3977 = vunpack.c.l.b16 %v3713
    %v3978 = vunpack.c.l.b16 %v3714
    %v3979 = vunpack.c.l.b16 %v3715
    %v3980 = vunpack.c.l.b16 %v3716
    %v3981 = vunpack.c.l.b16 %v3717
    %v3982 = vunpack.c.l.b16 %v3718
    %v3983 = vunpack.c.l.b16 %v3719
    %v3984 = vunpack.c.l.b16 %v3720
    %v3985 = vunpack.c.l.b16 %v3721
    %v3986 = vunpack.c.l.b16 %v3722
    %v3987 = vunpack.c.l.b16 %v3723
    %v3988 = vunpack.c.l.b16 %v3724
    %v3989 = vunpack.c.l.b16 %v3725
    %v3990 = vunpack.c.l.b16 %v3726
    %v3991 = vunpack.c.l.b16 %v3727
    %v3992 = vunpack.c.l.b16 %v3728
    %v3993 = vunpack.c.l.b16 %v3729
    %v3994 = vunpack.c.l.b16 %v3730
    %v3995 = vunpack.c.l.b16 %v3731
    %v3996 = vunpack.c.l.b16 %v3732
    %v3997 = vunpack.c.l.b16 %v3733
    %v3998 = vunpack.c.l.b16 %v3734
    %v3999 = vunpack.c.l.b16 %v3735
    %v4000 = vunpack.c.l.b16 %v3736
    %v4001 = vunpack.c.l.b16 %v3737
    %v4002 = vunpack.c.l.b16 %v3738
    %v4003 = vunpack.c.l.b16 %v3739
    %v4004 = vunpack.c.l.b16 %v3740
    %v4005 = vunpack.c.l.b16 %v3741
    %v4006 = vunpack.c.l.b16 %v3742
    %v4007 = vunpack.c.l.b16 %v3743
    %v4008 = vunpack.c.l.b16 %v3744
    %v4009 = vunpack.c.l.b16 %v3745
    %v4010 = vunpack.c.l.b16 %v3746
    %v4011 = vunpack.c.l.b16 %v3747
    %v4012 = vunpack.c.l.b16 %v3748
    %v4013 = vunpack.c.l.b16 %v3749
    %v4014 = vunpack.c.l.b16 %v3750
    %v4015 = vunpack.c.l.b16 %v3751
    %v4016 = vunpack.c.l.b16 %v3752
    %v4017 = vunpack.c.l.b16 %v3753
    %v4018 = vunpack.c.l.b16 %v3754
    %v4019 = vunpack.c.l.b16 %v3755
    %v4020 = vunpack.c.l.b16 %v3756
    %v4021 = vunpack.c.l.b16 %v3757
    %v4022 = vunpack.c.l.b16 %v3758
    %v4023 = vunpack.c.l.b16 %v3759
    %v4024 = vunpack.c.l.b16 %v3760
    %v4025 = vunpack.c.l.b16 %v3761
    %v4026 = vunpack.c.l.b16 %v3762
    %v4027 = vunpack.c.l.b16 %v3763
    %v4028 = vunpack.c.l.b16 %v3764
    %v4029 = vunpack.c.l.b16 %v3765
    %v4030 = vunpack.c.l.b16 %v3766
    %v4031 = vunpack.c.l.b16 %v3767
    %v4032 = vunpack.c.l.b16 %v3768
    %v4033 = vunpack.c.l.b16 %v3769
    %v4034 = vunpack.c.l.b16 %v3770
    %v4035 = vunpack.c.l.b16 %v3771
    %v4036 = vunpack.c.l.b16 %v3772
    %v4037 = vunpack.c.l.b16 %v3773
    %v4038 = vunpack.c.l.b16 %v3774
    %v4039 = vunpack.c.l.b16 %v3775
    %v4040 = vunpack.c.l.b16 %v3776
    %v4041 = vunpack.c.l.b16 %v3777
    %v4042 = vunpack.c.l.b16 %v3778
    %v4043 = vunpack.c.l.b16 %v3779
    %v4044 = vunpack.c.l.b16 %v3780
    %v4045 = vunpack.c.l.b16 %v3781
    %v4046 = vunpack.c.l.b16 %v3782
    %v4047 = vunpack.c.l.b16 %v3783
    %v4048 = vunpack.c.l.b16 %v3784
    %v4049 = vunpack.c.l.b16 %v3785
    %v4050 = vunpack.c.l.b16 %v3786
    %v4051 = vunpack.c.l.b16 %v3787
    %v4052 = vunpack.c.l.b16 %v3788
    %v4053 = vunpack.c.l.b16 %v3789
    %v4054 = vunpack.c.l.b16 %v3790
    %v4055 = vunpack.c.l.b16 %v3791
    %v4056 = vunpack.c.l.b16 %v3792
    %v4057 = vunpack.c.l.b16 %v3793
    %v4058 = vunpack.c.l.b16 %v3794
    %v4059 = vunpack.c.l.b16 %v3795
    %v4060 = vunpack.c.l.b16 %v3796
    %v4061 = vunpack.c.l.b16 %v3797
    %v4062 = vunpack.c.l.b16 %v3798
    %v4063 = vunpack.c.l.b16 %v3799
    %v4064 = vunpack.c.l.b16 %v3800
    %v4065 = vunpack.c.l.b16 %v3801
    %v4066 = vunpack.c.l.b16 %v3802
    %v4067 = vunpack.c.l.b16 %v3803
    %v4068 = vunpack.c.l.b16 %v3804
    %v4069 = vunpack.c.l.b16 %v3805
    %v4070 = vpack.c.b16 %v3943, %v3942
    %v4071 = vpack.c.b16 %v3945, %v3944
    %v4072 = vpack.c.b16 %v3947, %v3946
    %v4073 = vpack.c.b16 %v3949, %v3948
    %v4074 = vpack.c.b16 %v3951, %v3950
    %v4075 = vpack.c.b16 %v3953, %v3952
    %v4076 = vpack.c.b16 %v3955, %v3954
    %v4077 = vpack.c.b16 %v3957, %v3956
    %v4078 = vpack.c.b16 %v3959, %v3958
    %v4079 = vpack.c.b16 %v3961, %v3960
    %v4080 = vpack.c.b16 %v3963, %v3962
    %v4081 = vpack.c.b16 %v3965, %v3964
    %v4082 = vpack.c.b16 %v3967, %v3966
    %v4083 = vpack.c.b16 %v3969, %v3968
    %v4084 = vpack.c.b16 %v3971, %v3970
    %v4085 = vpack.c.b16 %v3973, %v3972
    %v4086 = vpack.c.b16 %v3975, %v3974
    %v4087 = vpack.c.b16 %v3977, %v3976
    %v4088 = vpack.c.b16 %v3979, %v3978
    %v4089 = vpack.c.b16 %v3981, %v3980
    %v4090 = vpack.c.b16 %v3983, %v3982
    %v4091 = vpack.c.b16 %v3985, %v3984
    %v4092 = vpack.c.b16 %v3987, %v3986
    %v4093 = vpack.c.b16 %v3989, %v3988
    %v4094 = vpack.c.b16 %v3991, %v3990
    %v4095 = vpack.c.b16 %v3993, %v3992
    %v4096 = vpack.c.b16 %v3995, %v3994
    %v4097 = vpack.c.b16 %v3997, %v3996
    %v4098 = vpack.c.b16 %v3999, %v3998
    %v4099 = vpack.c.b16 %v4001, %v4000
    %v4100 = vpack.c.b16 %v4003, %v4002
    %v4101 = vpack.c.b16 %v4005, %v4004
    %v4102 = vpack.c.b16 %v4007, %v4006
    %v4103 = vpack.c.b16 %v4009, %v4008
    %v4104 = vpack.c.b16 %v4011, %v4010
    %v4105 = vpack.c.b16 %v4013, %v4012
    %v4106 = vpack.c.b16 %v4015, %v4014
    %v4107 = vpack.c.b16 %v4017, %v4016
    %v4108 = vpack.c.b16 %v4019, %v4018
    %v4109 = vpack.c.b16 %v4021, %v4020
    %v4110 = vpack.c.b16 %v4023, %v4022
    %v4111 = vpack.c.b16 %v4025, %v4024
    %v4112 = vpack.c.b16 %v4027, %v4026
    %v4113 = vpack.c.b16 %v4029, %v4028
    %v4114 = vpack.c.b16 %v4031, %v4030
    %v4115 = vpack.c.b16 %v4033, %v4032
    %v4116 = vpack.c.b16 %v4035, %v4034
    %v4117 = vpack.c.b16 %v4037, %v4036
    %v4118 = vpack.c.b16 %v4039, %v4038
    %v4119 = vpack.c.b16 %v4041, %v4040
    %v4120 = vpack.c.b16 %v4043, %v4042
    %v4121 = vpack.c.b16 %v4045, %v4044
    %v4122 = vpack.c.b16 %v4047, %v4046
    %v4123 = vpack.c.b16 %v4049, %v4048
    %v4124 = vpack.c.b16 %v4051, %v4050
    %v4125 = vpack.c.b16 %v4053, %v4052
    %v4126 = vpack.c.b16 %v4055, %v4054
    %v4127 = vpack.c.b16 %v4057, %v4056
    %v4128 = vpack.c.b16 %v4059, %v4058
    %v4129 = vpack.c.b16 %v4061, %v4060
    %v4130 = vpack.c.b16 %v4063, %v4062
    %v4131 = vpack.c.b16 %v4065, %v4064
    %v4132 = vpack.c.b16 %v4067, %v4066
    %v4133 = vpack.c.b16 %v4069, %v4068
    %4198 = vmatprep.subr.bf16.mxu0 0
    %4199 = vmatpush1.bf16.msra.mxu0 %v4077
    %4200 = vmatprep.subr.bf16.mxu0 0
    %4201 = vmatpush1.bf16.msra.mxu0 %v4076
    %4202 = vmatprep.subr.bf16.mxu0 0
    %4203 = vmatpush1.bf16.msra.mxu0 %v4075
    %4204 = vmatprep.subr.bf16.mxu0 0
    %4205 = vmatpush1.bf16.msra.mxu0 %v4074
    %4206 = vmatprep.subr.bf16.mxu0 0
    %4207 = vmatpush1.bf16.msra.mxu0 %v4073
    %4208 = vmatprep.subr.bf16.mxu0 0
    %4209 = vmatpush1.bf16.msra.mxu0 %v4072
    %4210 = vmatprep.subr.bf16.mxu0 0
    %4211 = vmatpush1.bf16.msra.mxu0 %v4071
    %4212 = vmatprep.subr.bf16.mxu0 0
    %4213 = vmatpush1.bf16.msra.mxu0 %v4070
    %4214 = vmatprep.subr.bf16.mxu0 0
    %4215 = vmatpush2.bf16.msra.mxu0 %v4085
    %4216 = vmatprep.subr.bf16.mxu0 0
    %4217 = vmatpush2.bf16.msra.mxu0 %v4084
    %4218 = vmatprep.subr.bf16.mxu0 0
    %4219 = vmatpush2.bf16.msra.mxu0 %v4083
    %4220 = vmatprep.subr.bf16.mxu0 0
    %4221 = vmatpush2.bf16.msra.mxu0 %v4082
    %4222 = vmatprep.subr.bf16.mxu0 0
    %4223 = vmatpush2.bf16.msra.mxu0 %v4081
    %4224 = vmatprep.subr.bf16.mxu0 0
    %4225 = vmatpush2.bf16.msra.mxu0 %v4080
    %4226 = vmatprep.subr.bf16.mxu0 0
    %4227 = vmatpush2.bf16.msra.mxu0 %v4079
    %4228 = vmatprep.subr.bf16.mxu0 0
    %4229 = vmatpush2.bf16.msra.mxu0 %v4078
    %4230 = vmatprep.mubr.bf16.mxu0 %v236
    %4231 = vmatmul.mubr.bf16.gmra.mxu0 %v235
    %v4232 = vpop.f32.mrf.mxu0
    %v4233 = vadd.f32 %v3812, %v4232
    %v4234 = vpop.f32.mrf.mxu0
    %v4235 = vpop.f32.mrf.mxu0
    %v4236 = vpop.f32.mrf.mxu0
    %4237 = vdwg.mxu0
    %4238 = vmatprep.subr.bf16.mxu0 0
    %4239 = vmatpush1.bf16.msra.mxu0 %v4093
    %4240 = vmatprep.subr.bf16.mxu0 0
    %4241 = vmatpush1.bf16.msra.mxu0 %v4092
    %4242 = vmatprep.subr.bf16.mxu0 0
    %4243 = vmatpush1.bf16.msra.mxu0 %v4091
    %4244 = vmatprep.subr.bf16.mxu0 0
    %4245 = vmatpush1.bf16.msra.mxu0 %v4090
    %4246 = vmatprep.subr.bf16.mxu0 0
    %4247 = vmatpush1.bf16.msra.mxu0 %v4089
    %4248 = vmatprep.subr.bf16.mxu0 0
    %4249 = vmatpush1.bf16.msra.mxu0 %v4088
    %4250 = vmatprep.subr.bf16.mxu0 0
    %4251 = vmatpush1.bf16.msra.mxu0 %v4087
    %4252 = vmatprep.subr.bf16.mxu0 0
    %4253 = vmatpush1.bf16.msra.mxu0 %v4086
    %4254 = vmatprep.subr.bf16.mxu0 0
    %4255 = vmatpush2.bf16.msra.mxu0 %v4101
    %4256 = vmatprep.subr.bf16.mxu0 0
    %4257 = vmatpush2.bf16.msra.mxu0 %v4100
    %4258 = vmatprep.subr.bf16.mxu0 0
    %4259 = vmatpush2.bf16.msra.mxu0 %v4099
    %4260 = vmatprep.subr.bf16.mxu0 0
    %4261 = vmatpush2.bf16.msra.mxu0 %v4098
    %4262 = vmatprep.subr.bf16.mxu0 0
    %4263 = vmatpush2.bf16.msra.mxu0 %v4097
    %4264 = vmatprep.subr.bf16.mxu0 0
    %4265 = vmatpush2.bf16.msra.mxu0 %v4096
    %4266 = vmatprep.subr.bf16.mxu0 0
    %4267 = vmatpush2.bf16.msra.mxu0 %v4095
    %4268 = vmatprep.subr.bf16.mxu0 0
    %4269 = vmatpush2.bf16.msra.mxu0 %v4094
    %4270 = vmatprep.mubr.bf16.mxu0 %v238
    %4271 = vmatmul.mubr.bf16.gmra.mxu0 %v237
    %v4272 = vpop.f32.mrf.mxu0
    %v4273 = vadd.f32 %v4233, %v4272
    %v4274 = vpop.f32.mrf.mxu0
    %v4275 = vpop.f32.mrf.mxu0
    %v4276 = vpop.f32.mrf.mxu0
    %4277 = vdwg.mxu0
    %4278 = vmatprep.subr.bf16.mxu0 0
    %4279 = vmatpush1.bf16.msra.mxu0 %v4109
    %4280 = vmatprep.subr.bf16.mxu0 0
    %4281 = vmatpush1.bf16.msra.mxu0 %v4108
    %4282 = vmatprep.subr.bf16.mxu0 0
    %4283 = vmatpush1.bf16.msra.mxu0 %v4107
    %4284 = vmatprep.subr.bf16.mxu0 0
    %4285 = vmatpush1.bf16.msra.mxu0 %v4106
    %4286 = vmatprep.subr.bf16.mxu0 0
    %4287 = vmatpush1.bf16.msra.mxu0 %v4105
    %4288 = vmatprep.subr.bf16.mxu0 0
    %4289 = vmatpush1.bf16.msra.mxu0 %v4104
    %4290 = vmatprep.subr.bf16.mxu0 0
    %4291 = vmatpush1.bf16.msra.mxu0 %v4103
    %4292 = vmatprep.subr.bf16.mxu0 0
    %4293 = vmatpush1.bf16.msra.mxu0 %v4102
    %4294 = vmatprep.subr.bf16.mxu0 0
    %4295 = vmatpush2.bf16.msra.mxu0 %v4117
    %4296 = vmatprep.subr.bf16.mxu0 0
    %4297 = vmatpush2.bf16.msra.mxu0 %v4116
    %4298 = vmatprep.subr.bf16.mxu0 0
    %4299 = vmatpush2.bf16.msra.mxu0 %v4115
    %4300 = vmatprep.subr.bf16.mxu0 0
    %4301 = vmatpush2.bf16.msra.mxu0 %v4114
    %4302 = vmatprep.subr.bf16.mxu0 0
    %4303 = vmatpush2.bf16.msra.mxu0 %v4113
    %4304 = vmatprep.subr.bf16.mxu0 0
    %4305 = vmatpush2.bf16.msra.mxu0 %v4112
    %4306 = vmatprep.subr.bf16.mxu0 0
    %4307 = vmatpush2.bf16.msra.mxu0 %v4111
    %4308 = vmatprep.subr.bf16.mxu0 0
    %4309 = vmatpush2.bf16.msra.mxu0 %v4110
    %4310 = vmatprep.mubr.bf16.mxu0 %v240
    %4311 = vmatmul.mubr.bf16.gmra.mxu0 %v239
    %v4312 = vpop.f32.mrf.mxu0
    %v4313 = vadd.f32 %v4273, %v4312
    %v4314 = vpop.f32.mrf.mxu0
    %v4315 = vpop.f32.mrf.mxu0
    %v4316 = vpop.f32.mrf.mxu0
    %4317 = vdwg.mxu0
    %4318 = vmatprep.subr.bf16.mxu0 0
    %4319 = vmatpush1.bf16.msra.mxu0 %v4125
    %4320 = vmatprep.subr.bf16.mxu0 0
    %4321 = vmatpush1.bf16.msra.mxu0 %v4124
    %4322 = vmatprep.subr.bf16.mxu0 0
    %4323 = vmatpush1.bf16.msra.mxu0 %v4123
    %4324 = vmatprep.subr.bf16.mxu0 0
    %4325 = vmatpush1.bf16.msra.mxu0 %v4122
    %4326 = vmatprep.subr.bf16.mxu0 0
    %4327 = vmatpush1.bf16.msra.mxu0 %v4121
    %4328 = vmatprep.subr.bf16.mxu0 0
    %4329 = vmatpush1.bf16.msra.mxu0 %v4120
    %4330 = vmatprep.subr.bf16.mxu0 0
    %4331 = vmatpush1.bf16.msra.mxu0 %v4119
    %4332 = vmatprep.subr.bf16.mxu0 0
    %4333 = vmatpush1.bf16.msra.mxu0 %v4118
    %4334 = vmatprep.subr.bf16.mxu0 0
    %4335 = vmatpush2.bf16.msra.mxu0 %v4133
    %4336 = vmatprep.subr.bf16.mxu0 0
    %4337 = vmatpush2.bf16.msra.mxu0 %v4132
    %4338 = vmatprep.subr.bf16.mxu0 0
    %4339 = vmatpush2.bf16.msra.mxu0 %v4131
    %4340 = vmatprep.subr.bf16.mxu0 0
    %4341 = vmatpush2.bf16.msra.mxu0 %v4130
    %4342 = vmatprep.subr.bf16.mxu0 0
    %4343 = vmatpush2.bf16.msra.mxu0 %v4129
    %4344 = vmatprep.subr.bf16.mxu0 0
    %4345 = vmatpush2.bf16.msra.mxu0 %v4128
    %4346 = vmatprep.subr.bf16.mxu0 0
    %4347 = vmatpush2.bf16.msra.mxu0 %v4127
    %4348 = vmatprep.subr.bf16.mxu0 0
    %4349 = vmatpush2.bf16.msra.mxu0 %v4126
    %4350 = vmatprep.mubr.bf16.mxu0 %v242
    %4351 = vmatmul.mubr.bf16.gmra.mxu0 %v241
    %v4352 = vpop.f32.mrf.mxu0
    %v4353 = vadd.f32 %v4313, %v4352
    %v4354 = vpop.f32.mrf.mxu0
    %v4355 = vpop.f32.mrf.mxu0
    %v4356 = vpop.f32.mrf.mxu0
    %4357 = vdwg.mxu0
    %v4358 = vlaneseq
    %v4359 = vshrl.u32 %v4358, 7
    %v4360 = vsub.s32 5, %v4359
    %v4361 = vrot.slane %v186, %v4360
    %v4362 = vadd.f32 %v4353, %v4361
    %4363 = vst.msk [vmem:[#allocation2 + $0xa] sm:$0x3] %vm927, %v4362
    %s4364 = scalar_lea.vmem %s1, 3072
    %v4365 = vld [vmem:[%s4364] sm:$0xf]
    %v4366 = vld [vmem:[%s4364 + $0x4] sm:$0xf]
    %v4367 = vld [vmem:[%s4364 + $0x8] sm:$0xf]
    %v4368 = vld [vmem:[%s4364 + $0xc] sm:$0xf]
    %v4369 = vld [vmem:[%s4364 + $0x10] sm:$0xf]
    %v4370 = vld [vmem:[%s4364 + $0x14] sm:$0xf]
    %v4371 = vld [vmem:[%s4364 + $0x18] sm:$0xf]
    %v4372 = vld [vmem:[%s4364 + $0x1c] sm:$0xf]
    %v4373 = vld [vmem:[%s4364 + $0x20] sm:$0xf]
    %v4374 = vld [vmem:[%s4364 + $0x24] sm:$0xf]
    %v4375 = vld [vmem:[%s4364 + $0x28] sm:$0xf]
    %v4376 = vld [vmem:[%s4364 + $0x2c] sm:$0xf]
    %v4377 = vld [vmem:[%s4364 + $0x30] sm:$0xf]
    %v4378 = vld [vmem:[%s4364 + $0x34] sm:$0xf]
    %v4379 = vld [vmem:[%s4364 + $0x38] sm:$0xf]
    %v4380 = vld [vmem:[%s4364 + $0x3c] sm:$0xf]
    %v4381 = vld [vmem:[%s4364 + $0x40] sm:$0xf]
    %v4382 = vld [vmem:[%s4364 + $0x44] sm:$0xf]
    %v4383 = vld [vmem:[%s4364 + $0x48] sm:$0xf]
    %v4384 = vld [vmem:[%s4364 + $0x4c] sm:$0xf]
    %v4385 = vld [vmem:[%s4364 + $0x50] sm:$0xf]
    %v4386 = vld [vmem:[%s4364 + $0x54] sm:$0xf]
    %v4387 = vld [vmem:[%s4364 + $0x58] sm:$0xf]
    %v4388 = vld [vmem:[%s4364 + $0x5c] sm:$0xf]
    %v4389 = vld [vmem:[%s4364 + $0x60] sm:$0xf]
    %v4390 = vld [vmem:[%s4364 + $0x64] sm:$0xf]
    %v4391 = vld [vmem:[%s4364 + $0x68] sm:$0xf]
    %v4392 = vld [vmem:[%s4364 + $0x6c] sm:$0xf]
    %v4393 = vld [vmem:[%s4364 + $0x70] sm:$0xf]
    %v4394 = vld [vmem:[%s4364 + $0x74] sm:$0xf]
    %v4395 = vld [vmem:[%s4364 + $0x78] sm:$0xf]
    %v4396 = vld [vmem:[%s4364 + $0x7c] sm:$0xf]
    %v4397 = vld [vmem:[%s4364 + $0x80] sm:$0xf]
    %v4398 = vld [vmem:[%s4364 + $0x84] sm:$0xf]
    %v4399 = vld [vmem:[%s4364 + $0x88] sm:$0xf]
    %v4400 = vld [vmem:[%s4364 + $0x8c] sm:$0xf]
    %v4401 = vld [vmem:[%s4364 + $0x90] sm:$0xf]
    %v4402 = vld [vmem:[%s4364 + $0x94] sm:$0xf]
    %v4403 = vld [vmem:[%s4364 + $0x98] sm:$0xf]
    %v4404 = vld [vmem:[%s4364 + $0x9c] sm:$0xf]
    %v4405 = vld [vmem:[%s4364 + $0xa0] sm:$0xf]
    %v4406 = vld [vmem:[%s4364 + $0xa4] sm:$0xf]
    %v4407 = vld [vmem:[%s4364 + $0xa8] sm:$0xf]
    %v4408 = vld [vmem:[%s4364 + $0xac] sm:$0xf]
    %v4409 = vld [vmem:[%s4364 + $0xb0] sm:$0xf]
    %v4410 = vld [vmem:[%s4364 + $0xb4] sm:$0xf]
    %v4411 = vld [vmem:[%s4364 + $0xb8] sm:$0xf]
    %v4412 = vld [vmem:[%s4364 + $0xbc] sm:$0xf]
    %v4413 = vld [vmem:[%s4364 + $0xc0] sm:$0xf]
    %v4414 = vld [vmem:[%s4364 + $0xc4] sm:$0xf]
    %v4415 = vld [vmem:[%s4364 + $0xc8] sm:$0xf]
    %v4416 = vld [vmem:[%s4364 + $0xcc] sm:$0xf]
    %v4417 = vld [vmem:[%s4364 + $0xd0] sm:$0xf]
    %v4418 = vld [vmem:[%s4364 + $0xd4] sm:$0xf]
    %v4419 = vld [vmem:[%s4364 + $0xd8] sm:$0xf]
    %v4420 = vld [vmem:[%s4364 + $0xdc] sm:$0xf]
    %v4421 = vld [vmem:[%s4364 + $0xe0] sm:$0xf]
    %v4422 = vld [vmem:[%s4364 + $0xe4] sm:$0xf]
    %v4423 = vld [vmem:[%s4364 + $0xe8] sm:$0xf]
    %v4424 = vld [vmem:[%s4364 + $0xec] sm:$0xf]
    %v4425 = vld [vmem:[%s4364 + $0xf0] sm:$0xf]
    %v4426 = vld [vmem:[%s4364 + $0xf4] sm:$0xf]
    %v4427 = vld [vmem:[%s4364 + $0xf8] sm:$0xf]
    %v4428 = vld [vmem:[%s4364 + $0xfc] sm:$0xf]
    %v4429 = vld [vmem:[%s4364 + $0x100] sm:$0xf]
    %v4430 = vld [vmem:[%s4364 + $0x104] sm:$0xf]
    %v4431 = vld [vmem:[%s4364 + $0x108] sm:$0xf]
    %v4432 = vld [vmem:[%s4364 + $0x10c] sm:$0xf]
    %v4433 = vld [vmem:[%s4364 + $0x110] sm:$0xf]
    %v4434 = vld [vmem:[%s4364 + $0x114] sm:$0xf]
    %v4435 = vld [vmem:[%s4364 + $0x118] sm:$0xf]
    %v4436 = vld [vmem:[%s4364 + $0x11c] sm:$0xf]
    %v4437 = vld [vmem:[%s4364 + $0x120] sm:$0xf]
    %v4438 = vld [vmem:[%s4364 + $0x124] sm:$0xf]
    %v4439 = vld [vmem:[%s4364 + $0x128] sm:$0xf]
    %v4440 = vld [vmem:[%s4364 + $0x12c] sm:$0xf]
    %v4441 = vld [vmem:[%s4364 + $0x130] sm:$0xf]
    %v4442 = vld [vmem:[%s4364 + $0x134] sm:$0xf]
    %v4443 = vld [vmem:[%s4364 + $0x138] sm:$0xf]
    %v4444 = vld [vmem:[%s4364 + $0x13c] sm:$0xf]
    %v4445 = vld [vmem:[%s4364 + $0x140] sm:$0xf]
    %v4446 = vld [vmem:[%s4364 + $0x144] sm:$0xf]
    %v4447 = vld [vmem:[%s4364 + $0x148] sm:$0xf]
    %v4448 = vld [vmem:[%s4364 + $0x14c] sm:$0xf]
    %v4449 = vld [vmem:[%s4364 + $0x150] sm:$0xf]
    %v4450 = vld [vmem:[%s4364 + $0x154] sm:$0xf]
    %v4451 = vld [vmem:[%s4364 + $0x158] sm:$0xf]
    %v4452 = vld [vmem:[%s4364 + $0x15c] sm:$0xf]
    %v4453 = vld [vmem:[%s4364 + $0x160] sm:$0xf]
    %v4454 = vld [vmem:[%s4364 + $0x164] sm:$0xf]
    %v4455 = vld [vmem:[%s4364 + $0x168] sm:$0xf]
    %v4456 = vld [vmem:[%s4364 + $0x16c] sm:$0xf]
    %v4457 = vld [vmem:[%s4364 + $0x170] sm:$0xf]
    %v4458 = vld [vmem:[%s4364 + $0x174] sm:$0xf]
    %v4459 = vld [vmem:[%s4364 + $0x178] sm:$0xf]
    %v4460 = vld [vmem:[%s4364 + $0x17c] sm:$0xf]
    %v4461 = vld [vmem:[%s4364 + $0x180] sm:$0xf]
    %v4462 = vld [vmem:[%s4364 + $0x184] sm:$0xf]
    %v4463 = vld [vmem:[%s4364 + $0x188] sm:$0xf]
    %v4464 = vld [vmem:[%s4364 + $0x18c] sm:$0xf]
    %v4465 = vld [vmem:[%s4364 + $0x190] sm:$0xf]
    %v4466 = vld [vmem:[%s4364 + $0x194] sm:$0xf]
    %v4467 = vld [vmem:[%s4364 + $0x198] sm:$0xf]
    %v4468 = vld [vmem:[%s4364 + $0x19c] sm:$0xf]
    %v4469 = vld [vmem:[%s4364 + $0x1a0] sm:$0xf]
    %v4470 = vld [vmem:[%s4364 + $0x1a4] sm:$0xf]
    %v4471 = vld [vmem:[%s4364 + $0x1a8] sm:$0xf]
    %v4472 = vld [vmem:[%s4364 + $0x1ac] sm:$0xf]
    %v4473 = vld [vmem:[%s4364 + $0x1b0] sm:$0xf]
    %v4474 = vld [vmem:[%s4364 + $0x1b4] sm:$0xf]
    %v4475 = vld [vmem:[%s4364 + $0x1b8] sm:$0xf]
    %v4476 = vld [vmem:[%s4364 + $0x1bc] sm:$0xf]
    %v4477 = vld [vmem:[%s4364 + $0x1c0] sm:$0xf]
    %v4478 = vld [vmem:[%s4364 + $0x1c4] sm:$0xf]
    %v4479 = vld [vmem:[%s4364 + $0x1c8] sm:$0xf]
    %v4480 = vld [vmem:[%s4364 + $0x1cc] sm:$0xf]
    %v4481 = vld [vmem:[%s4364 + $0x1d0] sm:$0xf]
    %v4482 = vld [vmem:[%s4364 + $0x1d4] sm:$0xf]
    %v4483 = vld [vmem:[%s4364 + $0x1d8] sm:$0xf]
    %v4484 = vld [vmem:[%s4364 + $0x1dc] sm:$0xf]
    %v4485 = vld [vmem:[%s4364 + $0x1e0] sm:$0xf]
    %v4486 = vld [vmem:[%s4364 + $0x1e4] sm:$0xf]
    %v4487 = vld [vmem:[%s4364 + $0x1e8] sm:$0xf]
    %v4488 = vld [vmem:[%s4364 + $0x1ec] sm:$0xf]
    %v4489 = vld [vmem:[%s4364 + $0x1f0] sm:$0xf]
    %v4490 = vld [vmem:[%s4364 + $0x1f4] sm:$0xf]
    %v4491 = vld [vmem:[%s4364 + $0x1f8] sm:$0xf]
    %v4492 = vld [vmem:[%s4364 + $0x1fc] sm:$0xf]
    %s4493 = scalar_lea.vmem %s2, 6
    %v4494 = vld [vmem:[%s4493] sm:$0x1]
    %v4496 = vlaneseq
    %v4497 = vshrl.u32 %v4496, 7
    %v4498 = vsub.s32 0, %v4497
    %v4499 = vrot.slane %v4494, %v4498
    %v4629 = vunpack.c.l.b16 %v4365
    %v4630 = vunpack.c.l.b16 %v4366
    %v4631 = vunpack.c.l.b16 %v4367
    %v4632 = vunpack.c.l.b16 %v4368
    %v4633 = vunpack.c.l.b16 %v4369
    %v4634 = vunpack.c.l.b16 %v4370
    %v4635 = vunpack.c.l.b16 %v4371
    %v4636 = vunpack.c.l.b16 %v4372
    %v4637 = vunpack.c.l.b16 %v4373
    %v4638 = vunpack.c.l.b16 %v4374
    %v4639 = vunpack.c.l.b16 %v4375
    %v4640 = vunpack.c.l.b16 %v4376
    %v4641 = vunpack.c.l.b16 %v4377
    %v4642 = vunpack.c.l.b16 %v4378
    %v4643 = vunpack.c.l.b16 %v4379
    %v4644 = vunpack.c.l.b16 %v4380
    %v4645 = vunpack.c.l.b16 %v4381
    %v4646 = vunpack.c.l.b16 %v4382
    %v4647 = vunpack.c.l.b16 %v4383
    %v4648 = vunpack.c.l.b16 %v4384
    %v4649 = vunpack.c.l.b16 %v4385
    %v4650 = vunpack.c.l.b16 %v4386
    %v4651 = vunpack.c.l.b16 %v4387
    %v4652 = vunpack.c.l.b16 %v4388
    %v4653 = vunpack.c.l.b16 %v4389
    %v4654 = vunpack.c.l.b16 %v4390
    %v4655 = vunpack.c.l.b16 %v4391
    %v4656 = vunpack.c.l.b16 %v4392
    %v4657 = vunpack.c.l.b16 %v4393
    %v4658 = vunpack.c.l.b16 %v4394
    %v4659 = vunpack.c.l.b16 %v4395
    %v4660 = vunpack.c.l.b16 %v4396
    %v4661 = vunpack.c.l.b16 %v4397
    %v4662 = vunpack.c.l.b16 %v4398
    %v4663 = vunpack.c.l.b16 %v4399
    %v4664 = vunpack.c.l.b16 %v4400
    %v4665 = vunpack.c.l.b16 %v4401
    %v4666 = vunpack.c.l.b16 %v4402
    %v4667 = vunpack.c.l.b16 %v4403
    %v4668 = vunpack.c.l.b16 %v4404
    %v4669 = vunpack.c.l.b16 %v4405
    %v4670 = vunpack.c.l.b16 %v4406
    %v4671 = vunpack.c.l.b16 %v4407
    %v4672 = vunpack.c.l.b16 %v4408
    %v4673 = vunpack.c.l.b16 %v4409
    %v4674 = vunpack.c.l.b16 %v4410
    %v4675 = vunpack.c.l.b16 %v4411
    %v4676 = vunpack.c.l.b16 %v4412
    %v4677 = vunpack.c.l.b16 %v4413
    %v4678 = vunpack.c.l.b16 %v4414
    %v4679 = vunpack.c.l.b16 %v4415
    %v4680 = vunpack.c.l.b16 %v4416
    %v4681 = vunpack.c.l.b16 %v4417
    %v4682 = vunpack.c.l.b16 %v4418
    %v4683 = vunpack.c.l.b16 %v4419
    %v4684 = vunpack.c.l.b16 %v4420
    %v4685 = vunpack.c.l.b16 %v4421
    %v4686 = vunpack.c.l.b16 %v4422
    %v4687 = vunpack.c.l.b16 %v4423
    %v4688 = vunpack.c.l.b16 %v4424
    %v4689 = vunpack.c.l.b16 %v4425
    %v4690 = vunpack.c.l.b16 %v4426
    %v4691 = vunpack.c.l.b16 %v4427
    %v4692 = vunpack.c.l.b16 %v4428
    %v4693 = vunpack.c.l.b16 %v4429
    %v4694 = vunpack.c.l.b16 %v4430
    %v4695 = vunpack.c.l.b16 %v4431
    %v4696 = vunpack.c.l.b16 %v4432
    %v4697 = vunpack.c.l.b16 %v4433
    %v4698 = vunpack.c.l.b16 %v4434
    %v4699 = vunpack.c.l.b16 %v4435
    %v4700 = vunpack.c.l.b16 %v4436
    %v4701 = vunpack.c.l.b16 %v4437
    %v4702 = vunpack.c.l.b16 %v4438
    %v4703 = vunpack.c.l.b16 %v4439
    %v4704 = vunpack.c.l.b16 %v4440
    %v4705 = vunpack.c.l.b16 %v4441
    %v4706 = vunpack.c.l.b16 %v4442
    %v4707 = vunpack.c.l.b16 %v4443
    %v4708 = vunpack.c.l.b16 %v4444
    %v4709 = vunpack.c.l.b16 %v4445
    %v4710 = vunpack.c.l.b16 %v4446
    %v4711 = vunpack.c.l.b16 %v4447
    %v4712 = vunpack.c.l.b16 %v4448
    %v4713 = vunpack.c.l.b16 %v4449
    %v4714 = vunpack.c.l.b16 %v4450
    %v4715 = vunpack.c.l.b16 %v4451
    %v4716 = vunpack.c.l.b16 %v4452
    %v4717 = vunpack.c.l.b16 %v4453
    %v4718 = vunpack.c.l.b16 %v4454
    %v4719 = vunpack.c.l.b16 %v4455
    %v4720 = vunpack.c.l.b16 %v4456
    %v4721 = vunpack.c.l.b16 %v4457
    %v4722 = vunpack.c.l.b16 %v4458
    %v4723 = vunpack.c.l.b16 %v4459
    %v4724 = vunpack.c.l.b16 %v4460
    %v4725 = vunpack.c.l.b16 %v4461
    %v4726 = vunpack.c.l.b16 %v4462
    %v4727 = vunpack.c.l.b16 %v4463
    %v4728 = vunpack.c.l.b16 %v4464
    %v4729 = vunpack.c.l.b16 %v4465
    %v4730 = vunpack.c.l.b16 %v4466
    %v4731 = vunpack.c.l.b16 %v4467
    %v4732 = vunpack.c.l.b16 %v4468
    %v4733 = vunpack.c.l.b16 %v4469
    %v4734 = vunpack.c.l.b16 %v4470
    %v4735 = vunpack.c.l.b16 %v4471
    %v4736 = vunpack.c.l.b16 %v4472
    %v4737 = vunpack.c.l.b16 %v4473
    %v4738 = vunpack.c.l.b16 %v4474
    %v4739 = vunpack.c.l.b16 %v4475
    %v4740 = vunpack.c.l.b16 %v4476
    %v4741 = vunpack.c.l.b16 %v4477
    %v4742 = vunpack.c.l.b16 %v4478
    %v4743 = vunpack.c.l.b16 %v4479
    %v4744 = vunpack.c.l.b16 %v4480
    %v4745 = vunpack.c.l.b16 %v4481
    %v4746 = vunpack.c.l.b16 %v4482
    %v4747 = vunpack.c.l.b16 %v4483
    %v4748 = vunpack.c.l.b16 %v4484
    %v4749 = vunpack.c.l.b16 %v4485
    %v4750 = vunpack.c.l.b16 %v4486
    %v4751 = vunpack.c.l.b16 %v4487
    %v4752 = vunpack.c.l.b16 %v4488
    %v4753 = vunpack.c.l.b16 %v4489
    %v4754 = vunpack.c.l.b16 %v4490
    %v4755 = vunpack.c.l.b16 %v4491
    %v4756 = vunpack.c.l.b16 %v4492
    %v4757 = vpack.c.b16 %v4630, %v4629
    %v4758 = vpack.c.b16 %v4632, %v4631
    %v4759 = vpack.c.b16 %v4634, %v4633
    %v4760 = vpack.c.b16 %v4636, %v4635
    %v4761 = vpack.c.b16 %v4638, %v4637
    %v4762 = vpack.c.b16 %v4640, %v4639
    %v4763 = vpack.c.b16 %v4642, %v4641
    %v4764 = vpack.c.b16 %v4644, %v4643
    %v4765 = vpack.c.b16 %v4646, %v4645
    %v4766 = vpack.c.b16 %v4648, %v4647
    %v4767 = vpack.c.b16 %v4650, %v4649
    %v4768 = vpack.c.b16 %v4652, %v4651
    %v4769 = vpack.c.b16 %v4654, %v4653
    %v4770 = vpack.c.b16 %v4656, %v4655
    %v4771 = vpack.c.b16 %v4658, %v4657
    %v4772 = vpack.c.b16 %v4660, %v4659
    %v4773 = vpack.c.b16 %v4662, %v4661
    %v4774 = vpack.c.b16 %v4664, %v4663
    %v4775 = vpack.c.b16 %v4666, %v4665
    %v4776 = vpack.c.b16 %v4668, %v4667
    %v4777 = vpack.c.b16 %v4670, %v4669
    %v4778 = vpack.c.b16 %v4672, %v4671
    %v4779 = vpack.c.b16 %v4674, %v4673
    %v4780 = vpack.c.b16 %v4676, %v4675
    %v4781 = vpack.c.b16 %v4678, %v4677
    %v4782 = vpack.c.b16 %v4680, %v4679
    %v4783 = vpack.c.b16 %v4682, %v4681
    %v4784 = vpack.c.b16 %v4684, %v4683
    %v4785 = vpack.c.b16 %v4686, %v4685
    %v4786 = vpack.c.b16 %v4688, %v4687
    %v4787 = vpack.c.b16 %v4690, %v4689
    %v4788 = vpack.c.b16 %v4692, %v4691
    %v4789 = vpack.c.b16 %v4694, %v4693
    %v4790 = vpack.c.b16 %v4696, %v4695
    %v4791 = vpack.c.b16 %v4698, %v4697
    %v4792 = vpack.c.b16 %v4700, %v4699
    %v4793 = vpack.c.b16 %v4702, %v4701
    %v4794 = vpack.c.b16 %v4704, %v4703
    %v4795 = vpack.c.b16 %v4706, %v4705
    %v4796 = vpack.c.b16 %v4708, %v4707
    %v4797 = vpack.c.b16 %v4710, %v4709
    %v4798 = vpack.c.b16 %v4712, %v4711
    %v4799 = vpack.c.b16 %v4714, %v4713
    %v4800 = vpack.c.b16 %v4716, %v4715
    %v4801 = vpack.c.b16 %v4718, %v4717
    %v4802 = vpack.c.b16 %v4720, %v4719
    %v4803 = vpack.c.b16 %v4722, %v4721
    %v4804 = vpack.c.b16 %v4724, %v4723
    %v4805 = vpack.c.b16 %v4726, %v4725
    %v4806 = vpack.c.b16 %v4728, %v4727
    %v4807 = vpack.c.b16 %v4730, %v4729
    %v4808 = vpack.c.b16 %v4732, %v4731
    %v4809 = vpack.c.b16 %v4734, %v4733
    %v4810 = vpack.c.b16 %v4736, %v4735
    %v4811 = vpack.c.b16 %v4738, %v4737
    %v4812 = vpack.c.b16 %v4740, %v4739
    %v4813 = vpack.c.b16 %v4742, %v4741
    %v4814 = vpack.c.b16 %v4744, %v4743
    %v4815 = vpack.c.b16 %v4746, %v4745
    %v4816 = vpack.c.b16 %v4748, %v4747
    %v4817 = vpack.c.b16 %v4750, %v4749
    %v4818 = vpack.c.b16 %v4752, %v4751
    %v4819 = vpack.c.b16 %v4754, %v4753
    %v4820 = vpack.c.b16 %v4756, %v4755
    %4885 = vmatprep.subr.bf16.mxu0 0
    %4886 = vmatpush1.bf16.msra.mxu0 %v4764
    %4887 = vmatprep.subr.bf16.mxu0 0
    %4888 = vmatpush1.bf16.msra.mxu0 %v4763
    %4889 = vmatprep.subr.bf16.mxu0 0
    %4890 = vmatpush1.bf16.msra.mxu0 %v4762
    %4891 = vmatprep.subr.bf16.mxu0 0
    %4892 = vmatpush1.bf16.msra.mxu0 %v4761
    %4893 = vmatprep.subr.bf16.mxu0 0
    %4894 = vmatpush1.bf16.msra.mxu0 %v4760
    %4895 = vmatprep.subr.bf16.mxu0 0
    %4896 = vmatpush1.bf16.msra.mxu0 %v4759
    %4897 = vmatprep.subr.bf16.mxu0 0
    %4898 = vmatpush1.bf16.msra.mxu0 %v4758
    %4899 = vmatprep.subr.bf16.mxu0 0
    %4900 = vmatpush1.bf16.msra.mxu0 %v4757
    %4901 = vmatprep.subr.bf16.mxu0 0
    %4902 = vmatpush2.bf16.msra.mxu0 %v4772
    %4903 = vmatprep.subr.bf16.mxu0 0
    %4904 = vmatpush2.bf16.msra.mxu0 %v4771
    %4905 = vmatprep.subr.bf16.mxu0 0
    %4906 = vmatpush2.bf16.msra.mxu0 %v4770
    %4907 = vmatprep.subr.bf16.mxu0 0
    %4908 = vmatpush2.bf16.msra.mxu0 %v4769
    %4909 = vmatprep.subr.bf16.mxu0 0
    %4910 = vmatpush2.bf16.msra.mxu0 %v4768
    %4911 = vmatprep.subr.bf16.mxu0 0
    %4912 = vmatpush2.bf16.msra.mxu0 %v4767
    %4913 = vmatprep.subr.bf16.mxu0 0
    %4914 = vmatpush2.bf16.msra.mxu0 %v4766
    %4915 = vmatprep.subr.bf16.mxu0 0
    %4916 = vmatpush2.bf16.msra.mxu0 %v4765
    %4917 = vmatprep.mubr.bf16.mxu0 %v236
    %4918 = vmatmul.mubr.bf16.gmra.mxu0 %v235
    %v4919 = vpop.f32.mrf.mxu0
    %v4920 = vadd.f32 %v4499, %v4919
    %v4921 = vpop.f32.mrf.mxu0
    %v4922 = vpop.f32.mrf.mxu0
    %v4923 = vpop.f32.mrf.mxu0
    %4924 = vdwg.mxu0
    %4925 = vmatprep.subr.bf16.mxu0 0
    %4926 = vmatpush1.bf16.msra.mxu0 %v4780
    %4927 = vmatprep.subr.bf16.mxu0 0
    %4928 = vmatpush1.bf16.msra.mxu0 %v4779
    %4929 = vmatprep.subr.bf16.mxu0 0
    %4930 = vmatpush1.bf16.msra.mxu0 %v4778
    %4931 = vmatprep.subr.bf16.mxu0 0
    %4932 = vmatpush1.bf16.msra.mxu0 %v4777
    %4933 = vmatprep.subr.bf16.mxu0 0
    %4934 = vmatpush1.bf16.msra.mxu0 %v4776
    %4935 = vmatprep.subr.bf16.mxu0 0
    %4936 = vmatpush1.bf16.msra.mxu0 %v4775
    %4937 = vmatprep.subr.bf16.mxu0 0
    %4938 = vmatpush1.bf16.msra.mxu0 %v4774
    %4939 = vmatprep.subr.bf16.mxu0 0
    %4940 = vmatpush1.bf16.msra.mxu0 %v4773
    %4941 = vmatprep.subr.bf16.mxu0 0
    %4942 = vmatpush2.bf16.msra.mxu0 %v4788
    %4943 = vmatprep.subr.bf16.mxu0 0
    %4944 = vmatpush2.bf16.msra.mxu0 %v4787
    %4945 = vmatprep.subr.bf16.mxu0 0
    %4946 = vmatpush2.bf16.msra.mxu0 %v4786
    %4947 = vmatprep.subr.bf16.mxu0 0
    %4948 = vmatpush2.bf16.msra.mxu0 %v4785
    %4949 = vmatprep.subr.bf16.mxu0 0
    %4950 = vmatpush2.bf16.msra.mxu0 %v4784
    %4951 = vmatprep.subr.bf16.mxu0 0
    %4952 = vmatpush2.bf16.msra.mxu0 %v4783
    %4953 = vmatprep.subr.bf16.mxu0 0
    %4954 = vmatpush2.bf16.msra.mxu0 %v4782
    %4955 = vmatprep.subr.bf16.mxu0 0
    %4956 = vmatpush2.bf16.msra.mxu0 %v4781
    %4957 = vmatprep.mubr.bf16.mxu0 %v238
    %4958 = vmatmul.mubr.bf16.gmra.mxu0 %v237
    %v4959 = vpop.f32.mrf.mxu0
    %v4960 = vadd.f32 %v4920, %v4959
    %v4961 = vpop.f32.mrf.mxu0
    %v4962 = vpop.f32.mrf.mxu0
    %v4963 = vpop.f32.mrf.mxu0
    %4964 = vdwg.mxu0
    %4965 = vmatprep.subr.bf16.mxu0 0
    %4966 = vmatpush1.bf16.msra.mxu0 %v4796
    %4967 = vmatprep.subr.bf16.mxu0 0
    %4968 = vmatpush1.bf16.msra.mxu0 %v4795
    %4969 = vmatprep.subr.bf16.mxu0 0
    %4970 = vmatpush1.bf16.msra.mxu0 %v4794
    %4971 = vmatprep.subr.bf16.mxu0 0
    %4972 = vmatpush1.bf16.msra.mxu0 %v4793
    %4973 = vmatprep.subr.bf16.mxu0 0
    %4974 = vmatpush1.bf16.msra.mxu0 %v4792
    %4975 = vmatprep.subr.bf16.mxu0 0
    %4976 = vmatpush1.bf16.msra.mxu0 %v4791
    %4977 = vmatprep.subr.bf16.mxu0 0
    %4978 = vmatpush1.bf16.msra.mxu0 %v4790
    %4979 = vmatprep.subr.bf16.mxu0 0
    %4980 = vmatpush1.bf16.msra.mxu0 %v4789
    %4981 = vmatprep.subr.bf16.mxu0 0
    %4982 = vmatpush2.bf16.msra.mxu0 %v4804
    %4983 = vmatprep.subr.bf16.mxu0 0
    %4984 = vmatpush2.bf16.msra.mxu0 %v4803
    %4985 = vmatprep.subr.bf16.mxu0 0
    %4986 = vmatpush2.bf16.msra.mxu0 %v4802
    %4987 = vmatprep.subr.bf16.mxu0 0
    %4988 = vmatpush2.bf16.msra.mxu0 %v4801
    %4989 = vmatprep.subr.bf16.mxu0 0
    %4990 = vmatpush2.bf16.msra.mxu0 %v4800
    %4991 = vmatprep.subr.bf16.mxu0 0
    %4992 = vmatpush2.bf16.msra.mxu0 %v4799
    %4993 = vmatprep.subr.bf16.mxu0 0
    %4994 = vmatpush2.bf16.msra.mxu0 %v4798
    %4995 = vmatprep.subr.bf16.mxu0 0
    %4996 = vmatpush2.bf16.msra.mxu0 %v4797
    %4997 = vmatprep.mubr.bf16.mxu0 %v240
    %4998 = vmatmul.mubr.bf16.gmra.mxu0 %v239
    %v4999 = vpop.f32.mrf.mxu0
    %v5000 = vadd.f32 %v4960, %v4999
    %v5001 = vpop.f32.mrf.mxu0
    %v5002 = vpop.f32.mrf.mxu0
    %v5003 = vpop.f32.mrf.mxu0
    %5004 = vdwg.mxu0
    %5005 = vmatprep.subr.bf16.mxu0 0
    %5006 = vmatpush1.bf16.msra.mxu0 %v4812
    %5007 = vmatprep.subr.bf16.mxu0 0
    %5008 = vmatpush1.bf16.msra.mxu0 %v4811
    %5009 = vmatprep.subr.bf16.mxu0 0
    %5010 = vmatpush1.bf16.msra.mxu0 %v4810
    %5011 = vmatprep.subr.bf16.mxu0 0
    %5012 = vmatpush1.bf16.msra.mxu0 %v4809
    %5013 = vmatprep.subr.bf16.mxu0 0
    %5014 = vmatpush1.bf16.msra.mxu0 %v4808
    %5015 = vmatprep.subr.bf16.mxu0 0
    %5016 = vmatpush1.bf16.msra.mxu0 %v4807
    %5017 = vmatprep.subr.bf16.mxu0 0
    %5018 = vmatpush1.bf16.msra.mxu0 %v4806
    %5019 = vmatprep.subr.bf16.mxu0 0
    %5020 = vmatpush1.bf16.msra.mxu0 %v4805
    %5021 = vmatprep.subr.bf16.mxu0 0
    %5022 = vmatpush2.bf16.msra.mxu0 %v4820
    %5023 = vmatprep.subr.bf16.mxu0 0
    %5024 = vmatpush2.bf16.msra.mxu0 %v4819
    %5025 = vmatprep.subr.bf16.mxu0 0
    %5026 = vmatpush2.bf16.msra.mxu0 %v4818
    %5027 = vmatprep.subr.bf16.mxu0 0
    %5028 = vmatpush2.bf16.msra.mxu0 %v4817
    %5029 = vmatprep.subr.bf16.mxu0 0
    %5030 = vmatpush2.bf16.msra.mxu0 %v4816
    %5031 = vmatprep.subr.bf16.mxu0 0
    %5032 = vmatpush2.bf16.msra.mxu0 %v4815
    %5033 = vmatprep.subr.bf16.mxu0 0
    %5034 = vmatpush2.bf16.msra.mxu0 %v4814
    %5035 = vmatprep.subr.bf16.mxu0 0
    %5036 = vmatpush2.bf16.msra.mxu0 %v4813
    %5037 = vmatprep.mubr.bf16.mxu0 %v242
    %5038 = vmatmul.mubr.bf16.gmra.mxu0 %v241
    %v5039 = vpop.f32.mrf.mxu0
    %v5040 = vadd.f32 %v5000, %v5039
    %v5041 = vpop.f32.mrf.mxu0
    %v5042 = vpop.f32.mrf.mxu0
    %v5043 = vpop.f32.mrf.mxu0
    %5044 = vdwg.mxu0
    %v5045 = vlaneseq
    %v5046 = vshrl.u32 %v5045, 7
    %v5047 = vsub.s32 6, %v5046
    %v5048 = vrot.slane %v186, %v5047
    %v5049 = vadd.f32 %v5040, %v5048
    %5050 = vst.msk [vmem:[#allocation2 + $0xc] sm:$0x3] %vm927, %v5049
    %s5051 = scalar_lea.vmem %s1, 3584
    %v5052 = vld [vmem:[%s5051] sm:$0xf]
    %v5053 = vld [vmem:[%s5051 + $0x4] sm:$0xf]
    %v5054 = vld [vmem:[%s5051 + $0x8] sm:$0xf]
    %v5055 = vld [vmem:[%s5051 + $0xc] sm:$0xf]
    %v5056 = vld [vmem:[%s5051 + $0x10] sm:$0xf]
    %v5057 = vld [vmem:[%s5051 + $0x14] sm:$0xf]
    %v5058 = vld [vmem:[%s5051 + $0x18] sm:$0xf]
    %v5059 = vld [vmem:[%s5051 + $0x1c] sm:$0xf]
    %v5060 = vld [vmem:[%s5051 + $0x20] sm:$0xf]
    %v5061 = vld [vmem:[%s5051 + $0x24] sm:$0xf]
    %v5062 = vld [vmem:[%s5051 + $0x28] sm:$0xf]
    %v5063 = vld [vmem:[%s5051 + $0x2c] sm:$0xf]
    %v5064 = vld [vmem:[%s5051 + $0x30] sm:$0xf]
    %v5065 = vld [vmem:[%s5051 + $0x34] sm:$0xf]
    %v5066 = vld [vmem:[%s5051 + $0x38] sm:$0xf]
    %v5067 = vld [vmem:[%s5051 + $0x3c] sm:$0xf]
    %v5068 = vld [vmem:[%s5051 + $0x40] sm:$0xf]
    %v5069 = vld [vmem:[%s5051 + $0x44] sm:$0xf]
    %v5070 = vld [vmem:[%s5051 + $0x48] sm:$0xf]
    %v5071 = vld [vmem:[%s5051 + $0x4c] sm:$0xf]
    %v5072 = vld [vmem:[%s5051 + $0x50] sm:$0xf]
    %v5073 = vld [vmem:[%s5051 + $0x54] sm:$0xf]
    %v5074 = vld [vmem:[%s5051 + $0x58] sm:$0xf]
    %v5075 = vld [vmem:[%s5051 + $0x5c] sm:$0xf]
    %v5076 = vld [vmem:[%s5051 + $0x60] sm:$0xf]
    %v5077 = vld [vmem:[%s5051 + $0x64] sm:$0xf]
    %v5078 = vld [vmem:[%s5051 + $0x68] sm:$0xf]
    %v5079 = vld [vmem:[%s5051 + $0x6c] sm:$0xf]
    %v5080 = vld [vmem:[%s5051 + $0x70] sm:$0xf]
    %v5081 = vld [vmem:[%s5051 + $0x74] sm:$0xf]
    %v5082 = vld [vmem:[%s5051 + $0x78] sm:$0xf]
    %v5083 = vld [vmem:[%s5051 + $0x7c] sm:$0xf]
    %v5084 = vld [vmem:[%s5051 + $0x80] sm:$0xf]
    %v5085 = vld [vmem:[%s5051 + $0x84] sm:$0xf]
    %v5086 = vld [vmem:[%s5051 + $0x88] sm:$0xf]
    %v5087 = vld [vmem:[%s5051 + $0x8c] sm:$0xf]
    %v5088 = vld [vmem:[%s5051 + $0x90] sm:$0xf]
    %v5089 = vld [vmem:[%s5051 + $0x94] sm:$0xf]
    %v5090 = vld [vmem:[%s5051 + $0x98] sm:$0xf]
    %v5091 = vld [vmem:[%s5051 + $0x9c] sm:$0xf]
    %v5092 = vld [vmem:[%s5051 + $0xa0] sm:$0xf]
    %v5093 = vld [vmem:[%s5051 + $0xa4] sm:$0xf]
    %v5094 = vld [vmem:[%s5051 + $0xa8] sm:$0xf]
    %v5095 = vld [vmem:[%s5051 + $0xac] sm:$0xf]
    %v5096 = vld [vmem:[%s5051 + $0xb0] sm:$0xf]
    %v5097 = vld [vmem:[%s5051 + $0xb4] sm:$0xf]
    %v5098 = vld [vmem:[%s5051 + $0xb8] sm:$0xf]
    %v5099 = vld [vmem:[%s5051 + $0xbc] sm:$0xf]
    %v5100 = vld [vmem:[%s5051 + $0xc0] sm:$0xf]
    %v5101 = vld [vmem:[%s5051 + $0xc4] sm:$0xf]
    %v5102 = vld [vmem:[%s5051 + $0xc8] sm:$0xf]
    %v5103 = vld [vmem:[%s5051 + $0xcc] sm:$0xf]
    %v5104 = vld [vmem:[%s5051 + $0xd0] sm:$0xf]
    %v5105 = vld [vmem:[%s5051 + $0xd4] sm:$0xf]
    %v5106 = vld [vmem:[%s5051 + $0xd8] sm:$0xf]
    %v5107 = vld [vmem:[%s5051 + $0xdc] sm:$0xf]
    %v5108 = vld [vmem:[%s5051 + $0xe0] sm:$0xf]
    %v5109 = vld [vmem:[%s5051 + $0xe4] sm:$0xf]
    %v5110 = vld [vmem:[%s5051 + $0xe8] sm:$0xf]
    %v5111 = vld [vmem:[%s5051 + $0xec] sm:$0xf]
    %v5112 = vld [vmem:[%s5051 + $0xf0] sm:$0xf]
    %v5113 = vld [vmem:[%s5051 + $0xf4] sm:$0xf]
    %v5114 = vld [vmem:[%s5051 + $0xf8] sm:$0xf]
    %v5115 = vld [vmem:[%s5051 + $0xfc] sm:$0xf]
    %v5116 = vld [vmem:[%s5051 + $0x100] sm:$0xf]
    %v5117 = vld [vmem:[%s5051 + $0x104] sm:$0xf]
    %v5118 = vld [vmem:[%s5051 + $0x108] sm:$0xf]
    %v5119 = vld [vmem:[%s5051 + $0x10c] sm:$0xf]
    %v5120 = vld [vmem:[%s5051 + $0x110] sm:$0xf]
    %v5121 = vld [vmem:[%s5051 + $0x114] sm:$0xf]
    %v5122 = vld [vmem:[%s5051 + $0x118] sm:$0xf]
    %v5123 = vld [vmem:[%s5051 + $0x11c] sm:$0xf]
    %v5124 = vld [vmem:[%s5051 + $0x120] sm:$0xf]
    %v5125 = vld [vmem:[%s5051 + $0x124] sm:$0xf]
    %v5126 = vld [vmem:[%s5051 + $0x128] sm:$0xf]
    %v5127 = vld [vmem:[%s5051 + $0x12c] sm:$0xf]
    %v5128 = vld [vmem:[%s5051 + $0x130] sm:$0xf]
    %v5129 = vld [vmem:[%s5051 + $0x134] sm:$0xf]
    %v5130 = vld [vmem:[%s5051 + $0x138] sm:$0xf]
    %v5131 = vld [vmem:[%s5051 + $0x13c] sm:$0xf]
    %v5132 = vld [vmem:[%s5051 + $0x140] sm:$0xf]
    %v5133 = vld [vmem:[%s5051 + $0x144] sm:$0xf]
    %v5134 = vld [vmem:[%s5051 + $0x148] sm:$0xf]
    %v5135 = vld [vmem:[%s5051 + $0x14c] sm:$0xf]
    %v5136 = vld [vmem:[%s5051 + $0x150] sm:$0xf]
    %v5137 = vld [vmem:[%s5051 + $0x154] sm:$0xf]
    %v5138 = vld [vmem:[%s5051 + $0x158] sm:$0xf]
    %v5139 = vld [vmem:[%s5051 + $0x15c] sm:$0xf]
    %v5140 = vld [vmem:[%s5051 + $0x160] sm:$0xf]
    %v5141 = vld [vmem:[%s5051 + $0x164] sm:$0xf]
    %v5142 = vld [vmem:[%s5051 + $0x168] sm:$0xf]
    %v5143 = vld [vmem:[%s5051 + $0x16c] sm:$0xf]
    %v5144 = vld [vmem:[%s5051 + $0x170] sm:$0xf]
    %v5145 = vld [vmem:[%s5051 + $0x174] sm:$0xf]
    %v5146 = vld [vmem:[%s5051 + $0x178] sm:$0xf]
    %v5147 = vld [vmem:[%s5051 + $0x17c] sm:$0xf]
    %v5148 = vld [vmem:[%s5051 + $0x180] sm:$0xf]
    %v5149 = vld [vmem:[%s5051 + $0x184] sm:$0xf]
    %v5150 = vld [vmem:[%s5051 + $0x188] sm:$0xf]
    %v5151 = vld [vmem:[%s5051 + $0x18c] sm:$0xf]
    %v5152 = vld [vmem:[%s5051 + $0x190] sm:$0xf]
    %v5153 = vld [vmem:[%s5051 + $0x194] sm:$0xf]
    %v5154 = vld [vmem:[%s5051 + $0x198] sm:$0xf]
    %v5155 = vld [vmem:[%s5051 + $0x19c] sm:$0xf]
    %v5156 = vld [vmem:[%s5051 + $0x1a0] sm:$0xf]
    %v5157 = vld [vmem:[%s5051 + $0x1a4] sm:$0xf]
    %v5158 = vld [vmem:[%s5051 + $0x1a8] sm:$0xf]
    %v5159 = vld [vmem:[%s5051 + $0x1ac] sm:$0xf]
    %v5160 = vld [vmem:[%s5051 + $0x1b0] sm:$0xf]
    %v5161 = vld [vmem:[%s5051 + $0x1b4] sm:$0xf]
    %v5162 = vld [vmem:[%s5051 + $0x1b8] sm:$0xf]
    %v5163 = vld [vmem:[%s5051 + $0x1bc] sm:$0xf]
    %v5164 = vld [vmem:[%s5051 + $0x1c0] sm:$0xf]
    %v5165 = vld [vmem:[%s5051 + $0x1c4] sm:$0xf]
    %v5166 = vld [vmem:[%s5051 + $0x1c8] sm:$0xf]
    %v5167 = vld [vmem:[%s5051 + $0x1cc] sm:$0xf]
    %v5168 = vld [vmem:[%s5051 + $0x1d0] sm:$0xf]
    %v5169 = vld [vmem:[%s5051 + $0x1d4] sm:$0xf]
    %v5170 = vld [vmem:[%s5051 + $0x1d8] sm:$0xf]
    %v5171 = vld [vmem:[%s5051 + $0x1dc] sm:$0xf]
    %v5172 = vld [vmem:[%s5051 + $0x1e0] sm:$0xf]
    %v5173 = vld [vmem:[%s5051 + $0x1e4] sm:$0xf]
    %v5174 = vld [vmem:[%s5051 + $0x1e8] sm:$0xf]
    %v5175 = vld [vmem:[%s5051 + $0x1ec] sm:$0xf]
    %v5176 = vld [vmem:[%s5051 + $0x1f0] sm:$0xf]
    %v5177 = vld [vmem:[%s5051 + $0x1f4] sm:$0xf]
    %v5178 = vld [vmem:[%s5051 + $0x1f8] sm:$0xf]
    %v5179 = vld [vmem:[%s5051 + $0x1fc] sm:$0xf]
    %s5180 = scalar_lea.vmem %s2, 7
    %v5181 = vld [vmem:[%s5180] sm:$0x1]
    %v5183 = vlaneseq
    %v5184 = vshrl.u32 %v5183, 7
    %v5185 = vsub.s32 0, %v5184
    %v5186 = vrot.slane %v5181, %v5185
    %v5316 = vunpack.c.l.b16 %v5052
    %v5317 = vunpack.c.l.b16 %v5053
    %v5318 = vunpack.c.l.b16 %v5054
    %v5319 = vunpack.c.l.b16 %v5055
    %v5320 = vunpack.c.l.b16 %v5056
    %v5321 = vunpack.c.l.b16 %v5057
    %v5322 = vunpack.c.l.b16 %v5058
    %v5323 = vunpack.c.l.b16 %v5059
    %v5324 = vunpack.c.l.b16 %v5060
    %v5325 = vunpack.c.l.b16 %v5061
    %v5326 = vunpack.c.l.b16 %v5062
    %v5327 = vunpack.c.l.b16 %v5063
    %v5328 = vunpack.c.l.b16 %v5064
    %v5329 = vunpack.c.l.b16 %v5065
    %v5330 = vunpack.c.l.b16 %v5066
    %v5331 = vunpack.c.l.b16 %v5067
    %v5332 = vunpack.c.l.b16 %v5068
    %v5333 = vunpack.c.l.b16 %v5069
    %v5334 = vunpack.c.l.b16 %v5070
    %v5335 = vunpack.c.l.b16 %v5071
    %v5336 = vunpack.c.l.b16 %v5072
    %v5337 = vunpack.c.l.b16 %v5073
    %v5338 = vunpack.c.l.b16 %v5074
    %v5339 = vunpack.c.l.b16 %v5075
    %v5340 = vunpack.c.l.b16 %v5076
    %v5341 = vunpack.c.l.b16 %v5077
    %v5342 = vunpack.c.l.b16 %v5078
    %v5343 = vunpack.c.l.b16 %v5079
    %v5344 = vunpack.c.l.b16 %v5080
    %v5345 = vunpack.c.l.b16 %v5081
    %v5346 = vunpack.c.l.b16 %v5082
    %v5347 = vunpack.c.l.b16 %v5083
    %v5348 = vunpack.c.l.b16 %v5084
    %v5349 = vunpack.c.l.b16 %v5085
    %v5350 = vunpack.c.l.b16 %v5086
    %v5351 = vunpack.c.l.b16 %v5087
    %v5352 = vunpack.c.l.b16 %v5088
    %v5353 = vunpack.c.l.b16 %v5089
    %v5354 = vunpack.c.l.b16 %v5090
    %v5355 = vunpack.c.l.b16 %v5091
    %v5356 = vunpack.c.l.b16 %v5092
    %v5357 = vunpack.c.l.b16 %v5093
    %v5358 = vunpack.c.l.b16 %v5094
    %v5359 = vunpack.c.l.b16 %v5095
    %v5360 = vunpack.c.l.b16 %v5096
    %v5361 = vunpack.c.l.b16 %v5097
    %v5362 = vunpack.c.l.b16 %v5098
    %v5363 = vunpack.c.l.b16 %v5099
    %v5364 = vunpack.c.l.b16 %v5100
    %v5365 = vunpack.c.l.b16 %v5101
    %v5366 = vunpack.c.l.b16 %v5102
    %v5367 = vunpack.c.l.b16 %v5103
    %v5368 = vunpack.c.l.b16 %v5104
    %v5369 = vunpack.c.l.b16 %v5105
    %v5370 = vunpack.c.l.b16 %v5106
    %v5371 = vunpack.c.l.b16 %v5107
    %v5372 = vunpack.c.l.b16 %v5108
    %v5373 = vunpack.c.l.b16 %v5109
    %v5374 = vunpack.c.l.b16 %v5110
    %v5375 = vunpack.c.l.b16 %v5111
    %v5376 = vunpack.c.l.b16 %v5112
    %v5377 = vunpack.c.l.b16 %v5113
    %v5378 = vunpack.c.l.b16 %v5114
    %v5379 = vunpack.c.l.b16 %v5115
    %v5380 = vunpack.c.l.b16 %v5116
    %v5381 = vunpack.c.l.b16 %v5117
    %v5382 = vunpack.c.l.b16 %v5118
    %v5383 = vunpack.c.l.b16 %v5119
    %v5384 = vunpack.c.l.b16 %v5120
    %v5385 = vunpack.c.l.b16 %v5121
    %v5386 = vunpack.c.l.b16 %v5122
    %v5387 = vunpack.c.l.b16 %v5123
    %v5388 = vunpack.c.l.b16 %v5124
    %v5389 = vunpack.c.l.b16 %v5125
    %v5390 = vunpack.c.l.b16 %v5126
    %v5391 = vunpack.c.l.b16 %v5127
    %v5392 = vunpack.c.l.b16 %v5128
    %v5393 = vunpack.c.l.b16 %v5129
    %v5394 = vunpack.c.l.b16 %v5130
    %v5395 = vunpack.c.l.b16 %v5131
    %v5396 = vunpack.c.l.b16 %v5132
    %v5397 = vunpack.c.l.b16 %v5133
    %v5398 = vunpack.c.l.b16 %v5134
    %v5399 = vunpack.c.l.b16 %v5135
    %v5400 = vunpack.c.l.b16 %v5136
    %v5401 = vunpack.c.l.b16 %v5137
    %v5402 = vunpack.c.l.b16 %v5138
    %v5403 = vunpack.c.l.b16 %v5139
    %v5404 = vunpack.c.l.b16 %v5140
    %v5405 = vunpack.c.l.b16 %v5141
    %v5406 = vunpack.c.l.b16 %v5142
    %v5407 = vunpack.c.l.b16 %v5143
    %v5408 = vunpack.c.l.b16 %v5144
    %v5409 = vunpack.c.l.b16 %v5145
    %v5410 = vunpack.c.l.b16 %v5146
    %v5411 = vunpack.c.l.b16 %v5147
    %v5412 = vunpack.c.l.b16 %v5148
    %v5413 = vunpack.c.l.b16 %v5149
    %v5414 = vunpack.c.l.b16 %v5150
    %v5415 = vunpack.c.l.b16 %v5151
    %v5416 = vunpack.c.l.b16 %v5152
    %v5417 = vunpack.c.l.b16 %v5153
    %v5418 = vunpack.c.l.b16 %v5154
    %v5419 = vunpack.c.l.b16 %v5155
    %v5420 = vunpack.c.l.b16 %v5156
    %v5421 = vunpack.c.l.b16 %v5157
    %v5422 = vunpack.c.l.b16 %v5158
    %v5423 = vunpack.c.l.b16 %v5159
    %v5424 = vunpack.c.l.b16 %v5160
    %v5425 = vunpack.c.l.b16 %v5161
    %v5426 = vunpack.c.l.b16 %v5162
    %v5427 = vunpack.c.l.b16 %v5163
    %v5428 = vunpack.c.l.b16 %v5164
    %v5429 = vunpack.c.l.b16 %v5165
    %v5430 = vunpack.c.l.b16 %v5166
    %v5431 = vunpack.c.l.b16 %v5167
    %v5432 = vunpack.c.l.b16 %v5168
    %v5433 = vunpack.c.l.b16 %v5169
    %v5434 = vunpack.c.l.b16 %v5170
    %v5435 = vunpack.c.l.b16 %v5171
    %v5436 = vunpack.c.l.b16 %v5172
    %v5437 = vunpack.c.l.b16 %v5173
    %v5438 = vunpack.c.l.b16 %v5174
    %v5439 = vunpack.c.l.b16 %v5175
    %v5440 = vunpack.c.l.b16 %v5176
    %v5441 = vunpack.c.l.b16 %v5177
    %v5442 = vunpack.c.l.b16 %v5178
    %v5443 = vunpack.c.l.b16 %v5179
    %v5444 = vpack.c.b16 %v5317, %v5316
    %v5445 = vpack.c.b16 %v5319, %v5318
    %v5446 = vpack.c.b16 %v5321, %v5320
    %v5447 = vpack.c.b16 %v5323, %v5322
    %v5448 = vpack.c.b16 %v5325, %v5324
    %v5449 = vpack.c.b16 %v5327, %v5326
    %v5450 = vpack.c.b16 %v5329, %v5328
    %v5451 = vpack.c.b16 %v5331, %v5330
    %v5452 = vpack.c.b16 %v5333, %v5332
    %v5453 = vpack.c.b16 %v5335, %v5334
    %v5454 = vpack.c.b16 %v5337, %v5336
    %v5455 = vpack.c.b16 %v5339, %v5338
    %v5456 = vpack.c.b16 %v5341, %v5340
    %v5457 = vpack.c.b16 %v5343, %v5342
    %v5458 = vpack.c.b16 %v5345, %v5344
    %v5459 = vpack.c.b16 %v5347, %v5346
    %v5460 = vpack.c.b16 %v5349, %v5348
    %v5461 = vpack.c.b16 %v5351, %v5350
    %v5462 = vpack.c.b16 %v5353, %v5352
    %v5463 = vpack.c.b16 %v5355, %v5354
    %v5464 = vpack.c.b16 %v5357, %v5356
    %v5465 = vpack.c.b16 %v5359, %v5358
    %v5466 = vpack.c.b16 %v5361, %v5360
    %v5467 = vpack.c.b16 %v5363, %v5362
    %v5468 = vpack.c.b16 %v5365, %v5364
    %v5469 = vpack.c.b16 %v5367, %v5366
    %v5470 = vpack.c.b16 %v5369, %v5368
    %v5471 = vpack.c.b16 %v5371, %v5370
    %v5472 = vpack.c.b16 %v5373, %v5372
    %v5473 = vpack.c.b16 %v5375, %v5374
    %v5474 = vpack.c.b16 %v5377, %v5376
    %v5475 = vpack.c.b16 %v5379, %v5378
    %v5476 = vpack.c.b16 %v5381, %v5380
    %v5477 = vpack.c.b16 %v5383, %v5382
    %v5478 = vpack.c.b16 %v5385, %v5384
    %v5479 = vpack.c.b16 %v5387, %v5386
    %v5480 = vpack.c.b16 %v5389, %v5388
    %v5481 = vpack.c.b16 %v5391, %v5390
    %v5482 = vpack.c.b16 %v5393, %v5392
    %v5483 = vpack.c.b16 %v5395, %v5394
    %v5484 = vpack.c.b16 %v5397, %v5396
    %v5485 = vpack.c.b16 %v5399, %v5398
    %v5486 = vpack.c.b16 %v5401, %v5400
    %v5487 = vpack.c.b16 %v5403, %v5402
    %v5488 = vpack.c.b16 %v5405, %v5404
    %v5489 = vpack.c.b16 %v5407, %v5406
    %v5490 = vpack.c.b16 %v5409, %v5408
    %v5491 = vpack.c.b16 %v5411, %v5410
    %v5492 = vpack.c.b16 %v5413, %v5412
    %v5493 = vpack.c.b16 %v5415, %v5414
    %v5494 = vpack.c.b16 %v5417, %v5416
    %v5495 = vpack.c.b16 %v5419, %v5418
    %v5496 = vpack.c.b16 %v5421, %v5420
    %v5497 = vpack.c.b16 %v5423, %v5422
    %v5498 = vpack.c.b16 %v5425, %v5424
    %v5499 = vpack.c.b16 %v5427, %v5426
    %v5500 = vpack.c.b16 %v5429, %v5428
    %v5501 = vpack.c.b16 %v5431, %v5430
    %v5502 = vpack.c.b16 %v5433, %v5432
    %v5503 = vpack.c.b16 %v5435, %v5434
    %v5504 = vpack.c.b16 %v5437, %v5436
    %v5505 = vpack.c.b16 %v5439, %v5438
    %v5506 = vpack.c.b16 %v5441, %v5440
    %v5507 = vpack.c.b16 %v5443, %v5442
    %5572 = vmatprep.subr.bf16.mxu0 0
    %5573 = vmatpush1.bf16.msra.mxu0 %v5451
    %5574 = vmatprep.subr.bf16.mxu0 0
    %5575 = vmatpush1.bf16.msra.mxu0 %v5450
    %5576 = vmatprep.subr.bf16.mxu0 0
    %5577 = vmatpush1.bf16.msra.mxu0 %v5449
    %5578 = vmatprep.subr.bf16.mxu0 0
    %5579 = vmatpush1.bf16.msra.mxu0 %v5448
    %5580 = vmatprep.subr.bf16.mxu0 0
    %5581 = vmatpush1.bf16.msra.mxu0 %v5447
    %5582 = vmatprep.subr.bf16.mxu0 0
    %5583 = vmatpush1.bf16.msra.mxu0 %v5446
    %5584 = vmatprep.subr.bf16.mxu0 0
    %5585 = vmatpush1.bf16.msra.mxu0 %v5445
    %5586 = vmatprep.subr.bf16.mxu0 0
    %5587 = vmatpush1.bf16.msra.mxu0 %v5444
    %5588 = vmatprep.subr.bf16.mxu0 0
    %5589 = vmatpush2.bf16.msra.mxu0 %v5459
    %5590 = vmatprep.subr.bf16.mxu0 0
    %5591 = vmatpush2.bf16.msra.mxu0 %v5458
    %5592 = vmatprep.subr.bf16.mxu0 0
    %5593 = vmatpush2.bf16.msra.mxu0 %v5457
    %5594 = vmatprep.subr.bf16.mxu0 0
    %5595 = vmatpush2.bf16.msra.mxu0 %v5456
    %5596 = vmatprep.subr.bf16.mxu0 0
    %5597 = vmatpush2.bf16.msra.mxu0 %v5455
    %5598 = vmatprep.subr.bf16.mxu0 0
    %5599 = vmatpush2.bf16.msra.mxu0 %v5454
    %5600 = vmatprep.subr.bf16.mxu0 0
    %5601 = vmatpush2.bf16.msra.mxu0 %v5453
    %5602 = vmatprep.subr.bf16.mxu0 0
    %5603 = vmatpush2.bf16.msra.mxu0 %v5452
    %5604 = vmatprep.mubr.bf16.mxu0 %v236
    %5605 = vmatmul.mubr.bf16.gmra.mxu0 %v235
    %v5606 = vpop.f32.mrf.mxu0
    %v5607 = vadd.f32 %v5186, %v5606
    %v5608 = vpop.f32.mrf.mxu0
    %v5609 = vpop.f32.mrf.mxu0
    %v5610 = vpop.f32.mrf.mxu0
    %5611 = vdwg.mxu0
    %5612 = vmatprep.subr.bf16.mxu0 0
    %5613 = vmatpush1.bf16.msra.mxu0 %v5467
    %5614 = vmatprep.subr.bf16.mxu0 0
    %5615 = vmatpush1.bf16.msra.mxu0 %v5466
    %5616 = vmatprep.subr.bf16.mxu0 0
    %5617 = vmatpush1.bf16.msra.mxu0 %v5465
    %5618 = vmatprep.subr.bf16.mxu0 0
    %5619 = vmatpush1.bf16.msra.mxu0 %v5464
    %5620 = vmatprep.subr.bf16.mxu0 0
    %5621 = vmatpush1.bf16.msra.mxu0 %v5463
    %5622 = vmatprep.subr.bf16.mxu0 0
    %5623 = vmatpush1.bf16.msra.mxu0 %v5462
    %5624 = vmatprep.subr.bf16.mxu0 0
    %5625 = vmatpush1.bf16.msra.mxu0 %v5461
    %5626 = vmatprep.subr.bf16.mxu0 0
    %5627 = vmatpush1.bf16.msra.mxu0 %v5460
    %5628 = vmatprep.subr.bf16.mxu0 0
    %5629 = vmatpush2.bf16.msra.mxu0 %v5475
    %5630 = vmatprep.subr.bf16.mxu0 0
    %5631 = vmatpush2.bf16.msra.mxu0 %v5474
    %5632 = vmatprep.subr.bf16.mxu0 0
    %5633 = vmatpush2.bf16.msra.mxu0 %v5473
    %5634 = vmatprep.subr.bf16.mxu0 0
    %5635 = vmatpush2.bf16.msra.mxu0 %v5472
    %5636 = vmatprep.subr.bf16.mxu0 0
    %5637 = vmatpush2.bf16.msra.mxu0 %v5471
    %5638 = vmatprep.subr.bf16.mxu0 0
    %5639 = vmatpush2.bf16.msra.mxu0 %v5470
    %5640 = vmatprep.subr.bf16.mxu0 0
    %5641 = vmatpush2.bf16.msra.mxu0 %v5469
    %5642 = vmatprep.subr.bf16.mxu0 0
    %5643 = vmatpush2.bf16.msra.mxu0 %v5468
    %5644 = vmatprep.mubr.bf16.mxu0 %v238
    %5645 = vmatmul.mubr.bf16.gmra.mxu0 %v237
    %v5646 = vpop.f32.mrf.mxu0
    %v5647 = vadd.f32 %v5607, %v5646
    %v5648 = vpop.f32.mrf.mxu0
    %v5649 = vpop.f32.mrf.mxu0
    %v5650 = vpop.f32.mrf.mxu0
    %5651 = vdwg.mxu0
    %5652 = vmatprep.subr.bf16.mxu0 0
    %5653 = vmatpush1.bf16.msra.mxu0 %v5483
    %5654 = vmatprep.subr.bf16.mxu0 0
    %5655 = vmatpush1.bf16.msra.mxu0 %v5482
    %5656 = vmatprep.subr.bf16.mxu0 0
    %5657 = vmatpush1.bf16.msra.mxu0 %v5481
    %5658 = vmatprep.subr.bf16.mxu0 0
    %5659 = vmatpush1.bf16.msra.mxu0 %v5480
    %5660 = vmatprep.subr.bf16.mxu0 0
    %5661 = vmatpush1.bf16.msra.mxu0 %v5479
    %5662 = vmatprep.subr.bf16.mxu0 0
    %5663 = vmatpush1.bf16.msra.mxu0 %v5478
    %5664 = vmatprep.subr.bf16.mxu0 0
    %5665 = vmatpush1.bf16.msra.mxu0 %v5477
    %5666 = vmatprep.subr.bf16.mxu0 0
    %5667 = vmatpush1.bf16.msra.mxu0 %v5476
    %5668 = vmatprep.subr.bf16.mxu0 0
    %5669 = vmatpush2.bf16.msra.mxu0 %v5491
    %5670 = vmatprep.subr.bf16.mxu0 0
    %5671 = vmatpush2.bf16.msra.mxu0 %v5490
    %5672 = vmatprep.subr.bf16.mxu0 0
    %5673 = vmatpush2.bf16.msra.mxu0 %v5489
    %5674 = vmatprep.subr.bf16.mxu0 0
    %5675 = vmatpush2.bf16.msra.mxu0 %v5488
    %5676 = vmatprep.subr.bf16.mxu0 0
    %5677 = vmatpush2.bf16.msra.mxu0 %v5487
    %5678 = vmatprep.subr.bf16.mxu0 0
    %5679 = vmatpush2.bf16.msra.mxu0 %v5486
    %5680 = vmatprep.subr.bf16.mxu0 0
    %5681 = vmatpush2.bf16.msra.mxu0 %v5485
    %5682 = vmatprep.subr.bf16.mxu0 0
    %5683 = vmatpush2.bf16.msra.mxu0 %v5484
    %5684 = vmatprep.mubr.bf16.mxu0 %v240
    %5685 = vmatmul.mubr.bf16.gmra.mxu0 %v239
    %v5686 = vpop.f32.mrf.mxu0
    %v5687 = vadd.f32 %v5647, %v5686
    %v5688 = vpop.f32.mrf.mxu0
    %v5689 = vpop.f32.mrf.mxu0
    %v5690 = vpop.f32.mrf.mxu0
    %5691 = vdwg.mxu0
    %5692 = vmatprep.subr.bf16.mxu0 0
    %5693 = vmatpush1.bf16.msra.mxu0 %v5499
    %5694 = vmatprep.subr.bf16.mxu0 0
    %5695 = vmatpush1.bf16.msra.mxu0 %v5498
    %5696 = vmatprep.subr.bf16.mxu0 0
    %5697 = vmatpush1.bf16.msra.mxu0 %v5497
    %5698 = vmatprep.subr.bf16.mxu0 0
    %5699 = vmatpush1.bf16.msra.mxu0 %v5496
    %5700 = vmatprep.subr.bf16.mxu0 0
    %5701 = vmatpush1.bf16.msra.mxu0 %v5495
    %5702 = vmatprep.subr.bf16.mxu0 0
    %5703 = vmatpush1.bf16.msra.mxu0 %v5494
    %5704 = vmatprep.subr.bf16.mxu0 0
    %5705 = vmatpush1.bf16.msra.mxu0 %v5493
    %5706 = vmatprep.subr.bf16.mxu0 0
    %5707 = vmatpush1.bf16.msra.mxu0 %v5492
    %5708 = vmatprep.subr.bf16.mxu0 0
    %5709 = vmatpush2.bf16.msra.mxu0 %v5507
    %5710 = vmatprep.subr.bf16.mxu0 0
    %5711 = vmatpush2.bf16.msra.mxu0 %v5506
    %5712 = vmatprep.subr.bf16.mxu0 0
    %5713 = vmatpush2.bf16.msra.mxu0 %v5505
    %5714 = vmatprep.subr.bf16.mxu0 0
    %5715 = vmatpush2.bf16.msra.mxu0 %v5504
    %5716 = vmatprep.subr.bf16.mxu0 0
    %5717 = vmatpush2.bf16.msra.mxu0 %v5503
    %5718 = vmatprep.subr.bf16.mxu0 0
    %5719 = vmatpush2.bf16.msra.mxu0 %v5502
    %5720 = vmatprep.subr.bf16.mxu0 0
    %5721 = vmatpush2.bf16.msra.mxu0 %v5501
    %5722 = vmatprep.subr.bf16.mxu0 0
    %5723 = vmatpush2.bf16.msra.mxu0 %v5500
    %5724 = vmatprep.mubr.bf16.mxu0 %v242
    %5725 = vmatmul.mubr.bf16.gmra.mxu0 %v241
    %v5726 = vpop.f32.mrf.mxu0
    %v5727 = vadd.f32 %v5687, %v5726
    %v5728 = vpop.f32.mrf.mxu0
    %v5729 = vpop.f32.mrf.mxu0
    %v5730 = vpop.f32.mrf.mxu0
    %5731 = vdwg.mxu0
    %v5732 = vlaneseq
    %v5733 = vshrl.u32 %v5732, 7
    %v5734 = vsub.s32 7, %v5733
    %v5735 = vrot.slane %v186, %v5734
    %v5736 = vadd.f32 %v5727, %v5735
    %5737 = vst.msk [vmem:[#allocation2 + $0xe] sm:$0x3] %vm927, %v5736
    %v5738 = vld [vmem:[#allocation2] sm:$0xff]
    %v5739 = vld [vmem:[#allocation2 + $0x8] sm:$0xff]
    %v5740 = vlaneseq
    %v5741 = vshrl.u32 %v5740, 7
    %v5742 = vadd.s32 %v5741, 8
    %v5743 = vlaneseq
    %v5744 = vand.u32 %v5743, 127
    %v5745 = vand.u32 %v5741, 1
    %v5746 = vand.u32 %v5742, 1
    %v5747 = vand.u32 %v5744, 1
    %vm5748 = vcmp.eq.s32.totalorder %v5745, %v5747
    %vm5749 = vcmp.eq.s32.totalorder %v5746, %v5747
    %v5750 = vld [vmem:[%s6] sm:$0xff]
    %v5751 = vld [vmem:[%s6 + $0x8] sm:$0xff]
    %v5752 = vld [vmem:[%s6 + $0x10] sm:$0xff]
    %v5753 = vld [vmem:[%s6 + $0x18] sm:$0xff]
    %v5754 = vld [vmem:[%s7] sm:$0x1]
    %v5756 = vlaneseq
    %v5757 = vshrl.u32 %v5756, 7
    %v5758 = vsub.s32 0, %v5757
    %v5759 = vrot.slane %v5754, %v5758
    %vm5761 = vcmask 261120
    %v5763 = vsel %vm5761, %v5738, 0
    %v5766 = vsel %vm5761, %v5739, 0
    %5768 = vmatprep.subr.mxu0 0.0
    %5769 = vmatpush1.msra.mxu0 0.0
    %5770 = vmatprep.subr.mxu0 0.0
    %5771 = vmatpush1.msra.mxu0 0.0
    %5772 = vmatprep.subr.mxu0 0.0
    %5773 = vmatpush1.msra.mxu0 0.0
    %5774 = vmatprep.subr.mxu0 0.0
    %5775 = vmatpush1.msra.mxu0 0.0
    %5776 = vmatprep.subr.mxu0 0.0
    %5777 = vmatpush1.msra.mxu0 0.0
    %5778 = vmatprep.subr.mxu0 0.0
    %5779 = vmatpush1.msra.mxu0 0.0
    %5780 = vmatprep.subr.mxu0 0.0
    %5781 = vmatpush1.msra.mxu0 0.0
    %5782 = vmatprep.subr.mxu0 0.0
    %5783 = vmatpush1.msra.mxu0 0.0
    %5784 = vmatprep.subr.mxu0 0.0
    %5785 = vmatpush1.msra.mxu0 0.0
    %5786 = vmatprep.subr.mxu0 0.0
    %5787 = vmatpush1.msra.mxu0 0.0
    %5788 = vmatprep.subr.mxu0 0.0
    %5789 = vmatpush1.msra.mxu0 0.0
    %5790 = vmatprep.subr.mxu0 0.0
    %5791 = vmatpush1.msra.mxu0 0.0
    %5792 = vmatprep.subr.mxu0 0.0
    %5793 = vmatpush1.msra.mxu0 %v5753
    %5794 = vmatprep.subr.mxu0 0.0
    %5795 = vmatpush1.msra.mxu0 %v5752
    %5796 = vmatprep.subr.mxu0 0.0
    %5797 = vmatpush1.msra.mxu0 %v5751
    %5798 = vmatprep.subr.mxu0 0.0
    %5799 = vmatpush1.msra.mxu0 %v5750
    %5800 = vmatprep.subr.mxu0 0.0
    %5801 = vmatpush2.msra.mxu0 0.0
    %5802 = vmatprep.subr.mxu0 0.0
    %5803 = vmatpush2.msra.mxu0 0.0
    %5804 = vmatprep.subr.mxu0 0.0
    %5805 = vmatpush2.msra.mxu0 0.0
    %5806 = vmatprep.subr.mxu0 0.0
    %5807 = vmatpush2.msra.mxu0 0.0
    %5808 = vmatprep.subr.mxu0 0.0
    %5809 = vmatpush2.msra.mxu0 0.0
    %5810 = vmatprep.subr.mxu0 0.0
    %5811 = vmatpush2.msra.mxu0 0.0
    %5812 = vmatprep.subr.mxu0 0.0
    %5813 = vmatpush2.msra.mxu0 0.0
    %5814 = vmatprep.subr.mxu0 0.0
    %5815 = vmatpush2.msra.mxu0 0.0
    %5816 = vmatprep.subr.mxu0 0.0
    %5817 = vmatpush2.msra.mxu0 0.0
    %5818 = vmatprep.subr.mxu0 0.0
    %5819 = vmatpush2.msra.mxu0 0.0
    %5820 = vmatprep.subr.mxu0 0.0
    %5821 = vmatpush2.msra.mxu0 0.0
    %5822 = vmatprep.subr.mxu0 0.0
    %5823 = vmatpush2.msra.mxu0 0.0
    %5824 = vmatprep.subr.mxu0 0.0
    %5825 = vmatpush2.msra.mxu0 0.0
    %5826 = vmatprep.subr.mxu0 0.0
    %5827 = vmatpush2.msra.mxu0 0.0
    %5828 = vmatprep.subr.mxu0 0.0
    %5829 = vmatpush2.msra.mxu0 0.0
    %5830 = vmatprep.subr.mxu0 0.0
    %5831 = vmatpush2.msra.mxu0 0.0
    %5832 = vmatprep.mubr.f32.mxu0 0.0
    %5833 = vmatmul.mubr.f32.gmra.mxu0 %v5763
    %v5834 = vpop.f32.mrf.mxu0
    %v5835 = vadd.f32 %v5759, %v5834
    %v5836 = vpop.f32.mrf.mxu0
    %5837 = vmatprep.mubr.f32.mxu0 0.0
    %5838 = vmatmul.mubr.f32.gmra.mxu0 %v5766
    %v5839 = vpop.f32.mrf.mxu0
    %v5840 = vadd.f32 %v5759, %v5839
    %v5841 = vpop.f32.mrf.mxu0
    %5842 = vdwg.mxu0
    %v5843 = vld [vmem:[%s8] sm:$0xff]
    %v5844 = vld [vmem:[%s8 + $0x8] sm:$0xff]
    %v5845 = vld [vmem:[%s8 + $0x10] sm:$0xff]
    %v5846 = vld [vmem:[%s8 + $0x18] sm:$0xff]
    %5849 = vrot.lane.b32.xlu0 %v5835, 96
    %v5850 = vpop.permute.xlu0 %5849
    %5851 = vrot.lane.b32.xlu0 %v5840, 96
    %v5852 = vpop.permute.xlu0 %5851
    %vm5853 = vcmask 64512
    %v5854 = vsel %vm5853, %v5835, 0
    %v5856 = vsel %vm5853, %v5840, 0
    %v5858 = vsel %vm5853, %v5850, 0
    %v5860 = vsel %vm5853, %v5852, 0
    %5862 = vmatprep.subr.mxu0 0.0
    %5863 = vmatpush1.xpose.msra.mxu0 0.0
    %5864 = vmatprep.subr.mxu0 0.0
    %5865 = vmatpush1.xpose.msra.mxu0 0.0
    %5866 = vmatprep.subr.mxu0 0.0
    %5867 = vmatpush1.xpose.msra.mxu0 0.0
    %5868 = vmatprep.subr.mxu0 0.0
    %5869 = vmatpush1.xpose.msra.mxu0 0.0
    %5870 = vmatprep.subr.mxu0 0.0
    %5871 = vmatpush1.xpose.msra.mxu0 0.0
    %5872 = vmatprep.subr.mxu0 0.0
    %5873 = vmatpush1.xpose.msra.mxu0 0.0
    %5874 = vmatprep.subr.mxu0 0.0
    %5875 = vmatpush1.xpose.msra.mxu0 0.0
    %5876 = vmatprep.subr.mxu0 0.0
    %5877 = vmatpush1.xpose.msra.mxu0 0.0
    %5878 = vmatprep.subr.mxu0 0.0
    %5879 = vmatpush1.xpose.msra.mxu0 0.0
    %5880 = vmatprep.subr.mxu0 0.0
    %5881 = vmatpush1.xpose.msra.mxu0 0.0
    %5882 = vmatprep.subr.mxu0 0.0
    %5883 = vmatpush1.xpose.msra.mxu0 0.0
    %5884 = vmatprep.subr.mxu0 0.0
    %5885 = vmatpush1.xpose.msra.mxu0 0.0
    %5886 = vmatprep.subr.mxu0 0.0
    %5887 = vmatpush1.xpose.msra.mxu0 0.0
    %5888 = vmatprep.subr.mxu0 0.0
    %5889 = vmatpush1.xpose.msra.mxu0 0.0
    %5890 = vmatprep.subr.mxu0 0.0
    %5891 = vmatpush1.xpose.msra.mxu0 %v5860
    %5892 = vmatprep.subr.mxu0 0.0
    %5893 = vmatpush1.xpose.msra.mxu0 %v5858
    %5894 = vmatprep.subr.mxu0 0.0
    %5895 = vmatpush2.xpose.msra.mxu0 0.0
    %5896 = vmatprep.subr.mxu0 0.0
    %5897 = vmatpush2.xpose.msra.mxu0 0.0
    %5898 = vmatprep.subr.mxu0 0.0
    %5899 = vmatpush2.xpose.msra.mxu0 0.0
    %5900 = vmatprep.subr.mxu0 0.0
    %5901 = vmatpush2.xpose.msra.mxu0 0.0
    %5902 = vmatprep.subr.mxu0 0.0
    %5903 = vmatpush2.xpose.msra.mxu0 0.0
    %5904 = vmatprep.subr.mxu0 0.0
    %5905 = vmatpush2.xpose.msra.mxu0 0.0
    %5906 = vmatprep.subr.mxu0 0.0
    %5907 = vmatpush2.xpose.msra.mxu0 0.0
    %5908 = vmatprep.subr.mxu0 0.0
    %5909 = vmatpush2.xpose.msra.mxu0 0.0
    %5910 = vmatprep.subr.mxu0 0.0
    %5911 = vmatpush2.xpose.msra.mxu0 0.0
    %5912 = vmatprep.subr.mxu0 0.0
    %5913 = vmatpush2.xpose.msra.mxu0 0.0
    %5914 = vmatprep.subr.mxu0 0.0
    %5915 = vmatpush2.xpose.msra.mxu0 0.0
    %5916 = vmatprep.subr.mxu0 0.0
    %5917 = vmatpush2.xpose.msra.mxu0 0.0
    %5918 = vmatprep.subr.mxu0 0.0
    %5919 = vmatpush2.xpose.msra.mxu0 0.0
    %5920 = vmatprep.subr.mxu0 0.0
    %5921 = vmatpush2.xpose.msra.mxu0 0.0
    %5922 = vmatprep.subr.mxu0 0.0
    %5923 = vmatpush2.xpose.msra.mxu0 0.0
    %5924 = vmatprep.subr.mxu0 0.0
    %5925 = vmatpush2.xpose.msra.mxu0 0.0
    %5926 = vmatprep.mubr.f32.mxu0 0.0
    %5927 = vmatmul.mubr.f32.gmra.mxu0 %v5854
    %v5928 = vpop.f32.mrf.mxu0
    %v5929 = vadd.f32 0.0, %v5928
    %v5930 = vpop.f32.mrf.mxu0
    %5931 = vmatprep.mubr.f32.mxu0 0.0
    %5932 = vmatmul.mubr.f32.gmra.mxu0 %v5856
    %v5933 = vpop.f32.mrf.mxu0
    %v5934 = vadd.f32 0.0, %v5933
    %v5935 = vpop.f32.mrf.mxu0
    %5936 = vdwg.mxu0
    %v5937 = vmul.f32 %v5929, 0.35355338
    %v5938 = vmul.f32 %v5934, 0.35355338
    %v5939 = vsel %vm5748, %v5937, -1e+30
    %v5940 = vsel %vm5749, %v5938, -1e+30
    %vm5941 = vcmask 130048
    %v5942 = vsel %vm5941, %v5939, -inf
    %5943 = vmax.xlane.f32.xlu0 %v5942
    %v5944 = vpop.xlane.xlu0 %5943
    %v5945 = vsel %vm5941, %v5940, -inf
    %5946 = vmax.xlane.f32.xlu0 %v5945
    %v5947 = vpop.xlane.xlu0 %5946
    %v5948 = vsub.f32 %v5939, %v5944
    %v5949 = vsub.f32 %v5940, %v5947
    %v5950 = vmul.f32 %v5948, 1.442695
    %v5951 = vpow.pop %v5950
    %v5952 = vmul.f32 %v5949, 1.442695
    %v5953 = vpow.pop %v5952
    %v5954 = vsel %vm5941, %v5951, 0.0
    %5955 = vadd.xlane.f32.xlu0 %v5954
    %v5956 = vpop.xlane.xlu0 %5955
    %v5957 = vsel %vm5941, %v5953, 0.0
    %5958 = vadd.xlane.f32.xlu0 %v5957
    %v5959 = vpop.xlane.xlu0 %5958
    %v5960 = vrcp.pop %v5956
    %v5961 = vrcp.pop %v5959
    %v5962 = vmul.f32 %v5951, %v5960
    %v5963 = vmul.f32 %v5953, %v5961
    %5964 = vrot.lane.b32.xlu0 %v5835, 64
    %v5965 = vpop.permute.xlu0 %5964
    %5966 = vrot.lane.b32.xlu0 %v5840, 64
    %v5967 = vpop.permute.xlu0 %5966
    %v5971 = vsel %vm5941, %v5962, 0
    %v5974 = vsel %vm5941, %v5963, 0
    %5976 = vmatprep.subr.mxu0 0.0
    %5977 = vmatpush1.msra.mxu0 0.0
    %5978 = vmatprep.subr.mxu0 0.0
    %5979 = vmatpush1.msra.mxu0 0.0
    %5980 = vmatprep.subr.mxu0 0.0
    %5981 = vmatpush1.msra.mxu0 0.0
    %5982 = vmatprep.subr.mxu0 0.0
    %5983 = vmatpush1.msra.mxu0 0.0
    %5984 = vmatprep.subr.mxu0 0.0
    %5985 = vmatpush1.msra.mxu0 0.0
    %5986 = vmatprep.subr.mxu0 0.0
    %5987 = vmatpush1.msra.mxu0 0.0
    %5988 = vmatprep.subr.mxu0 0.0
    %5989 = vmatpush1.msra.mxu0 0.0
    %5990 = vmatprep.subr.mxu0 0.0
    %5991 = vmatpush1.msra.mxu0 0.0
    %5992 = vmatprep.subr.mxu0 0.0
    %5993 = vmatpush1.msra.mxu0 0.0
    %5994 = vmatprep.subr.mxu0 0.0
    %5995 = vmatpush1.msra.mxu0 0.0
    %5996 = vmatprep.subr.mxu0 0.0
    %5997 = vmatpush1.msra.mxu0 0.0
    %5998 = vmatprep.subr.mxu0 0.0
    %5999 = vmatpush1.msra.mxu0 0.0
    %6000 = vmatprep.subr.mxu0 0.0
    %6001 = vmatpush1.msra.mxu0 0.0
    %6002 = vmatprep.subr.mxu0 0.0
    %6003 = vmatpush1.msra.mxu0 0.0
    %6004 = vmatprep.subr.mxu0 0.0
    %6005 = vmatpush1.msra.mxu0 %v5967
    %6006 = vmatprep.subr.mxu0 0.0
    %6007 = vmatpush1.msra.mxu0 %v5965
    %6008 = vmatprep.subr.mxu0 0.0
    %6009 = vmatpush2.msra.mxu0 0.0
    %6010 = vmatprep.subr.mxu0 0.0
    %6011 = vmatpush2.msra.mxu0 0.0
    %6012 = vmatprep.subr.mxu0 0.0
    %6013 = vmatpush2.msra.mxu0 0.0
    %6014 = vmatprep.subr.mxu0 0.0
    %6015 = vmatpush2.msra.mxu0 0.0
    %6016 = vmatprep.subr.mxu0 0.0
    %6017 = vmatpush2.msra.mxu0 0.0
    %6018 = vmatprep.subr.mxu0 0.0
    %6019 = vmatpush2.msra.mxu0 0.0
    %6020 = vmatprep.subr.mxu0 0.0
    %6021 = vmatpush2.msra.mxu0 0.0
    %6022 = vmatprep.subr.mxu0 0.0
    %6023 = vmatpush2.msra.mxu0 0.0
    %6024 = vmatprep.subr.mxu0 0.0
    %6025 = vmatpush2.msra.mxu0 0.0
    %6026 = vmatprep.subr.mxu0 0.0
    %6027 = vmatpush2.msra.mxu0 0.0
    %6028 = vmatprep.subr.mxu0 0.0
    %6029 = vmatpush2.msra.mxu0 0.0
    %6030 = vmatprep.subr.mxu0 0.0
    %6031 = vmatpush2.msra.mxu0 0.0
    %6032 = vmatprep.subr.mxu0 0.0
    %6033 = vmatpush2.msra.mxu0 0.0
    %6034 = vmatprep.subr.mxu0 0.0
    %6035 = vmatpush2.msra.mxu0 0.0
    %6036 = vmatprep.subr.mxu0 0.0
    %6037 = vmatpush2.msra.mxu0 0.0
    %6038 = vmatprep.subr.mxu0 0.0
    %6039 = vmatpush2.msra.mxu0 0.0
    %6040 = vmatprep.mubr.f32.mxu0 0.0
    %6041 = vmatmul.mubr.f32.gmra.mxu0 %v5971
    %v6042 = vpop.f32.mrf.mxu0
    %v6043 = vadd.f32 0.0, %v6042
    %v6044 = vpop.f32.mrf.mxu0
    %6045 = vmatprep.mubr.f32.mxu0 0.0
    %6046 = vmatmul.mubr.f32.gmra.mxu0 %v5974
    %v6047 = vpop.f32.mrf.mxu0
    %v6048 = vadd.f32 0.0, %v6047
    %v6049 = vpop.f32.mrf.mxu0
    %6050 = vdwg.mxu0
    %6051 = vrot.lane.b32.xlu0 %v5835, 120
    %v6052 = vpop.permute.xlu0 %6051
    %6053 = vrot.lane.b32.xlu0 %v5840, 120
    %v6054 = vpop.permute.xlu0 %6053
    %6055 = vrot.lane.b32.xlu0 %v5835, 88
    %v6056 = vpop.permute.xlu0 %6055
    %6057 = vrot.lane.b32.xlu0 %v5840, 88
    %v6058 = vpop.permute.xlu0 %6057
    %v6059 = vsel %vm5853, %v6052, 0
    %v6061 = vsel %vm5853, %v6054, 0
    %v6063 = vsel %vm5853, %v6056, 0
    %v6065 = vsel %vm5853, %v6058, 0
    %6067 = vmatprep.subr.mxu0 0.0
    %6068 = vmatpush1.xpose.msra.mxu0 0.0
    %6069 = vmatprep.subr.mxu0 0.0
    %6070 = vmatpush1.xpose.msra.mxu0 0.0
    %6071 = vmatprep.subr.mxu0 0.0
    %6072 = vmatpush1.xpose.msra.mxu0 0.0
    %6073 = vmatprep.subr.mxu0 0.0
    %6074 = vmatpush1.xpose.msra.mxu0 0.0
    %6075 = vmatprep.subr.mxu0 0.0
    %6076 = vmatpush1.xpose.msra.mxu0 0.0
    %6077 = vmatprep.subr.mxu0 0.0
    %6078 = vmatpush1.xpose.msra.mxu0 0.0
    %6079 = vmatprep.subr.mxu0 0.0
    %6080 = vmatpush1.xpose.msra.mxu0 0.0
    %6081 = vmatprep.subr.mxu0 0.0
    %6082 = vmatpush1.xpose.msra.mxu0 0.0
    %6083 = vmatprep.subr.mxu0 0.0
    %6084 = vmatpush1.xpose.msra.mxu0 0.0
    %6085 = vmatprep.subr.mxu0 0.0
    %6086 = vmatpush1.xpose.msra.mxu0 0.0
    %6087 = vmatprep.subr.mxu0 0.0
    %6088 = vmatpush1.xpose.msra.mxu0 0.0
    %6089 = vmatprep.subr.mxu0 0.0
    %6090 = vmatpush1.xpose.msra.mxu0 0.0
    %6091 = vmatprep.subr.mxu0 0.0
    %6092 = vmatpush1.xpose.msra.mxu0 0.0
    %6093 = vmatprep.subr.mxu0 0.0
    %6094 = vmatpush1.xpose.msra.mxu0 0.0
    %6095 = vmatprep.subr.mxu0 0.0
    %6096 = vmatpush1.xpose.msra.mxu0 %v6065
    %6097 = vmatprep.subr.mxu0 0.0
    %6098 = vmatpush1.xpose.msra.mxu0 %v6063
    %6099 = vmatprep.subr.mxu0 0.0
    %6100 = vmatpush2.xpose.msra.mxu0 0.0
    %6101 = vmatprep.subr.mxu0 0.0
    %6102 = vmatpush2.xpose.msra.mxu0 0.0
    %6103 = vmatprep.subr.mxu0 0.0
    %6104 = vmatpush2.xpose.msra.mxu0 0.0
    %6105 = vmatprep.subr.mxu0 0.0
    %6106 = vmatpush2.xpose.msra.mxu0 0.0
    %6107 = vmatprep.subr.mxu0 0.0
    %6108 = vmatpush2.xpose.msra.mxu0 0.0
    %6109 = vmatprep.subr.mxu0 0.0
    %6110 = vmatpush2.xpose.msra.mxu0 0.0
    %6111 = vmatprep.subr.mxu0 0.0
    %6112 = vmatpush2.xpose.msra.mxu0 0.0
    %6113 = vmatprep.subr.mxu0 0.0
    %6114 = vmatpush2.xpose.msra.mxu0 0.0
    %6115 = vmatprep.subr.mxu0 0.0
    %6116 = vmatpush2.xpose.msra.mxu0 0.0
    %6117 = vmatprep.subr.mxu0 0.0
    %6118 = vmatpush2.xpose.msra.mxu0 0.0
    %6119 = vmatprep.subr.mxu0 0.0
    %6120 = vmatpush2.xpose.msra.mxu0 0.0
    %6121 = vmatprep.subr.mxu0 0.0
    %6122 = vmatpush2.xpose.msra.mxu0 0.0
    %6123 = vmatprep.subr.mxu0 0.0
    %6124 = vmatpush2.xpose.msra.mxu0 0.0
    %6125 = vmatprep.subr.mxu0 0.0
    %6126 = vmatpush2.xpose.msra.mxu0 0.0
    %6127 = vmatprep.subr.mxu0 0.0
    %6128 = vmatpush2.xpose.msra.mxu0 0.0
    %6129 = vmatprep.subr.mxu0 0.0
    %6130 = vmatpush2.xpose.msra.mxu0 0.0
    %6131 = vmatprep.mubr.f32.mxu0 0.0
    %6132 = vmatmul.mubr.f32.gmra.mxu0 %v6059
    %v6133 = vpop.f32.mrf.mxu0
    %v6134 = vadd.f32 0.0, %v6133
    %v6135 = vpop.f32.mrf.mxu0
    %6136 = vmatprep.mubr.f32.mxu0 0.0
    %6137 = vmatmul.mubr.f32.gmra.mxu0 %v6061
    %v6138 = vpop.f32.mrf.mxu0
    %v6139 = vadd.f32 0.0, %v6138
    %v6140 = vpop.f32.mrf.mxu0
    %6141 = vdwg.mxu0
    %v6142 = vmul.f32 %v6134, 0.35355338
    %v6143 = vmul.f32 %v6139, 0.35355338
    %v6144 = vsel %vm5748, %v6142, -1e+30
    %v6145 = vsel %vm5749, %v6143, -1e+30
    %v6146 = vsel %vm5941, %v6144, -inf
    %6147 = vmax.xlane.f32.xlu0 %v6146
    %v6148 = vpop.xlane.xlu0 %6147
    %v6149 = vsel %vm5941, %v6145, -inf
    %6150 = vmax.xlane.f32.xlu0 %v6149
    %v6151 = vpop.xlane.xlu0 %6150
    %v6152 = vsub.f32 %v6144, %v6148
    %v6153 = vsub.f32 %v6145, %v6151
    %v6154 = vmul.f32 %v6152, 1.442695
    %v6155 = vpow.pop %v6154
    %v6156 = vmul.f32 %v6153, 1.442695
    %v6157 = vpow.pop %v6156
    %v6158 = vsel %vm5941, %v6155, 0.0
    %6159 = vadd.xlane.f32.xlu0 %v6158
    %v6160 = vpop.xlane.xlu0 %6159
    %v6161 = vsel %vm5941, %v6157, 0.0
    %6162 = vadd.xlane.f32.xlu0 %v6161
    %v6163 = vpop.xlane.xlu0 %6162
    %v6164 = vrcp.pop %v6160
    %v6165 = vrcp.pop %v6163
    %v6166 = vmul.f32 %v6155, %v6164
    %v6167 = vmul.f32 %v6157, %v6165
    %6168 = vrot.lane.b32.xlu0 %v5835, 56
    %v6169 = vpop.permute.xlu0 %6168
    %6170 = vrot.lane.b32.xlu0 %v5840, 56
    %v6171 = vpop.permute.xlu0 %6170
    %v6175 = vsel %vm5941, %v6166, 0
    %v6178 = vsel %vm5941, %v6167, 0
    %6180 = vmatprep.subr.mxu0 0.0
    %6181 = vmatpush1.msra.mxu0 0.0
    %6182 = vmatprep.subr.mxu0 0.0
    %6183 = vmatpush1.msra.mxu0 0.0
    %6184 = vmatprep.subr.mxu0 0.0
    %6185 = vmatpush1.msra.mxu0 0.0
    %6186 = vmatprep.subr.mxu0 0.0
    %6187 = vmatpush1.msra.mxu0 0.0
    %6188 = vmatprep.subr.mxu0 0.0
    %6189 = vmatpush1.msra.mxu0 0.0
    %6190 = vmatprep.subr.mxu0 0.0
    %6191 = vmatpush1.msra.mxu0 0.0
    %6192 = vmatprep.subr.mxu0 0.0
    %6193 = vmatpush1.msra.mxu0 0.0
    %6194 = vmatprep.subr.mxu0 0.0
    %6195 = vmatpush1.msra.mxu0 0.0
    %6196 = vmatprep.subr.mxu0 0.0
    %6197 = vmatpush1.msra.mxu0 0.0
    %6198 = vmatprep.subr.mxu0 0.0
    %6199 = vmatpush1.msra.mxu0 0.0
    %6200 = vmatprep.subr.mxu0 0.0
    %6201 = vmatpush1.msra.mxu0 0.0
    %6202 = vmatprep.subr.mxu0 0.0
    %6203 = vmatpush1.msra.mxu0 0.0
    %6204 = vmatprep.subr.mxu0 0.0
    %6205 = vmatpush1.msra.mxu0 0.0
    %6206 = vmatprep.subr.mxu0 0.0
    %6207 = vmatpush1.msra.mxu0 0.0
    %6208 = vmatprep.subr.mxu0 0.0
    %6209 = vmatpush1.msra.mxu0 %v6171
    %6210 = vmatprep.subr.mxu0 0.0
    %6211 = vmatpush1.msra.mxu0 %v6169
    %6212 = vmatprep.subr.mxu0 0.0
    %6213 = vmatpush2.msra.mxu0 0.0
    %6214 = vmatprep.subr.mxu0 0.0
    %6215 = vmatpush2.msra.mxu0 0.0
    %6216 = vmatprep.subr.mxu0 0.0
    %6217 = vmatpush2.msra.mxu0 0.0
    %6218 = vmatprep.subr.mxu0 0.0
    %6219 = vmatpush2.msra.mxu0 0.0
    %6220 = vmatprep.subr.mxu0 0.0
    %6221 = vmatpush2.msra.mxu0 0.0
    %6222 = vmatprep.subr.mxu0 0.0
    %6223 = vmatpush2.msra.mxu0 0.0
    %6224 = vmatprep.subr.mxu0 0.0
    %6225 = vmatpush2.msra.mxu0 0.0
    %6226 = vmatprep.subr.mxu0 0.0
    %6227 = vmatpush2.msra.mxu0 0.0
    %6228 = vmatprep.subr.mxu0 0.0
    %6229 = vmatpush2.msra.mxu0 0.0
    %6230 = vmatprep.subr.mxu0 0.0
    %6231 = vmatpush2.msra.mxu0 0.0
    %6232 = vmatprep.subr.mxu0 0.0
    %6233 = vmatpush2.msra.mxu0 0.0
    %6234 = vmatprep.subr.mxu0 0.0
    %6235 = vmatpush2.msra.mxu0 0.0
    %6236 = vmatprep.subr.mxu0 0.0
    %6237 = vmatpush2.msra.mxu0 0.0
    %6238 = vmatprep.subr.mxu0 0.0
    %6239 = vmatpush2.msra.mxu0 0.0
    %6240 = vmatprep.subr.mxu0 0.0
    %6241 = vmatpush2.msra.mxu0 0.0
    %6242 = vmatprep.subr.mxu0 0.0
    %6243 = vmatpush2.msra.mxu0 0.0
    %6244 = vmatprep.mubr.f32.mxu0 0.0
    %6245 = vmatmul.mubr.f32.gmra.mxu0 %v6175
    %v6246 = vpop.f32.mrf.mxu0
    %v6247 = vadd.f32 0.0, %v6246
    %v6248 = vpop.f32.mrf.mxu0
    %6249 = vmatprep.mubr.f32.mxu0 0.0
    %6250 = vmatmul.mubr.f32.gmra.mxu0 %v6178
    %v6251 = vpop.f32.mrf.mxu0
    %v6252 = vadd.f32 0.0, %v6251
    %v6253 = vpop.f32.mrf.mxu0
    %6254 = vdwg.mxu0
    %v6256 = vsel %vm5853, %v6247, 0
    %v6259 = vsel %vm5853, %v6252, 0
    %6261 = vmatprep.subr.mxu0 0.0
    %6262 = vmatpush1.msra.mxu0 0.0
    %6263 = vmatprep.subr.mxu0 0.0
    %6264 = vmatpush1.msra.mxu0 0.0
    %6265 = vmatprep.subr.mxu0 0.0
    %6266 = vmatpush1.msra.mxu0 0.0
    %6267 = vmatprep.subr.mxu0 0.0
    %6268 = vmatpush1.msra.mxu0 0.0
    %6269 = vmatprep.subr.mxu0 0.0
    %6270 = vmatpush1.msra.mxu0 0.0
    %6271 = vmatprep.subr.mxu0 0.0
    %6272 = vmatpush1.msra.mxu0 0.0
    %6273 = vmatprep.subr.mxu0 0.0
    %6274 = vmatpush1.msra.mxu0 0.0
    %6275 = vmatprep.subr.mxu0 0.0
    %6276 = vmatpush1.msra.mxu0 0.0
    %6277 = vmatprep.subr.mxu0 0.0
    %6278 = vmatpush1.msra.mxu0 0.0
    %6279 = vmatprep.subr.mxu0 0.0
    %6280 = vmatpush1.msra.mxu0 0.0
    %6281 = vmatprep.subr.mxu0 0.0
    %6282 = vmatpush1.msra.mxu0 0.0
    %6283 = vmatprep.subr.mxu0 0.0
    %6284 = vmatpush1.msra.mxu0 0.0
    %6285 = vmatprep.subr.mxu0 0.0
    %6286 = vmatpush1.msra.mxu0 0.0
    %6287 = vmatprep.subr.mxu0 0.0
    %6288 = vmatpush1.msra.mxu0 0.0
    %6289 = vmatprep.subr.mxu0 0.0
    %6290 = vmatpush1.msra.mxu0 0.0
    %6291 = vmatprep.subr.mxu0 0.0
    %6292 = vmatpush1.msra.mxu0 %v5844
    %6293 = vmatprep.subr.mxu0 0.0
    %6294 = vmatpush2.msra.mxu0 0.0
    %6295 = vmatprep.subr.mxu0 0.0
    %6296 = vmatpush2.msra.mxu0 0.0
    %6297 = vmatprep.subr.mxu0 0.0
    %6298 = vmatpush2.msra.mxu0 0.0
    %6299 = vmatprep.subr.mxu0 0.0
    %6300 = vmatpush2.msra.mxu0 0.0
    %6301 = vmatprep.subr.mxu0 0.0
    %6302 = vmatpush2.msra.mxu0 0.0
    %6303 = vmatprep.subr.mxu0 0.0
    %6304 = vmatpush2.msra.mxu0 0.0
    %6305 = vmatprep.subr.mxu0 0.0
    %6306 = vmatpush2.msra.mxu0 0.0
    %6307 = vmatprep.subr.mxu0 0.0
    %6308 = vmatpush2.msra.mxu0 0.0
    %6309 = vmatprep.subr.mxu0 0.0
    %6310 = vmatpush2.msra.mxu0 0.0
    %6311 = vmatprep.subr.mxu0 0.0
    %6312 = vmatpush2.msra.mxu0 0.0
    %6313 = vmatprep.subr.mxu0 0.0
    %6314 = vmatpush2.msra.mxu0 0.0
    %6315 = vmatprep.subr.mxu0 0.0
    %6316 = vmatpush2.msra.mxu0 0.0
    %6317 = vmatprep.subr.mxu0 0.0
    %6318 = vmatpush2.msra.mxu0 0.0
    %6319 = vmatprep.subr.mxu0 0.0
    %6320 = vmatpush2.msra.mxu0 0.0
    %6321 = vmatprep.subr.mxu0 0.0
    %6322 = vmatpush2.msra.mxu0 0.0
    %6323 = vmatprep.subr.mxu0 0.0
    %6324 = vmatpush2.msra.mxu0 0.0
    %6325 = vmatprep.mubr.f32.mxu0 0.0
    %6326 = vmatmul.mubr.f32.gmra.mxu0 %v6256
    %v6327 = vpop.f32.mrf.mxu0
    %v6328 = vadd.f32 0.0, %v6327
    %v6329 = vpop.f32.mrf.mxu0
    %6330 = vmatprep.mubr.f32.mxu0 0.0
    %6331 = vmatmul.mubr.f32.gmra.mxu0 %v6259
    %v6332 = vpop.f32.mrf.mxu0
    %v6333 = vadd.f32 0.0, %v6332
    %v6334 = vpop.f32.mrf.mxu0
    %6335 = vdwg.mxu0
    %v6337 = vsel %vm5853, %v6043, 0
    %v6340 = vsel %vm5853, %v6048, 0
    %6342 = vmatprep.subr.mxu0 0.0
    %6343 = vmatpush1.msra.mxu0 0.0
    %6344 = vmatprep.subr.mxu0 0.0
    %6345 = vmatpush1.msra.mxu0 0.0
    %6346 = vmatprep.subr.mxu0 0.0
    %6347 = vmatpush1.msra.mxu0 0.0
    %6348 = vmatprep.subr.mxu0 0.0
    %6349 = vmatpush1.msra.mxu0 0.0
    %6350 = vmatprep.subr.mxu0 0.0
    %6351 = vmatpush1.msra.mxu0 0.0
    %6352 = vmatprep.subr.mxu0 0.0
    %6353 = vmatpush1.msra.mxu0 0.0
    %6354 = vmatprep.subr.mxu0 0.0
    %6355 = vmatpush1.msra.mxu0 0.0
    %6356 = vmatprep.subr.mxu0 0.0
    %6357 = vmatpush1.msra.mxu0 0.0
    %6358 = vmatprep.subr.mxu0 0.0
    %6359 = vmatpush1.msra.mxu0 0.0
    %6360 = vmatprep.subr.mxu0 0.0
    %6361 = vmatpush1.msra.mxu0 0.0
    %6362 = vmatprep.subr.mxu0 0.0
    %6363 = vmatpush1.msra.mxu0 0.0
    %6364 = vmatprep.subr.mxu0 0.0
    %6365 = vmatpush1.msra.mxu0 0.0
    %6366 = vmatprep.subr.mxu0 0.0
    %6367 = vmatpush1.msra.mxu0 0.0
    %6368 = vmatprep.subr.mxu0 0.0
    %6369 = vmatpush1.msra.mxu0 0.0
    %6370 = vmatprep.subr.mxu0 0.0
    %6371 = vmatpush1.msra.mxu0 0.0
    %6372 = vmatprep.subr.mxu0 0.0
    %6373 = vmatpush1.msra.mxu0 %v5843
    %6374 = vmatprep.subr.mxu0 0.0
    %6375 = vmatpush2.msra.mxu0 0.0
    %6376 = vmatprep.subr.mxu0 0.0
    %6377 = vmatpush2.msra.mxu0 0.0
    %6378 = vmatprep.subr.mxu0 0.0
    %6379 = vmatpush2.msra.mxu0 0.0
    %6380 = vmatprep.subr.mxu0 0.0
    %6381 = vmatpush2.msra.mxu0 0.0
    %6382 = vmatprep.subr.mxu0 0.0
    %6383 = vmatpush2.msra.mxu0 0.0
    %6384 = vmatprep.subr.mxu0 0.0
    %6385 = vmatpush2.msra.mxu0 0.0
    %6386 = vmatprep.subr.mxu0 0.0
    %6387 = vmatpush2.msra.mxu0 0.0
    %6388 = vmatprep.subr.mxu0 0.0
    %6389 = vmatpush2.msra.mxu0 0.0
    %6390 = vmatprep.subr.mxu0 0.0
    %6391 = vmatpush2.msra.mxu0 0.0
    %6392 = vmatprep.subr.mxu0 0.0
    %6393 = vmatpush2.msra.mxu0 0.0
    %6394 = vmatprep.subr.mxu0 0.0
    %6395 = vmatpush2.msra.mxu0 0.0
    %6396 = vmatprep.subr.mxu0 0.0
    %6397 = vmatpush2.msra.mxu0 0.0
    %6398 = vmatprep.subr.mxu0 0.0
    %6399 = vmatpush2.msra.mxu0 0.0
    %6400 = vmatprep.subr.mxu0 0.0
    %6401 = vmatpush2.msra.mxu0 0.0
    %6402 = vmatprep.subr.mxu0 0.0
    %6403 = vmatpush2.msra.mxu0 0.0
    %6404 = vmatprep.subr.mxu0 0.0
    %6405 = vmatpush2.msra.mxu0 0.0
    %6406 = vmatprep.mubr.f32.mxu0 0.0
    %6407 = vmatmul.mubr.f32.gmra.mxu0 %v6337
    %v6408 = vpop.f32.mrf.mxu0
    %v6409 = vadd.f32 %v6328, %v6408
    %v6410 = vpop.f32.mrf.mxu0
    %6411 = vmatprep.mubr.f32.mxu0 0.0
    %6412 = vmatmul.mubr.f32.gmra.mxu0 %v6340
    %v6413 = vpop.f32.mrf.mxu0
    %v6414 = vadd.f32 %v6333, %v6413
    %v6415 = vpop.f32.mrf.mxu0
    %6416 = vdwg.mxu0
    %6417 = vrot.lane.b32.xlu0 %v5835, 112
    %v6418 = vpop.permute.xlu0 %6417
    %6419 = vrot.lane.b32.xlu0 %v5840, 112
    %v6420 = vpop.permute.xlu0 %6419
    %6421 = vrot.lane.b32.xlu0 %v5835, 80
    %v6422 = vpop.permute.xlu0 %6421
    %6423 = vrot.lane.b32.xlu0 %v5840, 80
    %v6424 = vpop.permute.xlu0 %6423
    %v6425 = vsel %vm5853, %v6418, 0
    %v6427 = vsel %vm5853, %v6420, 0
    %v6429 = vsel %vm5853, %v6422, 0
    %v6431 = vsel %vm5853, %v6424, 0
    %6433 = vmatprep.subr.mxu0 0.0
    %6434 = vmatpush1.xpose.msra.mxu0 0.0
    %6435 = vmatprep.subr.mxu0 0.0
    %6436 = vmatpush1.xpose.msra.mxu0 0.0
    %6437 = vmatprep.subr.mxu0 0.0
    %6438 = vmatpush1.xpose.msra.mxu0 0.0
    %6439 = vmatprep.subr.mxu0 0.0
    %6440 = vmatpush1.xpose.msra.mxu0 0.0
    %6441 = vmatprep.subr.mxu0 0.0
    %6442 = vmatpush1.xpose.msra.mxu0 0.0
    %6443 = vmatprep.subr.mxu0 0.0
    %6444 = vmatpush1.xpose.msra.mxu0 0.0
    %6445 = vmatprep.subr.mxu0 0.0
    %6446 = vmatpush1.xpose.msra.mxu0 0.0
    %6447 = vmatprep.subr.mxu0 0.0
    %6448 = vmatpush1.xpose.msra.mxu0 0.0
    %6449 = vmatprep.subr.mxu0 0.0
    %6450 = vmatpush1.xpose.msra.mxu0 0.0
    %6451 = vmatprep.subr.mxu0 0.0
    %6452 = vmatpush1.xpose.msra.mxu0 0.0
    %6453 = vmatprep.subr.mxu0 0.0
    %6454 = vmatpush1.xpose.msra.mxu0 0.0
    %6455 = vmatprep.subr.mxu0 0.0
    %6456 = vmatpush1.xpose.msra.mxu0 0.0
    %6457 = vmatprep.subr.mxu0 0.0
    %6458 = vmatpush1.xpose.msra.mxu0 0.0
    %6459 = vmatprep.subr.mxu0 0.0
    %6460 = vmatpush1.xpose.msra.mxu0 0.0
    %6461 = vmatprep.subr.mxu0 0.0
    %6462 = vmatpush1.xpose.msra.mxu0 %v6431
    %6463 = vmatprep.subr.mxu0 0.0
    %6464 = vmatpush1.xpose.msra.mxu0 %v6429
    %6465 = vmatprep.subr.mxu0 0.0
    %6466 = vmatpush2.xpose.msra.mxu0 0.0
    %6467 = vmatprep.subr.mxu0 0.0
    %6468 = vmatpush2.xpose.msra.mxu0 0.0
    %6469 = vmatprep.subr.mxu0 0.0
    %6470 = vmatpush2.xpose.msra.mxu0 0.0
    %6471 = vmatprep.subr.mxu0 0.0
    %6472 = vmatpush2.xpose.msra.mxu0 0.0
    %6473 = vmatprep.subr.mxu0 0.0
    %6474 = vmatpush2.xpose.msra.mxu0 0.0
    %6475 = vmatprep.subr.mxu0 0.0
    %6476 = vmatpush2.xpose.msra.mxu0 0.0
    %6477 = vmatprep.subr.mxu0 0.0
    %6478 = vmatpush2.xpose.msra.mxu0 0.0
    %6479 = vmatprep.subr.mxu0 0.0
    %6480 = vmatpush2.xpose.msra.mxu0 0.0
    %6481 = vmatprep.subr.mxu0 0.0
    %6482 = vmatpush2.xpose.msra.mxu0 0.0
    %6483 = vmatprep.subr.mxu0 0.0
    %6484 = vmatpush2.xpose.msra.mxu0 0.0
    %6485 = vmatprep.subr.mxu0 0.0
    %6486 = vmatpush2.xpose.msra.mxu0 0.0
    %6487 = vmatprep.subr.mxu0 0.0
    %6488 = vmatpush2.xpose.msra.mxu0 0.0
    %6489 = vmatprep.subr.mxu0 0.0
    %6490 = vmatpush2.xpose.msra.mxu0 0.0
    %6491 = vmatprep.subr.mxu0 0.0
    %6492 = vmatpush2.xpose.msra.mxu0 0.0
    %6493 = vmatprep.subr.mxu0 0.0
    %6494 = vmatpush2.xpose.msra.mxu0 0.0
    %6495 = vmatprep.subr.mxu0 0.0
    %6496 = vmatpush2.xpose.msra.mxu0 0.0
    %6497 = vmatprep.mubr.f32.mxu0 0.0
    %6498 = vmatmul.mubr.f32.gmra.mxu0 %v6425
    %v6499 = vpop.f32.mrf.mxu0
    %v6500 = vadd.f32 0.0, %v6499
    %v6501 = vpop.f32.mrf.mxu0
    %6502 = vmatprep.mubr.f32.mxu0 0.0
    %6503 = vmatmul.mubr.f32.gmra.mxu0 %v6427
    %v6504 = vpop.f32.mrf.mxu0
    %v6505 = vadd.f32 0.0, %v6504
    %v6506 = vpop.f32.mrf.mxu0
    %6507 = vdwg.mxu0
    %v6508 = vmul.f32 %v6500, 0.35355338
    %v6509 = vmul.f32 %v6505, 0.35355338
    %v6510 = vsel %vm5748, %v6508, -1e+30
    %v6511 = vsel %vm5749, %v6509, -1e+30
    %v6512 = vsel %vm5941, %v6510, -inf
    %6513 = vmax.xlane.f32.xlu0 %v6512
    %v6514 = vpop.xlane.xlu0 %6513
    %v6515 = vsel %vm5941, %v6511, -inf
    %6516 = vmax.xlane.f32.xlu0 %v6515
    %v6517 = vpop.xlane.xlu0 %6516
    %v6518 = vsub.f32 %v6510, %v6514
    %v6519 = vsub.f32 %v6511, %v6517
    %v6520 = vmul.f32 %v6518, 1.442695
    %v6521 = vpow.pop %v6520
    %v6522 = vmul.f32 %v6519, 1.442695
    %v6523 = vpow.pop %v6522
    %v6524 = vsel %vm5941, %v6521, 0.0
    %6525 = vadd.xlane.f32.xlu0 %v6524
    %v6526 = vpop.xlane.xlu0 %6525
    %v6527 = vsel %vm5941, %v6523, 0.0
    %6528 = vadd.xlane.f32.xlu0 %v6527
    %v6529 = vpop.xlane.xlu0 %6528
    %v6530 = vrcp.pop %v6526
    %v6531 = vrcp.pop %v6529
    %v6532 = vmul.f32 %v6521, %v6530
    %v6533 = vmul.f32 %v6523, %v6531
    %6534 = vrot.lane.b32.xlu0 %v5835, 48
    %v6535 = vpop.permute.xlu0 %6534
    %6536 = vrot.lane.b32.xlu0 %v5840, 48
    %v6537 = vpop.permute.xlu0 %6536
    %v6541 = vsel %vm5941, %v6532, 0
    %v6544 = vsel %vm5941, %v6533, 0
    %6546 = vmatprep.subr.mxu0 0.0
    %6547 = vmatpush1.msra.mxu0 0.0
    %6548 = vmatprep.subr.mxu0 0.0
    %6549 = vmatpush1.msra.mxu0 0.0
    %6550 = vmatprep.subr.mxu0 0.0
    %6551 = vmatpush1.msra.mxu0 0.0
    %6552 = vmatprep.subr.mxu0 0.0
    %6553 = vmatpush1.msra.mxu0 0.0
    %6554 = vmatprep.subr.mxu0 0.0
    %6555 = vmatpush1.msra.mxu0 0.0
    %6556 = vmatprep.subr.mxu0 0.0
    %6557 = vmatpush1.msra.mxu0 0.0
    %6558 = vmatprep.subr.mxu0 0.0
    %6559 = vmatpush1.msra.mxu0 0.0
    %6560 = vmatprep.subr.mxu0 0.0
    %6561 = vmatpush1.msra.mxu0 0.0
    %6562 = vmatprep.subr.mxu0 0.0
    %6563 = vmatpush1.msra.mxu0 0.0
    %6564 = vmatprep.subr.mxu0 0.0
    %6565 = vmatpush1.msra.mxu0 0.0
    %6566 = vmatprep.subr.mxu0 0.0
    %6567 = vmatpush1.msra.mxu0 0.0
    %6568 = vmatprep.subr.mxu0 0.0
    %6569 = vmatpush1.msra.mxu0 0.0
    %6570 = vmatprep.subr.mxu0 0.0
    %6571 = vmatpush1.msra.mxu0 0.0
    %6572 = vmatprep.subr.mxu0 0.0
    %6573 = vmatpush1.msra.mxu0 0.0
    %6574 = vmatprep.subr.mxu0 0.0
    %6575 = vmatpush1.msra.mxu0 %v6537
    %6576 = vmatprep.subr.mxu0 0.0
    %6577 = vmatpush1.msra.mxu0 %v6535
    %6578 = vmatprep.subr.mxu0 0.0
    %6579 = vmatpush2.msra.mxu0 0.0
    %6580 = vmatprep.subr.mxu0 0.0
    %6581 = vmatpush2.msra.mxu0 0.0
    %6582 = vmatprep.subr.mxu0 0.0
    %6583 = vmatpush2.msra.mxu0 0.0
    %6584 = vmatprep.subr.mxu0 0.0
    %6585 = vmatpush2.msra.mxu0 0.0
    %6586 = vmatprep.subr.mxu0 0.0
    %6587 = vmatpush2.msra.mxu0 0.0
    %6588 = vmatprep.subr.mxu0 0.0
    %6589 = vmatpush2.msra.mxu0 0.0
    %6590 = vmatprep.subr.mxu0 0.0
    %6591 = vmatpush2.msra.mxu0 0.0
    %6592 = vmatprep.subr.mxu0 0.0
    %6593 = vmatpush2.msra.mxu0 0.0
    %6594 = vmatprep.subr.mxu0 0.0
    %6595 = vmatpush2.msra.mxu0 0.0
    %6596 = vmatprep.subr.mxu0 0.0
    %6597 = vmatpush2.msra.mxu0 0.0
    %6598 = vmatprep.subr.mxu0 0.0
    %6599 = vmatpush2.msra.mxu0 0.0
    %6600 = vmatprep.subr.mxu0 0.0
    %6601 = vmatpush2.msra.mxu0 0.0
    %6602 = vmatprep.subr.mxu0 0.0
    %6603 = vmatpush2.msra.mxu0 0.0
    %6604 = vmatprep.subr.mxu0 0.0
    %6605 = vmatpush2.msra.mxu0 0.0
    %6606 = vmatprep.subr.mxu0 0.0
    %6607 = vmatpush2.msra.mxu0 0.0
    %6608 = vmatprep.subr.mxu0 0.0
    %6609 = vmatpush2.msra.mxu0 0.0
    %6610 = vmatprep.mubr.f32.mxu0 0.0
    %6611 = vmatmul.mubr.f32.gmra.mxu0 %v6541
    %v6612 = vpop.f32.mrf.mxu0
    %v6613 = vadd.f32 0.0, %v6612
    %v6614 = vpop.f32.mrf.mxu0
    %6615 = vmatprep.mubr.f32.mxu0 0.0
    %6616 = vmatmul.mubr.f32.gmra.mxu0 %v6544
    %v6617 = vpop.f32.mrf.mxu0
    %v6618 = vadd.f32 0.0, %v6617
    %v6619 = vpop.f32.mrf.mxu0
    %6620 = vdwg.mxu0
    %v6622 = vsel %vm5853, %v6613, 0
    %v6625 = vsel %vm5853, %v6618, 0
    %6627 = vmatprep.subr.mxu0 0.0
    %6628 = vmatpush1.msra.mxu0 0.0
    %6629 = vmatprep.subr.mxu0 0.0
    %6630 = vmatpush1.msra.mxu0 0.0
    %6631 = vmatprep.subr.mxu0 0.0
    %6632 = vmatpush1.msra.mxu0 0.0
    %6633 = vmatprep.subr.mxu0 0.0
    %6634 = vmatpush1.msra.mxu0 0.0
    %6635 = vmatprep.subr.mxu0 0.0
    %6636 = vmatpush1.msra.mxu0 0.0
    %6637 = vmatprep.subr.mxu0 0.0
    %6638 = vmatpush1.msra.mxu0 0.0
    %6639 = vmatprep.subr.mxu0 0.0
    %6640 = vmatpush1.msra.mxu0 0.0
    %6641 = vmatprep.subr.mxu0 0.0
    %6642 = vmatpush1.msra.mxu0 0.0
    %6643 = vmatprep.subr.mxu0 0.0
    %6644 = vmatpush1.msra.mxu0 0.0
    %6645 = vmatprep.subr.mxu0 0.0
    %6646 = vmatpush1.msra.mxu0 0.0
    %6647 = vmatprep.subr.mxu0 0.0
    %6648 = vmatpush1.msra.mxu0 0.0
    %6649 = vmatprep.subr.mxu0 0.0
    %6650 = vmatpush1.msra.mxu0 0.0
    %6651 = vmatprep.subr.mxu0 0.0
    %6652 = vmatpush1.msra.mxu0 0.0
    %6653 = vmatprep.subr.mxu0 0.0
    %6654 = vmatpush1.msra.mxu0 0.0
    %6655 = vmatprep.subr.mxu0 0.0
    %6656 = vmatpush1.msra.mxu0 0.0
    %6657 = vmatprep.subr.mxu0 0.0
    %6658 = vmatpush1.msra.mxu0 %v5845
    %6659 = vmatprep.subr.mxu0 0.0
    %6660 = vmatpush2.msra.mxu0 0.0
    %6661 = vmatprep.subr.mxu0 0.0
    %6662 = vmatpush2.msra.mxu0 0.0
    %6663 = vmatprep.subr.mxu0 0.0
    %6664 = vmatpush2.msra.mxu0 0.0
    %6665 = vmatprep.subr.mxu0 0.0
    %6666 = vmatpush2.msra.mxu0 0.0
    %6667 = vmatprep.subr.mxu0 0.0
    %6668 = vmatpush2.msra.mxu0 0.0
    %6669 = vmatprep.subr.mxu0 0.0
    %6670 = vmatpush2.msra.mxu0 0.0
    %6671 = vmatprep.subr.mxu0 0.0
    %6672 = vmatpush2.msra.mxu0 0.0
    %6673 = vmatprep.subr.mxu0 0.0
    %6674 = vmatpush2.msra.mxu0 0.0
    %6675 = vmatprep.subr.mxu0 0.0
    %6676 = vmatpush2.msra.mxu0 0.0
    %6677 = vmatprep.subr.mxu0 0.0
    %6678 = vmatpush2.msra.mxu0 0.0
    %6679 = vmatprep.subr.mxu0 0.0
    %6680 = vmatpush2.msra.mxu0 0.0
    %6681 = vmatprep.subr.mxu0 0.0
    %6682 = vmatpush2.msra.mxu0 0.0
    %6683 = vmatprep.subr.mxu0 0.0
    %6684 = vmatpush2.msra.mxu0 0.0
    %6685 = vmatprep.subr.mxu0 0.0
    %6686 = vmatpush2.msra.mxu0 0.0
    %6687 = vmatprep.subr.mxu0 0.0
    %6688 = vmatpush2.msra.mxu0 0.0
    %6689 = vmatprep.subr.mxu0 0.0
    %6690 = vmatpush2.msra.mxu0 0.0
    %6691 = vmatprep.mubr.f32.mxu0 0.0
    %6692 = vmatmul.mubr.f32.gmra.mxu0 %v6622
    %v6693 = vpop.f32.mrf.mxu0
    %v6694 = vadd.f32 0.0, %v6693
    %v6695 = vpop.f32.mrf.mxu0
    %6696 = vmatprep.mubr.f32.mxu0 0.0
    %6697 = vmatmul.mubr.f32.gmra.mxu0 %v6625
    %v6698 = vpop.f32.mrf.mxu0
    %v6699 = vadd.f32 0.0, %v6698
    %v6700 = vpop.f32.mrf.mxu0
    %6701 = vdwg.mxu0
    %v6702 = vadd.f32 %v6409, %v6694
    %v6703 = vadd.f32 %v6414, %v6699
    %6704 = vrot.lane.b32.xlu0 %v5835, 104
    %v6705 = vpop.permute.xlu0 %6704
    %6706 = vrot.lane.b32.xlu0 %v5840, 104
    %v6707 = vpop.permute.xlu0 %6706
    %6708 = vrot.lane.b32.xlu0 %v5835, 72
    %v6709 = vpop.permute.xlu0 %6708
    %6710 = vrot.lane.b32.xlu0 %v5840, 72
    %v6711 = vpop.permute.xlu0 %6710
    %v6712 = vsel %vm5853, %v6705, 0
    %v6714 = vsel %vm5853, %v6707, 0
    %v6716 = vsel %vm5853, %v6709, 0
    %v6718 = vsel %vm5853, %v6711, 0
    %6720 = vmatprep.subr.mxu0 0.0
    %6721 = vmatpush1.xpose.msra.mxu0 0.0
    %6722 = vmatprep.subr.mxu0 0.0
    %6723 = vmatpush1.xpose.msra.mxu0 0.0
    %6724 = vmatprep.subr.mxu0 0.0
    %6725 = vmatpush1.xpose.msra.mxu0 0.0
    %6726 = vmatprep.subr.mxu0 0.0
    %6727 = vmatpush1.xpose.msra.mxu0 0.0
    %6728 = vmatprep.subr.mxu0 0.0
    %6729 = vmatpush1.xpose.msra.mxu0 0.0
    %6730 = vmatprep.subr.mxu0 0.0
    %6731 = vmatpush1.xpose.msra.mxu0 0.0
    %6732 = vmatprep.subr.mxu0 0.0
    %6733 = vmatpush1.xpose.msra.mxu0 0.0
    %6734 = vmatprep.subr.mxu0 0.0
    %6735 = vmatpush1.xpose.msra.mxu0 0.0
    %6736 = vmatprep.subr.mxu0 0.0
    %6737 = vmatpush1.xpose.msra.mxu0 0.0
    %6738 = vmatprep.subr.mxu0 0.0
    %6739 = vmatpush1.xpose.msra.mxu0 0.0
    %6740 = vmatprep.subr.mxu0 0.0
    %6741 = vmatpush1.xpose.msra.mxu0 0.0
    %6742 = vmatprep.subr.mxu0 0.0
    %6743 = vmatpush1.xpose.msra.mxu0 0.0
    %6744 = vmatprep.subr.mxu0 0.0
    %6745 = vmatpush1.xpose.msra.mxu0 0.0
    %6746 = vmatprep.subr.mxu0 0.0
    %6747 = vmatpush1.xpose.msra.mxu0 0.0
    %6748 = vmatprep.subr.mxu0 0.0
    %6749 = vmatpush1.xpose.msra.mxu0 %v6718
    %6750 = vmatprep.subr.mxu0 0.0
    %6751 = vmatpush1.xpose.msra.mxu0 %v6716
    %6752 = vmatprep.subr.mxu0 0.0
    %6753 = vmatpush2.xpose.msra.mxu0 0.0
    %6754 = vmatprep.subr.mxu0 0.0
    %6755 = vmatpush2.xpose.msra.mxu0 0.0
    %6756 = vmatprep.subr.mxu0 0.0
    %6757 = vmatpush2.xpose.msra.mxu0 0.0
    %6758 = vmatprep.subr.mxu0 0.0
    %6759 = vmatpush2.xpose.msra.mxu0 0.0
    %6760 = vmatprep.subr.mxu0 0.0
    %6761 = vmatpush2.xpose.msra.mxu0 0.0
    %6762 = vmatprep.subr.mxu0 0.0
    %6763 = vmatpush2.xpose.msra.mxu0 0.0
    %6764 = vmatprep.subr.mxu0 0.0
    %6765 = vmatpush2.xpose.msra.mxu0 0.0
    %6766 = vmatprep.subr.mxu0 0.0
    %6767 = vmatpush2.xpose.msra.mxu0 0.0
    %6768 = vmatprep.subr.mxu0 0.0
    %6769 = vmatpush2.xpose.msra.mxu0 0.0
    %6770 = vmatprep.subr.mxu0 0.0
    %6771 = vmatpush2.xpose.msra.mxu0 0.0
    %6772 = vmatprep.subr.mxu0 0.0
    %6773 = vmatpush2.xpose.msra.mxu0 0.0
    %6774 = vmatprep.subr.mxu0 0.0
    %6775 = vmatpush2.xpose.msra.mxu0 0.0
    %6776 = vmatprep.subr.mxu0 0.0
    %6777 = vmatpush2.xpose.msra.mxu0 0.0
    %6778 = vmatprep.subr.mxu0 0.0
    %6779 = vmatpush2.xpose.msra.mxu0 0.0
    %6780 = vmatprep.subr.mxu0 0.0
    %6781 = vmatpush2.xpose.msra.mxu0 0.0
    %6782 = vmatprep.subr.mxu0 0.0
    %6783 = vmatpush2.xpose.msra.mxu0 0.0
    %6784 = vmatprep.mubr.f32.mxu0 0.0
    %6785 = vmatmul.mubr.f32.gmra.mxu0 %v6712
    %v6786 = vpop.f32.mrf.mxu0
    %v6787 = vadd.f32 0.0, %v6786
    %v6788 = vpop.f32.mrf.mxu0
    %6789 = vmatprep.mubr.f32.mxu0 0.0
    %6790 = vmatmul.mubr.f32.gmra.mxu0 %v6714
    %v6791 = vpop.f32.mrf.mxu0
    %v6792 = vadd.f32 0.0, %v6791
    %v6793 = vpop.f32.mrf.mxu0
    %6794 = vdwg.mxu0
    %v6795 = vmul.f32 %v6787, 0.35355338
    %v6796 = vmul.f32 %v6792, 0.35355338
    %v6797 = vsel %vm5748, %v6795, -1e+30
    %v6798 = vsel %vm5749, %v6796, -1e+30
    %v6799 = vsel %vm5941, %v6797, -inf
    %6800 = vmax.xlane.f32.xlu0 %v6799
    %v6801 = vpop.xlane.xlu0 %6800
    %v6802 = vsel %vm5941, %v6798, -inf
    %6803 = vmax.xlane.f32.xlu0 %v6802
    %v6804 = vpop.xlane.xlu0 %6803
    %v6805 = vsub.f32 %v6797, %v6801
    %v6806 = vsub.f32 %v6798, %v6804
    %v6807 = vmul.f32 %v6805, 1.442695
    %v6808 = vpow.pop %v6807
    %v6809 = vmul.f32 %v6806, 1.442695
    %v6810 = vpow.pop %v6809
    %v6811 = vsel %vm5941, %v6808, 0.0
    %6812 = vadd.xlane.f32.xlu0 %v6811
    %v6813 = vpop.xlane.xlu0 %6812
    %v6814 = vsel %vm5941, %v6810, 0.0
    %6815 = vadd.xlane.f32.xlu0 %v6814
    %v6816 = vpop.xlane.xlu0 %6815
    %v6817 = vrcp.pop %v6813
    %v6818 = vrcp.pop %v6816
    %v6819 = vmul.f32 %v6808, %v6817
    %v6820 = vmul.f32 %v6810, %v6818
    %6821 = vrot.lane.b32.xlu0 %v5835, 40
    %v6822 = vpop.permute.xlu0 %6821
    %6823 = vrot.lane.b32.xlu0 %v5840, 40
    %v6824 = vpop.permute.xlu0 %6823
    %v6828 = vsel %vm5941, %v6819, 0
    %v6831 = vsel %vm5941, %v6820, 0
    %6833 = vmatprep.subr.mxu0 0.0
    %6834 = vmatpush1.msra.mxu0 0.0
    %6835 = vmatprep.subr.mxu0 0.0
    %6836 = vmatpush1.msra.mxu0 0.0
    %6837 = vmatprep.subr.mxu0 0.0
    %6838 = vmatpush1.msra.mxu0 0.0
    %6839 = vmatprep.subr.mxu0 0.0
    %6840 = vmatpush1.msra.mxu0 0.0
    %6841 = vmatprep.subr.mxu0 0.0
    %6842 = vmatpush1.msra.mxu0 0.0
    %6843 = vmatprep.subr.mxu0 0.0
    %6844 = vmatpush1.msra.mxu0 0.0
    %6845 = vmatprep.subr.mxu0 0.0
    %6846 = vmatpush1.msra.mxu0 0.0
    %6847 = vmatprep.subr.mxu0 0.0
    %6848 = vmatpush1.msra.mxu0 0.0
    %6849 = vmatprep.subr.mxu0 0.0
    %6850 = vmatpush1.msra.mxu0 0.0
    %6851 = vmatprep.subr.mxu0 0.0
    %6852 = vmatpush1.msra.mxu0 0.0
    %6853 = vmatprep.subr.mxu0 0.0
    %6854 = vmatpush1.msra.mxu0 0.0
    %6855 = vmatprep.subr.mxu0 0.0
    %6856 = vmatpush1.msra.mxu0 0.0
    %6857 = vmatprep.subr.mxu0 0.0
    %6858 = vmatpush1.msra.mxu0 0.0
    %6859 = vmatprep.subr.mxu0 0.0
    %6860 = vmatpush1.msra.mxu0 0.0
    %6861 = vmatprep.subr.mxu0 0.0
    %6862 = vmatpush1.msra.mxu0 %v6824
    %6863 = vmatprep.subr.mxu0 0.0
    %6864 = vmatpush1.msra.mxu0 %v6822
    %6865 = vmatprep.subr.mxu0 0.0
    %6866 = vmatpush2.msra.mxu0 0.0
    %6867 = vmatprep.subr.mxu0 0.0
    %6868 = vmatpush2.msra.mxu0 0.0
    %6869 = vmatprep.subr.mxu0 0.0
    %6870 = vmatpush2.msra.mxu0 0.0
    %6871 = vmatprep.subr.mxu0 0.0
    %6872 = vmatpush2.msra.mxu0 0.0
    %6873 = vmatprep.subr.mxu0 0.0
    %6874 = vmatpush2.msra.mxu0 0.0
    %6875 = vmatprep.subr.mxu0 0.0
    %6876 = vmatpush2.msra.mxu0 0.0
    %6877 = vmatprep.subr.mxu0 0.0
    %6878 = vmatpush2.msra.mxu0 0.0
    %6879 = vmatprep.subr.mxu0 0.0
    %6880 = vmatpush2.msra.mxu0 0.0
    %6881 = vmatprep.subr.mxu0 0.0
    %6882 = vmatpush2.msra.mxu0 0.0
    %6883 = vmatprep.subr.mxu0 0.0
    %6884 = vmatpush2.msra.mxu0 0.0
    %6885 = vmatprep.subr.mxu0 0.0
    %6886 = vmatpush2.msra.mxu0 0.0
    %6887 = vmatprep.subr.mxu0 0.0
    %6888 = vmatpush2.msra.mxu0 0.0
    %6889 = vmatprep.subr.mxu0 0.0
    %6890 = vmatpush2.msra.mxu0 0.0
    %6891 = vmatprep.subr.mxu0 0.0
    %6892 = vmatpush2.msra.mxu0 0.0
    %6893 = vmatprep.subr.mxu0 0.0
    %6894 = vmatpush2.msra.mxu0 0.0
    %6895 = vmatprep.subr.mxu0 0.0
    %6896 = vmatpush2.msra.mxu0 0.0
    %6897 = vmatprep.mubr.f32.mxu0 0.0
    %6898 = vmatmul.mubr.f32.gmra.mxu0 %v6828
    %v6899 = vpop.f32.mrf.mxu0
    %v6900 = vadd.f32 0.0, %v6899
    %v6901 = vpop.f32.mrf.mxu0
    %6902 = vmatprep.mubr.f32.mxu0 0.0
    %6903 = vmatmul.mubr.f32.gmra.mxu0 %v6831
    %v6904 = vpop.f32.mrf.mxu0
    %v6905 = vadd.f32 0.0, %v6904
    %v6906 = vpop.f32.mrf.mxu0
    %6907 = vdwg.mxu0
    %v6909 = vsel %vm5853, %v6900, 0
    %v6912 = vsel %vm5853, %v6905, 0
    %6914 = vmatprep.subr.mxu0 0.0
    %6915 = vmatpush1.msra.mxu0 0.0
    %6916 = vmatprep.subr.mxu0 0.0
    %6917 = vmatpush1.msra.mxu0 0.0
    %6918 = vmatprep.subr.mxu0 0.0
    %6919 = vmatpush1.msra.mxu0 0.0
    %6920 = vmatprep.subr.mxu0 0.0
    %6921 = vmatpush1.msra.mxu0 0.0
    %6922 = vmatprep.subr.mxu0 0.0
    %6923 = vmatpush1.msra.mxu0 0.0
    %6924 = vmatprep.subr.mxu0 0.0
    %6925 = vmatpush1.msra.mxu0 0.0
    %6926 = vmatprep.subr.mxu0 0.0
    %6927 = vmatpush1.msra.mxu0 0.0
    %6928 = vmatprep.subr.mxu0 0.0
    %6929 = vmatpush1.msra.mxu0 0.0
    %6930 = vmatprep.subr.mxu0 0.0
    %6931 = vmatpush1.msra.mxu0 0.0
    %6932 = vmatprep.subr.mxu0 0.0
    %6933 = vmatpush1.msra.mxu0 0.0
    %6934 = vmatprep.subr.mxu0 0.0
    %6935 = vmatpush1.msra.mxu0 0.0
    %6936 = vmatprep.subr.mxu0 0.0
    %6937 = vmatpush1.msra.mxu0 0.0
    %6938 = vmatprep.subr.mxu0 0.0
    %6939 = vmatpush1.msra.mxu0 0.0
    %6940 = vmatprep.subr.mxu0 0.0
    %6941 = vmatpush1.msra.mxu0 0.0
    %6942 = vmatprep.subr.mxu0 0.0
    %6943 = vmatpush1.msra.mxu0 0.0
    %6944 = vmatprep.subr.mxu0 0.0
    %6945 = vmatpush1.msra.mxu0 %v5846
    %6946 = vmatprep.subr.mxu0 0.0
    %6947 = vmatpush2.msra.mxu0 0.0
    %6948 = vmatprep.subr.mxu0 0.0
    %6949 = vmatpush2.msra.mxu0 0.0
    %6950 = vmatprep.subr.mxu0 0.0
    %6951 = vmatpush2.msra.mxu0 0.0
    %6952 = vmatprep.subr.mxu0 0.0
    %6953 = vmatpush2.msra.mxu0 0.0
    %6954 = vmatprep.subr.mxu0 0.0
    %6955 = vmatpush2.msra.mxu0 0.0
    %6956 = vmatprep.subr.mxu0 0.0
    %6957 = vmatpush2.msra.mxu0 0.0
    %6958 = vmatprep.subr.mxu0 0.0
    %6959 = vmatpush2.msra.mxu0 0.0
    %6960 = vmatprep.subr.mxu0 0.0
    %6961 = vmatpush2.msra.mxu0 0.0
    %6962 = vmatprep.subr.mxu0 0.0
    %6963 = vmatpush2.msra.mxu0 0.0
    %6964 = vmatprep.subr.mxu0 0.0
    %6965 = vmatpush2.msra.mxu0 0.0
    %6966 = vmatprep.subr.mxu0 0.0
    %6967 = vmatpush2.msra.mxu0 0.0
    %6968 = vmatprep.subr.mxu0 0.0
    %6969 = vmatpush2.msra.mxu0 0.0
    %6970 = vmatprep.subr.mxu0 0.0
    %6971 = vmatpush2.msra.mxu0 0.0
    %6972 = vmatprep.subr.mxu0 0.0
    %6973 = vmatpush2.msra.mxu0 0.0
    %6974 = vmatprep.subr.mxu0 0.0
    %6975 = vmatpush2.msra.mxu0 0.0
    %6976 = vmatprep.subr.mxu0 0.0
    %6977 = vmatpush2.msra.mxu0 0.0
    %6978 = vmatprep.mubr.f32.mxu0 0.0
    %6979 = vmatmul.mubr.f32.gmra.mxu0 %v6909
    %v6980 = vpop.f32.mrf.mxu0
    %v6981 = vadd.f32 0.0, %v6980
    %v6982 = vpop.f32.mrf.mxu0
    %6983 = vmatprep.mubr.f32.mxu0 0.0
    %6984 = vmatmul.mubr.f32.gmra.mxu0 %v6912
    %v6985 = vpop.f32.mrf.mxu0
    %v6986 = vadd.f32 0.0, %v6985
    %v6987 = vpop.f32.mrf.mxu0
    %6988 = vdwg.mxu0
    %v6989 = vadd.f32 %v6702, %v6981
    %v6990 = vadd.f32 %v6703, %v6986
    %v6991 = vadd.f32 %v5738, %v6989
    %v6992 = vadd.f32 %v5739, %v6990
    %v6993 = vld [vmem:[%s9] sm:$0x1]
    %v6995 = vlaneseq
    %v6996 = vshrl.u32 %v6995, 7
    %v6997 = vsub.s32 0, %v6996
    %v6998 = vrot.slane %v6993, %v6997
    %v7000 = vadd.f32 %v6991, %v6998
    %v7001 = vadd.f32 %v6992, %v6998
    %v7002 = vld [vmem:[%s10] sm:$0x1]
    %v7003 = vld [vmem:[%s11] sm:$0x1]
    %v7004 = vsel %vm5761, %v7000, 0.0
    %7005 = vadd.xlane.f32.xlu0 %v7004
    %v7006 = vpop.xlane.xlu0 %7005
    %v7007 = vsel %vm5761, %v7001, 0.0
    %7008 = vadd.xlane.f32.xlu0 %v7007
    %v7009 = vpop.xlane.xlu0 %7008
    %v7010 = vrcp.pop 32.0
    %v7011 = vmul.f32 %v7006, %v7010
    %v7012 = vmul.f32 %v7009, %v7010
    %v7013 = vsub.f32 %v7000, %v7011
    %v7014 = vsub.f32 %v7001, %v7012
    %v7015 = vmul.f32 %v7013, %v7013
    %v7016 = vmul.f32 %v7014, %v7014
    %v7017 = vsel %vm5761, %v7015, 0.0
    %7018 = vadd.xlane.f32.xlu0 %v7017
    %v7019 = vpop.xlane.xlu0 %7018
    %v7020 = vsel %vm5761, %v7016, 0.0
    %7021 = vadd.xlane.f32.xlu0 %v7020
    %v7022 = vpop.xlane.xlu0 %7021
    %v7023 = vmul.f32 %v7019, %v7010
    %v7024 = vmul.f32 %v7022, %v7010
    %v7025 = vadd.f32 %v7023, 1e-05
    %v7026 = vadd.f32 %v7024, 1e-05
    %v7027 = vrsqrt.pop %v7025
    %v7028 = vrsqrt.pop %v7026
    %v7029 = vmul.f32 %v7013, %v7027
    %v7030 = vmul.f32 %v7014, %v7028
    %v7032 = vlaneseq
    %v7033 = vshrl.u32 %v7032, 7
    %v7034 = vsub.s32 0, %v7033
    %v7035 = vrot.slane %v7002, %v7034
    %v7037 = vmul.f32 %v7029, %v7035
    %v7038 = vmul.f32 %v7030, %v7035
    %v7040 = vlaneseq
    %v7041 = vshrl.u32 %v7040, 7
    %v7042 = vsub.s32 0, %v7041
    %v7043 = vrot.slane %v7003, %v7042
    %v7045 = vadd.f32 %v7037, %v7043
    %v7046 = vadd.f32 %v7038, %v7043
    %v7047 = vpack.c.bf16 %v7046, %v7045
    %v7048 = vld [vmem:[%s12] sm:$0xff]
    %v7049 = vld [vmem:[%s12 + $0x8] sm:$0xff]
    %v7050 = vld [vmem:[%s12 + $0x10] sm:$0xff]
    %v7051 = vld [vmem:[%s12 + $0x18] sm:$0xff]
    %v7052 = vld [vmem:[%s12 + $0x20] sm:$0xff]
    %v7053 = vld [vmem:[%s12 + $0x28] sm:$0xff]
    %v7054 = vld [vmem:[%s12 + $0x30] sm:$0xff]
    %v7055 = vld [vmem:[%s12 + $0x38] sm:$0xff]
    %v7056 = vld [vmem:[%s12 + $0x40] sm:$0xff]
    %v7057 = vld [vmem:[%s12 + $0x48] sm:$0xff]
    %v7058 = vld [vmem:[%s12 + $0x50] sm:$0xff]
    %v7059 = vld [vmem:[%s12 + $0x58] sm:$0xff]
    %v7060 = vld [vmem:[%s12 + $0x60] sm:$0xff]
    %v7061 = vld [vmem:[%s12 + $0x68] sm:$0xff]
    %v7062 = vld [vmem:[%s12 + $0x70] sm:$0xff]
    %v7063 = vld [vmem:[%s12 + $0x78] sm:$0xff]
    %v7064 = vld [vmem:[%s12 + $0x80] sm:$0xff]
    %v7065 = vld [vmem:[%s12 + $0x88] sm:$0xff]
    %v7066 = vld [vmem:[%s12 + $0x90] sm:$0xff]
    %v7067 = vld [vmem:[%s12 + $0x98] sm:$0xff]
    %v7068 = vld [vmem:[%s12 + $0xa0] sm:$0xff]
    %v7069 = vld [vmem:[%s12 + $0xa8] sm:$0xff]
    %v7070 = vld [vmem:[%s12 + $0xb0] sm:$0xff]
    %v7071 = vld [vmem:[%s12 + $0xb8] sm:$0xff]
    %v7072 = vld [vmem:[%s12 + $0xc0] sm:$0xff]
    %v7073 = vld [vmem:[%s12 + $0xc8] sm:$0xff]
    %v7074 = vld [vmem:[%s12 + $0xd0] sm:$0xff]
    %v7075 = vld [vmem:[%s12 + $0xd8] sm:$0xff]
    %v7076 = vld [vmem:[%s12 + $0xe0] sm:$0xff]
    %v7077 = vld [vmem:[%s12 + $0xe8] sm:$0xff]
    %v7078 = vld [vmem:[%s12 + $0xf0] sm:$0xff]
    %v7079 = vld [vmem:[%s12 + $0xf8] sm:$0xff]
    %v7080 = vld [vmem:[%s13] sm:$0xff]
    %v7081 = vld [vmem:[%s13 + $0x8] sm:$0xff]
    %v7084 = vlaneseq
    %v7085 = vshrl.u32 %v7084, 7
    %v7086 = vsub.s32 0, %v7085
    %v7087 = vrot.slane %v7080, %v7086
    %v7088 = vlaneseq
    %v7089 = vshrl.u32 %v7088, 7
    %v7090 = vsub.s32 1, %v7089
    %v7091 = vrot.slane %v7080, %v7090
    %v7092 = vlaneseq
    %v7093 = vshrl.u32 %v7092, 7
    %v7094 = vsub.s32 2, %v7093
    %v7095 = vrot.slane %v7080, %v7094
    %v7096 = vlaneseq
    %v7097 = vshrl.u32 %v7096, 7
    %v7098 = vsub.s32 3, %v7097
    %v7099 = vrot.slane %v7080, %v7098
    %v7100 = vlaneseq
    %v7101 = vshrl.u32 %v7100, 7
    %v7102 = vsub.s32 4, %v7101
    %v7103 = vrot.slane %v7080, %v7102
    %v7104 = vlaneseq
    %v7105 = vshrl.u32 %v7104, 7
    %v7106 = vsub.s32 5, %v7105
    %v7107 = vrot.slane %v7080, %v7106
    %v7108 = vlaneseq
    %v7109 = vshrl.u32 %v7108, 7
    %v7110 = vsub.s32 6, %v7109
    %v7111 = vrot.slane %v7080, %v7110
    %v7112 = vlaneseq
    %v7113 = vshrl.u32 %v7112, 7
    %v7114 = vsub.s32 7, %v7113
    %v7115 = vrot.slane %v7080, %v7114
    %v7116 = vlaneseq
    %v7117 = vshrl.u32 %v7116, 7
    %v7118 = vsub.s32 0, %v7117
    %v7119 = vrot.slane %v7081, %v7118
    %v7120 = vlaneseq
    %v7121 = vshrl.u32 %v7120, 7
    %v7122 = vsub.s32 1, %v7121
    %v7123 = vrot.slane %v7081, %v7122
    %v7124 = vlaneseq
    %v7125 = vshrl.u32 %v7124, 7
    %v7126 = vsub.s32 2, %v7125
    %v7127 = vrot.slane %v7081, %v7126
    %v7128 = vlaneseq
    %v7129 = vshrl.u32 %v7128, 7
    %v7130 = vsub.s32 3, %v7129
    %v7131 = vrot.slane %v7081, %v7130
    %v7132 = vlaneseq
    %v7133 = vshrl.u32 %v7132, 7
    %v7134 = vsub.s32 4, %v7133
    %v7135 = vrot.slane %v7081, %v7134
    %v7136 = vlaneseq
    %v7137 = vshrl.u32 %v7136, 7
    %v7138 = vsub.s32 5, %v7137
    %v7139 = vrot.slane %v7081, %v7138
    %v7140 = vlaneseq
    %v7141 = vshrl.u32 %v7140, 7
    %v7142 = vsub.s32 6, %v7141
    %v7143 = vrot.slane %v7081, %v7142
    %v7144 = vlaneseq
    %v7145 = vshrl.u32 %v7144, 7
    %v7146 = vsub.s32 7, %v7145
    %v7147 = vrot.slane %v7081, %v7146
    %v7196 = vunpack.c.l.b16 %v7048
    %v7197 = vunpack.c.h.b16 %v7048
    %v7198 = vunpack.c.l.b16 %v7049
    %v7199 = vunpack.c.h.b16 %v7049
    %v7200 = vunpack.c.l.b16 %v7050
    %v7201 = vunpack.c.h.b16 %v7050
    %v7202 = vunpack.c.l.b16 %v7051
    %v7203 = vunpack.c.h.b16 %v7051
    %v7204 = vunpack.c.l.b16 %v7052
    %v7205 = vunpack.c.h.b16 %v7052
    %v7206 = vunpack.c.l.b16 %v7053
    %v7207 = vunpack.c.h.b16 %v7053
    %v7208 = vunpack.c.l.b16 %v7054
    %v7209 = vunpack.c.h.b16 %v7054
    %v7210 = vunpack.c.l.b16 %v7055
    %v7211 = vunpack.c.h.b16 %v7055
    %v7212 = vunpack.c.l.b16 %v7056
    %v7213 = vunpack.c.h.b16 %v7056
    %v7214 = vunpack.c.l.b16 %v7057
    %v7215 = vunpack.c.h.b16 %v7057
    %v7216 = vunpack.c.l.b16 %v7058
    %v7217 = vunpack.c.h.b16 %v7058
    %v7218 = vunpack.c.l.b16 %v7059
    %v7219 = vunpack.c.h.b16 %v7059
    %v7220 = vunpack.c.l.b16 %v7060
    %v7221 = vunpack.c.h.b16 %v7060
    %v7222 = vunpack.c.l.b16 %v7061
    %v7223 = vunpack.c.h.b16 %v7061
    %v7224 = vunpack.c.l.b16 %v7062
    %v7225 = vunpack.c.h.b16 %v7062
    %v7226 = vunpack.c.l.b16 %v7063
    %v7227 = vunpack.c.h.b16 %v7063
    %v7228 = vunpack.c.l.b16 %v7064
    %v7229 = vunpack.c.h.b16 %v7064
    %v7230 = vunpack.c.l.b16 %v7065
    %v7231 = vunpack.c.h.b16 %v7065
    %v7232 = vunpack.c.l.b16 %v7066
    %v7233 = vunpack.c.h.b16 %v7066
    %v7234 = vunpack.c.l.b16 %v7067
    %v7235 = vunpack.c.h.b16 %v7067
    %v7236 = vunpack.c.l.b16 %v7068
    %v7237 = vunpack.c.h.b16 %v7068
    %v7238 = vunpack.c.l.b16 %v7069
    %v7239 = vunpack.c.h.b16 %v7069
    %v7240 = vunpack.c.l.b16 %v7070
    %v7241 = vunpack.c.h.b16 %v7070
    %v7242 = vunpack.c.l.b16 %v7071
    %v7243 = vunpack.c.h.b16 %v7071
    %v7244 = vunpack.c.l.b16 %v7072
    %v7245 = vunpack.c.h.b16 %v7072
    %v7246 = vunpack.c.l.b16 %v7073
    %v7247 = vunpack.c.h.b16 %v7073
    %v7248 = vunpack.c.l.b16 %v7074
    %v7249 = vunpack.c.h.b16 %v7074
    %v7250 = vunpack.c.l.b16 %v7075
    %v7251 = vunpack.c.h.b16 %v7075
    %v7252 = vunpack.c.l.b16 %v7076
    %v7253 = vunpack.c.h.b16 %v7076
    %v7254 = vunpack.c.l.b16 %v7077
    %v7255 = vunpack.c.h.b16 %v7077
    %v7256 = vunpack.c.l.b16 %v7078
    %v7257 = vunpack.c.h.b16 %v7078
    %v7258 = vunpack.c.l.b16 %v7079
    %v7259 = vunpack.c.h.b16 %v7079
    %v7260 = vpack.c.b16 %v7212, %v7196
    %v7261 = vpack.c.b16 %v7213, %v7197
    %v7262 = vpack.c.b16 %v7214, %v7198
    %v7263 = vpack.c.b16 %v7215, %v7199
    %v7264 = vpack.c.b16 %v7216, %v7200
    %v7265 = vpack.c.b16 %v7217, %v7201
    %v7266 = vpack.c.b16 %v7218, %v7202
    %v7267 = vpack.c.b16 %v7219, %v7203
    %v7268 = vpack.c.b16 %v7220, %v7204
    %v7269 = vpack.c.b16 %v7221, %v7205
    %v7270 = vpack.c.b16 %v7222, %v7206
    %v7271 = vpack.c.b16 %v7223, %v7207
    %v7272 = vpack.c.b16 %v7224, %v7208
    %v7273 = vpack.c.b16 %v7225, %v7209
    %v7274 = vpack.c.b16 %v7226, %v7210
    %v7275 = vpack.c.b16 %v7227, %v7211
    %v7276 = vpack.c.b16 %v7244, %v7228
    %v7277 = vpack.c.b16 %v7245, %v7229
    %v7278 = vpack.c.b16 %v7246, %v7230
    %v7279 = vpack.c.b16 %v7247, %v7231
    %v7280 = vpack.c.b16 %v7248, %v7232
    %v7281 = vpack.c.b16 %v7249, %v7233
    %v7282 = vpack.c.b16 %v7250, %v7234
    %v7283 = vpack.c.b16 %v7251, %v7235
    %v7284 = vpack.c.b16 %v7252, %v7236
    %v7285 = vpack.c.b16 %v7253, %v7237
    %v7286 = vpack.c.b16 %v7254, %v7238
    %v7287 = vpack.c.b16 %v7255, %v7239
    %v7288 = vpack.c.b16 %v7256, %v7240
    %v7289 = vpack.c.b16 %v7257, %v7241
    %v7290 = vpack.c.b16 %v7258, %v7242
    %v7291 = vpack.c.b16 %v7259, %v7243
    %v7325 = vsel %vm5761, %v7047, 0
    %7327 = vmatprep.subr.bf16.mxu0 0
    %7328 = vmatpush1.bf16.msra.mxu0 0
    %7329 = vmatprep.subr.bf16.mxu0 0
    %7330 = vmatpush1.bf16.msra.mxu0 0
    %7331 = vmatprep.subr.bf16.mxu0 0
    %7332 = vmatpush1.bf16.msra.mxu0 0
    %7333 = vmatprep.subr.bf16.mxu0 0
    %7334 = vmatpush1.bf16.msra.mxu0 0
    %7335 = vmatprep.subr.bf16.mxu0 0
    %7336 = vmatpush1.bf16.msra.mxu0 0
    %7337 = vmatprep.subr.bf16.mxu0 0
    %7338 = vmatpush1.bf16.msra.mxu0 0
    %7339 = vmatprep.subr.bf16.mxu0 %v7277
    %7340 = vmatpush1.bf16.msra.mxu0 %v7276
    %7341 = vmatprep.subr.bf16.mxu0 %v7261
    %7342 = vmatpush1.bf16.msra.mxu0 %v7260
    %7343 = vmatprep.subr.bf16.mxu0 0
    %7344 = vmatpush2.bf16.msra.mxu0 0
    %7345 = vmatprep.subr.bf16.mxu0 0
    %7346 = vmatpush2.bf16.msra.mxu0 0
    %7347 = vmatprep.subr.bf16.mxu0 0
    %7348 = vmatpush2.bf16.msra.mxu0 0
    %7349 = vmatprep.subr.bf16.mxu0 0
    %7350 = vmatpush2.bf16.msra.mxu0 0
    %7351 = vmatprep.subr.bf16.mxu0 0
    %7352 = vmatpush2.bf16.msra.mxu0 0
    %7353 = vmatprep.subr.bf16.mxu0 0
    %7354 = vmatpush2.bf16.msra.mxu0 0
    %7355 = vmatprep.subr.bf16.mxu0 0
    %7356 = vmatpush2.bf16.msra.mxu0 0
    %7357 = vmatprep.subr.bf16.mxu0 0
    %7358 = vmatpush2.bf16.msra.mxu0 0
    %7359 = vmatprep.mubr.bf16.mxu0 0
    %7360 = vmatmul.mubr.bf16.gmra.mxu0 %v7325
    %v7361 = vpop.f32.mrf.mxu0
    %v7362 = vadd.f32 %v7087, %v7361
    %v7363 = vpop.f32.mrf.mxu0
    %v7364 = vadd.f32 %v7091, %v7363
    %v7365 = vpop.f32.mrf.mxu0
    %v7366 = vadd.f32 %v7087, %v7365
    %v7367 = vpop.f32.mrf.mxu0
    %v7368 = vadd.f32 %v7091, %v7367
    %7369 = vdwg.mxu0
    %7370 = vmatprep.subr.bf16.mxu0 0
    %7371 = vmatpush1.bf16.msra.mxu0 0
    %7372 = vmatprep.subr.bf16.mxu0 0
    %7373 = vmatpush1.bf16.msra.mxu0 0
    %7374 = vmatprep.subr.bf16.mxu0 0
    %7375 = vmatpush1.bf16.msra.mxu0 0
    %7376 = vmatprep.subr.bf16.mxu0 0
    %7377 = vmatpush1.bf16.msra.mxu0 0
    %7378 = vmatprep.subr.bf16.mxu0 0
    %7379 = vmatpush1.bf16.msra.mxu0 0
    %7380 = vmatprep.subr.bf16.mxu0 0
    %7381 = vmatpush1.bf16.msra.mxu0 0
    %7382 = vmatprep.subr.bf16.mxu0 %v7279
    %7383 = vmatpush1.bf16.msra.mxu0 %v7278
    %7384 = vmatprep.subr.bf16.mxu0 %v7263
    %7385 = vmatpush1.bf16.msra.mxu0 %v7262
    %7386 = vmatprep.subr.bf16.mxu0 0
    %7387 = vmatpush2.bf16.msra.mxu0 0
    %7388 = vmatprep.subr.bf16.mxu0 0
    %7389 = vmatpush2.bf16.msra.mxu0 0
    %7390 = vmatprep.subr.bf16.mxu0 0
    %7391 = vmatpush2.bf16.msra.mxu0 0
    %7392 = vmatprep.subr.bf16.mxu0 0
    %7393 = vmatpush2.bf16.msra.mxu0 0
    %7394 = vmatprep.subr.bf16.mxu0 0
    %7395 = vmatpush2.bf16.msra.mxu0 0
    %7396 = vmatprep.subr.bf16.mxu0 0
    %7397 = vmatpush2.bf16.msra.mxu0 0
    %7398 = vmatprep.subr.bf16.mxu0 0
    %7399 = vmatpush2.bf16.msra.mxu0 0
    %7400 = vmatprep.subr.bf16.mxu0 0
    %7401 = vmatpush2.bf16.msra.mxu0 0
    %7402 = vmatprep.mubr.bf16.mxu0 0
    %7403 = vmatmul.mubr.bf16.gmra.mxu0 %v7325
    %v7404 = vpop.f32.mrf.mxu0
    %v7405 = vadd.f32 %v7095, %v7404
    %v7406 = vpop.f32.mrf.mxu0
    %v7407 = vadd.f32 %v7099, %v7406
    %v7408 = vpop.f32.mrf.mxu0
    %v7409 = vadd.f32 %v7095, %v7408
    %v7410 = vpop.f32.mrf.mxu0
    %v7411 = vadd.f32 %v7099, %v7410
    %7412 = vdwg.mxu0
    %7413 = vmatprep.subr.bf16.mxu0 0
    %7414 = vmatpush1.bf16.msra.mxu0 0
    %7415 = vmatprep.subr.bf16.mxu0 0
    %7416 = vmatpush1.bf16.msra.mxu0 0
    %7417 = vmatprep.subr.bf16.mxu0 0
    %7418 = vmatpush1.bf16.msra.mxu0 0
    %7419 = vmatprep.subr.bf16.mxu0 0
    %7420 = vmatpush1.bf16.msra.mxu0 0
    %7421 = vmatprep.subr.bf16.mxu0 0
    %7422 = vmatpush1.bf16.msra.mxu0 0
    %7423 = vmatprep.subr.bf16.mxu0 0
    %7424 = vmatpush1.bf16.msra.mxu0 0
    %7425 = vmatprep.subr.bf16.mxu0 %v7281
    %7426 = vmatpush1.bf16.msra.mxu0 %v7280
    %7427 = vmatprep.subr.bf16.mxu0 %v7265
    %7428 = vmatpush1.bf16.msra.mxu0 %v7264
    %7429 = vmatprep.subr.bf16.mxu0 0
    %7430 = vmatpush2.bf16.msra.mxu0 0
    %7431 = vmatprep.subr.bf16.mxu0 0
    %7432 = vmatpush2.bf16.msra.mxu0 0
    %7433 = vmatprep.subr.bf16.mxu0 0
    %7434 = vmatpush2.bf16.msra.mxu0 0
    %7435 = vmatprep.subr.bf16.mxu0 0
    %7436 = vmatpush2.bf16.msra.mxu0 0
    %7437 = vmatprep.subr.bf16.mxu0 0
    %7438 = vmatpush2.bf16.msra.mxu0 0
    %7439 = vmatprep.subr.bf16.mxu0 0
    %7440 = vmatpush2.bf16.msra.mxu0 0
    %7441 = vmatprep.subr.bf16.mxu0 0
    %7442 = vmatpush2.bf16.msra.mxu0 0
    %7443 = vmatprep.subr.bf16.mxu0 0
    %7444 = vmatpush2.bf16.msra.mxu0 0
    %7445 = vmatprep.mubr.bf16.mxu0 0
    %7446 = vmatmul.mubr.bf16.gmra.mxu0 %v7325
    %v7447 = vpop.f32.mrf.mxu0
    %v7448 = vadd.f32 %v7103, %v7447
    %v7449 = vpop.f32.mrf.mxu0
    %v7450 = vadd.f32 %v7107, %v7449
    %v7451 = vpop.f32.mrf.mxu0
    %v7452 = vadd.f32 %v7103, %v7451
    %v7453 = vpop.f32.mrf.mxu0
    %v7454 = vadd.f32 %v7107, %v7453
    %7455 = vdwg.mxu0
    %7456 = vmatprep.subr.bf16.mxu0 0
    %7457 = vmatpush1.bf16.msra.mxu0 0
    %7458 = vmatprep.subr.bf16.mxu0 0
    %7459 = vmatpush1.bf16.msra.mxu0 0
    %7460 = vmatprep.subr.bf16.mxu0 0
    %7461 = vmatpush1.bf16.msra.mxu0 0
    %7462 = vmatprep.subr.bf16.mxu0 0
    %7463 = vmatpush1.bf16.msra.mxu0 0
    %7464 = vmatprep.subr.bf16.mxu0 0
    %7465 = vmatpush1.bf16.msra.mxu0 0
    %7466 = vmatprep.subr.bf16.mxu0 0
    %7467 = vmatpush1.bf16.msra.mxu0 0
    %7468 = vmatprep.subr.bf16.mxu0 %v7283
    %7469 = vmatpush1.bf16.msra.mxu0 %v7282
    %7470 = vmatprep.subr.bf16.mxu0 %v7267
    %7471 = vmatpush1.bf16.msra.mxu0 %v7266
    %7472 = vmatprep.subr.bf16.mxu0 0
    %7473 = vmatpush2.bf16.msra.mxu0 0
    %7474 = vmatprep.subr.bf16.mxu0 0
    %7475 = vmatpush2.bf16.msra.mxu0 0
    %7476 = vmatprep.subr.bf16.mxu0 0
    %7477 = vmatpush2.bf16.msra.mxu0 0
    %7478 = vmatprep.subr.bf16.mxu0 0
    %7479 = vmatpush2.bf16.msra.mxu0 0
    %7480 = vmatprep.subr.bf16.mxu0 0
    %7481 = vmatpush2.bf16.msra.mxu0 0
    %7482 = vmatprep.subr.bf16.mxu0 0
    %7483 = vmatpush2.bf16.msra.mxu0 0
    %7484 = vmatprep.subr.bf16.mxu0 0
    %7485 = vmatpush2.bf16.msra.mxu0 0
    %7486 = vmatprep.subr.bf16.mxu0 0
    %7487 = vmatpush2.bf16.msra.mxu0 0
    %7488 = vmatprep.mubr.bf16.mxu0 0
    %7489 = vmatmul.mubr.bf16.gmra.mxu0 %v7325
    %v7490 = vpop.f32.mrf.mxu0
    %v7491 = vadd.f32 %v7111, %v7490
    %v7492 = vpop.f32.mrf.mxu0
    %v7493 = vadd.f32 %v7115, %v7492
    %v7494 = vpop.f32.mrf.mxu0
    %v7495 = vadd.f32 %v7111, %v7494
    %v7496 = vpop.f32.mrf.mxu0
    %v7497 = vadd.f32 %v7115, %v7496
    %7498 = vdwg.mxu0
    %7499 = vmatprep.subr.bf16.mxu0 0
    %7500 = vmatpush1.bf16.msra.mxu0 0
    %7501 = vmatprep.subr.bf16.mxu0 0
    %7502 = vmatpush1.bf16.msra.mxu0 0
    %7503 = vmatprep.subr.bf16.mxu0 0
    %7504 = vmatpush1.bf16.msra.mxu0 0
    %7505 = vmatprep.subr.bf16.mxu0 0
    %7506 = vmatpush1.bf16.msra.mxu0 0
    %7507 = vmatprep.subr.bf16.mxu0 0
    %7508 = vmatpush1.bf16.msra.mxu0 0
    %7509 = vmatprep.subr.bf16.mxu0 0
    %7510 = vmatpush1.bf16.msra.mxu0 0
    %7511 = vmatprep.subr.bf16.mxu0 %v7285
    %7512 = vmatpush1.bf16.msra.mxu0 %v7284
    %7513 = vmatprep.subr.bf16.mxu0 %v7269
    %7514 = vmatpush1.bf16.msra.mxu0 %v7268
    %7515 = vmatprep.subr.bf16.mxu0 0
    %7516 = vmatpush2.bf16.msra.mxu0 0
    %7517 = vmatprep.subr.bf16.mxu0 0
    %7518 = vmatpush2.bf16.msra.mxu0 0
    %7519 = vmatprep.subr.bf16.mxu0 0
    %7520 = vmatpush2.bf16.msra.mxu0 0
    %7521 = vmatprep.subr.bf16.mxu0 0
    %7522 = vmatpush2.bf16.msra.mxu0 0
    %7523 = vmatprep.subr.bf16.mxu0 0
    %7524 = vmatpush2.bf16.msra.mxu0 0
    %7525 = vmatprep.subr.bf16.mxu0 0
    %7526 = vmatpush2.bf16.msra.mxu0 0
    %7527 = vmatprep.subr.bf16.mxu0 0
    %7528 = vmatpush2.bf16.msra.mxu0 0
    %7529 = vmatprep.subr.bf16.mxu0 0
    %7530 = vmatpush2.bf16.msra.mxu0 0
    %7531 = vmatprep.mubr.bf16.mxu0 0
    %7532 = vmatmul.mubr.bf16.gmra.mxu0 %v7325
    %v7533 = vpop.f32.mrf.mxu0
    %v7534 = vadd.f32 %v7119, %v7533
    %v7535 = vpop.f32.mrf.mxu0
    %v7536 = vadd.f32 %v7123, %v7535
    %v7537 = vpop.f32.mrf.mxu0
    %v7538 = vadd.f32 %v7119, %v7537
    %v7539 = vpop.f32.mrf.mxu0
    %v7540 = vadd.f32 %v7123, %v7539
    %7541 = vdwg.mxu0
    %7542 = vmatprep.subr.bf16.mxu0 0
    %7543 = vmatpush1.bf16.msra.mxu0 0
    %7544 = vmatprep.subr.bf16.mxu0 0
    %7545 = vmatpush1.bf16.msra.mxu0 0
    %7546 = vmatprep.subr.bf16.mxu0 0
    %7547 = vmatpush1.bf16.msra.mxu0 0
    %7548 = vmatprep.subr.bf16.mxu0 0
    %7549 = vmatpush1.bf16.msra.mxu0 0
    %7550 = vmatprep.subr.bf16.mxu0 0
    %7551 = vmatpush1.bf16.msra.mxu0 0
    %7552 = vmatprep.subr.bf16.mxu0 0
    %7553 = vmatpush1.bf16.msra.mxu0 0
    %7554 = vmatprep.subr.bf16.mxu0 %v7287
    %7555 = vmatpush1.bf16.msra.mxu0 %v7286
    %7556 = vmatprep.subr.bf16.mxu0 %v7271
    %7557 = vmatpush1.bf16.msra.mxu0 %v7270
    %7558 = vmatprep.subr.bf16.mxu0 0
    %7559 = vmatpush2.bf16.msra.mxu0 0
    %7560 = vmatprep.subr.bf16.mxu0 0
    %7561 = vmatpush2.bf16.msra.mxu0 0
    %7562 = vmatprep.subr.bf16.mxu0 0
    %7563 = vmatpush2.bf16.msra.mxu0 0
    %7564 = vmatprep.subr.bf16.mxu0 0
    %7565 = vmatpush2.bf16.msra.mxu0 0
    %7566 = vmatprep.subr.bf16.mxu0 0
    %7567 = vmatpush2.bf16.msra.mxu0 0
    %7568 = vmatprep.subr.bf16.mxu0 0
    %7569 = vmatpush2.bf16.msra.mxu0 0
    %7570 = vmatprep.subr.bf16.mxu0 0
    %7571 = vmatpush2.bf16.msra.mxu0 0
    %7572 = vmatprep.subr.bf16.mxu0 0
    %7573 = vmatpush2.bf16.msra.mxu0 0
    %7574 = vmatprep.mubr.bf16.mxu0 0
    %7575 = vmatmul.mubr.bf16.gmra.mxu0 %v7325
    %v7576 = vpop.f32.mrf.mxu0
    %v7577 = vadd.f32 %v7127, %v7576
    %v7578 = vpop.f32.mrf.mxu0
    %v7579 = vadd.f32 %v7131, %v7578
    %v7580 = vpop.f32.mrf.mxu0
    %v7581 = vadd.f32 %v7127, %v7580
    %v7582 = vpop.f32.mrf.mxu0
    %v7583 = vadd.f32 %v7131, %v7582
    %7584 = vdwg.mxu0
    %7585 = vmatprep.subr.bf16.mxu0 0
    %7586 = vmatpush1.bf16.msra.mxu0 0
    %7587 = vmatprep.subr.bf16.mxu0 0
    %7588 = vmatpush1.bf16.msra.mxu0 0
    %7589 = vmatprep.subr.bf16.mxu0 0
    %7590 = vmatpush1.bf16.msra.mxu0 0
    %7591 = vmatprep.subr.bf16.mxu0 0
    %7592 = vmatpush1.bf16.msra.mxu0 0
    %7593 = vmatprep.subr.bf16.mxu0 0
    %7594 = vmatpush1.bf16.msra.mxu0 0
    %7595 = vmatprep.subr.bf16.mxu0 0
    %7596 = vmatpush1.bf16.msra.mxu0 0
    %7597 = vmatprep.subr.bf16.mxu0 %v7289
    %7598 = vmatpush1.bf16.msra.mxu0 %v7288
    %7599 = vmatprep.subr.bf16.mxu0 %v7273
    %7600 = vmatpush1.bf16.msra.mxu0 %v7272
    %7601 = vmatprep.subr.bf16.mxu0 0
    %7602 = vmatpush2.bf16.msra.mxu0 0
    %7603 = vmatprep.subr.bf16.mxu0 0
    %7604 = vmatpush2.bf16.msra.mxu0 0
    %7605 = vmatprep.subr.bf16.mxu0 0
    %7606 = vmatpush2.bf16.msra.mxu0 0
    %7607 = vmatprep.subr.bf16.mxu0 0
    %7608 = vmatpush2.bf16.msra.mxu0 0
    %7609 = vmatprep.subr.bf16.mxu0 0
    %7610 = vmatpush2.bf16.msra.mxu0 0
    %7611 = vmatprep.subr.bf16.mxu0 0
    %7612 = vmatpush2.bf16.msra.mxu0 0
    %7613 = vmatprep.subr.bf16.mxu0 0
    %7614 = vmatpush2.bf16.msra.mxu0 0
    %7615 = vmatprep.subr.bf16.mxu0 0
    %7616 = vmatpush2.bf16.msra.mxu0 0
    %7617 = vmatprep.mubr.bf16.mxu0 0
    %7618 = vmatmul.mubr.bf16.gmra.mxu0 %v7325
    %v7619 = vpop.f32.mrf.mxu0
    %v7620 = vadd.f32 %v7135, %v7619
    %v7621 = vpop.f32.mrf.mxu0
    %v7622 = vadd.f32 %v7139, %v7621
    %v7623 = vpop.f32.mrf.mxu0
    %v7624 = vadd.f32 %v7135, %v7623
    %v7625 = vpop.f32.mrf.mxu0
    %v7626 = vadd.f32 %v7139, %v7625
    %7627 = vdwg.mxu0
    %7628 = vmatprep.subr.bf16.mxu0 0
    %7629 = vmatpush1.bf16.msra.mxu0 0
    %7630 = vmatprep.subr.bf16.mxu0 0
    %7631 = vmatpush1.bf16.msra.mxu0 0
    %7632 = vmatprep.subr.bf16.mxu0 0
    %7633 = vmatpush1.bf16.msra.mxu0 0
    %7634 = vmatprep.subr.bf16.mxu0 0
    %7635 = vmatpush1.bf16.msra.mxu0 0
    %7636 = vmatprep.subr.bf16.mxu0 0
    %7637 = vmatpush1.bf16.msra.mxu0 0
    %7638 = vmatprep.subr.bf16.mxu0 0
    %7639 = vmatpush1.bf16.msra.mxu0 0
    %7640 = vmatprep.subr.bf16.mxu0 %v7291
    %7641 = vmatpush1.bf16.msra.mxu0 %v7290
    %7642 = vmatprep.subr.bf16.mxu0 %v7275
    %7643 = vmatpush1.bf16.msra.mxu0 %v7274
    %7644 = vmatprep.subr.bf16.mxu0 0
    %7645 = vmatpush2.bf16.msra.mxu0 0
    %7646 = vmatprep.subr.bf16.mxu0 0
    %7647 = vmatpush2.bf16.msra.mxu0 0
    %7648 = vmatprep.subr.bf16.mxu0 0
    %7649 = vmatpush2.bf16.msra.mxu0 0
    %7650 = vmatprep.subr.bf16.mxu0 0
    %7651 = vmatpush2.bf16.msra.mxu0 0
    %7652 = vmatprep.subr.bf16.mxu0 0
    %7653 = vmatpush2.bf16.msra.mxu0 0
    %7654 = vmatprep.subr.bf16.mxu0 0
    %7655 = vmatpush2.bf16.msra.mxu0 0
    %7656 = vmatprep.subr.bf16.mxu0 0
    %7657 = vmatpush2.bf16.msra.mxu0 0
    %7658 = vmatprep.subr.bf16.mxu0 0
    %7659 = vmatpush2.bf16.msra.mxu0 0
    %7660 = vmatprep.mubr.bf16.mxu0 0
    %7661 = vmatmul.mubr.bf16.gmra.mxu0 %v7325
    %v7662 = vpop.f32.mrf.mxu0
    %v7663 = vadd.f32 %v7143, %v7662
    %v7664 = vpop.f32.mrf.mxu0
    %v7665 = vadd.f32 %v7147, %v7664
    %v7666 = vpop.f32.mrf.mxu0
    %v7667 = vadd.f32 %v7143, %v7666
    %v7668 = vpop.f32.mrf.mxu0
    %v7669 = vadd.f32 %v7147, %v7668
    %7670 = vdwg.mxu0
    %v7671 = vmax.f32 %v7362, 0.0
    %v7672 = vmax.f32 %v7364, 0.0
    %v7673 = vmax.f32 %v7405, 0.0
    %v7674 = vmax.f32 %v7407, 0.0
    %v7675 = vmax.f32 %v7448, 0.0
    %v7676 = vmax.f32 %v7450, 0.0
    %v7677 = vmax.f32 %v7491, 0.0
    %v7678 = vmax.f32 %v7493, 0.0
    %v7679 = vmax.f32 %v7534, 0.0
    %v7680 = vmax.f32 %v7536, 0.0
    %v7681 = vmax.f32 %v7577, 0.0
    %v7682 = vmax.f32 %v7579, 0.0
    %v7683 = vmax.f32 %v7620, 0.0
    %v7684 = vmax.f32 %v7622, 0.0
    %v7685 = vmax.f32 %v7663, 0.0
    %v7686 = vmax.f32 %v7665, 0.0
    %v7687 = vmax.f32 %v7366, 0.0
    %v7688 = vmax.f32 %v7368, 0.0
    %v7689 = vmax.f32 %v7409, 0.0
    %v7690 = vmax.f32 %v7411, 0.0
    %v7691 = vmax.f32 %v7452, 0.0
    %v7692 = vmax.f32 %v7454, 0.0
    %v7693 = vmax.f32 %v7495, 0.0
    %v7694 = vmax.f32 %v7497, 0.0
    %v7695 = vmax.f32 %v7538, 0.0
    %v7696 = vmax.f32 %v7540, 0.0
    %v7697 = vmax.f32 %v7581, 0.0
    %v7698 = vmax.f32 %v7583, 0.0
    %v7699 = vmax.f32 %v7624, 0.0
    %v7700 = vmax.f32 %v7626, 0.0
    %v7701 = vmax.f32 %v7667, 0.0
    %v7702 = vmax.f32 %v7669, 0.0
    %v7703 = vpack.c.bf16 %v7687, %v7671
    %v7704 = vpack.c.bf16 %v7688, %v7672
    %v7705 = vpack.c.bf16 %v7689, %v7673
    %v7706 = vpack.c.bf16 %v7690, %v7674
    %v7707 = vpack.c.bf16 %v7691, %v7675
    %v7708 = vpack.c.bf16 %v7692, %v7676
    %v7709 = vpack.c.bf16 %v7693, %v7677
    %v7710 = vpack.c.bf16 %v7694, %v7678
    %v7711 = vpack.c.bf16 %v7695, %v7679
    %v7712 = vpack.c.bf16 %v7696, %v7680
    %v7713 = vpack.c.bf16 %v7697, %v7681
    %v7714 = vpack.c.bf16 %v7698, %v7682
    %v7715 = vpack.c.bf16 %v7699, %v7683
    %v7716 = vpack.c.bf16 %v7700, %v7684
    %v7717 = vpack.c.bf16 %v7701, %v7685
    %v7718 = vpack.c.bf16 %v7702, %v7686
    %v7719 = vld [vmem:[%s14] sm:$0xf]
    %v7720 = vld [vmem:[%s14 + $0x4] sm:$0xf]
    %v7721 = vld [vmem:[%s14 + $0x8] sm:$0xf]
    %v7722 = vld [vmem:[%s14 + $0xc] sm:$0xf]
    %v7723 = vld [vmem:[%s14 + $0x10] sm:$0xf]
    %v7724 = vld [vmem:[%s14 + $0x14] sm:$0xf]
    %v7725 = vld [vmem:[%s14 + $0x18] sm:$0xf]
    %v7726 = vld [vmem:[%s14 + $0x1c] sm:$0xf]
    %v7727 = vld [vmem:[%s14 + $0x20] sm:$0xf]
    %v7728 = vld [vmem:[%s14 + $0x24] sm:$0xf]
    %v7729 = vld [vmem:[%s14 + $0x28] sm:$0xf]
    %v7730 = vld [vmem:[%s14 + $0x2c] sm:$0xf]
    %v7731 = vld [vmem:[%s14 + $0x30] sm:$0xf]
    %v7732 = vld [vmem:[%s14 + $0x34] sm:$0xf]
    %v7733 = vld [vmem:[%s14 + $0x38] sm:$0xf]
    %v7734 = vld [vmem:[%s14 + $0x3c] sm:$0xf]
    %v7735 = vld [vmem:[%s14 + $0x40] sm:$0xf]
    %v7736 = vld [vmem:[%s14 + $0x44] sm:$0xf]
    %v7737 = vld [vmem:[%s14 + $0x48] sm:$0xf]
    %v7738 = vld [vmem:[%s14 + $0x4c] sm:$0xf]
    %v7739 = vld [vmem:[%s14 + $0x50] sm:$0xf]
    %v7740 = vld [vmem:[%s14 + $0x54] sm:$0xf]
    %v7741 = vld [vmem:[%s14 + $0x58] sm:$0xf]
    %v7742 = vld [vmem:[%s14 + $0x5c] sm:$0xf]
    %v7743 = vld [vmem:[%s14 + $0x60] sm:$0xf]
    %v7744 = vld [vmem:[%s14 + $0x64] sm:$0xf]
    %v7745 = vld [vmem:[%s14 + $0x68] sm:$0xf]
    %v7746 = vld [vmem:[%s14 + $0x6c] sm:$0xf]
    %v7747 = vld [vmem:[%s14 + $0x70] sm:$0xf]
    %v7748 = vld [vmem:[%s14 + $0x74] sm:$0xf]
    %v7749 = vld [vmem:[%s14 + $0x78] sm:$0xf]
    %v7750 = vld [vmem:[%s14 + $0x7c] sm:$0xf]
    %v7751 = vld [vmem:[%s14 + $0x80] sm:$0xf]
    %v7752 = vld [vmem:[%s14 + $0x84] sm:$0xf]
    %v7753 = vld [vmem:[%s14 + $0x88] sm:$0xf]
    %v7754 = vld [vmem:[%s14 + $0x8c] sm:$0xf]
    %v7755 = vld [vmem:[%s14 + $0x90] sm:$0xf]
    %v7756 = vld [vmem:[%s14 + $0x94] sm:$0xf]
    %v7757 = vld [vmem:[%s14 + $0x98] sm:$0xf]
    %v7758 = vld [vmem:[%s14 + $0x9c] sm:$0xf]
    %v7759 = vld [vmem:[%s14 + $0xa0] sm:$0xf]
    %v7760 = vld [vmem:[%s14 + $0xa4] sm:$0xf]
    %v7761 = vld [vmem:[%s14 + $0xa8] sm:$0xf]
    %v7762 = vld [vmem:[%s14 + $0xac] sm:$0xf]
    %v7763 = vld [vmem:[%s14 + $0xb0] sm:$0xf]
    %v7764 = vld [vmem:[%s14 + $0xb4] sm:$0xf]
    %v7765 = vld [vmem:[%s14 + $0xb8] sm:$0xf]
    %v7766 = vld [vmem:[%s14 + $0xbc] sm:$0xf]
    %v7767 = vld [vmem:[%s14 + $0xc0] sm:$0xf]
    %v7768 = vld [vmem:[%s14 + $0xc4] sm:$0xf]
    %v7769 = vld [vmem:[%s14 + $0xc8] sm:$0xf]
    %v7770 = vld [vmem:[%s14 + $0xcc] sm:$0xf]
    %v7771 = vld [vmem:[%s14 + $0xd0] sm:$0xf]
    %v7772 = vld [vmem:[%s14 + $0xd4] sm:$0xf]
    %v7773 = vld [vmem:[%s14 + $0xd8] sm:$0xf]
    %v7774 = vld [vmem:[%s14 + $0xdc] sm:$0xf]
    %v7775 = vld [vmem:[%s14 + $0xe0] sm:$0xf]
    %v7776 = vld [vmem:[%s14 + $0xe4] sm:$0xf]
    %v7777 = vld [vmem:[%s14 + $0xe8] sm:$0xf]
    %v7778 = vld [vmem:[%s14 + $0xec] sm:$0xf]
    %v7779 = vld [vmem:[%s14 + $0xf0] sm:$0xf]
    %v7780 = vld [vmem:[%s14 + $0xf4] sm:$0xf]
    %v7781 = vld [vmem:[%s14 + $0xf8] sm:$0xf]
    %v7782 = vld [vmem:[%s14 + $0xfc] sm:$0xf]
    %v7783 = vld [vmem:[%s14 + $0x100] sm:$0xf]
    %v7784 = vld [vmem:[%s14 + $0x104] sm:$0xf]
    %v7785 = vld [vmem:[%s14 + $0x108] sm:$0xf]
    %v7786 = vld [vmem:[%s14 + $0x10c] sm:$0xf]
    %v7787 = vld [vmem:[%s14 + $0x110] sm:$0xf]
    %v7788 = vld [vmem:[%s14 + $0x114] sm:$0xf]
    %v7789 = vld [vmem:[%s14 + $0x118] sm:$0xf]
    %v7790 = vld [vmem:[%s14 + $0x11c] sm:$0xf]
    %v7791 = vld [vmem:[%s14 + $0x120] sm:$0xf]
    %v7792 = vld [vmem:[%s14 + $0x124] sm:$0xf]
    %v7793 = vld [vmem:[%s14 + $0x128] sm:$0xf]
    %v7794 = vld [vmem:[%s14 + $0x12c] sm:$0xf]
    %v7795 = vld [vmem:[%s14 + $0x130] sm:$0xf]
    %v7796 = vld [vmem:[%s14 + $0x134] sm:$0xf]
    %v7797 = vld [vmem:[%s14 + $0x138] sm:$0xf]
    %v7798 = vld [vmem:[%s14 + $0x13c] sm:$0xf]
    %v7799 = vld [vmem:[%s14 + $0x140] sm:$0xf]
    %v7800 = vld [vmem:[%s14 + $0x144] sm:$0xf]
    %v7801 = vld [vmem:[%s14 + $0x148] sm:$0xf]
    %v7802 = vld [vmem:[%s14 + $0x14c] sm:$0xf]
    %v7803 = vld [vmem:[%s14 + $0x150] sm:$0xf]
    %v7804 = vld [vmem:[%s14 + $0x154] sm:$0xf]
    %v7805 = vld [vmem:[%s14 + $0x158] sm:$0xf]
    %v7806 = vld [vmem:[%s14 + $0x15c] sm:$0xf]
    %v7807 = vld [vmem:[%s14 + $0x160] sm:$0xf]
    %v7808 = vld [vmem:[%s14 + $0x164] sm:$0xf]
    %v7809 = vld [vmem:[%s14 + $0x168] sm:$0xf]
    %v7810 = vld [vmem:[%s14 + $0x16c] sm:$0xf]
    %v7811 = vld [vmem:[%s14 + $0x170] sm:$0xf]
    %v7812 = vld [vmem:[%s14 + $0x174] sm:$0xf]
    %v7813 = vld [vmem:[%s14 + $0x178] sm:$0xf]
    %v7814 = vld [vmem:[%s14 + $0x17c] sm:$0xf]
    %v7815 = vld [vmem:[%s14 + $0x180] sm:$0xf]
    %v7816 = vld [vmem:[%s14 + $0x184] sm:$0xf]
    %v7817 = vld [vmem:[%s14 + $0x188] sm:$0xf]
    %v7818 = vld [vmem:[%s14 + $0x18c] sm:$0xf]
    %v7819 = vld [vmem:[%s14 + $0x190] sm:$0xf]
    %v7820 = vld [vmem:[%s14 + $0x194] sm:$0xf]
    %v7821 = vld [vmem:[%s14 + $0x198] sm:$0xf]
    %v7822 = vld [vmem:[%s14 + $0x19c] sm:$0xf]
    %v7823 = vld [vmem:[%s14 + $0x1a0] sm:$0xf]
    %v7824 = vld [vmem:[%s14 + $0x1a4] sm:$0xf]
    %v7825 = vld [vmem:[%s14 + $0x1a8] sm:$0xf]
    %v7826 = vld [vmem:[%s14 + $0x1ac] sm:$0xf]
    %v7827 = vld [vmem:[%s14 + $0x1b0] sm:$0xf]
    %v7828 = vld [vmem:[%s14 + $0x1b4] sm:$0xf]
    %v7829 = vld [vmem:[%s14 + $0x1b8] sm:$0xf]
    %v7830 = vld [vmem:[%s14 + $0x1bc] sm:$0xf]
    %v7831 = vld [vmem:[%s14 + $0x1c0] sm:$0xf]
    %v7832 = vld [vmem:[%s14 + $0x1c4] sm:$0xf]
    %v7833 = vld [vmem:[%s14 + $0x1c8] sm:$0xf]
    %v7834 = vld [vmem:[%s14 + $0x1cc] sm:$0xf]
    %v7835 = vld [vmem:[%s14 + $0x1d0] sm:$0xf]
    %v7836 = vld [vmem:[%s14 + $0x1d4] sm:$0xf]
    %v7837 = vld [vmem:[%s14 + $0x1d8] sm:$0xf]
    %v7838 = vld [vmem:[%s14 + $0x1dc] sm:$0xf]
    %v7839 = vld [vmem:[%s14 + $0x1e0] sm:$0xf]
    %v7840 = vld [vmem:[%s14 + $0x1e4] sm:$0xf]
    %v7841 = vld [vmem:[%s14 + $0x1e8] sm:$0xf]
    %v7842 = vld [vmem:[%s14 + $0x1ec] sm:$0xf]
    %v7843 = vld [vmem:[%s14 + $0x1f0] sm:$0xf]
    %v7844 = vld [vmem:[%s14 + $0x1f4] sm:$0xf]
    %v7845 = vld [vmem:[%s14 + $0x1f8] sm:$0xf]
    %v7846 = vld [vmem:[%s14 + $0x1fc] sm:$0xf]
    %v7847 = vld [vmem:[%s14 + $0x200] sm:$0xf]
    %v7848 = vld [vmem:[%s14 + $0x204] sm:$0xf]
    %v7849 = vld [vmem:[%s14 + $0x208] sm:$0xf]
    %v7850 = vld [vmem:[%s14 + $0x20c] sm:$0xf]
    %v7851 = vld [vmem:[%s14 + $0x210] sm:$0xf]
    %v7852 = vld [vmem:[%s14 + $0x214] sm:$0xf]
    %v7853 = vld [vmem:[%s14 + $0x218] sm:$0xf]
    %v7854 = vld [vmem:[%s14 + $0x21c] sm:$0xf]
    %v7855 = vld [vmem:[%s14 + $0x220] sm:$0xf]
    %v7856 = vld [vmem:[%s14 + $0x224] sm:$0xf]
    %v7857 = vld [vmem:[%s14 + $0x228] sm:$0xf]
    %v7858 = vld [vmem:[%s14 + $0x22c] sm:$0xf]
    %v7859 = vld [vmem:[%s14 + $0x230] sm:$0xf]
    %v7860 = vld [vmem:[%s14 + $0x234] sm:$0xf]
    %v7861 = vld [vmem:[%s14 + $0x238] sm:$0xf]
    %v7862 = vld [vmem:[%s14 + $0x23c] sm:$0xf]
    %v7863 = vld [vmem:[%s14 + $0x240] sm:$0xf]
    %v7864 = vld [vmem:[%s14 + $0x244] sm:$0xf]
    %v7865 = vld [vmem:[%s14 + $0x248] sm:$0xf]
    %v7866 = vld [vmem:[%s14 + $0x24c] sm:$0xf]
    %v7867 = vld [vmem:[%s14 + $0x250] sm:$0xf]
    %v7868 = vld [vmem:[%s14 + $0x254] sm:$0xf]
    %v7869 = vld [vmem:[%s14 + $0x258] sm:$0xf]
    %v7870 = vld [vmem:[%s14 + $0x25c] sm:$0xf]
    %v7871 = vld [vmem:[%s14 + $0x260] sm:$0xf]
    %v7872 = vld [vmem:[%s14 + $0x264] sm:$0xf]
    %v7873 = vld [vmem:[%s14 + $0x268] sm:$0xf]
    %v7874 = vld [vmem:[%s14 + $0x26c] sm:$0xf]
    %v7875 = vld [vmem:[%s14 + $0x270] sm:$0xf]
    %v7876 = vld [vmem:[%s14 + $0x274] sm:$0xf]
    %v7877 = vld [vmem:[%s14 + $0x278] sm:$0xf]
    %v7878 = vld [vmem:[%s14 + $0x27c] sm:$0xf]
    %v7879 = vld [vmem:[%s14 + $0x280] sm:$0xf]
    %v7880 = vld [vmem:[%s14 + $0x284] sm:$0xf]
    %v7881 = vld [vmem:[%s14 + $0x288] sm:$0xf]
    %v7882 = vld [vmem:[%s14 + $0x28c] sm:$0xf]
    %v7883 = vld [vmem:[%s14 + $0x290] sm:$0xf]
    %v7884 = vld [vmem:[%s14 + $0x294] sm:$0xf]
    %v7885 = vld [vmem:[%s14 + $0x298] sm:$0xf]
    %v7886 = vld [vmem:[%s14 + $0x29c] sm:$0xf]
    %v7887 = vld [vmem:[%s14 + $0x2a0] sm:$0xf]
    %v7888 = vld [vmem:[%s14 + $0x2a4] sm:$0xf]
    %v7889 = vld [vmem:[%s14 + $0x2a8] sm:$0xf]
    %v7890 = vld [vmem:[%s14 + $0x2ac] sm:$0xf]
    %v7891 = vld [vmem:[%s14 + $0x2b0] sm:$0xf]
    %v7892 = vld [vmem:[%s14 + $0x2b4] sm:$0xf]
    %v7893 = vld [vmem:[%s14 + $0x2b8] sm:$0xf]
    %v7894 = vld [vmem:[%s14 + $0x2bc] sm:$0xf]
    %v7895 = vld [vmem:[%s14 + $0x2c0] sm:$0xf]
    %v7896 = vld [vmem:[%s14 + $0x2c4] sm:$0xf]
    %v7897 = vld [vmem:[%s14 + $0x2c8] sm:$0xf]
    %v7898 = vld [vmem:[%s14 + $0x2cc] sm:$0xf]
    %v7899 = vld [vmem:[%s14 + $0x2d0] sm:$0xf]
    %v7900 = vld [vmem:[%s14 + $0x2d4] sm:$0xf]
    %v7901 = vld [vmem:[%s14 + $0x2d8] sm:$0xf]
    %v7902 = vld [vmem:[%s14 + $0x2dc] sm:$0xf]
    %v7903 = vld [vmem:[%s14 + $0x2e0] sm:$0xf]
    %v7904 = vld [vmem:[%s14 + $0x2e4] sm:$0xf]
    %v7905 = vld [vmem:[%s14 + $0x2e8] sm:$0xf]
    %v7906 = vld [vmem:[%s14 + $0x2ec] sm:$0xf]
    %v7907 = vld [vmem:[%s14 + $0x2f0] sm:$0xf]
    %v7908 = vld [vmem:[%s14 + $0x2f4] sm:$0xf]
    %v7909 = vld [vmem:[%s14 + $0x2f8] sm:$0xf]
    %v7910 = vld [vmem:[%s14 + $0x2fc] sm:$0xf]
    %v7911 = vld [vmem:[%s14 + $0x300] sm:$0xf]
    %v7912 = vld [vmem:[%s14 + $0x304] sm:$0xf]
    %v7913 = vld [vmem:[%s14 + $0x308] sm:$0xf]
    %v7914 = vld [vmem:[%s14 + $0x30c] sm:$0xf]
    %v7915 = vld [vmem:[%s14 + $0x310] sm:$0xf]
    %v7916 = vld [vmem:[%s14 + $0x314] sm:$0xf]
    %v7917 = vld [vmem:[%s14 + $0x318] sm:$0xf]
    %v7918 = vld [vmem:[%s14 + $0x31c] sm:$0xf]
    %v7919 = vld [vmem:[%s14 + $0x320] sm:$0xf]
    %v7920 = vld [vmem:[%s14 + $0x324] sm:$0xf]
    %v7921 = vld [vmem:[%s14 + $0x328] sm:$0xf]
    %v7922 = vld [vmem:[%s14 + $0x32c] sm:$0xf]
    %v7923 = vld [vmem:[%s14 + $0x330] sm:$0xf]
    %v7924 = vld [vmem:[%s14 + $0x334] sm:$0xf]
    %v7925 = vld [vmem:[%s14 + $0x338] sm:$0xf]
    %v7926 = vld [vmem:[%s14 + $0x33c] sm:$0xf]
    %v7927 = vld [vmem:[%s14 + $0x340] sm:$0xf]
    %v7928 = vld [vmem:[%s14 + $0x344] sm:$0xf]
    %v7929 = vld [vmem:[%s14 + $0x348] sm:$0xf]
    %v7930 = vld [vmem:[%s14 + $0x34c] sm:$0xf]
    %v7931 = vld [vmem:[%s14 + $0x350] sm:$0xf]
    %v7932 = vld [vmem:[%s14 + $0x354] sm:$0xf]
    %v7933 = vld [vmem:[%s14 + $0x358] sm:$0xf]
    %v7934 = vld [vmem:[%s14 + $0x35c] sm:$0xf]
    %v7935 = vld [vmem:[%s14 + $0x360] sm:$0xf]
    %v7936 = vld [vmem:[%s14 + $0x364] sm:$0xf]
    %v7937 = vld [vmem:[%s14 + $0x368] sm:$0xf]
    %v7938 = vld [vmem:[%s14 + $0x36c] sm:$0xf]
    %v7939 = vld [vmem:[%s14 + $0x370] sm:$0xf]
    %v7940 = vld [vmem:[%s14 + $0x374] sm:$0xf]
    %v7941 = vld [vmem:[%s14 + $0x378] sm:$0xf]
    %v7942 = vld [vmem:[%s14 + $0x37c] sm:$0xf]
    %v7943 = vld [vmem:[%s14 + $0x380] sm:$0xf]
    %v7944 = vld [vmem:[%s14 + $0x384] sm:$0xf]
    %v7945 = vld [vmem:[%s14 + $0x388] sm:$0xf]
    %v7946 = vld [vmem:[%s14 + $0x38c] sm:$0xf]
    %v7947 = vld [vmem:[%s14 + $0x390] sm:$0xf]
    %v7948 = vld [vmem:[%s14 + $0x394] sm:$0xf]
    %v7949 = vld [vmem:[%s14 + $0x398] sm:$0xf]
    %v7950 = vld [vmem:[%s14 + $0x39c] sm:$0xf]
    %v7951 = vld [vmem:[%s14 + $0x3a0] sm:$0xf]
    %v7952 = vld [vmem:[%s14 + $0x3a4] sm:$0xf]
    %v7953 = vld [vmem:[%s14 + $0x3a8] sm:$0xf]
    %v7954 = vld [vmem:[%s14 + $0x3ac] sm:$0xf]
    %v7955 = vld [vmem:[%s14 + $0x3b0] sm:$0xf]
    %v7956 = vld [vmem:[%s14 + $0x3b4] sm:$0xf]
    %v7957 = vld [vmem:[%s14 + $0x3b8] sm:$0xf]
    %v7958 = vld [vmem:[%s14 + $0x3bc] sm:$0xf]
    %v7959 = vld [vmem:[%s14 + $0x3c0] sm:$0xf]
    %v7960 = vld [vmem:[%s14 + $0x3c4] sm:$0xf]
    %v7961 = vld [vmem:[%s14 + $0x3c8] sm:$0xf]
    %v7962 = vld [vmem:[%s14 + $0x3cc] sm:$0xf]
    %v7963 = vld [vmem:[%s14 + $0x3d0] sm:$0xf]
    %v7964 = vld [vmem:[%s14 + $0x3d4] sm:$0xf]
    %v7965 = vld [vmem:[%s14 + $0x3d8] sm:$0xf]
    %v7966 = vld [vmem:[%s14 + $0x3dc] sm:$0xf]
    %v7967 = vld [vmem:[%s14 + $0x3e0] sm:$0xf]
    %v7968 = vld [vmem:[%s14 + $0x3e4] sm:$0xf]
    %v7969 = vld [vmem:[%s14 + $0x3e8] sm:$0xf]
    %v7970 = vld [vmem:[%s14 + $0x3ec] sm:$0xf]
    %v7971 = vld [vmem:[%s14 + $0x3f0] sm:$0xf]
    %v7972 = vld [vmem:[%s14 + $0x3f4] sm:$0xf]
    %v7973 = vld [vmem:[%s14 + $0x3f8] sm:$0xf]
    %v7974 = vld [vmem:[%s14 + $0x3fc] sm:$0xf]
    %v7975 = vld [vmem:[%s15] sm:$0x1]
    %v7977 = vlaneseq
    %v7978 = vshrl.u32 %v7977, 7
    %v7979 = vsub.s32 0, %v7978
    %v7980 = vrot.slane %v7975, %v7979
    %v8238 = vunpack.c.l.b16 %v7719
    %v8239 = vunpack.c.l.b16 %v7720
    %v8240 = vunpack.c.l.b16 %v7721
    %v8241 = vunpack.c.l.b16 %v7722
    %v8242 = vunpack.c.l.b16 %v7723
    %v8243 = vunpack.c.l.b16 %v7724
    %v8244 = vunpack.c.l.b16 %v7725
    %v8245 = vunpack.c.l.b16 %v7726
    %v8246 = vunpack.c.l.b16 %v7727
    %v8247 = vunpack.c.l.b16 %v7728
    %v8248 = vunpack.c.l.b16 %v7729
    %v8249 = vunpack.c.l.b16 %v7730
    %v8250 = vunpack.c.l.b16 %v7731
    %v8251 = vunpack.c.l.b16 %v7732
    %v8252 = vunpack.c.l.b16 %v7733
    %v8253 = vunpack.c.l.b16 %v7734
    %v8254 = vunpack.c.l.b16 %v7735
    %v8255 = vunpack.c.l.b16 %v7736
    %v8256 = vunpack.c.l.b16 %v7737
    %v8257 = vunpack.c.l.b16 %v7738
    %v8258 = vunpack.c.l.b16 %v7739
    %v8259 = vunpack.c.l.b16 %v7740
    %v8260 = vunpack.c.l.b16 %v7741
    %v8261 = vunpack.c.l.b16 %v7742
    %v8262 = vunpack.c.l.b16 %v7743
    %v8263 = vunpack.c.l.b16 %v7744
    %v8264 = vunpack.c.l.b16 %v7745
    %v8265 = vunpack.c.l.b16 %v7746
    %v8266 = vunpack.c.l.b16 %v7747
    %v8267 = vunpack.c.l.b16 %v7748
    %v8268 = vunpack.c.l.b16 %v7749
    %v8269 = vunpack.c.l.b16 %v7750
    %v8270 = vunpack.c.l.b16 %v7751
    %v8271 = vunpack.c.l.b16 %v7752
    %v8272 = vunpack.c.l.b16 %v7753
    %v8273 = vunpack.c.l.b16 %v7754
    %v8274 = vunpack.c.l.b16 %v7755
    %v8275 = vunpack.c.l.b16 %v7756
    %v8276 = vunpack.c.l.b16 %v7757
    %v8277 = vunpack.c.l.b16 %v7758
    %v8278 = vunpack.c.l.b16 %v7759
    %v8279 = vunpack.c.l.b16 %v7760
    %v8280 = vunpack.c.l.b16 %v7761
    %v8281 = vunpack.c.l.b16 %v7762
    %v8282 = vunpack.c.l.b16 %v7763
    %v8283 = vunpack.c.l.b16 %v7764
    %v8284 = vunpack.c.l.b16 %v7765
    %v8285 = vunpack.c.l.b16 %v7766
    %v8286 = vunpack.c.l.b16 %v7767
    %v8287 = vunpack.c.l.b16 %v7768
    %v8288 = vunpack.c.l.b16 %v7769
    %v8289 = vunpack.c.l.b16 %v7770
    %v8290 = vunpack.c.l.b16 %v7771
    %v8291 = vunpack.c.l.b16 %v7772
    %v8292 = vunpack.c.l.b16 %v7773
    %v8293 = vunpack.c.l.b16 %v7774
    %v8294 = vunpack.c.l.b16 %v7775
    %v8295 = vunpack.c.l.b16 %v7776
    %v8296 = vunpack.c.l.b16 %v7777
    %v8297 = vunpack.c.l.b16 %v7778
    %v8298 = vunpack.c.l.b16 %v7779
    %v8299 = vunpack.c.l.b16 %v7780
    %v8300 = vunpack.c.l.b16 %v7781
    %v8301 = vunpack.c.l.b16 %v7782
    %v8302 = vunpack.c.l.b16 %v7783
    %v8303 = vunpack.c.l.b16 %v7784
    %v8304 = vunpack.c.l.b16 %v7785
    %v8305 = vunpack.c.l.b16 %v7786
    %v8306 = vunpack.c.l.b16 %v7787
    %v8307 = vunpack.c.l.b16 %v7788
    %v8308 = vunpack.c.l.b16 %v7789
    %v8309 = vunpack.c.l.b16 %v7790
    %v8310 = vunpack.c.l.b16 %v7791
    %v8311 = vunpack.c.l.b16 %v7792
    %v8312 = vunpack.c.l.b16 %v7793
    %v8313 = vunpack.c.l.b16 %v7794
    %v8314 = vunpack.c.l.b16 %v7795
    %v8315 = vunpack.c.l.b16 %v7796
    %v8316 = vunpack.c.l.b16 %v7797
    %v8317 = vunpack.c.l.b16 %v7798
    %v8318 = vunpack.c.l.b16 %v7799
    %v8319 = vunpack.c.l.b16 %v7800
    %v8320 = vunpack.c.l.b16 %v7801
    %v8321 = vunpack.c.l.b16 %v7802
    %v8322 = vunpack.c.l.b16 %v7803
    %v8323 = vunpack.c.l.b16 %v7804
    %v8324 = vunpack.c.l.b16 %v7805
    %v8325 = vunpack.c.l.b16 %v7806
    %v8326 = vunpack.c.l.b16 %v7807
    %v8327 = vunpack.c.l.b16 %v7808
    %v8328 = vunpack.c.l.b16 %v7809
    %v8329 = vunpack.c.l.b16 %v7810
    %v8330 = vunpack.c.l.b16 %v7811
    %v8331 = vunpack.c.l.b16 %v7812
    %v8332 = vunpack.c.l.b16 %v7813
    %v8333 = vunpack.c.l.b16 %v7814
    %v8334 = vunpack.c.l.b16 %v7815
    %v8335 = vunpack.c.l.b16 %v7816
    %v8336 = vunpack.c.l.b16 %v7817
    %v8337 = vunpack.c.l.b16 %v7818
    %v8338 = vunpack.c.l.b16 %v7819
    %v8339 = vunpack.c.l.b16 %v7820
    %v8340 = vunpack.c.l.b16 %v7821
    %v8341 = vunpack.c.l.b16 %v7822
    %v8342 = vunpack.c.l.b16 %v7823
    %v8343 = vunpack.c.l.b16 %v7824
    %v8344 = vunpack.c.l.b16 %v7825
    %v8345 = vunpack.c.l.b16 %v7826
    %v8346 = vunpack.c.l.b16 %v7827
    %v8347 = vunpack.c.l.b16 %v7828
    %v8348 = vunpack.c.l.b16 %v7829
    %v8349 = vunpack.c.l.b16 %v7830
    %v8350 = vunpack.c.l.b16 %v7831
    %v8351 = vunpack.c.l.b16 %v7832
    %v8352 = vunpack.c.l.b16 %v7833
    %v8353 = vunpack.c.l.b16 %v7834
    %v8354 = vunpack.c.l.b16 %v7835
    %v8355 = vunpack.c.l.b16 %v7836
    %v8356 = vunpack.c.l.b16 %v7837
    %v8357 = vunpack.c.l.b16 %v7838
    %v8358 = vunpack.c.l.b16 %v7839
    %v8359 = vunpack.c.l.b16 %v7840
    %v8360 = vunpack.c.l.b16 %v7841
    %v8361 = vunpack.c.l.b16 %v7842
    %v8362 = vunpack.c.l.b16 %v7843
    %v8363 = vunpack.c.l.b16 %v7844
    %v8364 = vunpack.c.l.b16 %v7845
    %v8365 = vunpack.c.l.b16 %v7846
    %v8366 = vunpack.c.l.b16 %v7847
    %v8367 = vunpack.c.l.b16 %v7848
    %v8368 = vunpack.c.l.b16 %v7849
    %v8369 = vunpack.c.l.b16 %v7850
    %v8370 = vunpack.c.l.b16 %v7851
    %v8371 = vunpack.c.l.b16 %v7852
    %v8372 = vunpack.c.l.b16 %v7853
    %v8373 = vunpack.c.l.b16 %v7854
    %v8374 = vunpack.c.l.b16 %v7855
    %v8375 = vunpack.c.l.b16 %v7856
    %v8376 = vunpack.c.l.b16 %v7857
    %v8377 = vunpack.c.l.b16 %v7858
    %v8378 = vunpack.c.l.b16 %v7859
    %v8379 = vunpack.c.l.b16 %v7860
    %v8380 = vunpack.c.l.b16 %v7861
    %v8381 = vunpack.c.l.b16 %v7862
    %v8382 = vunpack.c.l.b16 %v7863
    %v8383 = vunpack.c.l.b16 %v7864
    %v8384 = vunpack.c.l.b16 %v7865
    %v8385 = vunpack.c.l.b16 %v7866
    %v8386 = vunpack.c.l.b16 %v7867
    %v8387 = vunpack.c.l.b16 %v7868
    %v8388 = vunpack.c.l.b16 %v7869
    %v8389 = vunpack.c.l.b16 %v7870
    %v8390 = vunpack.c.l.b16 %v7871
    %v8391 = vunpack.c.l.b16 %v7872
    %v8392 = vunpack.c.l.b16 %v7873
    %v8393 = vunpack.c.l.b16 %v7874
    %v8394 = vunpack.c.l.b16 %v7875
    %v8395 = vunpack.c.l.b16 %v7876
    %v8396 = vunpack.c.l.b16 %v7877
    %v8397 = vunpack.c.l.b16 %v7878
    %v8398 = vunpack.c.l.b16 %v7879
    %v8399 = vunpack.c.l.b16 %v7880
    %v8400 = vunpack.c.l.b16 %v7881
    %v8401 = vunpack.c.l.b16 %v7882
    %v8402 = vunpack.c.l.b16 %v7883
    %v8403 = vunpack.c.l.b16 %v7884
    %v8404 = vunpack.c.l.b16 %v7885
    %v8405 = vunpack.c.l.b16 %v7886
    %v8406 = vunpack.c.l.b16 %v7887
    %v8407 = vunpack.c.l.b16 %v7888
    %v8408 = vunpack.c.l.b16 %v7889
    %v8409 = vunpack.c.l.b16 %v7890
    %v8410 = vunpack.c.l.b16 %v7891
    %v8411 = vunpack.c.l.b16 %v7892
    %v8412 = vunpack.c.l.b16 %v7893
    %v8413 = vunpack.c.l.b16 %v7894
    %v8414 = vunpack.c.l.b16 %v7895
    %v8415 = vunpack.c.l.b16 %v7896
    %v8416 = vunpack.c.l.b16 %v7897
    %v8417 = vunpack.c.l.b16 %v7898
    %v8418 = vunpack.c.l.b16 %v7899
    %v8419 = vunpack.c.l.b16 %v7900
    %v8420 = vunpack.c.l.b16 %v7901
    %v8421 = vunpack.c.l.b16 %v7902
    %v8422 = vunpack.c.l.b16 %v7903
    %v8423 = vunpack.c.l.b16 %v7904
    %v8424 = vunpack.c.l.b16 %v7905
    %v8425 = vunpack.c.l.b16 %v7906
    %v8426 = vunpack.c.l.b16 %v7907
    %v8427 = vunpack.c.l.b16 %v7908
    %v8428 = vunpack.c.l.b16 %v7909
    %v8429 = vunpack.c.l.b16 %v7910
    %v8430 = vunpack.c.l.b16 %v7911
    %v8431 = vunpack.c.l.b16 %v7912
    %v8432 = vunpack.c.l.b16 %v7913
    %v8433 = vunpack.c.l.b16 %v7914
    %v8434 = vunpack.c.l.b16 %v7915
    %v8435 = vunpack.c.l.b16 %v7916
    %v8436 = vunpack.c.l.b16 %v7917
    %v8437 = vunpack.c.l.b16 %v7918
    %v8438 = vunpack.c.l.b16 %v7919
    %v8439 = vunpack.c.l.b16 %v7920
    %v8440 = vunpack.c.l.b16 %v7921
    %v8441 = vunpack.c.l.b16 %v7922
    %v8442 = vunpack.c.l.b16 %v7923
    %v8443 = vunpack.c.l.b16 %v7924
    %v8444 = vunpack.c.l.b16 %v7925
    %v8445 = vunpack.c.l.b16 %v7926
    %v8446 = vunpack.c.l.b16 %v7927
    %v8447 = vunpack.c.l.b16 %v7928
    %v8448 = vunpack.c.l.b16 %v7929
    %v8449 = vunpack.c.l.b16 %v7930
    %v8450 = vunpack.c.l.b16 %v7931
    %v8451 = vunpack.c.l.b16 %v7932
    %v8452 = vunpack.c.l.b16 %v7933
    %v8453 = vunpack.c.l.b16 %v7934
    %v8454 = vunpack.c.l.b16 %v7935
    %v8455 = vunpack.c.l.b16 %v7936
    %v8456 = vunpack.c.l.b16 %v7937
    %v8457 = vunpack.c.l.b16 %v7938
    %v8458 = vunpack.c.l.b16 %v7939
    %v8459 = vunpack.c.l.b16 %v7940
    %v8460 = vunpack.c.l.b16 %v7941
    %v8461 = vunpack.c.l.b16 %v7942
    %v8462 = vunpack.c.l.b16 %v7943
    %v8463 = vunpack.c.l.b16 %v7944
    %v8464 = vunpack.c.l.b16 %v7945
    %v8465 = vunpack.c.l.b16 %v7946
    %v8466 = vunpack.c.l.b16 %v7947
    %v8467 = vunpack.c.l.b16 %v7948
    %v8468 = vunpack.c.l.b16 %v7949
    %v8469 = vunpack.c.l.b16 %v7950
    %v8470 = vunpack.c.l.b16 %v7951
    %v8471 = vunpack.c.l.b16 %v7952
    %v8472 = vunpack.c.l.b16 %v7953
    %v8473 = vunpack.c.l.b16 %v7954
    %v8474 = vunpack.c.l.b16 %v7955
    %v8475 = vunpack.c.l.b16 %v7956
    %v8476 = vunpack.c.l.b16 %v7957
    %v8477 = vunpack.c.l.b16 %v7958
    %v8478 = vunpack.c.l.b16 %v7959
    %v8479 = vunpack.c.l.b16 %v7960
    %v8480 = vunpack.c.l.b16 %v7961
    %v8481 = vunpack.c.l.b16 %v7962
    %v8482 = vunpack.c.l.b16 %v7963
    %v8483 = vunpack.c.l.b16 %v7964
    %v8484 = vunpack.c.l.b16 %v7965
    %v8485 = vunpack.c.l.b16 %v7966
    %v8486 = vunpack.c.l.b16 %v7967
    %v8487 = vunpack.c.l.b16 %v7968
    %v8488 = vunpack.c.l.b16 %v7969
    %v8489 = vunpack.c.l.b16 %v7970
    %v8490 = vunpack.c.l.b16 %v7971
    %v8491 = vunpack.c.l.b16 %v7972
    %v8492 = vunpack.c.l.b16 %v7973
    %v8493 = vunpack.c.l.b16 %v7974
    %v8494 = vpack.c.b16 %v8239, %v8238
    %v8495 = vpack.c.b16 %v8241, %v8240
    %v8496 = vpack.c.b16 %v8243, %v8242
    %v8497 = vpack.c.b16 %v8245, %v8244
    %v8498 = vpack.c.b16 %v8247, %v8246
    %v8499 = vpack.c.b16 %v8249, %v8248
    %v8500 = vpack.c.b16 %v8251, %v8250
    %v8501 = vpack.c.b16 %v8253, %v8252
    %v8502 = vpack.c.b16 %v8255, %v8254
    %v8503 = vpack.c.b16 %v8257, %v8256
    %v8504 = vpack.c.b16 %v8259, %v8258
    %v8505 = vpack.c.b16 %v8261, %v8260
    %v8506 = vpack.c.b16 %v8263, %v8262
    %v8507 = vpack.c.b16 %v8265, %v8264
    %v8508 = vpack.c.b16 %v8267, %v8266
    %v8509 = vpack.c.b16 %v8269, %v8268
    %v8510 = vpack.c.b16 %v8271, %v8270
    %v8511 = vpack.c.b16 %v8273, %v8272
    %v8512 = vpack.c.b16 %v8275, %v8274
    %v8513 = vpack.c.b16 %v8277, %v8276
    %v8514 = vpack.c.b16 %v8279, %v8278
    %v8515 = vpack.c.b16 %v8281, %v8280
    %v8516 = vpack.c.b16 %v8283, %v8282
    %v8517 = vpack.c.b16 %v8285, %v8284
    %v8518 = vpack.c.b16 %v8287, %v8286
    %v8519 = vpack.c.b16 %v8289, %v8288
    %v8520 = vpack.c.b16 %v8291, %v8290
    %v8521 = vpack.c.b16 %v8293, %v8292
    %v8522 = vpack.c.b16 %v8295, %v8294
    %v8523 = vpack.c.b16 %v8297, %v8296
    %v8524 = vpack.c.b16 %v8299, %v8298
    %v8525 = vpack.c.b16 %v8301, %v8300
    %v8526 = vpack.c.b16 %v8303, %v8302
    %v8527 = vpack.c.b16 %v8305, %v8304
    %v8528 = vpack.c.b16 %v8307, %v8306
    %v8529 = vpack.c.b16 %v8309, %v8308
    %v8530 = vpack.c.b16 %v8311, %v8310
    %v8531 = vpack.c.b16 %v8313, %v8312
    %v8532 = vpack.c.b16 %v8315, %v8314
    %v8533 = vpack.c.b16 %v8317, %v8316
    %v8534 = vpack.c.b16 %v8319, %v8318
    %v8535 = vpack.c.b16 %v8321, %v8320
    %v8536 = vpack.c.b16 %v8323, %v8322
    %v8537 = vpack.c.b16 %v8325, %v8324
    %v8538 = vpack.c.b16 %v8327, %v8326
    %v8539 = vpack.c.b16 %v8329, %v8328
    %v8540 = vpack.c.b16 %v8331, %v8330
    %v8541 = vpack.c.b16 %v8333, %v8332
    %v8542 = vpack.c.b16 %v8335, %v8334
    %v8543 = vpack.c.b16 %v8337, %v8336
    %v8544 = vpack.c.b16 %v8339, %v8338
    %v8545 = vpack.c.b16 %v8341, %v8340
    %v8546 = vpack.c.b16 %v8343, %v8342
    %v8547 = vpack.c.b16 %v8345, %v8344
    %v8548 = vpack.c.b16 %v8347, %v8346
    %v8549 = vpack.c.b16 %v8349, %v8348
    %v8550 = vpack.c.b16 %v8351, %v8350
    %v8551 = vpack.c.b16 %v8353, %v8352
    %v8552 = vpack.c.b16 %v8355, %v8354
    %v8553 = vpack.c.b16 %v8357, %v8356
    %v8554 = vpack.c.b16 %v8359, %v8358
    %v8555 = vpack.c.b16 %v8361, %v8360
    %v8556 = vpack.c.b16 %v8363, %v8362
    %v8557 = vpack.c.b16 %v8365, %v8364
    %v8558 = vpack.c.b16 %v8367, %v8366
    %v8559 = vpack.c.b16 %v8369, %v8368
    %v8560 = vpack.c.b16 %v8371, %v8370
    %v8561 = vpack.c.b16 %v8373, %v8372
    %v8562 = vpack.c.b16 %v8375, %v8374
    %v8563 = vpack.c.b16 %v8377, %v8376
    %v8564 = vpack.c.b16 %v8379, %v8378
    %v8565 = vpack.c.b16 %v8381, %v8380
    %v8566 = vpack.c.b16 %v8383, %v8382
    %v8567 = vpack.c.b16 %v8385, %v8384
    %v8568 = vpack.c.b16 %v8387, %v8386
    %v8569 = vpack.c.b16 %v8389, %v8388
    %v8570 = vpack.c.b16 %v8391, %v8390
    %v8571 = vpack.c.b16 %v8393, %v8392
    %v8572 = vpack.c.b16 %v8395, %v8394
    %v8573 = vpack.c.b16 %v8397, %v8396
    %v8574 = vpack.c.b16 %v8399, %v8398
    %v8575 = vpack.c.b16 %v8401, %v8400
    %v8576 = vpack.c.b16 %v8403, %v8402
    %v8577 = vpack.c.b16 %v8405, %v8404
    %v8578 = vpack.c.b16 %v8407, %v8406
    %v8579 = vpack.c.b16 %v8409, %v8408
    %v8580 = vpack.c.b16 %v8411, %v8410
    %v8581 = vpack.c.b16 %v8413, %v8412
    %v8582 = vpack.c.b16 %v8415, %v8414
    %v8583 = vpack.c.b16 %v8417, %v8416
    %v8584 = vpack.c.b16 %v8419, %v8418
    %v8585 = vpack.c.b16 %v8421, %v8420
    %v8586 = vpack.c.b16 %v8423, %v8422
    %v8587 = vpack.c.b16 %v8425, %v8424
    %v8588 = vpack.c.b16 %v8427, %v8426
    %v8589 = vpack.c.b16 %v8429, %v8428
    %v8590 = vpack.c.b16 %v8431, %v8430
    %v8591 = vpack.c.b16 %v8433, %v8432
    %v8592 = vpack.c.b16 %v8435, %v8434
    %v8593 = vpack.c.b16 %v8437, %v8436
    %v8594 = vpack.c.b16 %v8439, %v8438
    %v8595 = vpack.c.b16 %v8441, %v8440
    %v8596 = vpack.c.b16 %v8443, %v8442
    %v8597 = vpack.c.b16 %v8445, %v8444
    %v8598 = vpack.c.b16 %v8447, %v8446
    %v8599 = vpack.c.b16 %v8449, %v8448
    %v8600 = vpack.c.b16 %v8451, %v8450
    %v8601 = vpack.c.b16 %v8453, %v8452
    %v8602 = vpack.c.b16 %v8455, %v8454
    %v8603 = vpack.c.b16 %v8457, %v8456
    %v8604 = vpack.c.b16 %v8459, %v8458
    %v8605 = vpack.c.b16 %v8461, %v8460
    %v8606 = vpack.c.b16 %v8463, %v8462
    %v8607 = vpack.c.b16 %v8465, %v8464
    %v8608 = vpack.c.b16 %v8467, %v8466
    %v8609 = vpack.c.b16 %v8469, %v8468
    %v8610 = vpack.c.b16 %v8471, %v8470
    %v8611 = vpack.c.b16 %v8473, %v8472
    %v8612 = vpack.c.b16 %v8475, %v8474
    %v8613 = vpack.c.b16 %v8477, %v8476
    %v8614 = vpack.c.b16 %v8479, %v8478
    %v8615 = vpack.c.b16 %v8481, %v8480
    %v8616 = vpack.c.b16 %v8483, %v8482
    %v8617 = vpack.c.b16 %v8485, %v8484
    %v8618 = vpack.c.b16 %v8487, %v8486
    %v8619 = vpack.c.b16 %v8489, %v8488
    %v8620 = vpack.c.b16 %v8491, %v8490
    %v8621 = vpack.c.b16 %v8493, %v8492
    %8750 = vmatprep.subr.bf16.mxu0 0
    %8751 = vmatpush1.bf16.msra.mxu0 %v8501
    %8752 = vmatprep.subr.bf16.mxu0 0
    %8753 = vmatpush1.bf16.msra.mxu0 %v8500
    %8754 = vmatprep.subr.bf16.mxu0 0
    %8755 = vmatpush1.bf16.msra.mxu0 %v8499
    %8756 = vmatprep.subr.bf16.mxu0 0
    %8757 = vmatpush1.bf16.msra.mxu0 %v8498
    %8758 = vmatprep.subr.bf16.mxu0 0
    %8759 = vmatpush1.bf16.msra.mxu0 %v8497
    %8760 = vmatprep.subr.bf16.mxu0 0
    %8761 = vmatpush1.bf16.msra.mxu0 %v8496
    %8762 = vmatprep.subr.bf16.mxu0 0
    %8763 = vmatpush1.bf16.msra.mxu0 %v8495
    %8764 = vmatprep.subr.bf16.mxu0 0
    %8765 = vmatpush1.bf16.msra.mxu0 %v8494
    %8766 = vmatprep.subr.bf16.mxu0 0
    %8767 = vmatpush2.bf16.msra.mxu0 %v8509
    %8768 = vmatprep.subr.bf16.mxu0 0
    %8769 = vmatpush2.bf16.msra.mxu0 %v8508
    %8770 = vmatprep.subr.bf16.mxu0 0
    %8771 = vmatpush2.bf16.msra.mxu0 %v8507
    %8772 = vmatprep.subr.bf16.mxu0 0
    %8773 = vmatpush2.bf16.msra.mxu0 %v8506
    %8774 = vmatprep.subr.bf16.mxu0 0
    %8775 = vmatpush2.bf16.msra.mxu0 %v8505
    %8776 = vmatprep.subr.bf16.mxu0 0
    %8777 = vmatpush2.bf16.msra.mxu0 %v8504
    %8778 = vmatprep.subr.bf16.mxu0 0
    %8779 = vmatpush2.bf16.msra.mxu0 %v8503
    %8780 = vmatprep.subr.bf16.mxu0 0
    %8781 = vmatpush2.bf16.msra.mxu0 %v8502
    %8782 = vmatprep.mubr.bf16.mxu0 %v7704
    %8783 = vmatmul.mubr.bf16.gmra.mxu0 %v7703
    %v8784 = vpop.f32.mrf.mxu0
    %v8785 = vadd.f32 %v7980, %v8784
    %v8786 = vpop.f32.mrf.mxu0
    %v8787 = vpop.f32.mrf.mxu0
    %v8788 = vadd.f32 %v7980, %v8787
    %v8789 = vpop.f32.mrf.mxu0
    %8790 = vdwg.mxu0
    %8791 = vmatprep.subr.bf16.mxu0 0
    %8792 = vmatpush1.bf16.msra.mxu0 %v8517
    %8793 = vmatprep.subr.bf16.mxu0 0
    %8794 = vmatpush1.bf16.msra.mxu0 %v8516
    %8795 = vmatprep.subr.bf16.mxu0 0
    %8796 = vmatpush1.bf16.msra.mxu0 %v8515
    %8797 = vmatprep.subr.bf16.mxu0 0
    %8798 = vmatpush1.bf16.msra.mxu0 %v8514
    %8799 = vmatprep.subr.bf16.mxu0 0
    %8800 = vmatpush1.bf16.msra.mxu0 %v8513
    %8801 = vmatprep.subr.bf16.mxu0 0
    %8802 = vmatpush1.bf16.msra.mxu0 %v8512
    %8803 = vmatprep.subr.bf16.mxu0 0
    %8804 = vmatpush1.bf16.msra.mxu0 %v8511
    %8805 = vmatprep.subr.bf16.mxu0 0
    %8806 = vmatpush1.bf16.msra.mxu0 %v8510
    %8807 = vmatprep.subr.bf16.mxu0 0
    %8808 = vmatpush2.bf16.msra.mxu0 %v8525
    %8809 = vmatprep.subr.bf16.mxu0 0
    %8810 = vmatpush2.bf16.msra.mxu0 %v8524
    %8811 = vmatprep.subr.bf16.mxu0 0
    %8812 = vmatpush2.bf16.msra.mxu0 %v8523
    %8813 = vmatprep.subr.bf16.mxu0 0
    %8814 = vmatpush2.bf16.msra.mxu0 %v8522
    %8815 = vmatprep.subr.bf16.mxu0 0
    %8816 = vmatpush2.bf16.msra.mxu0 %v8521
    %8817 = vmatprep.subr.bf16.mxu0 0
    %8818 = vmatpush2.bf16.msra.mxu0 %v8520
    %8819 = vmatprep.subr.bf16.mxu0 0
    %8820 = vmatpush2.bf16.msra.mxu0 %v8519
    %8821 = vmatprep.subr.bf16.mxu0 0
    %8822 = vmatpush2.bf16.msra.mxu0 %v8518
    %8823 = vmatprep.mubr.bf16.mxu0 %v7706
    %8824 = vmatmul.mubr.bf16.gmra.mxu0 %v7705
    %v8825 = vpop.f32.mrf.mxu0
    %v8826 = vadd.f32 %v8785, %v8825
    %v8827 = vpop.f32.mrf.mxu0
    %v8828 = vpop.f32.mrf.mxu0
    %v8829 = vadd.f32 %v8788, %v8828
    %v8830 = vpop.f32.mrf.mxu0
    %8831 = vdwg.mxu0
    %8832 = vmatprep.subr.bf16.mxu0 0
    %8833 = vmatpush1.bf16.msra.mxu0 %v8533
    %8834 = vmatprep.subr.bf16.mxu0 0
    %8835 = vmatpush1.bf16.msra.mxu0 %v8532
    %8836 = vmatprep.subr.bf16.mxu0 0
    %8837 = vmatpush1.bf16.msra.mxu0 %v8531
    %8838 = vmatprep.subr.bf16.mxu0 0
    %8839 = vmatpush1.bf16.msra.mxu0 %v8530
    %8840 = vmatprep.subr.bf16.mxu0 0
    %8841 = vmatpush1.bf16.msra.mxu0 %v8529
    %8842 = vmatprep.subr.bf16.mxu0 0
    %8843 = vmatpush1.bf16.msra.mxu0 %v8528
    %8844 = vmatprep.subr.bf16.mxu0 0
    %8845 = vmatpush1.bf16.msra.mxu0 %v8527
    %8846 = vmatprep.subr.bf16.mxu0 0
    %8847 = vmatpush1.bf16.msra.mxu0 %v8526
    %8848 = vmatprep.subr.bf16.mxu0 0
    %8849 = vmatpush2.bf16.msra.mxu0 %v8541
    %8850 = vmatprep.subr.bf16.mxu0 0
    %8851 = vmatpush2.bf16.msra.mxu0 %v8540
    %8852 = vmatprep.subr.bf16.mxu0 0
    %8853 = vmatpush2.bf16.msra.mxu0 %v8539
    %8854 = vmatprep.subr.bf16.mxu0 0
    %8855 = vmatpush2.bf16.msra.mxu0 %v8538
    %8856 = vmatprep.subr.bf16.mxu0 0
    %8857 = vmatpush2.bf16.msra.mxu0 %v8537
    %8858 = vmatprep.subr.bf16.mxu0 0
    %8859 = vmatpush2.bf16.msra.mxu0 %v8536
    %8860 = vmatprep.subr.bf16.mxu0 0
    %8861 = vmatpush2.bf16.msra.mxu0 %v8535
    %8862 = vmatprep.subr.bf16.mxu0 0
    %8863 = vmatpush2.bf16.msra.mxu0 %v8534
    %8864 = vmatprep.mubr.bf16.mxu0 %v7708
    %8865 = vmatmul.mubr.bf16.gmra.mxu0 %v7707
    %v8866 = vpop.f32.mrf.mxu0
    %v8867 = vadd.f32 %v8826, %v8866
    %v8868 = vpop.f32.mrf.mxu0
    %v8869 = vpop.f32.mrf.mxu0
    %v8870 = vadd.f32 %v8829, %v8869
    %v8871 = vpop.f32.mrf.mxu0
    %8872 = vdwg.mxu0
    %8873 = vmatprep.subr.bf16.mxu0 0
    %8874 = vmatpush1.bf16.msra.mxu0 %v8549
    %8875 = vmatprep.subr.bf16.mxu0 0
    %8876 = vmatpush1.bf16.msra.mxu0 %v8548
    %8877 = vmatprep.subr.bf16.mxu0 0
    %8878 = vmatpush1.bf16.msra.mxu0 %v8547
    %8879 = vmatprep.subr.bf16.mxu0 0
    %8880 = vmatpush1.bf16.msra.mxu0 %v8546
    %8881 = vmatprep.subr.bf16.mxu0 0
    %8882 = vmatpush1.bf16.msra.mxu0 %v8545
    %8883 = vmatprep.subr.bf16.mxu0 0
    %8884 = vmatpush1.bf16.msra.mxu0 %v8544
    %8885 = vmatprep.subr.bf16.mxu0 0
    %8886 = vmatpush1.bf16.msra.mxu0 %v8543
    %8887 = vmatprep.subr.bf16.mxu0 0
    %8888 = vmatpush1.bf16.msra.mxu0 %v8542
    %8889 = vmatprep.subr.bf16.mxu0 0
    %8890 = vmatpush2.bf16.msra.mxu0 %v8557
    %8891 = vmatprep.subr.bf16.mxu0 0
    %8892 = vmatpush2.bf16.msra.mxu0 %v8556
    %8893 = vmatprep.subr.bf16.mxu0 0
    %8894 = vmatpush2.bf16.msra.mxu0 %v8555
    %8895 = vmatprep.subr.bf16.mxu0 0
    %8896 = vmatpush2.bf16.msra.mxu0 %v8554
    %8897 = vmatprep.subr.bf16.mxu0 0
    %8898 = vmatpush2.bf16.msra.mxu0 %v8553
    %8899 = vmatprep.subr.bf16.mxu0 0
    %8900 = vmatpush2.bf16.msra.mxu0 %v8552
    %8901 = vmatprep.subr.bf16.mxu0 0
    %8902 = vmatpush2.bf16.msra.mxu0 %v8551
    %8903 = vmatprep.subr.bf16.mxu0 0
    %8904 = vmatpush2.bf16.msra.mxu0 %v8550
    %8905 = vmatprep.mubr.bf16.mxu0 %v7710
    %8906 = vmatmul.mubr.bf16.gmra.mxu0 %v7709
    %v8907 = vpop.f32.mrf.mxu0
    %v8908 = vadd.f32 %v8867, %v8907
    %v8909 = vpop.f32.mrf.mxu0
    %v8910 = vpop.f32.mrf.mxu0
    %v8911 = vadd.f32 %v8870, %v8910
    %v8912 = vpop.f32.mrf.mxu0
    %8913 = vdwg.mxu0
    %8914 = vmatprep.subr.bf16.mxu0 0
    %8915 = vmatpush1.bf16.msra.mxu0 %v8565
    %8916 = vmatprep.subr.bf16.mxu0 0
    %8917 = vmatpush1.bf16.msra.mxu0 %v8564
    %8918 = vmatprep.subr.bf16.mxu0 0
    %8919 = vmatpush1.bf16.msra.mxu0 %v8563
    %8920 = vmatprep.subr.bf16.mxu0 0
    %8921 = vmatpush1.bf16.msra.mxu0 %v8562
    %8922 = vmatprep.subr.bf16.mxu0 0
    %8923 = vmatpush1.bf16.msra.mxu0 %v8561
    %8924 = vmatprep.subr.bf16.mxu0 0
    %8925 = vmatpush1.bf16.msra.mxu0 %v8560
    %8926 = vmatprep.subr.bf16.mxu0 0
    %8927 = vmatpush1.bf16.msra.mxu0 %v8559
    %8928 = vmatprep.subr.bf16.mxu0 0
    %8929 = vmatpush1.bf16.msra.mxu0 %v8558
    %8930 = vmatprep.subr.bf16.mxu0 0
    %8931 = vmatpush2.bf16.msra.mxu0 %v8573
    %8932 = vmatprep.subr.bf16.mxu0 0
    %8933 = vmatpush2.bf16.msra.mxu0 %v8572
    %8934 = vmatprep.subr.bf16.mxu0 0
    %8935 = vmatpush2.bf16.msra.mxu0 %v8571
    %8936 = vmatprep.subr.bf16.mxu0 0
    %8937 = vmatpush2.bf16.msra.mxu0 %v8570
    %8938 = vmatprep.subr.bf16.mxu0 0
    %8939 = vmatpush2.bf16.msra.mxu0 %v8569
    %8940 = vmatprep.subr.bf16.mxu0 0
    %8941 = vmatpush2.bf16.msra.mxu0 %v8568
    %8942 = vmatprep.subr.bf16.mxu0 0
    %8943 = vmatpush2.bf16.msra.mxu0 %v8567
    %8944 = vmatprep.subr.bf16.mxu0 0
    %8945 = vmatpush2.bf16.msra.mxu0 %v8566
    %8946 = vmatprep.mubr.bf16.mxu0 %v7712
    %8947 = vmatmul.mubr.bf16.gmra.mxu0 %v7711
    %v8948 = vpop.f32.mrf.mxu0
    %v8949 = vadd.f32 %v8908, %v8948
    %v8950 = vpop.f32.mrf.mxu0
    %v8951 = vpop.f32.mrf.mxu0
    %v8952 = vadd.f32 %v8911, %v8951
    %v8953 = vpop.f32.mrf.mxu0
    %8954 = vdwg.mxu0
    %8955 = vmatprep.subr.bf16.mxu0 0
    %8956 = vmatpush1.bf16.msra.mxu0 %v8581
    %8957 = vmatprep.subr.bf16.mxu0 0
    %8958 = vmatpush1.bf16.msra.mxu0 %v8580
    %8959 = vmatprep.subr.bf16.mxu0 0
    %8960 = vmatpush1.bf16.msra.mxu0 %v8579
    %8961 = vmatprep.subr.bf16.mxu0 0
    %8962 = vmatpush1.bf16.msra.mxu0 %v8578
    %8963 = vmatprep.subr.bf16.mxu0 0
    %8964 = vmatpush1.bf16.msra.mxu0 %v8577
    %8965 = vmatprep.subr.bf16.mxu0 0
    %8966 = vmatpush1.bf16.msra.mxu0 %v8576
    %8967 = vmatprep.subr.bf16.mxu0 0
    %8968 = vmatpush1.bf16.msra.mxu0 %v8575
    %8969 = vmatprep.subr.bf16.mxu0 0
    %8970 = vmatpush1.bf16.msra.mxu0 %v8574
    %8971 = vmatprep.subr.bf16.mxu0 0
    %8972 = vmatpush2.bf16.msra.mxu0 %v8589
    %8973 = vmatprep.subr.bf16.mxu0 0
    %8974 = vmatpush2.bf16.msra.mxu0 %v8588
    %8975 = vmatprep.subr.bf16.mxu0 0
    %8976 = vmatpush2.bf16.msra.mxu0 %v8587
    %8977 = vmatprep.subr.bf16.mxu0 0
    %8978 = vmatpush2.bf16.msra.mxu0 %v8586
    %8979 = vmatprep.subr.bf16.mxu0 0
    %8980 = vmatpush2.bf16.msra.mxu0 %v8585
    %8981 = vmatprep.subr.bf16.mxu0 0
    %8982 = vmatpush2.bf16.msra.mxu0 %v8584
    %8983 = vmatprep.subr.bf16.mxu0 0
    %8984 = vmatpush2.bf16.msra.mxu0 %v8583
    %8985 = vmatprep.subr.bf16.mxu0 0
    %8986 = vmatpush2.bf16.msra.mxu0 %v8582
    %8987 = vmatprep.mubr.bf16.mxu0 %v7714
    %8988 = vmatmul.mubr.bf16.gmra.mxu0 %v7713
    %v8989 = vpop.f32.mrf.mxu0
    %v8990 = vadd.f32 %v8949, %v8989
    %v8991 = vpop.f32.mrf.mxu0
    %v8992 = vpop.f32.mrf.mxu0
    %v8993 = vadd.f32 %v8952, %v8992
    %v8994 = vpop.f32.mrf.mxu0
    %8995 = vdwg.mxu0
    %8996 = vmatprep.subr.bf16.mxu0 0
    %8997 = vmatpush1.bf16.msra.mxu0 %v8597
    %8998 = vmatprep.subr.bf16.mxu0 0
    %8999 = vmatpush1.bf16.msra.mxu0 %v8596
    %9000 = vmatprep.subr.bf16.mxu0 0
    %9001 = vmatpush1.bf16.msra.mxu0 %v8595
    %9002 = vmatprep.subr.bf16.mxu0 0
    %9003 = vmatpush1.bf16.msra.mxu0 %v8594
    %9004 = vmatprep.subr.bf16.mxu0 0
    %9005 = vmatpush1.bf16.msra.mxu0 %v8593
    %9006 = vmatprep.subr.bf16.mxu0 0
    %9007 = vmatpush1.bf16.msra.mxu0 %v8592
    %9008 = vmatprep.subr.bf16.mxu0 0
    %9009 = vmatpush1.bf16.msra.mxu0 %v8591
    %9010 = vmatprep.subr.bf16.mxu0 0
    %9011 = vmatpush1.bf16.msra.mxu0 %v8590
    %9012 = vmatprep.subr.bf16.mxu0 0
    %9013 = vmatpush2.bf16.msra.mxu0 %v8605
    %9014 = vmatprep.subr.bf16.mxu0 0
    %9015 = vmatpush2.bf16.msra.mxu0 %v8604
    %9016 = vmatprep.subr.bf16.mxu0 0
    %9017 = vmatpush2.bf16.msra.mxu0 %v8603
    %9018 = vmatprep.subr.bf16.mxu0 0
    %9019 = vmatpush2.bf16.msra.mxu0 %v8602
    %9020 = vmatprep.subr.bf16.mxu0 0
    %9021 = vmatpush2.bf16.msra.mxu0 %v8601
    %9022 = vmatprep.subr.bf16.mxu0 0
    %9023 = vmatpush2.bf16.msra.mxu0 %v8600
    %9024 = vmatprep.subr.bf16.mxu0 0
    %9025 = vmatpush2.bf16.msra.mxu0 %v8599
    %9026 = vmatprep.subr.bf16.mxu0 0
    %9027 = vmatpush2.bf16.msra.mxu0 %v8598
    %9028 = vmatprep.mubr.bf16.mxu0 %v7716
    %9029 = vmatmul.mubr.bf16.gmra.mxu0 %v7715
    %v9030 = vpop.f32.mrf.mxu0
    %v9031 = vadd.f32 %v8990, %v9030
    %v9032 = vpop.f32.mrf.mxu0
    %v9033 = vpop.f32.mrf.mxu0
    %v9034 = vadd.f32 %v8993, %v9033
    %v9035 = vpop.f32.mrf.mxu0
    %9036 = vdwg.mxu0
    %9037 = vmatprep.subr.bf16.mxu0 0
    %9038 = vmatpush1.bf16.msra.mxu0 %v8613
    %9039 = vmatprep.subr.bf16.mxu0 0
    %9040 = vmatpush1.bf16.msra.mxu0 %v8612
    %9041 = vmatprep.subr.bf16.mxu0 0
    %9042 = vmatpush1.bf16.msra.mxu0 %v8611
    %9043 = vmatprep.subr.bf16.mxu0 0
    %9044 = vmatpush1.bf16.msra.mxu0 %v8610
    %9045 = vmatprep.subr.bf16.mxu0 0
    %9046 = vmatpush1.bf16.msra.mxu0 %v8609
    %9047 = vmatprep.subr.bf16.mxu0 0
    %9048 = vmatpush1.bf16.msra.mxu0 %v8608
    %9049 = vmatprep.subr.bf16.mxu0 0
    %9050 = vmatpush1.bf16.msra.mxu0 %v8607
    %9051 = vmatprep.subr.bf16.mxu0 0
    %9052 = vmatpush1.bf16.msra.mxu0 %v8606
    %9053 = vmatprep.subr.bf16.mxu0 0
    %9054 = vmatpush2.bf16.msra.mxu0 %v8621
    %9055 = vmatprep.subr.bf16.mxu0 0
    %9056 = vmatpush2.bf16.msra.mxu0 %v8620
    %9057 = vmatprep.subr.bf16.mxu0 0
    %9058 = vmatpush2.bf16.msra.mxu0 %v8619
    %9059 = vmatprep.subr.bf16.mxu0 0
    %9060 = vmatpush2.bf16.msra.mxu0 %v8618
    %9061 = vmatprep.subr.bf16.mxu0 0
    %9062 = vmatpush2.bf16.msra.mxu0 %v8617
    %9063 = vmatprep.subr.bf16.mxu0 0
    %9064 = vmatpush2.bf16.msra.mxu0 %v8616
    %9065 = vmatprep.subr.bf16.mxu0 0
    %9066 = vmatpush2.bf16.msra.mxu0 %v8615
    %9067 = vmatprep.subr.bf16.mxu0 0
    %9068 = vmatpush2.bf16.msra.mxu0 %v8614
    %9069 = vmatprep.mubr.bf16.mxu0 %v7718
    %9070 = vmatmul.mubr.bf16.gmra.mxu0 %v7717
    %v9071 = vpop.f32.mrf.mxu0
    %v9072 = vadd.f32 %v9031, %v9071
    %v9073 = vpop.f32.mrf.mxu0
    %v9074 = vpop.f32.mrf.mxu0
    %v9075 = vadd.f32 %v9034, %v9074
    %v9076 = vpop.f32.mrf.mxu0
    %9077 = vdwg.mxu0
    %v9078 = vadd.f32 %v7045, %v9072
    %v9079 = vadd.f32 %v7046, %v9075
    %v9080 = vld [vmem:[%s16] sm:$0x1]
    %v9081 = vld [vmem:[%s17] sm:$0x1]
    %v9082 = vsel %vm5761, %v9078, 0.0
    %9083 = vadd.xlane.f32.xlu0 %v9082
    %v9084 = vpop.xlane.xlu0 %9083
    %v9085 = vsel %vm5761, %v9079, 0.0
    %9086 = vadd.xlane.f32.xlu0 %v9085
    %v9087 = vpop.xlane.xlu0 %9086
    %v9088 = vmul.f32 %v9084, %v7010
    %v9089 = vmul.f32 %v9087, %v7010
    %v9090 = vsub.f32 %v9078, %v9088
    %v9091 = vsub.f32 %v9079, %v9089
    %v9092 = vmul.f32 %v9090, %v9090
    %v9093 = vmul.f32 %v9091, %v9091
    %v9094 = vsel %vm5761, %v9092, 0.0
    %9095 = vadd.xlane.f32.xlu0 %v9094
    %v9096 = vpop.xlane.xlu0 %9095
    %v9097 = vsel %vm5761, %v9093, 0.0
    %9098 = vadd.xlane.f32.xlu0 %v9097
    %v9099 = vpop.xlane.xlu0 %9098
    %v9100 = vmul.f32 %v9096, %v7010
    %v9101 = vmul.f32 %v9099, %v7010
    %v9102 = vadd.f32 %v9100, 1e-05
    %v9103 = vadd.f32 %v9101, 1e-05
    %v9104 = vrsqrt.pop %v9102
    %v9105 = vrsqrt.pop %v9103
    %v9106 = vmul.f32 %v9090, %v9104
    %v9107 = vmul.f32 %v9091, %v9105
    %v9109 = vlaneseq
    %v9110 = vshrl.u32 %v9109, 7
    %v9111 = vsub.s32 0, %v9110
    %v9112 = vrot.slane %v9080, %v9111
    %v9114 = vmul.f32 %v9106, %v9112
    %v9115 = vmul.f32 %v9107, %v9112
    %v9117 = vlaneseq
    %v9118 = vshrl.u32 %v9117, 7
    %v9119 = vsub.s32 0, %v9118
    %v9120 = vrot.slane %v9081, %v9119
    %v9122 = vadd.f32 %v9114, %v9120
    %v9123 = vadd.f32 %v9115, %v9120
    %s9124 = scalar_lea.vmem %s6, 32
    %v9125 = vld [vmem:[%s9124] sm:$0xff]
    %v9126 = vld [vmem:[%s9124 + $0x8] sm:$0xff]
    %v9127 = vld [vmem:[%s9124 + $0x10] sm:$0xff]
    %v9128 = vld [vmem:[%s9124 + $0x18] sm:$0xff]
    %s9129 = scalar_lea.vmem %s7, 1
    %v9130 = vld [vmem:[%s9129] sm:$0x1]
    %v9132 = vlaneseq
    %v9133 = vshrl.u32 %v9132, 7
    %v9134 = vsub.s32 0, %v9133
    %v9135 = vrot.slane %v9130, %v9134
    %v9138 = vsel %vm5761, %v9122, 0
    %v9141 = vsel %vm5761, %v9123, 0
    %9143 = vmatprep.subr.mxu0 0.0
    %9144 = vmatpush1.msra.mxu0 0.0
    %9145 = vmatprep.subr.mxu0 0.0
    %9146 = vmatpush1.msra.mxu0 0.0
    %9147 = vmatprep.subr.mxu0 0.0
    %9148 = vmatpush1.msra.mxu0 0.0
    %9149 = vmatprep.subr.mxu0 0.0
    %9150 = vmatpush1.msra.mxu0 0.0
    %9151 = vmatprep.subr.mxu0 0.0
    %9152 = vmatpush1.msra.mxu0 0.0
    %9153 = vmatprep.subr.mxu0 0.0
    %9154 = vmatpush1.msra.mxu0 0.0
    %9155 = vmatprep.subr.mxu0 0.0
    %9156 = vmatpush1.msra.mxu0 0.0
    %9157 = vmatprep.subr.mxu0 0.0
    %9158 = vmatpush1.msra.mxu0 0.0
    %9159 = vmatprep.subr.mxu0 0.0
    %9160 = vmatpush1.msra.mxu0 0.0
    %9161 = vmatprep.subr.mxu0 0.0
    %9162 = vmatpush1.msra.mxu0 0.0
    %9163 = vmatprep.subr.mxu0 0.0
    %9164 = vmatpush1.msra.mxu0 0.0
    %9165 = vmatprep.subr.mxu0 0.0
    %9166 = vmatpush1.msra.mxu0 0.0
    %9167 = vmatprep.subr.mxu0 0.0
    %9168 = vmatpush1.msra.mxu0 %v9128
    %9169 = vmatprep.subr.mxu0 0.0
    %9170 = vmatpush1.msra.mxu0 %v9127
    %9171 = vmatprep.subr.mxu0 0.0
    %9172 = vmatpush1.msra.mxu0 %v9126
    %9173 = vmatprep.subr.mxu0 0.0
    %9174 = vmatpush1.msra.mxu0 %v9125
    %9175 = vmatprep.subr.mxu0 0.0
    %9176 = vmatpush2.msra.mxu0 0.0
    %9177 = vmatprep.subr.mxu0 0.0
    %9178 = vmatpush2.msra.mxu0 0.0
    %9179 = vmatprep.subr.mxu0 0.0
    %9180 = vmatpush2.msra.mxu0 0.0
    %9181 = vmatprep.subr.mxu0 0.0
    %9182 = vmatpush2.msra.mxu0 0.0
    %9183 = vmatprep.subr.mxu0 0.0
    %9184 = vmatpush2.msra.mxu0 0.0
    %9185 = vmatprep.subr.mxu0 0.0
    %9186 = vmatpush2.msra.mxu0 0.0
    %9187 = vmatprep.subr.mxu0 0.0
    %9188 = vmatpush2.msra.mxu0 0.0
    %9189 = vmatprep.subr.mxu0 0.0
    %9190 = vmatpush2.msra.mxu0 0.0
    %9191 = vmatprep.subr.mxu0 0.0
    %9192 = vmatpush2.msra.mxu0 0.0
    %9193 = vmatprep.subr.mxu0 0.0
    %9194 = vmatpush2.msra.mxu0 0.0
    %9195 = vmatprep.subr.mxu0 0.0
    %9196 = vmatpush2.msra.mxu0 0.0
    %9197 = vmatprep.subr.mxu0 0.0
    %9198 = vmatpush2.msra.mxu0 0.0
    %9199 = vmatprep.subr.mxu0 0.0
    %9200 = vmatpush2.msra.mxu0 0.0
    %9201 = vmatprep.subr.mxu0 0.0
    %9202 = vmatpush2.msra.mxu0 0.0
    %9203 = vmatprep.subr.mxu0 0.0
    %9204 = vmatpush2.msra.mxu0 0.0
    %9205 = vmatprep.subr.mxu0 0.0
    %9206 = vmatpush2.msra.mxu0 0.0
    %9207 = vmatprep.mubr.f32.mxu0 0.0
    %9208 = vmatmul.mubr.f32.gmra.mxu0 %v9138
    %v9209 = vpop.f32.mrf.mxu0
    %v9210 = vadd.f32 %v9135, %v9209
    %v9211 = vpop.f32.mrf.mxu0
    %9212 = vmatprep.mubr.f32.mxu0 0.0
    %9213 = vmatmul.mubr.f32.gmra.mxu0 %v9141
    %v9214 = vpop.f32.mrf.mxu0
    %v9215 = vadd.f32 %v9135, %v9214
    %v9216 = vpop.f32.mrf.mxu0
    %9217 = vdwg.mxu0
    %s9218 = scalar_lea.vmem %s8, 32
    %v9219 = vld [vmem:[%s9218] sm:$0xff]
    %v9220 = vld [vmem:[%s9218 + $0x8] sm:$0xff]
    %v9221 = vld [vmem:[%s9218 + $0x10] sm:$0xff]
    %v9222 = vld [vmem:[%s9218 + $0x18] sm:$0xff]
    %9225 = vrot.lane.b32.xlu0 %v9210, 96
    %v9226 = vpop.permute.xlu0 %9225
    %9227 = vrot.lane.b32.xlu0 %v9215, 96
    %v9228 = vpop.permute.xlu0 %9227
    %v9229 = vsel %vm5853, %v9210, 0
    %v9231 = vsel %vm5853, %v9215, 0
    %v9233 = vsel %vm5853, %v9226, 0
    %v9235 = vsel %vm5853, %v9228, 0
    %9237 = vmatprep.subr.mxu0 0.0
    %9238 = vmatpush1.xpose.msra.mxu0 0.0
    %9239 = vmatprep.subr.mxu0 0.0
    %9240 = vmatpush1.xpose.msra.mxu0 0.0
    %9241 = vmatprep.subr.mxu0 0.0
    %9242 = vmatpush1.xpose.msra.mxu0 0.0
    %9243 = vmatprep.subr.mxu0 0.0
    %9244 = vmatpush1.xpose.msra.mxu0 0.0
    %9245 = vmatprep.subr.mxu0 0.0
    %9246 = vmatpush1.xpose.msra.mxu0 0.0
    %9247 = vmatprep.subr.mxu0 0.0
    %9248 = vmatpush1.xpose.msra.mxu0 0.0
    %9249 = vmatprep.subr.mxu0 0.0
    %9250 = vmatpush1.xpose.msra.mxu0 0.0
    %9251 = vmatprep.subr.mxu0 0.0
    %9252 = vmatpush1.xpose.msra.mxu0 0.0
    %9253 = vmatprep.subr.mxu0 0.0
    %9254 = vmatpush1.xpose.msra.mxu0 0.0
    %9255 = vmatprep.subr.mxu0 0.0
    %9256 = vmatpush1.xpose.msra.mxu0 0.0
    %9257 = vmatprep.subr.mxu0 0.0
    %9258 = vmatpush1.xpose.msra.mxu0 0.0
    %9259 = vmatprep.subr.mxu0 0.0
    %9260 = vmatpush1.xpose.msra.mxu0 0.0
    %9261 = vmatprep.subr.mxu0 0.0
    %9262 = vmatpush1.xpose.msra.mxu0 0.0
    %9263 = vmatprep.subr.mxu0 0.0
    %9264 = vmatpush1.xpose.msra.mxu0 0.0
    %9265 = vmatprep.subr.mxu0 0.0
    %9266 = vmatpush1.xpose.msra.mxu0 %v9235
    %9267 = vmatprep.subr.mxu0 0.0
    %9268 = vmatpush1.xpose.msra.mxu0 %v9233
    %9269 = vmatprep.subr.mxu0 0.0
    %9270 = vmatpush2.xpose.msra.mxu0 0.0
    %9271 = vmatprep.subr.mxu0 0.0
    %9272 = vmatpush2.xpose.msra.mxu0 0.0
    %9273 = vmatprep.subr.mxu0 0.0
    %9274 = vmatpush2.xpose.msra.mxu0 0.0
    %9275 = vmatprep.subr.mxu0 0.0
    %9276 = vmatpush2.xpose.msra.mxu0 0.0
    %9277 = vmatprep.subr.mxu0 0.0
    %9278 = vmatpush2.xpose.msra.mxu0 0.0
    %9279 = vmatprep.subr.mxu0 0.0
    %9280 = vmatpush2.xpose.msra.mxu0 0.0
    %9281 = vmatprep.subr.mxu0 0.0
    %9282 = vmatpush2.xpose.msra.mxu0 0.0
    %9283 = vmatprep.subr.mxu0 0.0
    %9284 = vmatpush2.xpose.msra.mxu0 0.0
    %9285 = vmatprep.subr.mxu0 0.0
    %9286 = vmatpush2.xpose.msra.mxu0 0.0
    %9287 = vmatprep.subr.mxu0 0.0
    %9288 = vmatpush2.xpose.msra.mxu0 0.0
    %9289 = vmatprep.subr.mxu0 0.0
    %9290 = vmatpush2.xpose.msra.mxu0 0.0
    %9291 = vmatprep.subr.mxu0 0.0
    %9292 = vmatpush2.xpose.msra.mxu0 0.0
    %9293 = vmatprep.subr.mxu0 0.0
    %9294 = vmatpush2.xpose.msra.mxu0 0.0
    %9295 = vmatprep.subr.mxu0 0.0
    %9296 = vmatpush2.xpose.msra.mxu0 0.0
    %9297 = vmatprep.subr.mxu0 0.0
    %9298 = vmatpush2.xpose.msra.mxu0 0.0
    %9299 = vmatprep.subr.mxu0 0.0
    %9300 = vmatpush2.xpose.msra.mxu0 0.0
    %9301 = vmatprep.mubr.f32.mxu0 0.0
    %9302 = vmatmul.mubr.f32.gmra.mxu0 %v9229
    %v9303 = vpop.f32.mrf.mxu0
    %v9304 = vadd.f32 0.0, %v9303
    %v9305 = vpop.f32.mrf.mxu0
    %9306 = vmatprep.mubr.f32.mxu0 0.0
    %9307 = vmatmul.mubr.f32.gmra.mxu0 %v9231
    %v9308 = vpop.f32.mrf.mxu0
    %v9309 = vadd.f32 0.0, %v9308
    %v9310 = vpop.f32.mrf.mxu0
    %9311 = vdwg.mxu0
    %v9312 = vmul.f32 %v9304, 0.35355338
    %v9313 = vmul.f32 %v9309, 0.35355338
    %v9314 = vsel %vm5748, %v9312, -1e+30
    %v9315 = vsel %vm5749, %v9313, -1e+30
    %v9316 = vsel %vm5941, %v9314, -inf
    %9317 = vmax.xlane.f32.xlu0 %v9316
    %v9318 = vpop.xlane.xlu0 %9317
    %v9319 = vsel %vm5941, %v9315, -inf
    %9320 = vmax.xlane.f32.xlu0 %v9319
    %v9321 = vpop.xlane.xlu0 %9320
    %v9322 = vsub.f32 %v9314, %v9318
    %v9323 = vsub.f32 %v9315, %v9321
    %v9324 = vmul.f32 %v9322, 1.442695
    %v9325 = vpow.pop %v9324
    %v9326 = vmul.f32 %v9323, 1.442695
    %v9327 = vpow.pop %v9326
    %v9328 = vsel %vm5941, %v9325, 0.0
    %9329 = vadd.xlane.f32.xlu0 %v9328
    %v9330 = vpop.xlane.xlu0 %9329
    %v9331 = vsel %vm5941, %v9327, 0.0
    %9332 = vadd.xlane.f32.xlu0 %v9331
    %v9333 = vpop.xlane.xlu0 %9332
    %v9334 = vrcp.pop %v9330
    %v9335 = vrcp.pop %v9333
    %v9336 = vmul.f32 %v9325, %v9334
    %v9337 = vmul.f32 %v9327, %v9335
    %9338 = vrot.lane.b32.xlu0 %v9210, 64
    %v9339 = vpop.permute.xlu0 %9338
    %9340 = vrot.lane.b32.xlu0 %v9215, 64
    %v9341 = vpop.permute.xlu0 %9340
    %v9345 = vsel %vm5941, %v9336, 0
    %v9348 = vsel %vm5941, %v9337, 0
    %9350 = vmatprep.subr.mxu0 0.0
    %9351 = vmatpush1.msra.mxu0 0.0
    %9352 = vmatprep.subr.mxu0 0.0
    %9353 = vmatpush1.msra.mxu0 0.0
    %9354 = vmatprep.subr.mxu0 0.0
    %9355 = vmatpush1.msra.mxu0 0.0
    %9356 = vmatprep.subr.mxu0 0.0
    %9357 = vmatpush1.msra.mxu0 0.0
    %9358 = vmatprep.subr.mxu0 0.0
    %9359 = vmatpush1.msra.mxu0 0.0
    %9360 = vmatprep.subr.mxu0 0.0
    %9361 = vmatpush1.msra.mxu0 0.0
    %9362 = vmatprep.subr.mxu0 0.0
    %9363 = vmatpush1.msra.mxu0 0.0
    %9364 = vmatprep.subr.mxu0 0.0
    %9365 = vmatpush1.msra.mxu0 0.0
    %9366 = vmatprep.subr.mxu0 0.0
    %9367 = vmatpush1.msra.mxu0 0.0
    %9368 = vmatprep.subr.mxu0 0.0
    %9369 = vmatpush1.msra.mxu0 0.0
    %9370 = vmatprep.subr.mxu0 0.0
    %9371 = vmatpush1.msra.mxu0 0.0
    %9372 = vmatprep.subr.mxu0 0.0
    %9373 = vmatpush1.msra.mxu0 0.0
    %9374 = vmatprep.subr.mxu0 0.0
    %9375 = vmatpush1.msra.mxu0 0.0
    %9376 = vmatprep.subr.mxu0 0.0
    %9377 = vmatpush1.msra.mxu0 0.0
    %9378 = vmatprep.subr.mxu0 0.0
    %9379 = vmatpush1.msra.mxu0 %v9341
    %9380 = vmatprep.subr.mxu0 0.0
    %9381 = vmatpush1.msra.mxu0 %v9339
    %9382 = vmatprep.subr.mxu0 0.0
    %9383 = vmatpush2.msra.mxu0 0.0
    %9384 = vmatprep.subr.mxu0 0.0
    %9385 = vmatpush2.msra.mxu0 0.0
    %9386 = vmatprep.subr.mxu0 0.0
    %9387 = vmatpush2.msra.mxu0 0.0
    %9388 = vmatprep.subr.mxu0 0.0
    %9389 = vmatpush2.msra.mxu0 0.0
    %9390 = vmatprep.subr.mxu0 0.0
    %9391 = vmatpush2.msra.mxu0 0.0
    %9392 = vmatprep.subr.mxu0 0.0
    %9393 = vmatpush2.msra.mxu0 0.0
    %9394 = vmatprep.subr.mxu0 0.0
    %9395 = vmatpush2.msra.mxu0 0.0
    %9396 = vmatprep.subr.mxu0 0.0
    %9397 = vmatpush2.msra.mxu0 0.0
    %9398 = vmatprep.subr.mxu0 0.0
    %9399 = vmatpush2.msra.mxu0 0.0
    %9400 = vmatprep.subr.mxu0 0.0
    %9401 = vmatpush2.msra.mxu0 0.0
    %9402 = vmatprep.subr.mxu0 0.0
    %9403 = vmatpush2.msra.mxu0 0.0
    %9404 = vmatprep.subr.mxu0 0.0
    %9405 = vmatpush2.msra.mxu0 0.0
    %9406 = vmatprep.subr.mxu0 0.0
    %9407 = vmatpush2.msra.mxu0 0.0
    %9408 = vmatprep.subr.mxu0 0.0
    %9409 = vmatpush2.msra.mxu0 0.0
    %9410 = vmatprep.subr.mxu0 0.0
    %9411 = vmatpush2.msra.mxu0 0.0
    %9412 = vmatprep.subr.mxu0 0.0
    %9413 = vmatpush2.msra.mxu0 0.0
    %9414 = vmatprep.mubr.f32.mxu0 0.0
    %9415 = vmatmul.mubr.f32.gmra.mxu0 %v9345
    %v9416 = vpop.f32.mrf.mxu0
    %v9417 = vadd.f32 0.0, %v9416
    %v9418 = vpop.f32.mrf.mxu0
    %9419 = vmatprep.mubr.f32.mxu0 0.0
    %9420 = vmatmul.mubr.f32.gmra.mxu0 %v9348
    %v9421 = vpop.f32.mrf.mxu0
    %v9422 = vadd.f32 0.0, %v9421
    %v9423 = vpop.f32.mrf.mxu0
    %9424 = vdwg.mxu0
    %9425 = vrot.lane.b32.xlu0 %v9210, 120
    %v9426 = vpop.permute.xlu0 %9425
    %9427 = vrot.lane.b32.xlu0 %v9215, 120
    %v9428 = vpop.permute.xlu0 %9427
    %9429 = vrot.lane.b32.xlu0 %v9210, 88
    %v9430 = vpop.permute.xlu0 %9429
    %9431 = vrot.lane.b32.xlu0 %v9215, 88
    %v9432 = vpop.permute.xlu0 %9431
    %v9433 = vsel %vm5853, %v9426, 0
    %v9435 = vsel %vm5853, %v9428, 0
    %v9437 = vsel %vm5853, %v9430, 0
    %v9439 = vsel %vm5853, %v9432, 0
    %9441 = vmatprep.subr.mxu0 0.0
    %9442 = vmatpush1.xpose.msra.mxu0 0.0
    %9443 = vmatprep.subr.mxu0 0.0
    %9444 = vmatpush1.xpose.msra.mxu0 0.0
    %9445 = vmatprep.subr.mxu0 0.0
    %9446 = vmatpush1.xpose.msra.mxu0 0.0
    %9447 = vmatprep.subr.mxu0 0.0
    %9448 = vmatpush1.xpose.msra.mxu0 0.0
    %9449 = vmatprep.subr.mxu0 0.0
    %9450 = vmatpush1.xpose.msra.mxu0 0.0
    %9451 = vmatprep.subr.mxu0 0.0
    %9452 = vmatpush1.xpose.msra.mxu0 0.0
    %9453 = vmatprep.subr.mxu0 0.0
    %9454 = vmatpush1.xpose.msra.mxu0 0.0
    %9455 = vmatprep.subr.mxu0 0.0
    %9456 = vmatpush1.xpose.msra.mxu0 0.0
    %9457 = vmatprep.subr.mxu0 0.0
    %9458 = vmatpush1.xpose.msra.mxu0 0.0
    %9459 = vmatprep.subr.mxu0 0.0
    %9460 = vmatpush1.xpose.msra.mxu0 0.0
    %9461 = vmatprep.subr.mxu0 0.0
    %9462 = vmatpush1.xpose.msra.mxu0 0.0
    %9463 = vmatprep.subr.mxu0 0.0
    %9464 = vmatpush1.xpose.msra.mxu0 0.0
    %9465 = vmatprep.subr.mxu0 0.0
    %9466 = vmatpush1.xpose.msra.mxu0 0.0
    %9467 = vmatprep.subr.mxu0 0.0
    %9468 = vmatpush1.xpose.msra.mxu0 0.0
    %9469 = vmatprep.subr.mxu0 0.0
    %9470 = vmatpush1.xpose.msra.mxu0 %v9439
    %9471 = vmatprep.subr.mxu0 0.0
    %9472 = vmatpush1.xpose.msra.mxu0 %v9437
    %9473 = vmatprep.subr.mxu0 0.0
    %9474 = vmatpush2.xpose.msra.mxu0 0.0
    %9475 = vmatprep.subr.mxu0 0.0
    %9476 = vmatpush2.xpose.msra.mxu0 0.0
    %9477 = vmatprep.subr.mxu0 0.0
    %9478 = vmatpush2.xpose.msra.mxu0 0.0
    %9479 = vmatprep.subr.mxu0 0.0
    %9480 = vmatpush2.xpose.msra.mxu0 0.0
    %9481 = vmatprep.subr.mxu0 0.0
    %9482 = vmatpush2.xpose.msra.mxu0 0.0
    %9483 = vmatprep.subr.mxu0 0.0
    %9484 = vmatpush2.xpose.msra.mxu0 0.0
    %9485 = vmatprep.subr.mxu0 0.0
    %9486 = vmatpush2.xpose.msra.mxu0 0.0
    %9487 = vmatprep.subr.mxu0 0.0
    %9488 = vmatpush2.xpose.msra.mxu0 0.0
    %9489 = vmatprep.subr.mxu0 0.0
    %9490 = vmatpush2.xpose.msra.mxu0 0.0
    %9491 = vmatprep.subr.mxu0 0.0
    %9492 = vmatpush2.xpose.msra.mxu0 0.0
    %9493 = vmatprep.subr.mxu0 0.0
    %9494 = vmatpush2.xpose.msra.mxu0 0.0
    %9495 = vmatprep.subr.mxu0 0.0
    %9496 = vmatpush2.xpose.msra.mxu0 0.0
    %9497 = vmatprep.subr.mxu0 0.0
    %9498 = vmatpush2.xpose.msra.mxu0 0.0
    %9499 = vmatprep.subr.mxu0 0.0
    %9500 = vmatpush2.xpose.msra.mxu0 0.0
    %9501 = vmatprep.subr.mxu0 0.0
    %9502 = vmatpush2.xpose.msra.mxu0 0.0
    %9503 = vmatprep.subr.mxu0 0.0
    %9504 = vmatpush2.xpose.msra.mxu0 0.0
    %9505 = vmatprep.mubr.f32.mxu0 0.0
    %9506 = vmatmul.mubr.f32.gmra.mxu0 %v9433
    %v9507 = vpop.f32.mrf.mxu0
    %v9508 = vadd.f32 0.0, %v9507
    %v9509 = vpop.f32.mrf.mxu0
    %9510 = vmatprep.mubr.f32.mxu0 0.0
    %9511 = vmatmul.mubr.f32.gmra.mxu0 %v9435
    %v9512 = vpop.f32.mrf.mxu0
    %v9513 = vadd.f32 0.0, %v9512
    %v9514 = vpop.f32.mrf.mxu0
    %9515 = vdwg.mxu0
    %v9516 = vmul.f32 %v9508, 0.35355338
    %v9517 = vmul.f32 %v9513, 0.35355338
    %v9518 = vsel %vm5748, %v9516, -1e+30
    %v9519 = vsel %vm5749, %v9517, -1e+30
    %v9520 = vsel %vm5941, %v9518, -inf
    %9521 = vmax.xlane.f32.xlu0 %v9520
    %v9522 = vpop.xlane.xlu0 %9521
    %v9523 = vsel %vm5941, %v9519, -inf
    %9524 = vmax.xlane.f32.xlu0 %v9523
    %v9525 = vpop.xlane.xlu0 %9524
    %v9526 = vsub.f32 %v9518, %v9522
    %v9527 = vsub.f32 %v9519, %v9525
    %v9528 = vmul.f32 %v9526, 1.442695
    %v9529 = vpow.pop %v9528
    %v9530 = vmul.f32 %v9527, 1.442695
    %v9531 = vpow.pop %v9530
    %v9532 = vsel %vm5941, %v9529, 0.0
    %9533 = vadd.xlane.f32.xlu0 %v9532
    %v9534 = vpop.xlane.xlu0 %9533
    %v9535 = vsel %vm5941, %v9531, 0.0
    %9536 = vadd.xlane.f32.xlu0 %v9535
    %v9537 = vpop.xlane.xlu0 %9536
    %v9538 = vrcp.pop %v9534
    %v9539 = vrcp.pop %v9537
    %v9540 = vmul.f32 %v9529, %v9538
    %v9541 = vmul.f32 %v9531, %v9539
    %9542 = vrot.lane.b32.xlu0 %v9210, 56
    %v9543 = vpop.permute.xlu0 %9542
    %9544 = vrot.lane.b32.xlu0 %v9215, 56
    %v9545 = vpop.permute.xlu0 %9544
    %v9549 = vsel %vm5941, %v9540, 0
    %v9552 = vsel %vm5941, %v9541, 0
    %9554 = vmatprep.subr.mxu0 0.0
    %9555 = vmatpush1.msra.mxu0 0.0
    %9556 = vmatprep.subr.mxu0 0.0
    %9557 = vmatpush1.msra.mxu0 0.0
    %9558 = vmatprep.subr.mxu0 0.0
    %9559 = vmatpush1.msra.mxu0 0.0
    %9560 = vmatprep.subr.mxu0 0.0
    %9561 = vmatpush1.msra.mxu0 0.0
    %9562 = vmatprep.subr.mxu0 0.0
    %9563 = vmatpush1.msra.mxu0 0.0
    %9564 = vmatprep.subr.mxu0 0.0
    %9565 = vmatpush1.msra.mxu0 0.0
    %9566 = vmatprep.subr.mxu0 0.0
    %9567 = vmatpush1.msra.mxu0 0.0
    %9568 = vmatprep.subr.mxu0 0.0
    %9569 = vmatpush1.msra.mxu0 0.0
    %9570 = vmatprep.subr.mxu0 0.0
    %9571 = vmatpush1.msra.mxu0 0.0
    %9572 = vmatprep.subr.mxu0 0.0
    %9573 = vmatpush1.msra.mxu0 0.0
    %9574 = vmatprep.subr.mxu0 0.0
    %9575 = vmatpush1.msra.mxu0 0.0
    %9576 = vmatprep.subr.mxu0 0.0
    %9577 = vmatpush1.msra.mxu0 0.0
    %9578 = vmatprep.subr.mxu0 0.0
    %9579 = vmatpush1.msra.mxu0 0.0
    %9580 = vmatprep.subr.mxu0 0.0
    %9581 = vmatpush1.msra.mxu0 0.0
    %9582 = vmatprep.subr.mxu0 0.0
    %9583 = vmatpush1.msra.mxu0 %v9545
    %9584 = vmatprep.subr.mxu0 0.0
    %9585 = vmatpush1.msra.mxu0 %v9543
    %9586 = vmatprep.subr.mxu0 0.0
    %9587 = vmatpush2.msra.mxu0 0.0
    %9588 = vmatprep.subr.mxu0 0.0
    %9589 = vmatpush2.msra.mxu0 0.0
    %9590 = vmatprep.subr.mxu0 0.0
    %9591 = vmatpush2.msra.mxu0 0.0
    %9592 = vmatprep.subr.mxu0 0.0
    %9593 = vmatpush2.msra.mxu0 0.0
    %9594 = vmatprep.subr.mxu0 0.0
    %9595 = vmatpush2.msra.mxu0 0.0
    %9596 = vmatprep.subr.mxu0 0.0
    %9597 = vmatpush2.msra.mxu0 0.0
    %9598 = vmatprep.subr.mxu0 0.0
    %9599 = vmatpush2.msra.mxu0 0.0
    %9600 = vmatprep.subr.mxu0 0.0
    %9601 = vmatpush2.msra.mxu0 0.0
    %9602 = vmatprep.subr.mxu0 0.0
    %9603 = vmatpush2.msra.mxu0 0.0
    %9604 = vmatprep.subr.mxu0 0.0
    %9605 = vmatpush2.msra.mxu0 0.0
    %9606 = vmatprep.subr.mxu0 0.0
    %9607 = vmatpush2.msra.mxu0 0.0
    %9608 = vmatprep.subr.mxu0 0.0
    %9609 = vmatpush2.msra.mxu0 0.0
    %9610 = vmatprep.subr.mxu0 0.0
    %9611 = vmatpush2.msra.mxu0 0.0
    %9612 = vmatprep.subr.mxu0 0.0
    %9613 = vmatpush2.msra.mxu0 0.0
    %9614 = vmatprep.subr.mxu0 0.0
    %9615 = vmatpush2.msra.mxu0 0.0
    %9616 = vmatprep.subr.mxu0 0.0
    %9617 = vmatpush2.msra.mxu0 0.0
    %9618 = vmatprep.mubr.f32.mxu0 0.0
    %9619 = vmatmul.mubr.f32.gmra.mxu0 %v9549
    %v9620 = vpop.f32.mrf.mxu0
    %v9621 = vadd.f32 0.0, %v9620
    %v9622 = vpop.f32.mrf.mxu0
    %9623 = vmatprep.mubr.f32.mxu0 0.0
    %9624 = vmatmul.mubr.f32.gmra.mxu0 %v9552
    %v9625 = vpop.f32.mrf.mxu0
    %v9626 = vadd.f32 0.0, %v9625
    %v9627 = vpop.f32.mrf.mxu0
    %9628 = vdwg.mxu0
    %v9630 = vsel %vm5853, %v9621, 0
    %v9633 = vsel %vm5853, %v9626, 0
    %9635 = vmatprep.subr.mxu0 0.0
    %9636 = vmatpush1.msra.mxu0 0.0
    %9637 = vmatprep.subr.mxu0 0.0
    %9638 = vmatpush1.msra.mxu0 0.0
    %9639 = vmatprep.subr.mxu0 0.0
    %9640 = vmatpush1.msra.mxu0 0.0
    %9641 = vmatprep.subr.mxu0 0.0
    %9642 = vmatpush1.msra.mxu0 0.0
    %9643 = vmatprep.subr.mxu0 0.0
    %9644 = vmatpush1.msra.mxu0 0.0
    %9645 = vmatprep.subr.mxu0 0.0
    %9646 = vmatpush1.msra.mxu0 0.0
    %9647 = vmatprep.subr.mxu0 0.0
    %9648 = vmatpush1.msra.mxu0 0.0
    %9649 = vmatprep.subr.mxu0 0.0
    %9650 = vmatpush1.msra.mxu0 0.0
    %9651 = vmatprep.subr.mxu0 0.0
    %9652 = vmatpush1.msra.mxu0 0.0
    %9653 = vmatprep.subr.mxu0 0.0
    %9654 = vmatpush1.msra.mxu0 0.0
    %9655 = vmatprep.subr.mxu0 0.0
    %9656 = vmatpush1.msra.mxu0 0.0
    %9657 = vmatprep.subr.mxu0 0.0
    %9658 = vmatpush1.msra.mxu0 0.0
    %9659 = vmatprep.subr.mxu0 0.0
    %9660 = vmatpush1.msra.mxu0 0.0
    %9661 = vmatprep.subr.mxu0 0.0
    %9662 = vmatpush1.msra.mxu0 0.0
    %9663 = vmatprep.subr.mxu0 0.0
    %9664 = vmatpush1.msra.mxu0 0.0
    %9665 = vmatprep.subr.mxu0 0.0
    %9666 = vmatpush1.msra.mxu0 %v9220
    %9667 = vmatprep.subr.mxu0 0.0
    %9668 = vmatpush2.msra.mxu0 0.0
    %9669 = vmatprep.subr.mxu0 0.0
    %9670 = vmatpush2.msra.mxu0 0.0
    %9671 = vmatprep.subr.mxu0 0.0
    %9672 = vmatpush2.msra.mxu0 0.0
    %9673 = vmatprep.subr.mxu0 0.0
    %9674 = vmatpush2.msra.mxu0 0.0
    %9675 = vmatprep.subr.mxu0 0.0
    %9676 = vmatpush2.msra.mxu0 0.0
    %9677 = vmatprep.subr.mxu0 0.0
    %9678 = vmatpush2.msra.mxu0 0.0
    %9679 = vmatprep.subr.mxu0 0.0
    %9680 = vmatpush2.msra.mxu0 0.0
    %9681 = vmatprep.subr.mxu0 0.0
    %9682 = vmatpush2.msra.mxu0 0.0
    %9683 = vmatprep.subr.mxu0 0.0
    %9684 = vmatpush2.msra.mxu0 0.0
    %9685 = vmatprep.subr.mxu0 0.0
    %9686 = vmatpush2.msra.mxu0 0.0
    %9687 = vmatprep.subr.mxu0 0.0
    %9688 = vmatpush2.msra.mxu0 0.0
    %9689 = vmatprep.subr.mxu0 0.0
    %9690 = vmatpush2.msra.mxu0 0.0
    %9691 = vmatprep.subr.mxu0 0.0
    %9692 = vmatpush2.msra.mxu0 0.0
    %9693 = vmatprep.subr.mxu0 0.0
    %9694 = vmatpush2.msra.mxu0 0.0
    %9695 = vmatprep.subr.mxu0 0.0
    %9696 = vmatpush2.msra.mxu0 0.0
    %9697 = vmatprep.subr.mxu0 0.0
    %9698 = vmatpush2.msra.mxu0 0.0
    %9699 = vmatprep.mubr.f32.mxu0 0.0
    %9700 = vmatmul.mubr.f32.gmra.mxu0 %v9630
    %v9701 = vpop.f32.mrf.mxu0
    %v9702 = vadd.f32 0.0, %v9701
    %v9703 = vpop.f32.mrf.mxu0
    %9704 = vmatprep.mubr.f32.mxu0 0.0
    %9705 = vmatmul.mubr.f32.gmra.mxu0 %v9633
    %v9706 = vpop.f32.mrf.mxu0
    %v9707 = vadd.f32 0.0, %v9706
    %v9708 = vpop.f32.mrf.mxu0
    %9709 = vdwg.mxu0
    %v9711 = vsel %vm5853, %v9417, 0
    %v9714 = vsel %vm5853, %v9422, 0
    %9716 = vmatprep.subr.mxu0 0.0
    %9717 = vmatpush1.msra.mxu0 0.0
    %9718 = vmatprep.subr.mxu0 0.0
    %9719 = vmatpush1.msra.mxu0 0.0
    %9720 = vmatprep.subr.mxu0 0.0
    %9721 = vmatpush1.msra.mxu0 0.0
    %9722 = vmatprep.subr.mxu0 0.0
    %9723 = vmatpush1.msra.mxu0 0.0
    %9724 = vmatprep.subr.mxu0 0.0
    %9725 = vmatpush1.msra.mxu0 0.0
    %9726 = vmatprep.subr.mxu0 0.0
    %9727 = vmatpush1.msra.mxu0 0.0
    %9728 = vmatprep.subr.mxu0 0.0
    %9729 = vmatpush1.msra.mxu0 0.0
    %9730 = vmatprep.subr.mxu0 0.0
    %9731 = vmatpush1.msra.mxu0 0.0
    %9732 = vmatprep.subr.mxu0 0.0
    %9733 = vmatpush1.msra.mxu0 0.0
    %9734 = vmatprep.subr.mxu0 0.0
    %9735 = vmatpush1.msra.mxu0 0.0
    %9736 = vmatprep.subr.mxu0 0.0
    %9737 = vmatpush1.msra.mxu0 0.0
    %9738 = vmatprep.subr.mxu0 0.0
    %9739 = vmatpush1.msra.mxu0 0.0
    %9740 = vmatprep.subr.mxu0 0.0
    %9741 = vmatpush1.msra.mxu0 0.0
    %9742 = vmatprep.subr.mxu0 0.0
    %9743 = vmatpush1.msra.mxu0 0.0
    %9744 = vmatprep.subr.mxu0 0.0
    %9745 = vmatpush1.msra.mxu0 0.0
    %9746 = vmatprep.subr.mxu0 0.0
    %9747 = vmatpush1.msra.mxu0 %v9219
    %9748 = vmatprep.subr.mxu0 0.0
    %9749 = vmatpush2.msra.mxu0 0.0
    %9750 = vmatprep.subr.mxu0 0.0
    %9751 = vmatpush2.msra.mxu0 0.0
    %9752 = vmatprep.subr.mxu0 0.0
    %9753 = vmatpush2.msra.mxu0 0.0
    %9754 = vmatprep.subr.mxu0 0.0
    %9755 = vmatpush2.msra.mxu0 0.0
    %9756 = vmatprep.subr.mxu0 0.0
    %9757 = vmatpush2.msra.mxu0 0.0
    %9758 = vmatprep.subr.mxu0 0.0
    %9759 = vmatpush2.msra.mxu0 0.0
    %9760 = vmatprep.subr.mxu0 0.0
    %9761 = vmatpush2.msra.mxu0 0.0
    %9762 = vmatprep.subr.mxu0 0.0
    %9763 = vmatpush2.msra.mxu0 0.0
    %9764 = vmatprep.subr.mxu0 0.0
    %9765 = vmatpush2.msra.mxu0 0.0
    %9766 = vmatprep.subr.mxu0 0.0
    %9767 = vmatpush2.msra.mxu0 0.0
    %9768 = vmatprep.subr.mxu0 0.0
    %9769 = vmatpush2.msra.mxu0 0.0
    %9770 = vmatprep.subr.mxu0 0.0
    %9771 = vmatpush2.msra.mxu0 0.0
    %9772 = vmatprep.subr.mxu0 0.0
    %9773 = vmatpush2.msra.mxu0 0.0
    %9774 = vmatprep.subr.mxu0 0.0
    %9775 = vmatpush2.msra.mxu0 0.0
    %9776 = vmatprep.subr.mxu0 0.0
    %9777 = vmatpush2.msra.mxu0 0.0
    %9778 = vmatprep.subr.mxu0 0.0
    %9779 = vmatpush2.msra.mxu0 0.0
    %9780 = vmatprep.mubr.f32.mxu0 0.0
    %9781 = vmatmul.mubr.f32.gmra.mxu0 %v9711
    %v9782 = vpop.f32.mrf.mxu0
    %v9783 = vadd.f32 %v9702, %v9782
    %v9784 = vpop.f32.mrf.mxu0
    %9785 = vmatprep.mubr.f32.mxu0 0.0
    %9786 = vmatmul.mubr.f32.gmra.mxu0 %v9714
    %v9787 = vpop.f32.mrf.mxu0
    %v9788 = vadd.f32 %v9707, %v9787
    %v9789 = vpop.f32.mrf.mxu0
    %9790 = vdwg.mxu0
    %9791 = vrot.lane.b32.xlu0 %v9210, 112
    %v9792 = vpop.permute.xlu0 %9791
    %9793 = vrot.lane.b32.xlu0 %v9215, 112
    %v9794 = vpop.permute.xlu0 %9793
    %9795 = vrot.lane.b32.xlu0 %v9210, 80
    %v9796 = vpop.permute.xlu0 %9795
    %9797 = vrot.lane.b32.xlu0 %v9215, 80
    %v9798 = vpop.permute.xlu0 %9797
    %v9799 = vsel %vm5853, %v9792, 0
    %v9801 = vsel %vm5853, %v9794, 0
    %v9803 = vsel %vm5853, %v9796, 0
    %v9805 = vsel %vm5853, %v9798, 0
    %9807 = vmatprep.subr.mxu0 0.0
    %9808 = vmatpush1.xpose.msra.mxu0 0.0
    %9809 = vmatprep.subr.mxu0 0.0
    %9810 = vmatpush1.xpose.msra.mxu0 0.0
    %9811 = vmatprep.subr.mxu0 0.0
    %9812 = vmatpush1.xpose.msra.mxu0 0.0
    %9813 = vmatprep.subr.mxu0 0.0
    %9814 = vmatpush1.xpose.msra.mxu0 0.0
    %9815 = vmatprep.subr.mxu0 0.0
    %9816 = vmatpush1.xpose.msra.mxu0 0.0
    %9817 = vmatprep.subr.mxu0 0.0
    %9818 = vmatpush1.xpose.msra.mxu0 0.0
    %9819 = vmatprep.subr.mxu0 0.0
    %9820 = vmatpush1.xpose.msra.mxu0 0.0
    %9821 = vmatprep.subr.mxu0 0.0
    %9822 = vmatpush1.xpose.msra.mxu0 0.0
    %9823 = vmatprep.subr.mxu0 0.0
    %9824 = vmatpush1.xpose.msra.mxu0 0.0
    %9825 = vmatprep.subr.mxu0 0.0
    %9826 = vmatpush1.xpose.msra.mxu0 0.0
    %9827 = vmatprep.subr.mxu0 0.0
    %9828 = vmatpush1.xpose.msra.mxu0 0.0
    %9829 = vmatprep.subr.mxu0 0.0
    %9830 = vmatpush1.xpose.msra.mxu0 0.0
    %9831 = vmatprep.subr.mxu0 0.0
    %9832 = vmatpush1.xpose.msra.mxu0 0.0
    %9833 = vmatprep.subr.mxu0 0.0
    %9834 = vmatpush1.xpose.msra.mxu0 0.0
    %9835 = vmatprep.subr.mxu0 0.0
    %9836 = vmatpush1.xpose.msra.mxu0 %v9805
    %9837 = vmatprep.subr.mxu0 0.0
    %9838 = vmatpush1.xpose.msra.mxu0 %v9803
    %9839 = vmatprep.subr.mxu0 0.0
    %9840 = vmatpush2.xpose.msra.mxu0 0.0
    %9841 = vmatprep.subr.mxu0 0.0
    %9842 = vmatpush2.xpose.msra.mxu0 0.0
    %9843 = vmatprep.subr.mxu0 0.0
    %9844 = vmatpush2.xpose.msra.mxu0 0.0
    %9845 = vmatprep.subr.mxu0 0.0
    %9846 = vmatpush2.xpose.msra.mxu0 0.0
    %9847 = vmatprep.subr.mxu0 0.0
    %9848 = vmatpush2.xpose.msra.mxu0 0.0
    %9849 = vmatprep.subr.mxu0 0.0
    %9850 = vmatpush2.xpose.msra.mxu0 0.0
    %9851 = vmatprep.subr.mxu0 0.0
    %9852 = vmatpush2.xpose.msra.mxu0 0.0
    %9853 = vmatprep.subr.mxu0 0.0
    %9854 = vmatpush2.xpose.msra.mxu0 0.0
    %9855 = vmatprep.subr.mxu0 0.0
    %9856 = vmatpush2.xpose.msra.mxu0 0.0
    %9857 = vmatprep.subr.mxu0 0.0
    %9858 = vmatpush2.xpose.msra.mxu0 0.0
    %9859 = vmatprep.subr.mxu0 0.0
    %9860 = vmatpush2.xpose.msra.mxu0 0.0
    %9861 = vmatprep.subr.mxu0 0.0
    %9862 = vmatpush2.xpose.msra.mxu0 0.0
    %9863 = vmatprep.subr.mxu0 0.0
    %9864 = vmatpush2.xpose.msra.mxu0 0.0
    %9865 = vmatprep.subr.mxu0 0.0
    %9866 = vmatpush2.xpose.msra.mxu0 0.0
    %9867 = vmatprep.subr.mxu0 0.0
    %9868 = vmatpush2.xpose.msra.mxu0 0.0
    %9869 = vmatprep.subr.mxu0 0.0
    %9870 = vmatpush2.xpose.msra.mxu0 0.0
    %9871 = vmatprep.mubr.f32.mxu0 0.0
    %9872 = vmatmul.mubr.f32.gmra.mxu0 %v9799
    %v9873 = vpop.f32.mrf.mxu0
    %v9874 = vadd.f32 0.0, %v9873
    %v9875 = vpop.f32.mrf.mxu0
    %9876 = vmatprep.mubr.f32.mxu0 0.0
    %9877 = vmatmul.mubr.f32.gmra.mxu0 %v9801
    %v9878 = vpop.f32.mrf.mxu0
    %v9879 = vadd.f32 0.0, %v9878
    %v9880 = vpop.f32.mrf.mxu0
    %9881 = vdwg.mxu0
    %v9882 = vmul.f32 %v9874, 0.35355338
    %v9883 = vmul.f32 %v9879, 0.35355338
    %v9884 = vsel %vm5748, %v9882, -1e+30
    %v9885 = vsel %vm5749, %v9883, -1e+30
    %v9886 = vsel %vm5941, %v9884, -inf
    %9887 = vmax.xlane.f32.xlu0 %v9886
    %v9888 = vpop.xlane.xlu0 %9887
    %v9889 = vsel %vm5941, %v9885, -inf
    %9890 = vmax.xlane.f32.xlu0 %v9889
    %v9891 = vpop.xlane.xlu0 %9890
    %v9892 = vsub.f32 %v9884, %v9888
    %v9893 = vsub.f32 %v9885, %v9891
    %v9894 = vmul.f32 %v9892, 1.442695
    %v9895 = vpow.pop %v9894
    %v9896 = vmul.f32 %v9893, 1.442695
    %v9897 = vpow.pop %v9896
    %v9898 = vsel %vm5941, %v9895, 0.0
    %9899 = vadd.xlane.f32.xlu0 %v9898
    %v9900 = vpop.xlane.xlu0 %9899
    %v9901 = vsel %vm5941, %v9897, 0.0
    %9902 = vadd.xlane.f32.xlu0 %v9901
    %v9903 = vpop.xlane.xlu0 %9902
    %v9904 = vrcp.pop %v9900
    %v9905 = vrcp.pop %v9903
    %v9906 = vmul.f32 %v9895, %v9904
    %v9907 = vmul.f32 %v9897, %v9905
    %9908 = vrot.lane.b32.xlu0 %v9210, 48
    %v9909 = vpop.permute.xlu0 %9908
    %9910 = vrot.lane.b32.xlu0 %v9215, 48
    %v9911 = vpop.permute.xlu0 %9910
    %v9915 = vsel %vm5941, %v9906, 0
    %v9918 = vsel %vm5941, %v9907, 0
    %9920 = vmatprep.subr.mxu0 0.0
    %9921 = vmatpush1.msra.mxu0 0.0
    %9922 = vmatprep.subr.mxu0 0.0
    %9923 = vmatpush1.msra.mxu0 0.0
    %9924 = vmatprep.subr.mxu0 0.0
    %9925 = vmatpush1.msra.mxu0 0.0
    %9926 = vmatprep.subr.mxu0 0.0
    %9927 = vmatpush1.msra.mxu0 0.0
    %9928 = vmatprep.subr.mxu0 0.0
    %9929 = vmatpush1.msra.mxu0 0.0
    %9930 = vmatprep.subr.mxu0 0.0
    %9931 = vmatpush1.msra.mxu0 0.0
    %9932 = vmatprep.subr.mxu0 0.0
    %9933 = vmatpush1.msra.mxu0 0.0
    %9934 = vmatprep.subr.mxu0 0.0
    %9935 = vmatpush1.msra.mxu0 0.0
    %9936 = vmatprep.subr.mxu0 0.0
    %9937 = vmatpush1.msra.mxu0 0.0
    %9938 = vmatprep.subr.mxu0 0.0
    %9939 = vmatpush1.msra.mxu0 0.0
    %9940 = vmatprep.subr.mxu0 0.0
    %9941 = vmatpush1.msra.mxu0 0.0
    %9942 = vmatprep.subr.mxu0 0.0
    %9943 = vmatpush1.msra.mxu0 0.0
    %9944 = vmatprep.subr.mxu0 0.0
    %9945 = vmatpush1.msra.mxu0 0.0
    %9946 = vmatprep.subr.mxu0 0.0
    %9947 = vmatpush1.msra.mxu0 0.0
    %9948 = vmatprep.subr.mxu0 0.0
    %9949 = vmatpush1.msra.mxu0 %v9911
    %9950 = vmatprep.subr.mxu0 0.0
    %9951 = vmatpush1.msra.mxu0 %v9909
    %9952 = vmatprep.subr.mxu0 0.0
    %9953 = vmatpush2.msra.mxu0 0.0
    %9954 = vmatprep.subr.mxu0 0.0
    %9955 = vmatpush2.msra.mxu0 0.0
    %9956 = vmatprep.subr.mxu0 0.0
    %9957 = vmatpush2.msra.mxu0 0.0
    %9958 = vmatprep.subr.mxu0 0.0
    %9959 = vmatpush2.msra.mxu0 0.0
    %9960 = vmatprep.subr.mxu0 0.0
    %9961 = vmatpush2.msra.mxu0 0.0
    %9962 = vmatprep.subr.mxu0 0.0
    %9963 = vmatpush2.msra.mxu0 0.0
    %9964 = vmatprep.subr.mxu0 0.0
    %9965 = vmatpush2.msra.mxu0 0.0
    %9966 = vmatprep.subr.mxu0 0.0
    %9967 = vmatpush2.msra.mxu0 0.0
    %9968 = vmatprep.subr.mxu0 0.0
    %9969 = vmatpush2.msra.mxu0 0.0
    %9970 = vmatprep.subr.mxu0 0.0
    %9971 = vmatpush2.msra.mxu0 0.0
    %9972 = vmatprep.subr.mxu0 0.0
    %9973 = vmatpush2.msra.mxu0 0.0
    %9974 = vmatprep.subr.mxu0 0.0
    %9975 = vmatpush2.msra.mxu0 0.0
    %9976 = vmatprep.subr.mxu0 0.0
    %9977 = vmatpush2.msra.mxu0 0.0
    %9978 = vmatprep.subr.mxu0 0.0
    %9979 = vmatpush2.msra.mxu0 0.0
    %9980 = vmatprep.subr.mxu0 0.0
    %9981 = vmatpush2.msra.mxu0 0.0
    %9982 = vmatprep.subr.mxu0 0.0
    %9983 = vmatpush2.msra.mxu0 0.0
    %9984 = vmatprep.mubr.f32.mxu0 0.0
    %9985 = vmatmul.mubr.f32.gmra.mxu0 %v9915
    %v9986 = vpop.f32.mrf.mxu0
    %v9987 = vadd.f32 0.0, %v9986
    %v9988 = vpop.f32.mrf.mxu0
    %9989 = vmatprep.mubr.f32.mxu0 0.0
    %9990 = vmatmul.mubr.f32.gmra.mxu0 %v9918
    %v9991 = vpop.f32.mrf.mxu0
    %v9992 = vadd.f32 0.0, %v9991
    %v9993 = vpop.f32.mrf.mxu0
    %9994 = vdwg.mxu0
    %v9996 = vsel %vm5853, %v9987, 0
    %v9999 = vsel %vm5853, %v9992, 0
    %10001 = vmatprep.subr.mxu0 0.0
    %10002 = vmatpush1.msra.mxu0 0.0
    %10003 = vmatprep.subr.mxu0 0.0
    %10004 = vmatpush1.msra.mxu0 0.0
    %10005 = vmatprep.subr.mxu0 0.0
    %10006 = vmatpush1.msra.mxu0 0.0
    %10007 = vmatprep.subr.mxu0 0.0
    %10008 = vmatpush1.msra.mxu0 0.0
    %10009 = vmatprep.subr.mxu0 0.0
    %10010 = vmatpush1.msra.mxu0 0.0
    %10011 = vmatprep.subr.mxu0 0.0
    %10012 = vmatpush1.msra.mxu0 0.0
    %10013 = vmatprep.subr.mxu0 0.0
    %10014 = vmatpush1.msra.mxu0 0.0
    %10015 = vmatprep.subr.mxu0 0.0
    %10016 = vmatpush1.msra.mxu0 0.0
    %10017 = vmatprep.subr.mxu0 0.0
    %10018 = vmatpush1.msra.mxu0 0.0
    %10019 = vmatprep.subr.mxu0 0.0
    %10020 = vmatpush1.msra.mxu0 0.0
    %10021 = vmatprep.subr.mxu0 0.0
    %10022 = vmatpush1.msra.mxu0 0.0
    %10023 = vmatprep.subr.mxu0 0.0
    %10024 = vmatpush1.msra.mxu0 0.0
    %10025 = vmatprep.subr.mxu0 0.0
    %10026 = vmatpush1.msra.mxu0 0.0
    %10027 = vmatprep.subr.mxu0 0.0
    %10028 = vmatpush1.msra.mxu0 0.0
    %10029 = vmatprep.subr.mxu0 0.0
    %10030 = vmatpush1.msra.mxu0 0.0
    %10031 = vmatprep.subr.mxu0 0.0
    %10032 = vmatpush1.msra.mxu0 %v9221
    %10033 = vmatprep.subr.mxu0 0.0
    %10034 = vmatpush2.msra.mxu0 0.0
    %10035 = vmatprep.subr.mxu0 0.0
    %10036 = vmatpush2.msra.mxu0 0.0
    %10037 = vmatprep.subr.mxu0 0.0
    %10038 = vmatpush2.msra.mxu0 0.0
    %10039 = vmatprep.subr.mxu0 0.0
    %10040 = vmatpush2.msra.mxu0 0.0
    %10041 = vmatprep.subr.mxu0 0.0
    %10042 = vmatpush2.msra.mxu0 0.0
    %10043 = vmatprep.subr.mxu0 0.0
    %10044 = vmatpush2.msra.mxu0 0.0
    %10045 = vmatprep.subr.mxu0 0.0
    %10046 = vmatpush2.msra.mxu0 0.0
    %10047 = vmatprep.subr.mxu0 0.0
    %10048 = vmatpush2.msra.mxu0 0.0
    %10049 = vmatprep.subr.mxu0 0.0
    %10050 = vmatpush2.msra.mxu0 0.0
    %10051 = vmatprep.subr.mxu0 0.0
    %10052 = vmatpush2.msra.mxu0 0.0
    %10053 = vmatprep.subr.mxu0 0.0
    %10054 = vmatpush2.msra.mxu0 0.0
    %10055 = vmatprep.subr.mxu0 0.0
    %10056 = vmatpush2.msra.mxu0 0.0
    %10057 = vmatprep.subr.mxu0 0.0
    %10058 = vmatpush2.msra.mxu0 0.0
    %10059 = vmatprep.subr.mxu0 0.0
    %10060 = vmatpush2.msra.mxu0 0.0
    %10061 = vmatprep.subr.mxu0 0.0
    %10062 = vmatpush2.msra.mxu0 0.0
    %10063 = vmatprep.subr.mxu0 0.0
    %10064 = vmatpush2.msra.mxu0 0.0
    %10065 = vmatprep.mubr.f32.mxu0 0.0
    %10066 = vmatmul.mubr.f32.gmra.mxu0 %v9996
    %v10067 = vpop.f32.mrf.mxu0
    %v10068 = vadd.f32 0.0, %v10067
    %v10069 = vpop.f32.mrf.mxu0
    %10070 = vmatprep.mubr.f32.mxu0 0.0
    %10071 = vmatmul.mubr.f32.gmra.mxu0 %v9999
    %v10072 = vpop.f32.mrf.mxu0
    %v10073 = vadd.f32 0.0, %v10072
    %v10074 = vpop.f32.mrf.mxu0
    %10075 = vdwg.mxu0
    %v10076 = vadd.f32 %v9783, %v10068
    %v10077 = vadd.f32 %v9788, %v10073
    %10078 = vrot.lane.b32.xlu0 %v9210, 104
    %v10079 = vpop.permute.xlu0 %10078
    %10080 = vrot.lane.b32.xlu0 %v9215, 104
    %v10081 = vpop.permute.xlu0 %10080
    %10082 = vrot.lane.b32.xlu0 %v9210, 72
    %v10083 = vpop.permute.xlu0 %10082
    %10084 = vrot.lane.b32.xlu0 %v9215, 72
    %v10085 = vpop.permute.xlu0 %10084
    %v10086 = vsel %vm5853, %v10079, 0
    %v10088 = vsel %vm5853, %v10081, 0
    %v10090 = vsel %vm5853, %v10083, 0
    %v10092 = vsel %vm5853, %v10085, 0
    %10094 = vmatprep.subr.mxu0 0.0
    %10095 = vmatpush1.xpose.msra.mxu0 0.0
    %10096 = vmatprep.subr.mxu0 0.0
    %10097 = vmatpush1.xpose.msra.mxu0 0.0
    %10098 = vmatprep.subr.mxu0 0.0
    %10099 = vmatpush1.xpose.msra.mxu0 0.0
    %10100 = vmatprep.subr.mxu0 0.0
    %10101 = vmatpush1.xpose.msra.mxu0 0.0
    %10102 = vmatprep.subr.mxu0 0.0
    %10103 = vmatpush1.xpose.msra.mxu0 0.0
    %10104 = vmatprep.subr.mxu0 0.0
    %10105 = vmatpush1.xpose.msra.mxu0 0.0
    %10106 = vmatprep.subr.mxu0 0.0
    %10107 = vmatpush1.xpose.msra.mxu0 0.0
    %10108 = vmatprep.subr.mxu0 0.0
    %10109 = vmatpush1.xpose.msra.mxu0 0.0
    %10110 = vmatprep.subr.mxu0 0.0
    %10111 = vmatpush1.xpose.msra.mxu0 0.0
    %10112 = vmatprep.subr.mxu0 0.0
    %10113 = vmatpush1.xpose.msra.mxu0 0.0
    %10114 = vmatprep.subr.mxu0 0.0
    %10115 = vmatpush1.xpose.msra.mxu0 0.0
    %10116 = vmatprep.subr.mxu0 0.0
    %10117 = vmatpush1.xpose.msra.mxu0 0.0
    %10118 = vmatprep.subr.mxu0 0.0
    %10119 = vmatpush1.xpose.msra.mxu0 0.0
    %10120 = vmatprep.subr.mxu0 0.0
    %10121 = vmatpush1.xpose.msra.mxu0 0.0
    %10122 = vmatprep.subr.mxu0 0.0
    %10123 = vmatpush1.xpose.msra.mxu0 %v10092
    %10124 = vmatprep.subr.mxu0 0.0
    %10125 = vmatpush1.xpose.msra.mxu0 %v10090
    %10126 = vmatprep.subr.mxu0 0.0
    %10127 = vmatpush2.xpose.msra.mxu0 0.0
    %10128 = vmatprep.subr.mxu0 0.0
    %10129 = vmatpush2.xpose.msra.mxu0 0.0
    %10130 = vmatprep.subr.mxu0 0.0
    %10131 = vmatpush2.xpose.msra.mxu0 0.0
    %10132 = vmatprep.subr.mxu0 0.0
    %10133 = vmatpush2.xpose.msra.mxu0 0.0
    %10134 = vmatprep.subr.mxu0 0.0
    %10135 = vmatpush2.xpose.msra.mxu0 0.0
    %10136 = vmatprep.subr.mxu0 0.0
    %10137 = vmatpush2.xpose.msra.mxu0 0.0
    %10138 = vmatprep.subr.mxu0 0.0
    %10139 = vmatpush2.xpose.msra.mxu0 0.0
    %10140 = vmatprep.subr.mxu0 0.0
    %10141 = vmatpush2.xpose.msra.mxu0 0.0
    %10142 = vmatprep.subr.mxu0 0.0
    %10143 = vmatpush2.xpose.msra.mxu0 0.0
    %10144 = vmatprep.subr.mxu0 0.0
    %10145 = vmatpush2.xpose.msra.mxu0 0.0
    %10146 = vmatprep.subr.mxu0 0.0
    %10147 = vmatpush2.xpose.msra.mxu0 0.0
    %10148 = vmatprep.subr.mxu0 0.0
    %10149 = vmatpush2.xpose.msra.mxu0 0.0
    %10150 = vmatprep.subr.mxu0 0.0
    %10151 = vmatpush2.xpose.msra.mxu0 0.0
    %10152 = vmatprep.subr.mxu0 0.0
    %10153 = vmatpush2.xpose.msra.mxu0 0.0
    %10154 = vmatprep.subr.mxu0 0.0
    %10155 = vmatpush2.xpose.msra.mxu0 0.0
    %10156 = vmatprep.subr.mxu0 0.0
    %10157 = vmatpush2.xpose.msra.mxu0 0.0
    %10158 = vmatprep.mubr.f32.mxu0 0.0
    %10159 = vmatmul.mubr.f32.gmra.mxu0 %v10086
    %v10160 = vpop.f32.mrf.mxu0
    %v10161 = vadd.f32 0.0, %v10160
    %v10162 = vpop.f32.mrf.mxu0
    %10163 = vmatprep.mubr.f32.mxu0 0.0
    %10164 = vmatmul.mubr.f32.gmra.mxu0 %v10088
    %v10165 = vpop.f32.mrf.mxu0
    %v10166 = vadd.f32 0.0, %v10165
    %v10167 = vpop.f32.mrf.mxu0
    %10168 = vdwg.mxu0
    %v10169 = vmul.f32 %v10161, 0.35355338
    %v10170 = vmul.f32 %v10166, 0.35355338
    %v10171 = vsel %vm5748, %v10169, -1e+30
    %v10172 = vsel %vm5749, %v10170, -1e+30
    %v10173 = vsel %vm5941, %v10171, -inf
    %10174 = vmax.xlane.f32.xlu0 %v10173
    %v10175 = vpop.xlane.xlu0 %10174
    %v10176 = vsel %vm5941, %v10172, -inf
    %10177 = vmax.xlane.f32.xlu0 %v10176
    %v10178 = vpop.xlane.xlu0 %10177
    %v10179 = vsub.f32 %v10171, %v10175
    %v10180 = vsub.f32 %v10172, %v10178
    %v10181 = vmul.f32 %v10179, 1.442695
    %v10182 = vpow.pop %v10181
    %v10183 = vmul.f32 %v10180, 1.442695
    %v10184 = vpow.pop %v10183
    %v10185 = vsel %vm5941, %v10182, 0.0
    %10186 = vadd.xlane.f32.xlu0 %v10185
    %v10187 = vpop.xlane.xlu0 %10186
    %v10188 = vsel %vm5941, %v10184, 0.0
    %10189 = vadd.xlane.f32.xlu0 %v10188
    %v10190 = vpop.xlane.xlu0 %10189
    %v10191 = vrcp.pop %v10187
    %v10192 = vrcp.pop %v10190
    %v10193 = vmul.f32 %v10182, %v10191
    %v10194 = vmul.f32 %v10184, %v10192
    %10195 = vrot.lane.b32.xlu0 %v9210, 40
    %v10196 = vpop.permute.xlu0 %10195
    %10197 = vrot.lane.b32.xlu0 %v9215, 40
    %v10198 = vpop.permute.xlu0 %10197
    %v10202 = vsel %vm5941, %v10193, 0
    %v10205 = vsel %vm5941, %v10194, 0
    %10207 = vmatprep.subr.mxu0 0.0
    %10208 = vmatpush1.msra.mxu0 0.0
    %10209 = vmatprep.subr.mxu0 0.0
    %10210 = vmatpush1.msra.mxu0 0.0
    %10211 = vmatprep.subr.mxu0 0.0
    %10212 = vmatpush1.msra.mxu0 0.0
    %10213 = vmatprep.subr.mxu0 0.0
    %10214 = vmatpush1.msra.mxu0 0.0
    %10215 = vmatprep.subr.mxu0 0.0
    %10216 = vmatpush1.msra.mxu0 0.0
    %10217 = vmatprep.subr.mxu0 0.0
    %10218 = vmatpush1.msra.mxu0 0.0
    %10219 = vmatprep.subr.mxu0 0.0
    %10220 = vmatpush1.msra.mxu0 0.0
    %10221 = vmatprep.subr.mxu0 0.0
    %10222 = vmatpush1.msra.mxu0 0.0
    %10223 = vmatprep.subr.mxu0 0.0
    %10224 = vmatpush1.msra.mxu0 0.0
    %10225 = vmatprep.subr.mxu0 0.0
    %10226 = vmatpush1.msra.mxu0 0.0
    %10227 = vmatprep.subr.mxu0 0.0
    %10228 = vmatpush1.msra.mxu0 0.0
    %10229 = vmatprep.subr.mxu0 0.0
    %10230 = vmatpush1.msra.mxu0 0.0
    %10231 = vmatprep.subr.mxu0 0.0
    %10232 = vmatpush1.msra.mxu0 0.0
    %10233 = vmatprep.subr.mxu0 0.0
    %10234 = vmatpush1.msra.mxu0 0.0
    %10235 = vmatprep.subr.mxu0 0.0
    %10236 = vmatpush1.msra.mxu0 %v10198
    %10237 = vmatprep.subr.mxu0 0.0
    %10238 = vmatpush1.msra.mxu0 %v10196
    %10239 = vmatprep.subr.mxu0 0.0
    %10240 = vmatpush2.msra.mxu0 0.0
    %10241 = vmatprep.subr.mxu0 0.0
    %10242 = vmatpush2.msra.mxu0 0.0
    %10243 = vmatprep.subr.mxu0 0.0
    %10244 = vmatpush2.msra.mxu0 0.0
    %10245 = vmatprep.subr.mxu0 0.0
    %10246 = vmatpush2.msra.mxu0 0.0
    %10247 = vmatprep.subr.mxu0 0.0
    %10248 = vmatpush2.msra.mxu0 0.0
    %10249 = vmatprep.subr.mxu0 0.0
    %10250 = vmatpush2.msra.mxu0 0.0
    %10251 = vmatprep.subr.mxu0 0.0
    %10252 = vmatpush2.msra.mxu0 0.0
    %10253 = vmatprep.subr.mxu0 0.0
    %10254 = vmatpush2.msra.mxu0 0.0
    %10255 = vmatprep.subr.mxu0 0.0
    %10256 = vmatpush2.msra.mxu0 0.0
    %10257 = vmatprep.subr.mxu0 0.0
    %10258 = vmatpush2.msra.mxu0 0.0
    %10259 = vmatprep.subr.mxu0 0.0
    %10260 = vmatpush2.msra.mxu0 0.0
    %10261 = vmatprep.subr.mxu0 0.0
    %10262 = vmatpush2.msra.mxu0 0.0
    %10263 = vmatprep.subr.mxu0 0.0
    %10264 = vmatpush2.msra.mxu0 0.0
    %10265 = vmatprep.subr.mxu0 0.0
    %10266 = vmatpush2.msra.mxu0 0.0
    %10267 = vmatprep.subr.mxu0 0.0
    %10268 = vmatpush2.msra.mxu0 0.0
    %10269 = vmatprep.subr.mxu0 0.0
    %10270 = vmatpush2.msra.mxu0 0.0
    %10271 = vmatprep.mubr.f32.mxu0 0.0
    %10272 = vmatmul.mubr.f32.gmra.mxu0 %v10202
    %v10273 = vpop.f32.mrf.mxu0
    %v10274 = vadd.f32 0.0, %v10273
    %v10275 = vpop.f32.mrf.mxu0
    %10276 = vmatprep.mubr.f32.mxu0 0.0
    %10277 = vmatmul.mubr.f32.gmra.mxu0 %v10205
    %v10278 = vpop.f32.mrf.mxu0
    %v10279 = vadd.f32 0.0, %v10278
    %v10280 = vpop.f32.mrf.mxu0
    %10281 = vdwg.mxu0
    %v10283 = vsel %vm5853, %v10274, 0
    %v10286 = vsel %vm5853, %v10279, 0
    %10288 = vmatprep.subr.mxu0 0.0
    %10289 = vmatpush1.msra.mxu0 0.0
    %10290 = vmatprep.subr.mxu0 0.0
    %10291 = vmatpush1.msra.mxu0 0.0
    %10292 = vmatprep.subr.mxu0 0.0
    %10293 = vmatpush1.msra.mxu0 0.0
    %10294 = vmatprep.subr.mxu0 0.0
    %10295 = vmatpush1.msra.mxu0 0.0
    %10296 = vmatprep.subr.mxu0 0.0
    %10297 = vmatpush1.msra.mxu0 0.0
    %10298 = vmatprep.subr.mxu0 0.0
    %10299 = vmatpush1.msra.mxu0 0.0
    %10300 = vmatprep.subr.mxu0 0.0
    %10301 = vmatpush1.msra.mxu0 0.0
    %10302 = vmatprep.subr.mxu0 0.0
    %10303 = vmatpush1.msra.mxu0 0.0
    %10304 = vmatprep.subr.mxu0 0.0
    %10305 = vmatpush1.msra.mxu0 0.0
    %10306 = vmatprep.subr.mxu0 0.0
    %10307 = vmatpush1.msra.mxu0 0.0
    %10308 = vmatprep.subr.mxu0 0.0
    %10309 = vmatpush1.msra.mxu0 0.0
    %10310 = vmatprep.subr.mxu0 0.0
    %10311 = vmatpush1.msra.mxu0 0.0
    %10312 = vmatprep.subr.mxu0 0.0
    %10313 = vmatpush1.msra.mxu0 0.0
    %10314 = vmatprep.subr.mxu0 0.0
    %10315 = vmatpush1.msra.mxu0 0.0
    %10316 = vmatprep.subr.mxu0 0.0
    %10317 = vmatpush1.msra.mxu0 0.0
    %10318 = vmatprep.subr.mxu0 0.0
    %10319 = vmatpush1.msra.mxu0 %v9222
    %10320 = vmatprep.subr.mxu0 0.0
    %10321 = vmatpush2.msra.mxu0 0.0
    %10322 = vmatprep.subr.mxu0 0.0
    %10323 = vmatpush2.msra.mxu0 0.0
    %10324 = vmatprep.subr.mxu0 0.0
    %10325 = vmatpush2.msra.mxu0 0.0
    %10326 = vmatprep.subr.mxu0 0.0
    %10327 = vmatpush2.msra.mxu0 0.0
    %10328 = vmatprep.subr.mxu0 0.0
    %10329 = vmatpush2.msra.mxu0 0.0
    %10330 = vmatprep.subr.mxu0 0.0
    %10331 = vmatpush2.msra.mxu0 0.0
    %10332 = vmatprep.subr.mxu0 0.0
    %10333 = vmatpush2.msra.mxu0 0.0
    %10334 = vmatprep.subr.mxu0 0.0
    %10335 = vmatpush2.msra.mxu0 0.0
    %10336 = vmatprep.subr.mxu0 0.0
    %10337 = vmatpush2.msra.mxu0 0.0
    %10338 = vmatprep.subr.mxu0 0.0
    %10339 = vmatpush2.msra.mxu0 0.0
    %10340 = vmatprep.subr.mxu0 0.0
    %10341 = vmatpush2.msra.mxu0 0.0
    %10342 = vmatprep.subr.mxu0 0.0
    %10343 = vmatpush2.msra.mxu0 0.0
    %10344 = vmatprep.subr.mxu0 0.0
    %10345 = vmatpush2.msra.mxu0 0.0
    %10346 = vmatprep.subr.mxu0 0.0
    %10347 = vmatpush2.msra.mxu0 0.0
    %10348 = vmatprep.subr.mxu0 0.0
    %10349 = vmatpush2.msra.mxu0 0.0
    %10350 = vmatprep.subr.mxu0 0.0
    %10351 = vmatpush2.msra.mxu0 0.0
    %10352 = vmatprep.mubr.f32.mxu0 0.0
    %10353 = vmatmul.mubr.f32.gmra.mxu0 %v10283
    %v10354 = vpop.f32.mrf.mxu0
    %v10355 = vadd.f32 0.0, %v10354
    %v10356 = vpop.f32.mrf.mxu0
    %10357 = vmatprep.mubr.f32.mxu0 0.0
    %10358 = vmatmul.mubr.f32.gmra.mxu0 %v10286
    %v10359 = vpop.f32.mrf.mxu0
    %v10360 = vadd.f32 0.0, %v10359
    %v10361 = vpop.f32.mrf.mxu0
    %10362 = vdwg.mxu0
    %v10363 = vadd.f32 %v10076, %v10355
    %v10364 = vadd.f32 %v10077, %v10360
    %v10365 = vadd.f32 %v9122, %v10363
    %v10366 = vadd.f32 %v9123, %v10364
    %s10367 = scalar_lea.vmem %s9, 1
    %v10368 = vld [vmem:[%s10367] sm:$0x1]
    %v10370 = vlaneseq
    %v10371 = vshrl.u32 %v10370, 7
    %v10372 = vsub.s32 0, %v10371
    %v10373 = vrot.slane %v10368, %v10372
    %v10375 = vadd.f32 %v10365, %v10373
    %v10376 = vadd.f32 %v10366, %v10373
    %s10377 = scalar_lea.vmem %s10, 1
    %v10378 = vld [vmem:[%s10377] sm:$0x1]
    %s10379 = scalar_lea.vmem %s11, 1
    %v10380 = vld [vmem:[%s10379] sm:$0x1]
    %v10381 = vsel %vm5761, %v10375, 0.0
    %10382 = vadd.xlane.f32.xlu0 %v10381
    %v10383 = vpop.xlane.xlu0 %10382
    %v10384 = vsel %vm5761, %v10376, 0.0
    %10385 = vadd.xlane.f32.xlu0 %v10384
    %v10386 = vpop.xlane.xlu0 %10385
    %v10387 = vmul.f32 %v10383, %v7010
    %v10388 = vmul.f32 %v10386, %v7010
    %v10389 = vsub.f32 %v10375, %v10387
    %v10390 = vsub.f32 %v10376, %v10388
    %v10391 = vmul.f32 %v10389, %v10389
    %v10392 = vmul.f32 %v10390, %v10390
    %v10393 = vsel %vm5761, %v10391, 0.0
    %10394 = vadd.xlane.f32.xlu0 %v10393
    %v10395 = vpop.xlane.xlu0 %10394
    %v10396 = vsel %vm5761, %v10392, 0.0
    %10397 = vadd.xlane.f32.xlu0 %v10396
    %v10398 = vpop.xlane.xlu0 %10397
    %v10399 = vmul.f32 %v10395, %v7010
    %v10400 = vmul.f32 %v10398, %v7010
    %v10401 = vadd.f32 %v10399, 1e-05
    %v10402 = vadd.f32 %v10400, 1e-05
    %v10403 = vrsqrt.pop %v10401
    %v10404 = vrsqrt.pop %v10402
    %v10405 = vmul.f32 %v10389, %v10403
    %v10406 = vmul.f32 %v10390, %v10404
    %v10408 = vlaneseq
    %v10409 = vshrl.u32 %v10408, 7
    %v10410 = vsub.s32 0, %v10409
    %v10411 = vrot.slane %v10378, %v10410
    %v10413 = vmul.f32 %v10405, %v10411
    %v10414 = vmul.f32 %v10406, %v10411
    %v10416 = vlaneseq
    %v10417 = vshrl.u32 %v10416, 7
    %v10418 = vsub.s32 0, %v10417
    %v10419 = vrot.slane %v10380, %v10418
    %v10421 = vadd.f32 %v10413, %v10419
    %v10422 = vadd.f32 %v10414, %v10419
    %v10423 = vpack.c.bf16 %v10422, %v10421
    %s10424 = scalar_lea.vmem %s12, 256
    %v10425 = vld [vmem:[%s10424] sm:$0xff]
    %v10426 = vld [vmem:[%s10424 + $0x8] sm:$0xff]
    %v10427 = vld [vmem:[%s10424 + $0x10] sm:$0xff]
    %v10428 = vld [vmem:[%s10424 + $0x18] sm:$0xff]
    %v10429 = vld [vmem:[%s10424 + $0x20] sm:$0xff]
    %v10430 = vld [vmem:[%s10424 + $0x28] sm:$0xff]
    %v10431 = vld [vmem:[%s10424 + $0x30] sm:$0xff]
    %v10432 = vld [vmem:[%s10424 + $0x38] sm:$0xff]
    %v10433 = vld [vmem:[%s10424 + $0x40] sm:$0xff]
    %v10434 = vld [vmem:[%s10424 + $0x48] sm:$0xff]
    %v10435 = vld [vmem:[%s10424 + $0x50] sm:$0xff]
    %v10436 = vld [vmem:[%s10424 + $0x58] sm:$0xff]
    %v10437 = vld [vmem:[%s10424 + $0x60] sm:$0xff]
    %v10438 = vld [vmem:[%s10424 + $0x68] sm:$0xff]
    %v10439 = vld [vmem:[%s10424 + $0x70] sm:$0xff]
    %v10440 = vld [vmem:[%s10424 + $0x78] sm:$0xff]
    %v10441 = vld [vmem:[%s10424 + $0x80] sm:$0xff]
    %v10442 = vld [vmem:[%s10424 + $0x88] sm:$0xff]
    %v10443 = vld [vmem:[%s10424 + $0x90] sm:$0xff]
    %v10444 = vld [vmem:[%s10424 + $0x98] sm:$0xff]
    %v10445 = vld [vmem:[%s10424 + $0xa0] sm:$0xff]
    %v10446 = vld [vmem:[%s10424 + $0xa8] sm:$0xff]
    %v10447 = vld [vmem:[%s10424 + $0xb0] sm:$0xff]
    %v10448 = vld [vmem:[%s10424 + $0xb8] sm:$0xff]
    %v10449 = vld [vmem:[%s10424 + $0xc0] sm:$0xff]
    %v10450 = vld [vmem:[%s10424 + $0xc8] sm:$0xff]
    %v10451 = vld [vmem:[%s10424 + $0xd0] sm:$0xff]
    %v10452 = vld [vmem:[%s10424 + $0xd8] sm:$0xff]
    %v10453 = vld [vmem:[%s10424 + $0xe0] sm:$0xff]
    %v10454 = vld [vmem:[%s10424 + $0xe8] sm:$0xff]
    %v10455 = vld [vmem:[%s10424 + $0xf0] sm:$0xff]
    %v10456 = vld [vmem:[%s10424 + $0xf8] sm:$0xff]
    %s10457 = scalar_lea.vmem %s13, 16
    %v10458 = vld [vmem:[%s10457] sm:$0xff]
    %v10459 = vld [vmem:[%s10457 + $0x8] sm:$0xff]
    %v10462 = vlaneseq
    %v10463 = vshrl.u32 %v10462, 7
    %v10464 = vsub.s32 0, %v10463
    %v10465 = vrot.slane %v10458, %v10464
    %v10466 = vlaneseq
    %v10467 = vshrl.u32 %v10466, 7
    %v10468 = vsub.s32 1, %v10467
    %v10469 = vrot.slane %v10458, %v10468
    %v10470 = vlaneseq
    %v10471 = vshrl.u32 %v10470, 7
    %v10472 = vsub.s32 2, %v10471
    %v10473 = vrot.slane %v10458, %v10472
    %v10474 = vlaneseq
    %v10475 = vshrl.u32 %v10474, 7
    %v10476 = vsub.s32 3, %v10475
    %v10477 = vrot.slane %v10458, %v10476
    %v10478 = vlaneseq
    %v10479 = vshrl.u32 %v10478, 7
    %v10480 = vsub.s32 4, %v10479
    %v10481 = vrot.slane %v10458, %v10480
    %v10482 = vlaneseq
    %v10483 = vshrl.u32 %v10482, 7
    %v10484 = vsub.s32 5, %v10483
    %v10485 = vrot.slane %v10458, %v10484
    %v10486 = vlaneseq
    %v10487 = vshrl.u32 %v10486, 7
    %v10488 = vsub.s32 6, %v10487
    %v10489 = vrot.slane %v10458, %v10488
    %v10490 = vlaneseq
    %v10491 = vshrl.u32 %v10490, 7
    %v10492 = vsub.s32 7, %v10491
    %v10493 = vrot.slane %v10458, %v10492
    %v10494 = vlaneseq
    %v10495 = vshrl.u32 %v10494, 7
    %v10496 = vsub.s32 0, %v10495
    %v10497 = vrot.slane %v10459, %v10496
    %v10498 = vlaneseq
    %v10499 = vshrl.u32 %v10498, 7
    %v10500 = vsub.s32 1, %v10499
    %v10501 = vrot.slane %v10459, %v10500
    %v10502 = vlaneseq
    %v10503 = vshrl.u32 %v10502, 7
    %v10504 = vsub.s32 2, %v10503
    %v10505 = vrot.slane %v10459, %v10504
    %v10506 = vlaneseq
    %v10507 = vshrl.u32 %v10506, 7
    %v10508 = vsub.s32 3, %v10507
    %v10509 = vrot.slane %v10459, %v10508
    %v10510 = vlaneseq
    %v10511 = vshrl.u32 %v10510, 7
    %v10512 = vsub.s32 4, %v10511
    %v10513 = vrot.slane %v10459, %v10512
    %v10514 = vlaneseq
    %v10515 = vshrl.u32 %v10514, 7
    %v10516 = vsub.s32 5, %v10515
    %v10517 = vrot.slane %v10459, %v10516
    %v10518 = vlaneseq
    %v10519 = vshrl.u32 %v10518, 7
    %v10520 = vsub.s32 6, %v10519
    %v10521 = vrot.slane %v10459, %v10520
    %v10522 = vlaneseq
    %v10523 = vshrl.u32 %v10522, 7
    %v10524 = vsub.s32 7, %v10523
    %v10525 = vrot.slane %v10459, %v10524
    %v10574 = vunpack.c.l.b16 %v10425
    %v10575 = vunpack.c.h.b16 %v10425
    %v10576 = vunpack.c.l.b16 %v10426
    %v10577 = vunpack.c.h.b16 %v10426
    %v10578 = vunpack.c.l.b16 %v10427
    %v10579 = vunpack.c.h.b16 %v10427
    %v10580 = vunpack.c.l.b16 %v10428
    %v10581 = vunpack.c.h.b16 %v10428
    %v10582 = vunpack.c.l.b16 %v10429
    %v10583 = vunpack.c.h.b16 %v10429
    %v10584 = vunpack.c.l.b16 %v10430
    %v10585 = vunpack.c.h.b16 %v10430
    %v10586 = vunpack.c.l.b16 %v10431
    %v10587 = vunpack.c.h.b16 %v10431
    %v10588 = vunpack.c.l.b16 %v10432
    %v10589 = vunpack.c.h.b16 %v10432
    %v10590 = vunpack.c.l.b16 %v10433
    %v10591 = vunpack.c.h.b16 %v10433
    %v10592 = vunpack.c.l.b16 %v10434
    %v10593 = vunpack.c.h.b16 %v10434
    %v10594 = vunpack.c.l.b16 %v10435
    %v10595 = vunpack.c.h.b16 %v10435
    %v10596 = vunpack.c.l.b16 %v10436
    %v10597 = vunpack.c.h.b16 %v10436
    %v10598 = vunpack.c.l.b16 %v10437
    %v10599 = vunpack.c.h.b16 %v10437
    %v10600 = vunpack.c.l.b16 %v10438
    %v10601 = vunpack.c.h.b16 %v10438
    %v10602 = vunpack.c.l.b16 %v10439
    %v10603 = vunpack.c.h.b16 %v10439
    %v10604 = vunpack.c.l.b16 %v10440
    %v10605 = vunpack.c.h.b16 %v10440
    %v10606 = vunpack.c.l.b16 %v10441
    %v10607 = vunpack.c.h.b16 %v10441
    %v10608 = vunpack.c.l.b16 %v10442
    %v10609 = vunpack.c.h.b16 %v10442
    %v10610 = vunpack.c.l.b16 %v10443
    %v10611 = vunpack.c.h.b16 %v10443
    %v10612 = vunpack.c.l.b16 %v10444
    %v10613 = vunpack.c.h.b16 %v10444
    %v10614 = vunpack.c.l.b16 %v10445
    %v10615 = vunpack.c.h.b16 %v10445
    %v10616 = vunpack.c.l.b16 %v10446
    %v10617 = vunpack.c.h.b16 %v10446
    %v10618 = vunpack.c.l.b16 %v10447
    %v10619 = vunpack.c.h.b16 %v10447
    %v10620 = vunpack.c.l.b16 %v10448
    %v10621 = vunpack.c.h.b16 %v10448
    %v10622 = vunpack.c.l.b16 %v10449
    %v10623 = vunpack.c.h.b16 %v10449
    %v10624 = vunpack.c.l.b16 %v10450
    %v10625 = vunpack.c.h.b16 %v10450
    %v10626 = vunpack.c.l.b16 %v10451
    %v10627 = vunpack.c.h.b16 %v10451
    %v10628 = vunpack.c.l.b16 %v10452
    %v10629 = vunpack.c.h.b16 %v10452
    %v10630 = vunpack.c.l.b16 %v10453
    %v10631 = vunpack.c.h.b16 %v10453
    %v10632 = vunpack.c.l.b16 %v10454
    %v10633 = vunpack.c.h.b16 %v10454
    %v10634 = vunpack.c.l.b16 %v10455
    %v10635 = vunpack.c.h.b16 %v10455
    %v10636 = vunpack.c.l.b16 %v10456
    %v10637 = vunpack.c.h.b16 %v10456
    %v10638 = vpack.c.b16 %v10590, %v10574
    %v10639 = vpack.c.b16 %v10591, %v10575
    %v10640 = vpack.c.b16 %v10592, %v10576
    %v10641 = vpack.c.b16 %v10593, %v10577
    %v10642 = vpack.c.b16 %v10594, %v10578
    %v10643 = vpack.c.b16 %v10595, %v10579
    %v10644 = vpack.c.b16 %v10596, %v10580
    %v10645 = vpack.c.b16 %v10597, %v10581
    %v10646 = vpack.c.b16 %v10598, %v10582
    %v10647 = vpack.c.b16 %v10599, %v10583
    %v10648 = vpack.c.b16 %v10600, %v10584
    %v10649 = vpack.c.b16 %v10601, %v10585
    %v10650 = vpack.c.b16 %v10602, %v10586
    %v10651 = vpack.c.b16 %v10603, %v10587
    %v10652 = vpack.c.b16 %v10604, %v10588
    %v10653 = vpack.c.b16 %v10605, %v10589
    %v10654 = vpack.c.b16 %v10622, %v10606
    %v10655 = vpack.c.b16 %v10623, %v10607
    %v10656 = vpack.c.b16 %v10624, %v10608
    %v10657 = vpack.c.b16 %v10625, %v10609
    %v10658 = vpack.c.b16 %v10626, %v10610
    %v10659 = vpack.c.b16 %v10627, %v10611
    %v10660 = vpack.c.b16 %v10628, %v10612
    %v10661 = vpack.c.b16 %v10629, %v10613
    %v10662 = vpack.c.b16 %v10630, %v10614
    %v10663 = vpack.c.b16 %v10631, %v10615
    %v10664 = vpack.c.b16 %v10632, %v10616
    %v10665 = vpack.c.b16 %v10633, %v10617
    %v10666 = vpack.c.b16 %v10634, %v10618
    %v10667 = vpack.c.b16 %v10635, %v10619
    %v10668 = vpack.c.b16 %v10636, %v10620
    %v10669 = vpack.c.b16 %v10637, %v10621
    %v10703 = vsel %vm5761, %v10423, 0
    %10705 = vmatprep.subr.bf16.mxu0 0
    %10706 = vmatpush1.bf16.msra.mxu0 0
    %10707 = vmatprep.subr.bf16.mxu0 0
    %10708 = vmatpush1.bf16.msra.mxu0 0
    %10709 = vmatprep.subr.bf16.mxu0 0
    %10710 = vmatpush1.bf16.msra.mxu0 0
    %10711 = vmatprep.subr.bf16.mxu0 0
    %10712 = vmatpush1.bf16.msra.mxu0 0
    %10713 = vmatprep.subr.bf16.mxu0 0
    %10714 = vmatpush1.bf16.msra.mxu0 0
    %10715 = vmatprep.subr.bf16.mxu0 0
    %10716 = vmatpush1.bf16.msra.mxu0 0
    %10717 = vmatprep.subr.bf16.mxu0 %v10655
    %10718 = vmatpush1.bf16.msra.mxu0 %v10654
    %10719 = vmatprep.subr.bf16.mxu0 %v10639
    %10720 = vmatpush1.bf16.msra.mxu0 %v10638
    %10721 = vmatprep.subr.bf16.mxu0 0
    %10722 = vmatpush2.bf16.msra.mxu0 0
    %10723 = vmatprep.subr.bf16.mxu0 0
    %10724 = vmatpush2.bf16.msra.mxu0 0
    %10725 = vmatprep.subr.bf16.mxu0 0
    %10726 = vmatpush2.bf16.msra.mxu0 0
    %10727 = vmatprep.subr.bf16.mxu0 0
    %10728 = vmatpush2.bf16.msra.mxu0 0
    %10729 = vmatprep.subr.bf16.mxu0 0
    %10730 = vmatpush2.bf16.msra.mxu0 0
    %10731 = vmatprep.subr.bf16.mxu0 0
    %10732 = vmatpush2.bf16.msra.mxu0 0
    %10733 = vmatprep.subr.bf16.mxu0 0
    %10734 = vmatpush2.bf16.msra.mxu0 0
    %10735 = vmatprep.subr.bf16.mxu0 0
    %10736 = vmatpush2.bf16.msra.mxu0 0
    %10737 = vmatprep.mubr.bf16.mxu0 0
    %10738 = vmatmul.mubr.bf16.gmra.mxu0 %v10703
    %v10739 = vpop.f32.mrf.mxu0
    %v10740 = vadd.f32 %v10465, %v10739
    %v10741 = vpop.f32.mrf.mxu0
    %v10742 = vadd.f32 %v10469, %v10741
    %v10743 = vpop.f32.mrf.mxu0
    %v10744 = vadd.f32 %v10465, %v10743
    %v10745 = vpop.f32.mrf.mxu0
    %v10746 = vadd.f32 %v10469, %v10745
    %10747 = vdwg.mxu0
    %10748 = vmatprep.subr.bf16.mxu0 0
    %10749 = vmatpush1.bf16.msra.mxu0 0
    %10750 = vmatprep.subr.bf16.mxu0 0
    %10751 = vmatpush1.bf16.msra.mxu0 0
    %10752 = vmatprep.subr.bf16.mxu0 0
    %10753 = vmatpush1.bf16.msra.mxu0 0
    %10754 = vmatprep.subr.bf16.mxu0 0
    %10755 = vmatpush1.bf16.msra.mxu0 0
    %10756 = vmatprep.subr.bf16.mxu0 0
    %10757 = vmatpush1.bf16.msra.mxu0 0
    %10758 = vmatprep.subr.bf16.mxu0 0
    %10759 = vmatpush1.bf16.msra.mxu0 0
    %10760 = vmatprep.subr.bf16.mxu0 %v10657
    %10761 = vmatpush1.bf16.msra.mxu0 %v10656
    %10762 = vmatprep.subr.bf16.mxu0 %v10641
    %10763 = vmatpush1.bf16.msra.mxu0 %v10640
    %10764 = vmatprep.subr.bf16.mxu0 0
    %10765 = vmatpush2.bf16.msra.mxu0 0
    %10766 = vmatprep.subr.bf16.mxu0 0
    %10767 = vmatpush2.bf16.msra.mxu0 0
    %10768 = vmatprep.subr.bf16.mxu0 0
    %10769 = vmatpush2.bf16.msra.mxu0 0
    %10770 = vmatprep.subr.bf16.mxu0 0
    %10771 = vmatpush2.bf16.msra.mxu0 0
    %10772 = vmatprep.subr.bf16.mxu0 0
    %10773 = vmatpush2.bf16.msra.mxu0 0
    %10774 = vmatprep.subr.bf16.mxu0 0
    %10775 = vmatpush2.bf16.msra.mxu0 0
    %10776 = vmatprep.subr.bf16.mxu0 0
    %10777 = vmatpush2.bf16.msra.mxu0 0
    %10778 = vmatprep.subr.bf16.mxu0 0
    %10779 = vmatpush2.bf16.msra.mxu0 0
    %10780 = vmatprep.mubr.bf16.mxu0 0
    %10781 = vmatmul.mubr.bf16.gmra.mxu0 %v10703
    %v10782 = vpop.f32.mrf.mxu0
    %v10783 = vadd.f32 %v10473, %v10782
    %v10784 = vpop.f32.mrf.mxu0
    %v10785 = vadd.f32 %v10477, %v10784
    %v10786 = vpop.f32.mrf.mxu0
    %v10787 = vadd.f32 %v10473, %v10786
    %v10788 = vpop.f32.mrf.mxu0
    %v10789 = vadd.f32 %v10477, %v10788
    %10790 = vdwg.mxu0
    %10791 = vmatprep.subr.bf16.mxu0 0
    %10792 = vmatpush1.bf16.msra.mxu0 0
    %10793 = vmatprep.subr.bf16.mxu0 0
    %10794 = vmatpush1.bf16.msra.mxu0 0
    %10795 = vmatprep.subr.bf16.mxu0 0
    %10796 = vmatpush1.bf16.msra.mxu0 0
    %10797 = vmatprep.subr.bf16.mxu0 0
    %10798 = vmatpush1.bf16.msra.mxu0 0
    %10799 = vmatprep.subr.bf16.mxu0 0
    %10800 = vmatpush1.bf16.msra.mxu0 0
    %10801 = vmatprep.subr.bf16.mxu0 0
    %10802 = vmatpush1.bf16.msra.mxu0 0
    %10803 = vmatprep.subr.bf16.mxu0 %v10659
    %10804 = vmatpush1.bf16.msra.mxu0 %v10658
    %10805 = vmatprep.subr.bf16.mxu0 %v10643
    %10806 = vmatpush1.bf16.msra.mxu0 %v10642
    %10807 = vmatprep.subr.bf16.mxu0 0
    %10808 = vmatpush2.bf16.msra.mxu0 0
    %10809 = vmatprep.subr.bf16.mxu0 0
    %10810 = vmatpush2.bf16.msra.mxu0 0
    %10811 = vmatprep.subr.bf16.mxu0 0
    %10812 = vmatpush2.bf16.msra.mxu0 0
    %10813 = vmatprep.subr.bf16.mxu0 0
    %10814 = vmatpush2.bf16.msra.mxu0 0
    %10815 = vmatprep.subr.bf16.mxu0 0
    %10816 = vmatpush2.bf16.msra.mxu0 0
    %10817 = vmatprep.subr.bf16.mxu0 0
    %10818 = vmatpush2.bf16.msra.mxu0 0
    %10819 = vmatprep.subr.bf16.mxu0 0
    %10820 = vmatpush2.bf16.msra.mxu0 0
    %10821 = vmatprep.subr.bf16.mxu0 0
    %10822 = vmatpush2.bf16.msra.mxu0 0
    %10823 = vmatprep.mubr.bf16.mxu0 0
    %10824 = vmatmul.mubr.bf16.gmra.mxu0 %v10703
    %v10825 = vpop.f32.mrf.mxu0
    %v10826 = vadd.f32 %v10481, %v10825
    %v10827 = vpop.f32.mrf.mxu0
    %v10828 = vadd.f32 %v10485, %v10827
    %v10829 = vpop.f32.mrf.mxu0
    %v10830 = vadd.f32 %v10481, %v10829
    %v10831 = vpop.f32.mrf.mxu0
    %v10832 = vadd.f32 %v10485, %v10831
    %10833 = vdwg.mxu0
    %10834 = vmatprep.subr.bf16.mxu0 0
    %10835 = vmatpush1.bf16.msra.mxu0 0
    %10836 = vmatprep.subr.bf16.mxu0 0
    %10837 = vmatpush1.bf16.msra.mxu0 0
    %10838 = vmatprep.subr.bf16.mxu0 0
    %10839 = vmatpush1.bf16.msra.mxu0 0
    %10840 = vmatprep.subr.bf16.mxu0 0
    %10841 = vmatpush1.bf16.msra.mxu0 0
    %10842 = vmatprep.subr.bf16.mxu0 0
    %10843 = vmatpush1.bf16.msra.mxu0 0
    %10844 = vmatprep.subr.bf16.mxu0 0
    %10845 = vmatpush1.bf16.msra.mxu0 0
    %10846 = vmatprep.subr.bf16.mxu0 %v10661
    %10847 = vmatpush1.bf16.msra.mxu0 %v10660
    %10848 = vmatprep.subr.bf16.mxu0 %v10645
    %10849 = vmatpush1.bf16.msra.mxu0 %v10644
    %10850 = vmatprep.subr.bf16.mxu0 0
    %10851 = vmatpush2.bf16.msra.mxu0 0
    %10852 = vmatprep.subr.bf16.mxu0 0
    %10853 = vmatpush2.bf16.msra.mxu0 0
    %10854 = vmatprep.subr.bf16.mxu0 0
    %10855 = vmatpush2.bf16.msra.mxu0 0
    %10856 = vmatprep.subr.bf16.mxu0 0
    %10857 = vmatpush2.bf16.msra.mxu0 0
    %10858 = vmatprep.subr.bf16.mxu0 0
    %10859 = vmatpush2.bf16.msra.mxu0 0
    %10860 = vmatprep.subr.bf16.mxu0 0
    %10861 = vmatpush2.bf16.msra.mxu0 0
    %10862 = vmatprep.subr.bf16.mxu0 0
    %10863 = vmatpush2.bf16.msra.mxu0 0
    %10864 = vmatprep.subr.bf16.mxu0 0
    %10865 = vmatpush2.bf16.msra.mxu0 0
    %10866 = vmatprep.mubr.bf16.mxu0 0
    %10867 = vmatmul.mubr.bf16.gmra.mxu0 %v10703
    %v10868 = vpop.f32.mrf.mxu0
    %v10869 = vadd.f32 %v10489, %v10868
    %v10870 = vpop.f32.mrf.mxu0
    %v10871 = vadd.f32 %v10493, %v10870
    %v10872 = vpop.f32.mrf.mxu0
    %v10873 = vadd.f32 %v10489, %v10872
    %v10874 = vpop.f32.mrf.mxu0
    %v10875 = vadd.f32 %v10493, %v10874
    %10876 = vdwg.mxu0
    %10877 = vmatprep.subr.bf16.mxu0 0
    %10878 = vmatpush1.bf16.msra.mxu0 0
    %10879 = vmatprep.subr.bf16.mxu0 0
    %10880 = vmatpush1.bf16.msra.mxu0 0
    %10881 = vmatprep.subr.bf16.mxu0 0
    %10882 = vmatpush1.bf16.msra.mxu0 0
    %10883 = vmatprep.subr.bf16.mxu0 0
    %10884 = vmatpush1.bf16.msra.mxu0 0
    %10885 = vmatprep.subr.bf16.mxu0 0
    %10886 = vmatpush1.bf16.msra.mxu0 0
    %10887 = vmatprep.subr.bf16.mxu0 0
    %10888 = vmatpush1.bf16.msra.mxu0 0
    %10889 = vmatprep.subr.bf16.mxu0 %v10663
    %10890 = vmatpush1.bf16.msra.mxu0 %v10662
    %10891 = vmatprep.subr.bf16.mxu0 %v10647
    %10892 = vmatpush1.bf16.msra.mxu0 %v10646
    %10893 = vmatprep.subr.bf16.mxu0 0
    %10894 = vmatpush2.bf16.msra.mxu0 0
    %10895 = vmatprep.subr.bf16.mxu0 0
    %10896 = vmatpush2.bf16.msra.mxu0 0
    %10897 = vmatprep.subr.bf16.mxu0 0
    %10898 = vmatpush2.bf16.msra.mxu0 0
    %10899 = vmatprep.subr.bf16.mxu0 0
    %10900 = vmatpush2.bf16.msra.mxu0 0
    %10901 = vmatprep.subr.bf16.mxu0 0
    %10902 = vmatpush2.bf16.msra.mxu0 0
    %10903 = vmatprep.subr.bf16.mxu0 0
    %10904 = vmatpush2.bf16.msra.mxu0 0
    %10905 = vmatprep.subr.bf16.mxu0 0
    %10906 = vmatpush2.bf16.msra.mxu0 0
    %10907 = vmatprep.subr.bf16.mxu0 0
    %10908 = vmatpush2.bf16.msra.mxu0 0
    %10909 = vmatprep.mubr.bf16.mxu0 0
    %10910 = vmatmul.mubr.bf16.gmra.mxu0 %v10703
    %v10911 = vpop.f32.mrf.mxu0
    %v10912 = vadd.f32 %v10497, %v10911
    %v10913 = vpop.f32.mrf.mxu0
    %v10914 = vadd.f32 %v10501, %v10913
    %v10915 = vpop.f32.mrf.mxu0
    %v10916 = vadd.f32 %v10497, %v10915
    %v10917 = vpop.f32.mrf.mxu0
    %v10918 = vadd.f32 %v10501, %v10917
    %10919 = vdwg.mxu0
    %10920 = vmatprep.subr.bf16.mxu0 0
    %10921 = vmatpush1.bf16.msra.mxu0 0
    %10922 = vmatprep.subr.bf16.mxu0 0
    %10923 = vmatpush1.bf16.msra.mxu0 0
    %10924 = vmatprep.subr.bf16.mxu0 0
    %10925 = vmatpush1.bf16.msra.mxu0 0
    %10926 = vmatprep.subr.bf16.mxu0 0
    %10927 = vmatpush1.bf16.msra.mxu0 0
    %10928 = vmatprep.subr.bf16.mxu0 0
    %10929 = vmatpush1.bf16.msra.mxu0 0
    %10930 = vmatprep.subr.bf16.mxu0 0
    %10931 = vmatpush1.bf16.msra.mxu0 0
    %10932 = vmatprep.subr.bf16.mxu0 %v10665
    %10933 = vmatpush1.bf16.msra.mxu0 %v10664
    %10934 = vmatprep.subr.bf16.mxu0 %v10649
    %10935 = vmatpush1.bf16.msra.mxu0 %v10648
    %10936 = vmatprep.subr.bf16.mxu0 0
    %10937 = vmatpush2.bf16.msra.mxu0 0
    %10938 = vmatprep.subr.bf16.mxu0 0
    %10939 = vmatpush2.bf16.msra.mxu0 0
    %10940 = vmatprep.subr.bf16.mxu0 0
    %10941 = vmatpush2.bf16.msra.mxu0 0
    %10942 = vmatprep.subr.bf16.mxu0 0
    %10943 = vmatpush2.bf16.msra.mxu0 0
    %10944 = vmatprep.subr.bf16.mxu0 0
    %10945 = vmatpush2.bf16.msra.mxu0 0
    %10946 = vmatprep.subr.bf16.mxu0 0
    %10947 = vmatpush2.bf16.msra.mxu0 0
    %10948 = vmatprep.subr.bf16.mxu0 0
    %10949 = vmatpush2.bf16.msra.mxu0 0
    %10950 = vmatprep.subr.bf16.mxu0 0
    %10951 = vmatpush2.bf16.msra.mxu0 0
    %10952 = vmatprep.mubr.bf16.mxu0 0
    %10953 = vmatmul.mubr.bf16.gmra.mxu0 %v10703
    %v10954 = vpop.f32.mrf.mxu0
    %v10955 = vadd.f32 %v10505, %v10954
    %v10956 = vpop.f32.mrf.mxu0
    %v10957 = vadd.f32 %v10509, %v10956
    %v10958 = vpop.f32.mrf.mxu0
    %v10959 = vadd.f32 %v10505, %v10958
    %v10960 = vpop.f32.mrf.mxu0
    %v10961 = vadd.f32 %v10509, %v10960
    %10962 = vdwg.mxu0
    %10963 = vmatprep.subr.bf16.mxu0 0
    %10964 = vmatpush1.bf16.msra.mxu0 0
    %10965 = vmatprep.subr.bf16.mxu0 0
    %10966 = vmatpush1.bf16.msra.mxu0 0
    %10967 = vmatprep.subr.bf16.mxu0 0
    %10968 = vmatpush1.bf16.msra.mxu0 0
    %10969 = vmatprep.subr.bf16.mxu0 0
    %10970 = vmatpush1.bf16.msra.mxu0 0
    %10971 = vmatprep.subr.bf16.mxu0 0
    %10972 = vmatpush1.bf16.msra.mxu0 0
    %10973 = vmatprep.subr.bf16.mxu0 0
    %10974 = vmatpush1.bf16.msra.mxu0 0
    %10975 = vmatprep.subr.bf16.mxu0 %v10667
    %10976 = vmatpush1.bf16.msra.mxu0 %v10666
    %10977 = vmatprep.subr.bf16.mxu0 %v10651
    %10978 = vmatpush1.bf16.msra.mxu0 %v10650
    %10979 = vmatprep.subr.bf16.mxu0 0
    %10980 = vmatpush2.bf16.msra.mxu0 0
    %10981 = vmatprep.subr.bf16.mxu0 0
    %10982 = vmatpush2.bf16.msra.mxu0 0
    %10983 = vmatprep.subr.bf16.mxu0 0
    %10984 = vmatpush2.bf16.msra.mxu0 0
    %10985 = vmatprep.subr.bf16.mxu0 0
    %10986 = vmatpush2.bf16.msra.mxu0 0
    %10987 = vmatprep.subr.bf16.mxu0 0
    %10988 = vmatpush2.bf16.msra.mxu0 0
    %10989 = vmatprep.subr.bf16.mxu0 0
    %10990 = vmatpush2.bf16.msra.mxu0 0
    %10991 = vmatprep.subr.bf16.mxu0 0
    %10992 = vmatpush2.bf16.msra.mxu0 0
    %10993 = vmatprep.subr.bf16.mxu0 0
    %10994 = vmatpush2.bf16.msra.mxu0 0
    %10995 = vmatprep.mubr.bf16.mxu0 0
    %10996 = vmatmul.mubr.bf16.gmra.mxu0 %v10703
    %v10997 = vpop.f32.mrf.mxu0
    %v10998 = vadd.f32 %v10513, %v10997
    %v10999 = vpop.f32.mrf.mxu0
    %v11000 = vadd.f32 %v10517, %v10999
    %v11001 = vpop.f32.mrf.mxu0
    %v11002 = vadd.f32 %v10513, %v11001
    %v11003 = vpop.f32.mrf.mxu0
    %v11004 = vadd.f32 %v10517, %v11003
    %11005 = vdwg.mxu0
    %11006 = vmatprep.subr.bf16.mxu0 0
    %11007 = vmatpush1.bf16.msra.mxu0 0
    %11008 = vmatprep.subr.bf16.mxu0 0
    %11009 = vmatpush1.bf16.msra.mxu0 0
    %11010 = vmatprep.subr.bf16.mxu0 0
    %11011 = vmatpush1.bf16.msra.mxu0 0
    %11012 = vmatprep.subr.bf16.mxu0 0
    %11013 = vmatpush1.bf16.msra.mxu0 0
    %11014 = vmatprep.subr.bf16.mxu0 0
    %11015 = vmatpush1.bf16.msra.mxu0 0
    %11016 = vmatprep.subr.bf16.mxu0 0
    %11017 = vmatpush1.bf16.msra.mxu0 0
    %11018 = vmatprep.subr.bf16.mxu0 %v10669
    %11019 = vmatpush1.bf16.msra.mxu0 %v10668
    %11020 = vmatprep.subr.bf16.mxu0 %v10653
    %11021 = vmatpush1.bf16.msra.mxu0 %v10652
    %11022 = vmatprep.subr.bf16.mxu0 0
    %11023 = vmatpush2.bf16.msra.mxu0 0
    %11024 = vmatprep.subr.bf16.mxu0 0
    %11025 = vmatpush2.bf16.msra.mxu0 0
    %11026 = vmatprep.subr.bf16.mxu0 0
    %11027 = vmatpush2.bf16.msra.mxu0 0
    %11028 = vmatprep.subr.bf16.mxu0 0
    %11029 = vmatpush2.bf16.msra.mxu0 0
    %11030 = vmatprep.subr.bf16.mxu0 0
    %11031 = vmatpush2.bf16.msra.mxu0 0
    %11032 = vmatprep.subr.bf16.mxu0 0
    %11033 = vmatpush2.bf16.msra.mxu0 0
    %11034 = vmatprep.subr.bf16.mxu0 0
    %11035 = vmatpush2.bf16.msra.mxu0 0
    %11036 = vmatprep.subr.bf16.mxu0 0
    %11037 = vmatpush2.bf16.msra.mxu0 0
    %11038 = vmatprep.mubr.bf16.mxu0 0
    %11039 = vmatmul.mubr.bf16.gmra.mxu0 %v10703
    %v11040 = vpop.f32.mrf.mxu0
    %v11041 = vadd.f32 %v10521, %v11040
    %v11042 = vpop.f32.mrf.mxu0
    %v11043 = vadd.f32 %v10525, %v11042
    %v11044 = vpop.f32.mrf.mxu0
    %v11045 = vadd.f32 %v10521, %v11044
    %v11046 = vpop.f32.mrf.mxu0
    %v11047 = vadd.f32 %v10525, %v11046
    %11048 = vdwg.mxu0
    %v11049 = vmax.f32 %v10740, 0.0
    %v11050 = vmax.f32 %v10742, 0.0
    %v11051 = vmax.f32 %v10783, 0.0
    %v11052 = vmax.f32 %v10785, 0.0
    %v11053 = vmax.f32 %v10826, 0.0
    %v11054 = vmax.f32 %v10828, 0.0
    %v11055 = vmax.f32 %v10869, 0.0
    %v11056 = vmax.f32 %v10871, 0.0
    %v11057 = vmax.f32 %v10912, 0.0
    %v11058 = vmax.f32 %v10914, 0.0
    %v11059 = vmax.f32 %v10955, 0.0
    %v11060 = vmax.f32 %v10957, 0.0
    %v11061 = vmax.f32 %v10998, 0.0
    %v11062 = vmax.f32 %v11000, 0.0
    %v11063 = vmax.f32 %v11041, 0.0
    %v11064 = vmax.f32 %v11043, 0.0
    %v11065 = vmax.f32 %v10744, 0.0
    %v11066 = vmax.f32 %v10746, 0.0
    %v11067 = vmax.f32 %v10787, 0.0
    %v11068 = vmax.f32 %v10789, 0.0
    %v11069 = vmax.f32 %v10830, 0.0
    %v11070 = vmax.f32 %v10832, 0.0
    %v11071 = vmax.f32 %v10873, 0.0
    %v11072 = vmax.f32 %v10875, 0.0
    %v11073 = vmax.f32 %v10916, 0.0
    %v11074 = vmax.f32 %v10918, 0.0
    %v11075 = vmax.f32 %v10959, 0.0
    %v11076 = vmax.f32 %v10961, 0.0
    %v11077 = vmax.f32 %v11002, 0.0
    %v11078 = vmax.f32 %v11004, 0.0
    %v11079 = vmax.f32 %v11045, 0.0
    %v11080 = vmax.f32 %v11047, 0.0
    %v11081 = vpack.c.bf16 %v11065, %v11049
    %v11082 = vpack.c.bf16 %v11066, %v11050
    %v11083 = vpack.c.bf16 %v11067, %v11051
    %v11084 = vpack.c.bf16 %v11068, %v11052
    %v11085 = vpack.c.bf16 %v11069, %v11053
    %v11086 = vpack.c.bf16 %v11070, %v11054
    %v11087 = vpack.c.bf16 %v11071, %v11055
    %v11088 = vpack.c.bf16 %v11072, %v11056
    %v11089 = vpack.c.bf16 %v11073, %v11057
    %v11090 = vpack.c.bf16 %v11074, %v11058
    %v11091 = vpack.c.bf16 %v11075, %v11059
    %v11092 = vpack.c.bf16 %v11076, %v11060
    %v11093 = vpack.c.bf16 %v11077, %v11061
    %v11094 = vpack.c.bf16 %v11078, %v11062
    %v11095 = vpack.c.bf16 %v11079, %v11063
    %v11096 = vpack.c.bf16 %v11080, %v11064
    %s11097 = scalar_lea.vmem %s14, 1024
    %v11098 = vld [vmem:[%s11097] sm:$0xf]
    %v11099 = vld [vmem:[%s11097 + $0x4] sm:$0xf]
    %v11100 = vld [vmem:[%s11097 + $0x8] sm:$0xf]
    %v11101 = vld [vmem:[%s11097 + $0xc] sm:$0xf]
    %v11102 = vld [vmem:[%s11097 + $0x10] sm:$0xf]
    %v11103 = vld [vmem:[%s11097 + $0x14] sm:$0xf]
    %v11104 = vld [vmem:[%s11097 + $0x18] sm:$0xf]
    %v11105 = vld [vmem:[%s11097 + $0x1c] sm:$0xf]
    %v11106 = vld [vmem:[%s11097 + $0x20] sm:$0xf]
    %v11107 = vld [vmem:[%s11097 + $0x24] sm:$0xf]
    %v11108 = vld [vmem:[%s11097 + $0x28] sm:$0xf]
    %v11109 = vld [vmem:[%s11097 + $0x2c] sm:$0xf]
    %v11110 = vld [vmem:[%s11097 + $0x30] sm:$0xf]
    %v11111 = vld [vmem:[%s11097 + $0x34] sm:$0xf]
    %v11112 = vld [vmem:[%s11097 + $0x38] sm:$0xf]
    %v11113 = vld [vmem:[%s11097 + $0x3c] sm:$0xf]
    %v11114 = vld [vmem:[%s11097 + $0x40] sm:$0xf]
    %v11115 = vld [vmem:[%s11097 + $0x44] sm:$0xf]
    %v11116 = vld [vmem:[%s11097 + $0x48] sm:$0xf]
    %v11117 = vld [vmem:[%s11097 + $0x4c] sm:$0xf]
    %v11118 = vld [vmem:[%s11097 + $0x50] sm:$0xf]
    %v11119 = vld [vmem:[%s11097 + $0x54] sm:$0xf]
    %v11120 = vld [vmem:[%s11097 + $0x58] sm:$0xf]
    %v11121 = vld [vmem:[%s11097 + $0x5c] sm:$0xf]
    %v11122 = vld [vmem:[%s11097 + $0x60] sm:$0xf]
    %v11123 = vld [vmem:[%s11097 + $0x64] sm:$0xf]
    %v11124 = vld [vmem:[%s11097 + $0x68] sm:$0xf]
    %v11125 = vld [vmem:[%s11097 + $0x6c] sm:$0xf]
    %v11126 = vld [vmem:[%s11097 + $0x70] sm:$0xf]
    %v11127 = vld [vmem:[%s11097 + $0x74] sm:$0xf]
    %v11128 = vld [vmem:[%s11097 + $0x78] sm:$0xf]
    %v11129 = vld [vmem:[%s11097 + $0x7c] sm:$0xf]
    %v11130 = vld [vmem:[%s11097 + $0x80] sm:$0xf]
    %v11131 = vld [vmem:[%s11097 + $0x84] sm:$0xf]
    %v11132 = vld [vmem:[%s11097 + $0x88] sm:$0xf]
    %v11133 = vld [vmem:[%s11097 + $0x8c] sm:$0xf]
    %v11134 = vld [vmem:[%s11097 + $0x90] sm:$0xf]
    %v11135 = vld [vmem:[%s11097 + $0x94] sm:$0xf]
    %v11136 = vld [vmem:[%s11097 + $0x98] sm:$0xf]
    %v11137 = vld [vmem:[%s11097 + $0x9c] sm:$0xf]
    %v11138 = vld [vmem:[%s11097 + $0xa0] sm:$0xf]
    %v11139 = vld [vmem:[%s11097 + $0xa4] sm:$0xf]
    %v11140 = vld [vmem:[%s11097 + $0xa8] sm:$0xf]
    %v11141 = vld [vmem:[%s11097 + $0xac] sm:$0xf]
    %v11142 = vld [vmem:[%s11097 + $0xb0] sm:$0xf]
    %v11143 = vld [vmem:[%s11097 + $0xb4] sm:$0xf]
    %v11144 = vld [vmem:[%s11097 + $0xb8] sm:$0xf]
    %v11145 = vld [vmem:[%s11097 + $0xbc] sm:$0xf]
    %v11146 = vld [vmem:[%s11097 + $0xc0] sm:$0xf]
    %v11147 = vld [vmem:[%s11097 + $0xc4] sm:$0xf]
    %v11148 = vld [vmem:[%s11097 + $0xc8] sm:$0xf]
    %v11149 = vld [vmem:[%s11097 + $0xcc] sm:$0xf]
    %v11150 = vld [vmem:[%s11097 + $0xd0] sm:$0xf]
    %v11151 = vld [vmem:[%s11097 + $0xd4] sm:$0xf]
    %v11152 = vld [vmem:[%s11097 + $0xd8] sm:$0xf]
    %v11153 = vld [vmem:[%s11097 + $0xdc] sm:$0xf]
    %v11154 = vld [vmem:[%s11097 + $0xe0] sm:$0xf]
    %v11155 = vld [vmem:[%s11097 + $0xe4] sm:$0xf]
    %v11156 = vld [vmem:[%s11097 + $0xe8] sm:$0xf]
    %v11157 = vld [vmem:[%s11097 + $0xec] sm:$0xf]
    %v11158 = vld [vmem:[%s11097 + $0xf0] sm:$0xf]
    %v11159 = vld [vmem:[%s11097 + $0xf4] sm:$0xf]
    %v11160 = vld [vmem:[%s11097 + $0xf8] sm:$0xf]
    %v11161 = vld [vmem:[%s11097 + $0xfc] sm:$0xf]
    %v11162 = vld [vmem:[%s11097 + $0x100] sm:$0xf]
    %v11163 = vld [vmem:[%s11097 + $0x104] sm:$0xf]
    %v11164 = vld [vmem:[%s11097 + $0x108] sm:$0xf]
    %v11165 = vld [vmem:[%s11097 + $0x10c] sm:$0xf]
    %v11166 = vld [vmem:[%s11097 + $0x110] sm:$0xf]
    %v11167 = vld [vmem:[%s11097 + $0x114] sm:$0xf]
    %v11168 = vld [vmem:[%s11097 + $0x118] sm:$0xf]
    %v11169 = vld [vmem:[%s11097 + $0x11c] sm:$0xf]
    %v11170 = vld [vmem:[%s11097 + $0x120] sm:$0xf]
    %v11171 = vld [vmem:[%s11097 + $0x124] sm:$0xf]
    %v11172 = vld [vmem:[%s11097 + $0x128] sm:$0xf]
    %v11173 = vld [vmem:[%s11097 + $0x12c] sm:$0xf]
    %v11174 = vld [vmem:[%s11097 + $0x130] sm:$0xf]
    %v11175 = vld [vmem:[%s11097 + $0x134] sm:$0xf]
    %v11176 = vld [vmem:[%s11097 + $0x138] sm:$0xf]
    %v11177 = vld [vmem:[%s11097 + $0x13c] sm:$0xf]
    %v11178 = vld [vmem:[%s11097 + $0x140] sm:$0xf]
    %v11179 = vld [vmem:[%s11097 + $0x144] sm:$0xf]
    %v11180 = vld [vmem:[%s11097 + $0x148] sm:$0xf]
    %v11181 = vld [vmem:[%s11097 + $0x14c] sm:$0xf]
    %v11182 = vld [vmem:[%s11097 + $0x150] sm:$0xf]
    %v11183 = vld [vmem:[%s11097 + $0x154] sm:$0xf]
    %v11184 = vld [vmem:[%s11097 + $0x158] sm:$0xf]
    %v11185 = vld [vmem:[%s11097 + $0x15c] sm:$0xf]
    %v11186 = vld [vmem:[%s11097 + $0x160] sm:$0xf]
    %v11187 = vld [vmem:[%s11097 + $0x164] sm:$0xf]
    %v11188 = vld [vmem:[%s11097 + $0x168] sm:$0xf]
    %v11189 = vld [vmem:[%s11097 + $0x16c] sm:$0xf]
    %v11190 = vld [vmem:[%s11097 + $0x170] sm:$0xf]
    %v11191 = vld [vmem:[%s11097 + $0x174] sm:$0xf]
    %v11192 = vld [vmem:[%s11097 + $0x178] sm:$0xf]
    %v11193 = vld [vmem:[%s11097 + $0x17c] sm:$0xf]
    %v11194 = vld [vmem:[%s11097 + $0x180] sm:$0xf]
    %v11195 = vld [vmem:[%s11097 + $0x184] sm:$0xf]
    %v11196 = vld [vmem:[%s11097 + $0x188] sm:$0xf]
    %v11197 = vld [vmem:[%s11097 + $0x18c] sm:$0xf]
    %v11198 = vld [vmem:[%s11097 + $0x190] sm:$0xf]
    %v11199 = vld [vmem:[%s11097 + $0x194] sm:$0xf]
    %v11200 = vld [vmem:[%s11097 + $0x198] sm:$0xf]
    %v11201 = vld [vmem:[%s11097 + $0x19c] sm:$0xf]
    %v11202 = vld [vmem:[%s11097 + $0x1a0] sm:$0xf]
    %v11203 = vld [vmem:[%s11097 + $0x1a4] sm:$0xf]
    %v11204 = vld [vmem:[%s11097 + $0x1a8] sm:$0xf]
    %v11205 = vld [vmem:[%s11097 + $0x1ac] sm:$0xf]
    %v11206 = vld [vmem:[%s11097 + $0x1b0] sm:$0xf]
    %v11207 = vld [vmem:[%s11097 + $0x1b4] sm:$0xf]
    %v11208 = vld [vmem:[%s11097 + $0x1b8] sm:$0xf]
    %v11209 = vld [vmem:[%s11097 + $0x1bc] sm:$0xf]
    %v11210 = vld [vmem:[%s11097 + $0x1c0] sm:$0xf]
    %v11211 = vld [vmem:[%s11097 + $0x1c4] sm:$0xf]
    %v11212 = vld [vmem:[%s11097 + $0x1c8] sm:$0xf]
    %v11213 = vld [vmem:[%s11097 + $0x1cc] sm:$0xf]
    %v11214 = vld [vmem:[%s11097 + $0x1d0] sm:$0xf]
    %v11215 = vld [vmem:[%s11097 + $0x1d4] sm:$0xf]
    %v11216 = vld [vmem:[%s11097 + $0x1d8] sm:$0xf]
    %v11217 = vld [vmem:[%s11097 + $0x1dc] sm:$0xf]
    %v11218 = vld [vmem:[%s11097 + $0x1e0] sm:$0xf]
    %v11219 = vld [vmem:[%s11097 + $0x1e4] sm:$0xf]
    %v11220 = vld [vmem:[%s11097 + $0x1e8] sm:$0xf]
    %v11221 = vld [vmem:[%s11097 + $0x1ec] sm:$0xf]
    %v11222 = vld [vmem:[%s11097 + $0x1f0] sm:$0xf]
    %v11223 = vld [vmem:[%s11097 + $0x1f4] sm:$0xf]
    %v11224 = vld [vmem:[%s11097 + $0x1f8] sm:$0xf]
    %v11225 = vld [vmem:[%s11097 + $0x1fc] sm:$0xf]
    %v11226 = vld [vmem:[%s11097 + $0x200] sm:$0xf]
    %v11227 = vld [vmem:[%s11097 + $0x204] sm:$0xf]
    %v11228 = vld [vmem:[%s11097 + $0x208] sm:$0xf]
    %v11229 = vld [vmem:[%s11097 + $0x20c] sm:$0xf]
    %v11230 = vld [vmem:[%s11097 + $0x210] sm:$0xf]
    %v11231 = vld [vmem:[%s11097 + $0x214] sm:$0xf]
    %v11232 = vld [vmem:[%s11097 + $0x218] sm:$0xf]
    %v11233 = vld [vmem:[%s11097 + $0x21c] sm:$0xf]
    %v11234 = vld [vmem:[%s11097 + $0x220] sm:$0xf]
    %v11235 = vld [vmem:[%s11097 + $0x224] sm:$0xf]
    %v11236 = vld [vmem:[%s11097 + $0x228] sm:$0xf]
    %v11237 = vld [vmem:[%s11097 + $0x22c] sm:$0xf]
    %v11238 = vld [vmem:[%s11097 + $0x230] sm:$0xf]
    %v11239 = vld [vmem:[%s11097 + $0x234] sm:$0xf]
    %v11240 = vld [vmem:[%s11097 + $0x238] sm:$0xf]
    %v11241 = vld [vmem:[%s11097 + $0x23c] sm:$0xf]
    %v11242 = vld [vmem:[%s11097 + $0x240] sm:$0xf]
    %v11243 = vld [vmem:[%s11097 + $0x244] sm:$0xf]
    %v11244 = vld [vmem:[%s11097 + $0x248] sm:$0xf]
    %v11245 = vld [vmem:[%s11097 + $0x24c] sm:$0xf]
    %v11246 = vld [vmem:[%s11097 + $0x250] sm:$0xf]
    %v11247 = vld [vmem:[%s11097 + $0x254] sm:$0xf]
    %v11248 = vld [vmem:[%s11097 + $0x258] sm:$0xf]
    %v11249 = vld [vmem:[%s11097 + $0x25c] sm:$0xf]
    %v11250 = vld [vmem:[%s11097 + $0x260] sm:$0xf]
    %v11251 = vld [vmem:[%s11097 + $0x264] sm:$0xf]
    %v11252 = vld [vmem:[%s11097 + $0x268] sm:$0xf]
    %v11253 = vld [vmem:[%s11097 + $0x26c] sm:$0xf]
    %v11254 = vld [vmem:[%s11097 + $0x270] sm:$0xf]
    %v11255 = vld [vmem:[%s11097 + $0x274] sm:$0xf]
    %v11256 = vld [vmem:[%s11097 + $0x278] sm:$0xf]
    %v11257 = vld [vmem:[%s11097 + $0x27c] sm:$0xf]
    %v11258 = vld [vmem:[%s11097 + $0x280] sm:$0xf]
    %v11259 = vld [vmem:[%s11097 + $0x284] sm:$0xf]
    %v11260 = vld [vmem:[%s11097 + $0x288] sm:$0xf]
    %v11261 = vld [vmem:[%s11097 + $0x28c] sm:$0xf]
    %v11262 = vld [vmem:[%s11097 + $0x290] sm:$0xf]
    %v11263 = vld [vmem:[%s11097 + $0x294] sm:$0xf]
    %v11264 = vld [vmem:[%s11097 + $0x298] sm:$0xf]
    %v11265 = vld [vmem:[%s11097 + $0x29c] sm:$0xf]
    %v11266 = vld [vmem:[%s11097 + $0x2a0] sm:$0xf]
    %v11267 = vld [vmem:[%s11097 + $0x2a4] sm:$0xf]
    %v11268 = vld [vmem:[%s11097 + $0x2a8] sm:$0xf]
    %v11269 = vld [vmem:[%s11097 + $0x2ac] sm:$0xf]
    %v11270 = vld [vmem:[%s11097 + $0x2b0] sm:$0xf]
    %v11271 = vld [vmem:[%s11097 + $0x2b4] sm:$0xf]
    %v11272 = vld [vmem:[%s11097 + $0x2b8] sm:$0xf]
    %v11273 = vld [vmem:[%s11097 + $0x2bc] sm:$0xf]
    %v11274 = vld [vmem:[%s11097 + $0x2c0] sm:$0xf]
    %v11275 = vld [vmem:[%s11097 + $0x2c4] sm:$0xf]
    %v11276 = vld [vmem:[%s11097 + $0x2c8] sm:$0xf]
    %v11277 = vld [vmem:[%s11097 + $0x2cc] sm:$0xf]
    %v11278 = vld [vmem:[%s11097 + $0x2d0] sm:$0xf]
    %v11279 = vld [vmem:[%s11097 + $0x2d4] sm:$0xf]
    %v11280 = vld [vmem:[%s11097 + $0x2d8] sm:$0xf]
    %v11281 = vld [vmem:[%s11097 + $0x2dc] sm:$0xf]
    %v11282 = vld [vmem:[%s11097 + $0x2e0] sm:$0xf]
    %v11283 = vld [vmem:[%s11097 + $0x2e4] sm:$0xf]
    %v11284 = vld [vmem:[%s11097 + $0x2e8] sm:$0xf]
    %v11285 = vld [vmem:[%s11097 + $0x2ec] sm:$0xf]
    %v11286 = vld [vmem:[%s11097 + $0x2f0] sm:$0xf]
    %v11287 = vld [vmem:[%s11097 + $0x2f4] sm:$0xf]
    %v11288 = vld [vmem:[%s11097 + $0x2f8] sm:$0xf]
    %v11289 = vld [vmem:[%s11097 + $0x2fc] sm:$0xf]
    %v11290 = vld [vmem:[%s11097 + $0x300] sm:$0xf]
    %v11291 = vld [vmem:[%s11097 + $0x304] sm:$0xf]
    %v11292 = vld [vmem:[%s11097 + $0x308] sm:$0xf]
    %v11293 = vld [vmem:[%s11097 + $0x30c] sm:$0xf]
    %v11294 = vld [vmem:[%s11097 + $0x310] sm:$0xf]
    %v11295 = vld [vmem:[%s11097 + $0x314] sm:$0xf]
    %v11296 = vld [vmem:[%s11097 + $0x318] sm:$0xf]
    %v11297 = vld [vmem:[%s11097 + $0x31c] sm:$0xf]
    %v11298 = vld [vmem:[%s11097 + $0x320] sm:$0xf]
    %v11299 = vld [vmem:[%s11097 + $0x324] sm:$0xf]
    %v11300 = vld [vmem:[%s11097 + $0x328] sm:$0xf]
    %v11301 = vld [vmem:[%s11097 + $0x32c] sm:$0xf]
    %v11302 = vld [vmem:[%s11097 + $0x330] sm:$0xf]
    %v11303 = vld [vmem:[%s11097 + $0x334] sm:$0xf]
    %v11304 = vld [vmem:[%s11097 + $0x338] sm:$0xf]
    %v11305 = vld [vmem:[%s11097 + $0x33c] sm:$0xf]
    %v11306 = vld [vmem:[%s11097 + $0x340] sm:$0xf]
    %v11307 = vld [vmem:[%s11097 + $0x344] sm:$0xf]
    %v11308 = vld [vmem:[%s11097 + $0x348] sm:$0xf]
    %v11309 = vld [vmem:[%s11097 + $0x34c] sm:$0xf]
    %v11310 = vld [vmem:[%s11097 + $0x350] sm:$0xf]
    %v11311 = vld [vmem:[%s11097 + $0x354] sm:$0xf]
    %v11312 = vld [vmem:[%s11097 + $0x358] sm:$0xf]
    %v11313 = vld [vmem:[%s11097 + $0x35c] sm:$0xf]
    %v11314 = vld [vmem:[%s11097 + $0x360] sm:$0xf]
    %v11315 = vld [vmem:[%s11097 + $0x364] sm:$0xf]
    %v11316 = vld [vmem:[%s11097 + $0x368] sm:$0xf]
    %v11317 = vld [vmem:[%s11097 + $0x36c] sm:$0xf]
    %v11318 = vld [vmem:[%s11097 + $0x370] sm:$0xf]
    %v11319 = vld [vmem:[%s11097 + $0x374] sm:$0xf]
    %v11320 = vld [vmem:[%s11097 + $0x378] sm:$0xf]
    %v11321 = vld [vmem:[%s11097 + $0x37c] sm:$0xf]
    %v11322 = vld [vmem:[%s11097 + $0x380] sm:$0xf]
    %v11323 = vld [vmem:[%s11097 + $0x384] sm:$0xf]
    %v11324 = vld [vmem:[%s11097 + $0x388] sm:$0xf]
    %v11325 = vld [vmem:[%s11097 + $0x38c] sm:$0xf]
    %v11326 = vld [vmem:[%s11097 + $0x390] sm:$0xf]
    %v11327 = vld [vmem:[%s11097 + $0x394] sm:$0xf]
    %v11328 = vld [vmem:[%s11097 + $0x398] sm:$0xf]
    %v11329 = vld [vmem:[%s11097 + $0x39c] sm:$0xf]
    %v11330 = vld [vmem:[%s11097 + $0x3a0] sm:$0xf]
    %v11331 = vld [vmem:[%s11097 + $0x3a4] sm:$0xf]
    %v11332 = vld [vmem:[%s11097 + $0x3a8] sm:$0xf]
    %v11333 = vld [vmem:[%s11097 + $0x3ac] sm:$0xf]
    %v11334 = vld [vmem:[%s11097 + $0x3b0] sm:$0xf]
    %v11335 = vld [vmem:[%s11097 + $0x3b4] sm:$0xf]
    %v11336 = vld [vmem:[%s11097 + $0x3b8] sm:$0xf]
    %v11337 = vld [vmem:[%s11097 + $0x3bc] sm:$0xf]
    %v11338 = vld [vmem:[%s11097 + $0x3c0] sm:$0xf]
    %v11339 = vld [vmem:[%s11097 + $0x3c4] sm:$0xf]
    %v11340 = vld [vmem:[%s11097 + $0x3c8] sm:$0xf]
    %v11341 = vld [vmem:[%s11097 + $0x3cc] sm:$0xf]
    %v11342 = vld [vmem:[%s11097 + $0x3d0] sm:$0xf]
    %v11343 = vld [vmem:[%s11097 + $0x3d4] sm:$0xf]
    %v11344 = vld [vmem:[%s11097 + $0x3d8] sm:$0xf]
    %v11345 = vld [vmem:[%s11097 + $0x3dc] sm:$0xf]
    %v11346 = vld [vmem:[%s11097 + $0x3e0] sm:$0xf]
    %v11347 = vld [vmem:[%s11097 + $0x3e4] sm:$0xf]
    %v11348 = vld [vmem:[%s11097 + $0x3e8] sm:$0xf]
    %v11349 = vld [vmem:[%s11097 + $0x3ec] sm:$0xf]
    %v11350 = vld [vmem:[%s11097 + $0x3f0] sm:$0xf]
    %v11351 = vld [vmem:[%s11097 + $0x3f4] sm:$0xf]
    %v11352 = vld [vmem:[%s11097 + $0x3f8] sm:$0xf]
    %v11353 = vld [vmem:[%s11097 + $0x3fc] sm:$0xf]
    %s11354 = scalar_lea.vmem %s15, 1
    %v11355 = vld [vmem:[%s11354] sm:$0x1]
    %v11357 = vlaneseq
    %v11358 = vshrl.u32 %v11357, 7
    %v11359 = vsub.s32 0, %v11358
    %v11360 = vrot.slane %v11355, %v11359
    %v11618 = vunpack.c.l.b16 %v11098
    %v11619 = vunpack.c.l.b16 %v11099
    %v11620 = vunpack.c.l.b16 %v11100
    %v11621 = vunpack.c.l.b16 %v11101
    %v11622 = vunpack.c.l.b16 %v11102
    %v11623 = vunpack.c.l.b16 %v11103
    %v11624 = vunpack.c.l.b16 %v11104
    %v11625 = vunpack.c.l.b16 %v11105
    %v11626 = vunpack.c.l.b16 %v11106
    %v11627 = vunpack.c.l.b16 %v11107
    %v11628 = vunpack.c.l.b16 %v11108
    %v11629 = vunpack.c.l.b16 %v11109
    %v11630 = vunpack.c.l.b16 %v11110
    %v11631 = vunpack.c.l.b16 %v11111
    %v11632 = vunpack.c.l.b16 %v11112
    %v11633 = vunpack.c.l.b16 %v11113
    %v11634 = vunpack.c.l.b16 %v11114
    %v11635 = vunpack.c.l.b16 %v11115
    %v11636 = vunpack.c.l.b16 %v11116
    %v11637 = vunpack.c.l.b16 %v11117
    %v11638 = vunpack.c.l.b16 %v11118
    %v11639 = vunpack.c.l.b16 %v11119
    %v11640 = vunpack.c.l.b16 %v11120
    %v11641 = vunpack.c.l.b16 %v11121
    %v11642 = vunpack.c.l.b16 %v11122
    %v11643 = vunpack.c.l.b16 %v11123
    %v11644 = vunpack.c.l.b16 %v11124
    %v11645 = vunpack.c.l.b16 %v11125
    %v11646 = vunpack.c.l.b16 %v11126
    %v11647 = vunpack.c.l.b16 %v11127
    %v11648 = vunpack.c.l.b16 %v11128
    %v11649 = vunpack.c.l.b16 %v11129
    %v11650 = vunpack.c.l.b16 %v11130
    %v11651 = vunpack.c.l.b16 %v11131
    %v11652 = vunpack.c.l.b16 %v11132
    %v11653 = vunpack.c.l.b16 %v11133
    %v11654 = vunpack.c.l.b16 %v11134
    %v11655 = vunpack.c.l.b16 %v11135
    %v11656 = vunpack.c.l.b16 %v11136
    %v11657 = vunpack.c.l.b16 %v11137
    %v11658 = vunpack.c.l.b16 %v11138
    %v11659 = vunpack.c.l.b16 %v11139
    %v11660 = vunpack.c.l.b16 %v11140
    %v11661 = vunpack.c.l.b16 %v11141
    %v11662 = vunpack.c.l.b16 %v11142
    %v11663 = vunpack.c.l.b16 %v11143
    %v11664 = vunpack.c.l.b16 %v11144
    %v11665 = vunpack.c.l.b16 %v11145
    %v11666 = vunpack.c.l.b16 %v11146
    %v11667 = vunpack.c.l.b16 %v11147
    %v11668 = vunpack.c.l.b16 %v11148
    %v11669 = vunpack.c.l.b16 %v11149
    %v11670 = vunpack.c.l.b16 %v11150
    %v11671 = vunpack.c.l.b16 %v11151
    %v11672 = vunpack.c.l.b16 %v11152
    %v11673 = vunpack.c.l.b16 %v11153
    %v11674 = vunpack.c.l.b16 %v11154
    %v11675 = vunpack.c.l.b16 %v11155
    %v11676 = vunpack.c.l.b16 %v11156
    %v11677 = vunpack.c.l.b16 %v11157
    %v11678 = vunpack.c.l.b16 %v11158
    %v11679 = vunpack.c.l.b16 %v11159
    %v11680 = vunpack.c.l.b16 %v11160
    %v11681 = vunpack.c.l.b16 %v11161
    %v11682 = vunpack.c.l.b16 %v11162
    %v11683 = vunpack.c.l.b16 %v11163
    %v11684 = vunpack.c.l.b16 %v11164
    %v11685 = vunpack.c.l.b16 %v11165
    %v11686 = vunpack.c.l.b16 %v11166
    %v11687 = vunpack.c.l.b16 %v11167
    %v11688 = vunpack.c.l.b16 %v11168
    %v11689 = vunpack.c.l.b16 %v11169
    %v11690 = vunpack.c.l.b16 %v11170
    %v11691 = vunpack.c.l.b16 %v11171
    %v11692 = vunpack.c.l.b16 %v11172
    %v11693 = vunpack.c.l.b16 %v11173
    %v11694 = vunpack.c.l.b16 %v11174
    %v11695 = vunpack.c.l.b16 %v11175
    %v11696 = vunpack.c.l.b16 %v11176
    %v11697 = vunpack.c.l.b16 %v11177
    %v11698 = vunpack.c.l.b16 %v11178
    %v11699 = vunpack.c.l.b16 %v11179
    %v11700 = vunpack.c.l.b16 %v11180
    %v11701 = vunpack.c.l.b16 %v11181
    %v11702 = vunpack.c.l.b16 %v11182
    %v11703 = vunpack.c.l.b16 %v11183
    %v11704 = vunpack.c.l.b16 %v11184
    %v11705 = vunpack.c.l.b16 %v11185
    %v11706 = vunpack.c.l.b16 %v11186
    %v11707 = vunpack.c.l.b16 %v11187
    %v11708 = vunpack.c.l.b16 %v11188
    %v11709 = vunpack.c.l.b16 %v11189
    %v11710 = vunpack.c.l.b16 %v11190
    %v11711 = vunpack.c.l.b16 %v11191
    %v11712 = vunpack.c.l.b16 %v11192
    %v11713 = vunpack.c.l.b16 %v11193
    %v11714 = vunpack.c.l.b16 %v11194
    %v11715 = vunpack.c.l.b16 %v11195
    %v11716 = vunpack.c.l.b16 %v11196
    %v11717 = vunpack.c.l.b16 %v11197
    %v11718 = vunpack.c.l.b16 %v11198
    %v11719 = vunpack.c.l.b16 %v11199
    %v11720 = vunpack.c.l.b16 %v11200
    %v11721 = vunpack.c.l.b16 %v11201
    %v11722 = vunpack.c.l.b16 %v11202
    %v11723 = vunpack.c.l.b16 %v11203
    %v11724 = vunpack.c.l.b16 %v11204
    %v11725 = vunpack.c.l.b16 %v11205
    %v11726 = vunpack.c.l.b16 %v11206
    %v11727 = vunpack.c.l.b16 %v11207
    %v11728 = vunpack.c.l.b16 %v11208
    %v11729 = vunpack.c.l.b16 %v11209
    %v11730 = vunpack.c.l.b16 %v11210
    %v11731 = vunpack.c.l.b16 %v11211
    %v11732 = vunpack.c.l.b16 %v11212
    %v11733 = vunpack.c.l.b16 %v11213
    %v11734 = vunpack.c.l.b16 %v11214
    %v11735 = vunpack.c.l.b16 %v11215
    %v11736 = vunpack.c.l.b16 %v11216
    %v11737 = vunpack.c.l.b16 %v11217
    %v11738 = vunpack.c.l.b16 %v11218
    %v11739 = vunpack.c.l.b16 %v11219
    %v11740 = vunpack.c.l.b16 %v11220
    %v11741 = vunpack.c.l.b16 %v11221
    %v11742 = vunpack.c.l.b16 %v11222
    %v11743 = vunpack.c.l.b16 %v11223
    %v11744 = vunpack.c.l.b16 %v11224
    %v11745 = vunpack.c.l.b16 %v11225
    %v11746 = vunpack.c.l.b16 %v11226
    %v11747 = vunpack.c.l.b16 %v11227
    %v11748 = vunpack.c.l.b16 %v11228
    %v11749 = vunpack.c.l.b16 %v11229
    %v11750 = vunpack.c.l.b16 %v11230
    %v11751 = vunpack.c.l.b16 %v11231
    %v11752 = vunpack.c.l.b16 %v11232
    %v11753 = vunpack.c.l.b16 %v11233
    %v11754 = vunpack.c.l.b16 %v11234
    %v11755 = vunpack.c.l.b16 %v11235
    %v11756 = vunpack.c.l.b16 %v11236
    %v11757 = vunpack.c.l.b16 %v11237
    %v11758 = vunpack.c.l.b16 %v11238
    %v11759 = vunpack.c.l.b16 %v11239
    %v11760 = vunpack.c.l.b16 %v11240
    %v11761 = vunpack.c.l.b16 %v11241
    %v11762 = vunpack.c.l.b16 %v11242
    %v11763 = vunpack.c.l.b16 %v11243
    %v11764 = vunpack.c.l.b16 %v11244
    %v11765 = vunpack.c.l.b16 %v11245
    %v11766 = vunpack.c.l.b16 %v11246
    %v11767 = vunpack.c.l.b16 %v11247
    %v11768 = vunpack.c.l.b16 %v11248
    %v11769 = vunpack.c.l.b16 %v11249
    %v11770 = vunpack.c.l.b16 %v11250
    %v11771 = vunpack.c.l.b16 %v11251
    %v11772 = vunpack.c.l.b16 %v11252
    %v11773 = vunpack.c.l.b16 %v11253
    %v11774 = vunpack.c.l.b16 %v11254
    %v11775 = vunpack.c.l.b16 %v11255
    %v11776 = vunpack.c.l.b16 %v11256
    %v11777 = vunpack.c.l.b16 %v11257
    %v11778 = vunpack.c.l.b16 %v11258
    %v11779 = vunpack.c.l.b16 %v11259
    %v11780 = vunpack.c.l.b16 %v11260
    %v11781 = vunpack.c.l.b16 %v11261
    %v11782 = vunpack.c.l.b16 %v11262
    %v11783 = vunpack.c.l.b16 %v11263
    %v11784 = vunpack.c.l.b16 %v11264
    %v11785 = vunpack.c.l.b16 %v11265
    %v11786 = vunpack.c.l.b16 %v11266
    %v11787 = vunpack.c.l.b16 %v11267
    %v11788 = vunpack.c.l.b16 %v11268
    %v11789 = vunpack.c.l.b16 %v11269
    %v11790 = vunpack.c.l.b16 %v11270
    %v11791 = vunpack.c.l.b16 %v11271
    %v11792 = vunpack.c.l.b16 %v11272
    %v11793 = vunpack.c.l.b16 %v11273
    %v11794 = vunpack.c.l.b16 %v11274
    %v11795 = vunpack.c.l.b16 %v11275
    %v11796 = vunpack.c.l.b16 %v11276
    %v11797 = vunpack.c.l.b16 %v11277
    %v11798 = vunpack.c.l.b16 %v11278
    %v11799 = vunpack.c.l.b16 %v11279
    %v11800 = vunpack.c.l.b16 %v11280
    %v11801 = vunpack.c.l.b16 %v11281
    %v11802 = vunpack.c.l.b16 %v11282
    %v11803 = vunpack.c.l.b16 %v11283
    %v11804 = vunpack.c.l.b16 %v11284
    %v11805 = vunpack.c.l.b16 %v11285
    %v11806 = vunpack.c.l.b16 %v11286
    %v11807 = vunpack.c.l.b16 %v11287
    %v11808 = vunpack.c.l.b16 %v11288
    %v11809 = vunpack.c.l.b16 %v11289
    %v11810 = vunpack.c.l.b16 %v11290
    %v11811 = vunpack.c.l.b16 %v11291
    %v11812 = vunpack.c.l.b16 %v11292
    %v11813 = vunpack.c.l.b16 %v11293
    %v11814 = vunpack.c.l.b16 %v11294
    %v11815 = vunpack.c.l.b16 %v11295
    %v11816 = vunpack.c.l.b16 %v11296
    %v11817 = vunpack.c.l.b16 %v11297
    %v11818 = vunpack.c.l.b16 %v11298
    %v11819 = vunpack.c.l.b16 %v11299
    %v11820 = vunpack.c.l.b16 %v11300
    %v11821 = vunpack.c.l.b16 %v11301
    %v11822 = vunpack.c.l.b16 %v11302
    %v11823 = vunpack.c.l.b16 %v11303
    %v11824 = vunpack.c.l.b16 %v11304
    %v11825 = vunpack.c.l.b16 %v11305
    %v11826 = vunpack.c.l.b16 %v11306
    %v11827 = vunpack.c.l.b16 %v11307
    %v11828 = vunpack.c.l.b16 %v11308
    %v11829 = vunpack.c.l.b16 %v11309
    %v11830 = vunpack.c.l.b16 %v11310
    %v11831 = vunpack.c.l.b16 %v11311
    %v11832 = vunpack.c.l.b16 %v11312
    %v11833 = vunpack.c.l.b16 %v11313
    %v11834 = vunpack.c.l.b16 %v11314
    %v11835 = vunpack.c.l.b16 %v11315
    %v11836 = vunpack.c.l.b16 %v11316
    %v11837 = vunpack.c.l.b16 %v11317
    %v11838 = vunpack.c.l.b16 %v11318
    %v11839 = vunpack.c.l.b16 %v11319
    %v11840 = vunpack.c.l.b16 %v11320
    %v11841 = vunpack.c.l.b16 %v11321
    %v11842 = vunpack.c.l.b16 %v11322
    %v11843 = vunpack.c.l.b16 %v11323
    %v11844 = vunpack.c.l.b16 %v11324
    %v11845 = vunpack.c.l.b16 %v11325
    %v11846 = vunpack.c.l.b16 %v11326
    %v11847 = vunpack.c.l.b16 %v11327
    %v11848 = vunpack.c.l.b16 %v11328
    %v11849 = vunpack.c.l.b16 %v11329
    %v11850 = vunpack.c.l.b16 %v11330
    %v11851 = vunpack.c.l.b16 %v11331
    %v11852 = vunpack.c.l.b16 %v11332
    %v11853 = vunpack.c.l.b16 %v11333
    %v11854 = vunpack.c.l.b16 %v11334
    %v11855 = vunpack.c.l.b16 %v11335
    %v11856 = vunpack.c.l.b16 %v11336
    %v11857 = vunpack.c.l.b16 %v11337
    %v11858 = vunpack.c.l.b16 %v11338
    %v11859 = vunpack.c.l.b16 %v11339
    %v11860 = vunpack.c.l.b16 %v11340
    %v11861 = vunpack.c.l.b16 %v11341
    %v11862 = vunpack.c.l.b16 %v11342
    %v11863 = vunpack.c.l.b16 %v11343
    %v11864 = vunpack.c.l.b16 %v11344
    %v11865 = vunpack.c.l.b16 %v11345
    %v11866 = vunpack.c.l.b16 %v11346
    %v11867 = vunpack.c.l.b16 %v11347
    %v11868 = vunpack.c.l.b16 %v11348
    %v11869 = vunpack.c.l.b16 %v11349
    %v11870 = vunpack.c.l.b16 %v11350
    %v11871 = vunpack.c.l.b16 %v11351
    %v11872 = vunpack.c.l.b16 %v11352
    %v11873 = vunpack.c.l.b16 %v11353
    %v11874 = vpack.c.b16 %v11619, %v11618
    %v11875 = vpack.c.b16 %v11621, %v11620
    %v11876 = vpack.c.b16 %v11623, %v11622
    %v11877 = vpack.c.b16 %v11625, %v11624
    %v11878 = vpack.c.b16 %v11627, %v11626
    %v11879 = vpack.c.b16 %v11629, %v11628
    %v11880 = vpack.c.b16 %v11631, %v11630
    %v11881 = vpack.c.b16 %v11633, %v11632
    %v11882 = vpack.c.b16 %v11635, %v11634
    %v11883 = vpack.c.b16 %v11637, %v11636
    %v11884 = vpack.c.b16 %v11639, %v11638
    %v11885 = vpack.c.b16 %v11641, %v11640
    %v11886 = vpack.c.b16 %v11643, %v11642
    %v11887 = vpack.c.b16 %v11645, %v11644
    %v11888 = vpack.c.b16 %v11647, %v11646
    %v11889 = vpack.c.b16 %v11649, %v11648
    %v11890 = vpack.c.b16 %v11651, %v11650
    %v11891 = vpack.c.b16 %v11653, %v11652
    %v11892 = vpack.c.b16 %v11655, %v11654
    %v11893 = vpack.c.b16 %v11657, %v11656
    %v11894 = vpack.c.b16 %v11659, %v11658
    %v11895 = vpack.c.b16 %v11661, %v11660
    %v11896 = vpack.c.b16 %v11663, %v11662
    %v11897 = vpack.c.b16 %v11665, %v11664
    %v11898 = vpack.c.b16 %v11667, %v11666
    %v11899 = vpack.c.b16 %v11669, %v11668
    %v11900 = vpack.c.b16 %v11671, %v11670
    %v11901 = vpack.c.b16 %v11673, %v11672
    %v11902 = vpack.c.b16 %v11675, %v11674
    %v11903 = vpack.c.b16 %v11677, %v11676
    %v11904 = vpack.c.b16 %v11679, %v11678
    %v11905 = vpack.c.b16 %v11681, %v11680
    %v11906 = vpack.c.b16 %v11683, %v11682
    %v11907 = vpack.c.b16 %v11685, %v11684
    %v11908 = vpack.c.b16 %v11687, %v11686
    %v11909 = vpack.c.b16 %v11689, %v11688
    %v11910 = vpack.c.b16 %v11691, %v11690
    %v11911 = vpack.c.b16 %v11693, %v11692
    %v11912 = vpack.c.b16 %v11695, %v11694
    %v11913 = vpack.c.b16 %v11697, %v11696
    %v11914 = vpack.c.b16 %v11699, %v11698
    %v11915 = vpack.c.b16 %v11701, %v11700
    %v11916 = vpack.c.b16 %v11703, %v11702
    %v11917 = vpack.c.b16 %v11705, %v11704
    %v11918 = vpack.c.b16 %v11707, %v11706
    %v11919 = vpack.c.b16 %v11709, %v11708
    %v11920 = vpack.c.b16 %v11711, %v11710
    %v11921 = vpack.c.b16 %v11713, %v11712
    %v11922 = vpack.c.b16 %v11715, %v11714
    %v11923 = vpack.c.b16 %v11717, %v11716
    %v11924 = vpack.c.b16 %v11719, %v11718
    %v11925 = vpack.c.b16 %v11721, %v11720
    %v11926 = vpack.c.b16 %v11723, %v11722
    %v11927 = vpack.c.b16 %v11725, %v11724
    %v11928 = vpack.c.b16 %v11727, %v11726
    %v11929 = vpack.c.b16 %v11729, %v11728
    %v11930 = vpack.c.b16 %v11731, %v11730
    %v11931 = vpack.c.b16 %v11733, %v11732
    %v11932 = vpack.c.b16 %v11735, %v11734
    %v11933 = vpack.c.b16 %v11737, %v11736
    %v11934 = vpack.c.b16 %v11739, %v11738
    %v11935 = vpack.c.b16 %v11741, %v11740
    %v11936 = vpack.c.b16 %v11743, %v11742
    %v11937 = vpack.c.b16 %v11745, %v11744
    %v11938 = vpack.c.b16 %v11747, %v11746
    %v11939 = vpack.c.b16 %v11749, %v11748
    %v11940 = vpack.c.b16 %v11751, %v11750
    %v11941 = vpack.c.b16 %v11753, %v11752
    %v11942 = vpack.c.b16 %v11755, %v11754
    %v11943 = vpack.c.b16 %v11757, %v11756
    %v11944 = vpack.c.b16 %v11759, %v11758
    %v11945 = vpack.c.b16 %v11761, %v11760
    %v11946 = vpack.c.b16 %v11763, %v11762
    %v11947 = vpack.c.b16 %v11765, %v11764
    %v11948 = vpack.c.b16 %v11767, %v11766
    %v11949 = vpack.c.b16 %v11769, %v11768
    %v11950 = vpack.c.b16 %v11771, %v11770
    %v11951 = vpack.c.b16 %v11773, %v11772
    %v11952 = vpack.c.b16 %v11775, %v11774
    %v11953 = vpack.c.b16 %v11777, %v11776
    %v11954 = vpack.c.b16 %v11779, %v11778
    %v11955 = vpack.c.b16 %v11781, %v11780
    %v11956 = vpack.c.b16 %v11783, %v11782
    %v11957 = vpack.c.b16 %v11785, %v11784
    %v11958 = vpack.c.b16 %v11787, %v11786
    %v11959 = vpack.c.b16 %v11789, %v11788
    %v11960 = vpack.c.b16 %v11791, %v11790
    %v11961 = vpack.c.b16 %v11793, %v11792
    %v11962 = vpack.c.b16 %v11795, %v11794
    %v11963 = vpack.c.b16 %v11797, %v11796
    %v11964 = vpack.c.b16 %v11799, %v11798
    %v11965 = vpack.c.b16 %v11801, %v11800
    %v11966 = vpack.c.b16 %v11803, %v11802
    %v11967 = vpack.c.b16 %v11805, %v11804
    %v11968 = vpack.c.b16 %v11807, %v11806
    %v11969 = vpack.c.b16 %v11809, %v11808
    %v11970 = vpack.c.b16 %v11811, %v11810
    %v11971 = vpack.c.b16 %v11813, %v11812
    %v11972 = vpack.c.b16 %v11815, %v11814
    %v11973 = vpack.c.b16 %v11817, %v11816
    %v11974 = vpack.c.b16 %v11819, %v11818
    %v11975 = vpack.c.b16 %v11821, %v11820
    %v11976 = vpack.c.b16 %v11823, %v11822
    %v11977 = vpack.c.b16 %v11825, %v11824
    %v11978 = vpack.c.b16 %v11827, %v11826
    %v11979 = vpack.c.b16 %v11829, %v11828
    %v11980 = vpack.c.b16 %v11831, %v11830
    %v11981 = vpack.c.b16 %v11833, %v11832
    %v11982 = vpack.c.b16 %v11835, %v11834
    %v11983 = vpack.c.b16 %v11837, %v11836
    %v11984 = vpack.c.b16 %v11839, %v11838
    %v11985 = vpack.c.b16 %v11841, %v11840
    %v11986 = vpack.c.b16 %v11843, %v11842
    %v11987 = vpack.c.b16 %v11845, %v11844
    %v11988 = vpack.c.b16 %v11847, %v11846
    %v11989 = vpack.c.b16 %v11849, %v11848
    %v11990 = vpack.c.b16 %v11851, %v11850
    %v11991 = vpack.c.b16 %v11853, %v11852
    %v11992 = vpack.c.b16 %v11855, %v11854
    %v11993 = vpack.c.b16 %v11857, %v11856
    %v11994 = vpack.c.b16 %v11859, %v11858
    %v11995 = vpack.c.b16 %v11861, %v11860
    %v11996 = vpack.c.b16 %v11863, %v11862
    %v11997 = vpack.c.b16 %v11865, %v11864
    %v11998 = vpack.c.b16 %v11867, %v11866
    %v11999 = vpack.c.b16 %v11869, %v11868
    %v12000 = vpack.c.b16 %v11871, %v11870
    %v12001 = vpack.c.b16 %v11873, %v11872
    %12130 = vmatprep.subr.bf16.mxu0 0
    %12131 = vmatpush1.bf16.msra.mxu0 %v11881
    %12132 = vmatprep.subr.bf16.mxu0 0
    %12133 = vmatpush1.bf16.msra.mxu0 %v11880
    %12134 = vmatprep.subr.bf16.mxu0 0
    %12135 = vmatpush1.bf16.msra.mxu0 %v11879
    %12136 = vmatprep.subr.bf16.mxu0 0
    %12137 = vmatpush1.bf16.msra.mxu0 %v11878
    %12138 = vmatprep.subr.bf16.mxu0 0
    %12139 = vmatpush1.bf16.msra.mxu0 %v11877
    %12140 = vmatprep.subr.bf16.mxu0 0
    %12141 = vmatpush1.bf16.msra.mxu0 %v11876
    %12142 = vmatprep.subr.bf16.mxu0 0
    %12143 = vmatpush1.bf16.msra.mxu0 %v11875
    %12144 = vmatprep.subr.bf16.mxu0 0
    %12145 = vmatpush1.bf16.msra.mxu0 %v11874
    %12146 = vmatprep.subr.bf16.mxu0 0
    %12147 = vmatpush2.bf16.msra.mxu0 %v11889
    %12148 = vmatprep.subr.bf16.mxu0 0
    %12149 = vmatpush2.bf16.msra.mxu0 %v11888
    %12150 = vmatprep.subr.bf16.mxu0 0
    %12151 = vmatpush2.bf16.msra.mxu0 %v11887
    %12152 = vmatprep.subr.bf16.mxu0 0
    %12153 = vmatpush2.bf16.msra.mxu0 %v11886
    %12154 = vmatprep.subr.bf16.mxu0 0
    %12155 = vmatpush2.bf16.msra.mxu0 %v11885
    %12156 = vmatprep.subr.bf16.mxu0 0
    %12157 = vmatpush2.bf16.msra.mxu0 %v11884
    %12158 = vmatprep.subr.bf16.mxu0 0
    %12159 = vmatpush2.bf16.msra.mxu0 %v11883
    %12160 = vmatprep.subr.bf16.mxu0 0
    %12161 = vmatpush2.bf16.msra.mxu0 %v11882
    %12162 = vmatprep.mubr.bf16.mxu0 %v11082
    %12163 = vmatmul.mubr.bf16.gmra.mxu0 %v11081
    %v12164 = vpop.f32.mrf.mxu0
    %v12165 = vadd.f32 %v11360, %v12164
    %v12166 = vpop.f32.mrf.mxu0
    %v12167 = vpop.f32.mrf.mxu0
    %v12168 = vadd.f32 %v11360, %v12167
    %v12169 = vpop.f32.mrf.mxu0
    %12170 = vdwg.mxu0
    %12171 = vmatprep.subr.bf16.mxu0 0
    %12172 = vmatpush1.bf16.msra.mxu0 %v11897
    %12173 = vmatprep.subr.bf16.mxu0 0
    %12174 = vmatpush1.bf16.msra.mxu0 %v11896
    %12175 = vmatprep.subr.bf16.mxu0 0
    %12176 = vmatpush1.bf16.msra.mxu0 %v11895
    %12177 = vmatprep.subr.bf16.mxu0 0
    %12178 = vmatpush1.bf16.msra.mxu0 %v11894
    %12179 = vmatprep.subr.bf16.mxu0 0
    %12180 = vmatpush1.bf16.msra.mxu0 %v11893
    %12181 = vmatprep.subr.bf16.mxu0 0
    %12182 = vmatpush1.bf16.msra.mxu0 %v11892
    %12183 = vmatprep.subr.bf16.mxu0 0
    %12184 = vmatpush1.bf16.msra.mxu0 %v11891
    %12185 = vmatprep.subr.bf16.mxu0 0
    %12186 = vmatpush1.bf16.msra.mxu0 %v11890
    %12187 = vmatprep.subr.bf16.mxu0 0
    %12188 = vmatpush2.bf16.msra.mxu0 %v11905
    %12189 = vmatprep.subr.bf16.mxu0 0
    %12190 = vmatpush2.bf16.msra.mxu0 %v11904
    %12191 = vmatprep.subr.bf16.mxu0 0
    %12192 = vmatpush2.bf16.msra.mxu0 %v11903
    %12193 = vmatprep.subr.bf16.mxu0 0
    %12194 = vmatpush2.bf16.msra.mxu0 %v11902
    %12195 = vmatprep.subr.bf16.mxu0 0
    %12196 = vmatpush2.bf16.msra.mxu0 %v11901
    %12197 = vmatprep.subr.bf16.mxu0 0
    %12198 = vmatpush2.bf16.msra.mxu0 %v11900
    %12199 = vmatprep.subr.bf16.mxu0 0
    %12200 = vmatpush2.bf16.msra.mxu0 %v11899
    %12201 = vmatprep.subr.bf16.mxu0 0
    %12202 = vmatpush2.bf16.msra.mxu0 %v11898
    %12203 = vmatprep.mubr.bf16.mxu0 %v11084
    %12204 = vmatmul.mubr.bf16.gmra.mxu0 %v11083
    %v12205 = vpop.f32.mrf.mxu0
    %v12206 = vadd.f32 %v12165, %v12205
    %v12207 = vpop.f32.mrf.mxu0
    %v12208 = vpop.f32.mrf.mxu0
    %v12209 = vadd.f32 %v12168, %v12208
    %v12210 = vpop.f32.mrf.mxu0
    %12211 = vdwg.mxu0
    %12212 = vmatprep.subr.bf16.mxu0 0
    %12213 = vmatpush1.bf16.msra.mxu0 %v11913
    %12214 = vmatprep.subr.bf16.mxu0 0
    %12215 = vmatpush1.bf16.msra.mxu0 %v11912
    %12216 = vmatprep.subr.bf16.mxu0 0
    %12217 = vmatpush1.bf16.msra.mxu0 %v11911
    %12218 = vmatprep.subr.bf16.mxu0 0
    %12219 = vmatpush1.bf16.msra.mxu0 %v11910
    %12220 = vmatprep.subr.bf16.mxu0 0
    %12221 = vmatpush1.bf16.msra.mxu0 %v11909
    %12222 = vmatprep.subr.bf16.mxu0 0
    %12223 = vmatpush1.bf16.msra.mxu0 %v11908
    %12224 = vmatprep.subr.bf16.mxu0 0
    %12225 = vmatpush1.bf16.msra.mxu0 %v11907
    %12226 = vmatprep.subr.bf16.mxu0 0
    %12227 = vmatpush1.bf16.msra.mxu0 %v11906
    %12228 = vmatprep.subr.bf16.mxu0 0
    %12229 = vmatpush2.bf16.msra.mxu0 %v11921
    %12230 = vmatprep.subr.bf16.mxu0 0
    %12231 = vmatpush2.bf16.msra.mxu0 %v11920
    %12232 = vmatprep.subr.bf16.mxu0 0
    %12233 = vmatpush2.bf16.msra.mxu0 %v11919
    %12234 = vmatprep.subr.bf16.mxu0 0
    %12235 = vmatpush2.bf16.msra.mxu0 %v11918
    %12236 = vmatprep.subr.bf16.mxu0 0
    %12237 = vmatpush2.bf16.msra.mxu0 %v11917
    %12238 = vmatprep.subr.bf16.mxu0 0
    %12239 = vmatpush2.bf16.msra.mxu0 %v11916
    %12240 = vmatprep.subr.bf16.mxu0 0
    %12241 = vmatpush2.bf16.msra.mxu0 %v11915
    %12242 = vmatprep.subr.bf16.mxu0 0
    %12243 = vmatpush2.bf16.msra.mxu0 %v11914
    %12244 = vmatprep.mubr.bf16.mxu0 %v11086
    %12245 = vmatmul.mubr.bf16.gmra.mxu0 %v11085
    %v12246 = vpop.f32.mrf.mxu0
    %v12247 = vadd.f32 %v12206, %v12246
    %v12248 = vpop.f32.mrf.mxu0
    %v12249 = vpop.f32.mrf.mxu0
    %v12250 = vadd.f32 %v12209, %v12249
    %v12251 = vpop.f32.mrf.mxu0
    %12252 = vdwg.mxu0
    %12253 = vmatprep.subr.bf16.mxu0 0
    %12254 = vmatpush1.bf16.msra.mxu0 %v11929
    %12255 = vmatprep.subr.bf16.mxu0 0
    %12256 = vmatpush1.bf16.msra.mxu0 %v11928
    %12257 = vmatprep.subr.bf16.mxu0 0
    %12258 = vmatpush1.bf16.msra.mxu0 %v11927
    %12259 = vmatprep.subr.bf16.mxu0 0
    %12260 = vmatpush1.bf16.msra.mxu0 %v11926
    %12261 = vmatprep.subr.bf16.mxu0 0
    %12262 = vmatpush1.bf16.msra.mxu0 %v11925
    %12263 = vmatprep.subr.bf16.mxu0 0
    %12264 = vmatpush1.bf16.msra.mxu0 %v11924
    %12265 = vmatprep.subr.bf16.mxu0 0
    %12266 = vmatpush1.bf16.msra.mxu0 %v11923
    %12267 = vmatprep.subr.bf16.mxu0 0
    %12268 = vmatpush1.bf16.msra.mxu0 %v11922
    %12269 = vmatprep.subr.bf16.mxu0 0
    %12270 = vmatpush2.bf16.msra.mxu0 %v11937
    %12271 = vmatprep.subr.bf16.mxu0 0
    %12272 = vmatpush2.bf16.msra.mxu0 %v11936
    %12273 = vmatprep.subr.bf16.mxu0 0
    %12274 = vmatpush2.bf16.msra.mxu0 %v11935
    %12275 = vmatprep.subr.bf16.mxu0 0
    %12276 = vmatpush2.bf16.msra.mxu0 %v11934
    %12277 = vmatprep.subr.bf16.mxu0 0
    %12278 = vmatpush2.bf16.msra.mxu0 %v11933
    %12279 = vmatprep.subr.bf16.mxu0 0
    %12280 = vmatpush2.bf16.msra.mxu0 %v11932
    %12281 = vmatprep.subr.bf16.mxu0 0
    %12282 = vmatpush2.bf16.msra.mxu0 %v11931
    %12283 = vmatprep.subr.bf16.mxu0 0
    %12284 = vmatpush2.bf16.msra.mxu0 %v11930
    %12285 = vmatprep.mubr.bf16.mxu0 %v11088
    %12286 = vmatmul.mubr.bf16.gmra.mxu0 %v11087
    %v12287 = vpop.f32.mrf.mxu0
    %v12288 = vadd.f32 %v12247, %v12287
    %v12289 = vpop.f32.mrf.mxu0
    %v12290 = vpop.f32.mrf.mxu0
    %v12291 = vadd.f32 %v12250, %v12290
    %v12292 = vpop.f32.mrf.mxu0
    %12293 = vdwg.mxu0
    %12294 = vmatprep.subr.bf16.mxu0 0
    %12295 = vmatpush1.bf16.msra.mxu0 %v11945
    %12296 = vmatprep.subr.bf16.mxu0 0
    %12297 = vmatpush1.bf16.msra.mxu0 %v11944
    %12298 = vmatprep.subr.bf16.mxu0 0
    %12299 = vmatpush1.bf16.msra.mxu0 %v11943
    %12300 = vmatprep.subr.bf16.mxu0 0
    %12301 = vmatpush1.bf16.msra.mxu0 %v11942
    %12302 = vmatprep.subr.bf16.mxu0 0
    %12303 = vmatpush1.bf16.msra.mxu0 %v11941
    %12304 = vmatprep.subr.bf16.mxu0 0
    %12305 = vmatpush1.bf16.msra.mxu0 %v11940
    %12306 = vmatprep.subr.bf16.mxu0 0
    %12307 = vmatpush1.bf16.msra.mxu0 %v11939
    %12308 = vmatprep.subr.bf16.mxu0 0
    %12309 = vmatpush1.bf16.msra.mxu0 %v11938
    %12310 = vmatprep.subr.bf16.mxu0 0
    %12311 = vmatpush2.bf16.msra.mxu0 %v11953
    %12312 = vmatprep.subr.bf16.mxu0 0
    %12313 = vmatpush2.bf16.msra.mxu0 %v11952
    %12314 = vmatprep.subr.bf16.mxu0 0
    %12315 = vmatpush2.bf16.msra.mxu0 %v11951
    %12316 = vmatprep.subr.bf16.mxu0 0
    %12317 = vmatpush2.bf16.msra.mxu0 %v11950
    %12318 = vmatprep.subr.bf16.mxu0 0
    %12319 = vmatpush2.bf16.msra.mxu0 %v11949
    %12320 = vmatprep.subr.bf16.mxu0 0
    %12321 = vmatpush2.bf16.msra.mxu0 %v11948
    %12322 = vmatprep.subr.bf16.mxu0 0
    %12323 = vmatpush2.bf16.msra.mxu0 %v11947
    %12324 = vmatprep.subr.bf16.mxu0 0
    %12325 = vmatpush2.bf16.msra.mxu0 %v11946
    %12326 = vmatprep.mubr.bf16.mxu0 %v11090
    %12327 = vmatmul.mubr.bf16.gmra.mxu0 %v11089
    %v12328 = vpop.f32.mrf.mxu0
    %v12329 = vadd.f32 %v12288, %v12328
    %v12330 = vpop.f32.mrf.mxu0
    %v12331 = vpop.f32.mrf.mxu0
    %v12332 = vadd.f32 %v12291, %v12331
    %v12333 = vpop.f32.mrf.mxu0
    %12334 = vdwg.mxu0
    %12335 = vmatprep.subr.bf16.mxu0 0
    %12336 = vmatpush1.bf16.msra.mxu0 %v11961
    %12337 = vmatprep.subr.bf16.mxu0 0
    %12338 = vmatpush1.bf16.msra.mxu0 %v11960
    %12339 = vmatprep.subr.bf16.mxu0 0
    %12340 = vmatpush1.bf16.msra.mxu0 %v11959
    %12341 = vmatprep.subr.bf16.mxu0 0
    %12342 = vmatpush1.bf16.msra.mxu0 %v11958
    %12343 = vmatprep.subr.bf16.mxu0 0
    %12344 = vmatpush1.bf16.msra.mxu0 %v11957
    %12345 = vmatprep.subr.bf16.mxu0 0
    %12346 = vmatpush1.bf16.msra.mxu0 %v11956
    %12347 = vmatprep.subr.bf16.mxu0 0
    %12348 = vmatpush1.bf16.msra.mxu0 %v11955
    %12349 = vmatprep.subr.bf16.mxu0 0
    %12350 = vmatpush1.bf16.msra.mxu0 %v11954
    %12351 = vmatprep.subr.bf16.mxu0 0
    %12352 = vmatpush2.bf16.msra.mxu0 %v11969
    %12353 = vmatprep.subr.bf16.mxu0 0
    %12354 = vmatpush2.bf16.msra.mxu0 %v11968
    %12355 = vmatprep.subr.bf16.mxu0 0
    %12356 = vmatpush2.bf16.msra.mxu0 %v11967
    %12357 = vmatprep.subr.bf16.mxu0 0
    %12358 = vmatpush2.bf16.msra.mxu0 %v11966
    %12359 = vmatprep.subr.bf16.mxu0 0
    %12360 = vmatpush2.bf16.msra.mxu0 %v11965
    %12361 = vmatprep.subr.bf16.mxu0 0
    %12362 = vmatpush2.bf16.msra.mxu0 %v11964
    %12363 = vmatprep.subr.bf16.mxu0 0
    %12364 = vmatpush2.bf16.msra.mxu0 %v11963
    %12365 = vmatprep.subr.bf16.mxu0 0
    %12366 = vmatpush2.bf16.msra.mxu0 %v11962
    %12367 = vmatprep.mubr.bf16.mxu0 %v11092
    %12368 = vmatmul.mubr.bf16.gmra.mxu0 %v11091
    %v12369 = vpop.f32.mrf.mxu0
    %v12370 = vadd.f32 %v12329, %v12369
    %v12371 = vpop.f32.mrf.mxu0
    %v12372 = vpop.f32.mrf.mxu0
    %v12373 = vadd.f32 %v12332, %v12372
    %v12374 = vpop.f32.mrf.mxu0
    %12375 = vdwg.mxu0
    %12376 = vmatprep.subr.bf16.mxu0 0
    %12377 = vmatpush1.bf16.msra.mxu0 %v11977
    %12378 = vmatprep.subr.bf16.mxu0 0
    %12379 = vmatpush1.bf16.msra.mxu0 %v11976
    %12380 = vmatprep.subr.bf16.mxu0 0
    %12381 = vmatpush1.bf16.msra.mxu0 %v11975
    %12382 = vmatprep.subr.bf16.mxu0 0
    %12383 = vmatpush1.bf16.msra.mxu0 %v11974
    %12384 = vmatprep.subr.bf16.mxu0 0
    %12385 = vmatpush1.bf16.msra.mxu0 %v11973
    %12386 = vmatprep.subr.bf16.mxu0 0
    %12387 = vmatpush1.bf16.msra.mxu0 %v11972
    %12388 = vmatprep.subr.bf16.mxu0 0
    %12389 = vmatpush1.bf16.msra.mxu0 %v11971
    %12390 = vmatprep.subr.bf16.mxu0 0
    %12391 = vmatpush1.bf16.msra.mxu0 %v11970
    %12392 = vmatprep.subr.bf16.mxu0 0
    %12393 = vmatpush2.bf16.msra.mxu0 %v11985
    %12394 = vmatprep.subr.bf16.mxu0 0
    %12395 = vmatpush2.bf16.msra.mxu0 %v11984
    %12396 = vmatprep.subr.bf16.mxu0 0
    %12397 = vmatpush2.bf16.msra.mxu0 %v11983
    %12398 = vmatprep.subr.bf16.mxu0 0
    %12399 = vmatpush2.bf16.msra.mxu0 %v11982
    %12400 = vmatprep.subr.bf16.mxu0 0
    %12401 = vmatpush2.bf16.msra.mxu0 %v11981
    %12402 = vmatprep.subr.bf16.mxu0 0
    %12403 = vmatpush2.bf16.msra.mxu0 %v11980
    %12404 = vmatprep.subr.bf16.mxu0 0
    %12405 = vmatpush2.bf16.msra.mxu0 %v11979
    %12406 = vmatprep.subr.bf16.mxu0 0
    %12407 = vmatpush2.bf16.msra.mxu0 %v11978
    %12408 = vmatprep.mubr.bf16.mxu0 %v11094
    %12409 = vmatmul.mubr.bf16.gmra.mxu0 %v11093
    %v12410 = vpop.f32.mrf.mxu0
    %v12411 = vadd.f32 %v12370, %v12410
    %v12412 = vpop.f32.mrf.mxu0
    %v12413 = vpop.f32.mrf.mxu0
    %v12414 = vadd.f32 %v12373, %v12413
    %v12415 = vpop.f32.mrf.mxu0
    %12416 = vdwg.mxu0
    %12417 = vmatprep.subr.bf16.mxu0 0
    %12418 = vmatpush1.bf16.msra.mxu0 %v11993
    %12419 = vmatprep.subr.bf16.mxu0 0
    %12420 = vmatpush1.bf16.msra.mxu0 %v11992
    %12421 = vmatprep.subr.bf16.mxu0 0
    %12422 = vmatpush1.bf16.msra.mxu0 %v11991
    %12423 = vmatprep.subr.bf16.mxu0 0
    %12424 = vmatpush1.bf16.msra.mxu0 %v11990
    %12425 = vmatprep.subr.bf16.mxu0 0
    %12426 = vmatpush1.bf16.msra.mxu0 %v11989
    %12427 = vmatprep.subr.bf16.mxu0 0
    %12428 = vmatpush1.bf16.msra.mxu0 %v11988
    %12429 = vmatprep.subr.bf16.mxu0 0
    %12430 = vmatpush1.bf16.msra.mxu0 %v11987
    %12431 = vmatprep.subr.bf16.mxu0 0
    %12432 = vmatpush1.bf16.msra.mxu0 %v11986
    %12433 = vmatprep.subr.bf16.mxu0 0
    %12434 = vmatpush2.bf16.msra.mxu0 %v12001
    %12435 = vmatprep.subr.bf16.mxu0 0
    %12436 = vmatpush2.bf16.msra.mxu0 %v12000
    %12437 = vmatprep.subr.bf16.mxu0 0
    %12438 = vmatpush2.bf16.msra.mxu0 %v11999
    %12439 = vmatprep.subr.bf16.mxu0 0
    %12440 = vmatpush2.bf16.msra.mxu0 %v11998
    %12441 = vmatprep.subr.bf16.mxu0 0
    %12442 = vmatpush2.bf16.msra.mxu0 %v11997
    %12443 = vmatprep.subr.bf16.mxu0 0
    %12444 = vmatpush2.bf16.msra.mxu0 %v11996
    %12445 = vmatprep.subr.bf16.mxu0 0
    %12446 = vmatpush2.bf16.msra.mxu0 %v11995
    %12447 = vmatprep.subr.bf16.mxu0 0
    %12448 = vmatpush2.bf16.msra.mxu0 %v11994
    %12449 = vmatprep.mubr.bf16.mxu0 %v11096
    %12450 = vmatmul.mubr.bf16.gmra.mxu0 %v11095
    %v12451 = vpop.f32.mrf.mxu0
    %v12452 = vadd.f32 %v12411, %v12451
    %v12453 = vpop.f32.mrf.mxu0
    %v12454 = vpop.f32.mrf.mxu0
    %v12455 = vadd.f32 %v12414, %v12454
    %v12456 = vpop.f32.mrf.mxu0
    %12457 = vdwg.mxu0
    %v12458 = vadd.f32 %v10421, %v12452
    %v12459 = vadd.f32 %v10422, %v12455
    %s12460 = scalar_lea.vmem %s16, 1
    %v12461 = vld [vmem:[%s12460] sm:$0x1]
    %s12462 = scalar_lea.vmem %s17, 1
    %v12463 = vld [vmem:[%s12462] sm:$0x1]
    %v12464 = vsel %vm5761, %v12458, 0.0
    %12465 = vadd.xlane.f32.xlu0 %v12464
    %v12466 = vpop.xlane.xlu0 %12465
    %v12467 = vsel %vm5761, %v12459, 0.0
    %12468 = vadd.xlane.f32.xlu0 %v12467
    %v12469 = vpop.xlane.xlu0 %12468
    %v12470 = vmul.f32 %v12466, %v7010
    %v12471 = vmul.f32 %v12469, %v7010
    %v12472 = vsub.f32 %v12458, %v12470
    %v12473 = vsub.f32 %v12459, %v12471
    %v12474 = vmul.f32 %v12472, %v12472
    %v12475 = vmul.f32 %v12473, %v12473
    %v12476 = vsel %vm5761, %v12474, 0.0
    %12477 = vadd.xlane.f32.xlu0 %v12476
    %v12478 = vpop.xlane.xlu0 %12477
    %v12479 = vsel %vm5761, %v12475, 0.0
    %12480 = vadd.xlane.f32.xlu0 %v12479
    %v12481 = vpop.xlane.xlu0 %12480
    %v12482 = vmul.f32 %v12478, %v7010
    %v12483 = vmul.f32 %v12481, %v7010
    %v12484 = vadd.f32 %v12482, 1e-05
    %v12485 = vadd.f32 %v12483, 1e-05
    %v12486 = vrsqrt.pop %v12484
    %v12487 = vrsqrt.pop %v12485
    %v12488 = vmul.f32 %v12472, %v12486
    %v12489 = vmul.f32 %v12473, %v12487
    %v12491 = vlaneseq
    %v12492 = vshrl.u32 %v12491, 7
    %v12493 = vsub.s32 0, %v12492
    %v12494 = vrot.slane %v12461, %v12493
    %v12496 = vmul.f32 %v12488, %v12494
    %v12497 = vmul.f32 %v12489, %v12494
    %v12499 = vlaneseq
    %v12500 = vshrl.u32 %v12499, 7
    %v12501 = vsub.s32 0, %v12500
    %v12502 = vrot.slane %v12463, %v12501
    %v12504 = vadd.f32 %v12496, %v12502
    %v12505 = vadd.f32 %v12497, %v12502
    %v12506 = vld [vmem:[%s18] sm:$0xff]
    %v12507 = vld [vmem:[%s18 + $0x8] sm:$0xff]
    %v12508 = vld [vmem:[%s18 + $0x10] sm:$0xff]
    %v12509 = vld [vmem:[%s18 + $0x18] sm:$0xff]
    %v12510 = vld [vmem:[%s18 + $0x20] sm:$0xff]
    %v12511 = vld [vmem:[%s18 + $0x28] sm:$0xff]
    %v12512 = vld [vmem:[%s18 + $0x30] sm:$0xff]
    %v12513 = vld [vmem:[%s18 + $0x38] sm:$0xff]
    %v12515 = vrot.slane %v12505, 6
    %v12516 = vsel %vm5761, %v12515, 0
    %12518 = vmatprep.subr.mxu0 0.0
    %12519 = vmatpush1.msra.mxu0 0.0
    %12520 = vmatprep.subr.mxu0 0.0
    %12521 = vmatpush1.msra.mxu0 0.0
    %12522 = vmatprep.subr.mxu0 0.0
    %12523 = vmatpush1.msra.mxu0 0.0
    %12524 = vmatprep.subr.mxu0 0.0
    %12525 = vmatpush1.msra.mxu0 0.0
    %12526 = vmatprep.subr.mxu0 0.0
    %12527 = vmatpush1.msra.mxu0 0.0
    %12528 = vmatprep.subr.mxu0 0.0
    %12529 = vmatpush1.msra.mxu0 0.0
    %12530 = vmatprep.subr.mxu0 0.0
    %12531 = vmatpush1.msra.mxu0 0.0
    %12532 = vmatprep.subr.mxu0 0.0
    %12533 = vmatpush1.msra.mxu0 0.0
    %12534 = vmatprep.subr.mxu0 0.0
    %12535 = vmatpush1.msra.mxu0 0.0
    %12536 = vmatprep.subr.mxu0 0.0
    %12537 = vmatpush1.msra.mxu0 0.0
    %12538 = vmatprep.subr.mxu0 0.0
    %12539 = vmatpush1.msra.mxu0 0.0
    %12540 = vmatprep.subr.mxu0 0.0
    %12541 = vmatpush1.msra.mxu0 0.0
    %12542 = vmatprep.subr.mxu0 0.0
    %12543 = vmatpush1.msra.mxu0 %v12513
    %12544 = vmatprep.subr.mxu0 0.0
    %12545 = vmatpush1.msra.mxu0 %v12512
    %12546 = vmatprep.subr.mxu0 0.0
    %12547 = vmatpush1.msra.mxu0 %v12511
    %12548 = vmatprep.subr.mxu0 0.0
    %12549 = vmatpush1.msra.mxu0 %v12510
    %12550 = vmatprep.subr.mxu0 0.0
    %12551 = vmatpush2.msra.mxu0 0.0
    %12552 = vmatprep.subr.mxu0 0.0
    %12553 = vmatpush2.msra.mxu0 0.0
    %12554 = vmatprep.subr.mxu0 0.0
    %12555 = vmatpush2.msra.mxu0 0.0
    %12556 = vmatprep.subr.mxu0 0.0
    %12557 = vmatpush2.msra.mxu0 0.0
    %12558 = vmatprep.subr.mxu0 0.0
    %12559 = vmatpush2.msra.mxu0 0.0
    %12560 = vmatprep.subr.mxu0 0.0
    %12561 = vmatpush2.msra.mxu0 0.0
    %12562 = vmatprep.subr.mxu0 0.0
    %12563 = vmatpush2.msra.mxu0 0.0
    %12564 = vmatprep.subr.mxu0 0.0
    %12565 = vmatpush2.msra.mxu0 0.0
    %12566 = vmatprep.subr.mxu0 0.0
    %12567 = vmatpush2.msra.mxu0 0.0
    %12568 = vmatprep.subr.mxu0 0.0
    %12569 = vmatpush2.msra.mxu0 0.0
    %12570 = vmatprep.subr.mxu0 0.0
    %12571 = vmatpush2.msra.mxu0 0.0
    %12572 = vmatprep.subr.mxu0 0.0
    %12573 = vmatpush2.msra.mxu0 0.0
    %12574 = vmatprep.subr.mxu0 0.0
    %12575 = vmatpush2.msra.mxu0 0.0
    %12576 = vmatprep.subr.mxu0 0.0
    %12577 = vmatpush2.msra.mxu0 0.0
    %12578 = vmatprep.subr.mxu0 0.0
    %12579 = vmatpush2.msra.mxu0 0.0
    %12580 = vmatprep.subr.mxu0 0.0
    %12581 = vmatpush2.msra.mxu0 0.0
    %12582 = vmatprep.mubr.f32.mxu0 0.0
    %12583 = vmatmul.mubr.f32.gmra.mxu0 %v12516
    %v12584 = vpop.f32.mrf.mxu0
    %v12585 = vadd.f32 0.0, %v12584
    %v12586 = vpop.f32.mrf.mxu0
    %12587 = vdwg.mxu0
    %v12589 = vsel %vm5761, %v12504, 0
    %12591 = vmatprep.subr.mxu0 0.0
    %12592 = vmatpush1.msra.mxu0 0.0
    %12593 = vmatprep.subr.mxu0 0.0
    %12594 = vmatpush1.msra.mxu0 0.0
    %12595 = vmatprep.subr.mxu0 0.0
    %12596 = vmatpush1.msra.mxu0 0.0
    %12597 = vmatprep.subr.mxu0 0.0
    %12598 = vmatpush1.msra.mxu0 0.0
    %12599 = vmatprep.subr.mxu0 0.0
    %12600 = vmatpush1.msra.mxu0 0.0
    %12601 = vmatprep.subr.mxu0 0.0
    %12602 = vmatpush1.msra.mxu0 0.0
    %12603 = vmatprep.subr.mxu0 0.0
    %12604 = vmatpush1.msra.mxu0 0.0
    %12605 = vmatprep.subr.mxu0 0.0
    %12606 = vmatpush1.msra.mxu0 0.0
    %12607 = vmatprep.subr.mxu0 0.0
    %12608 = vmatpush1.msra.mxu0 0.0
    %12609 = vmatprep.subr.mxu0 0.0
    %12610 = vmatpush1.msra.mxu0 0.0
    %12611 = vmatprep.subr.mxu0 0.0
    %12612 = vmatpush1.msra.mxu0 0.0
    %12613 = vmatprep.subr.mxu0 0.0
    %12614 = vmatpush1.msra.mxu0 0.0
    %12615 = vmatprep.subr.mxu0 0.0
    %12616 = vmatpush1.msra.mxu0 %v12509
    %12617 = vmatprep.subr.mxu0 0.0
    %12618 = vmatpush1.msra.mxu0 %v12508
    %12619 = vmatprep.subr.mxu0 0.0
    %12620 = vmatpush1.msra.mxu0 %v12507
    %12621 = vmatprep.subr.mxu0 0.0
    %12622 = vmatpush1.msra.mxu0 %v12506
    %12623 = vmatprep.subr.mxu0 0.0
    %12624 = vmatpush2.msra.mxu0 0.0
    %12625 = vmatprep.subr.mxu0 0.0
    %12626 = vmatpush2.msra.mxu0 0.0
    %12627 = vmatprep.subr.mxu0 0.0
    %12628 = vmatpush2.msra.mxu0 0.0
    %12629 = vmatprep.subr.mxu0 0.0
    %12630 = vmatpush2.msra.mxu0 0.0
    %12631 = vmatprep.subr.mxu0 0.0
    %12632 = vmatpush2.msra.mxu0 0.0
    %12633 = vmatprep.subr.mxu0 0.0
    %12634 = vmatpush2.msra.mxu0 0.0
    %12635 = vmatprep.subr.mxu0 0.0
    %12636 = vmatpush2.msra.mxu0 0.0
    %12637 = vmatprep.subr.mxu0 0.0
    %12638 = vmatpush2.msra.mxu0 0.0
    %12639 = vmatprep.subr.mxu0 0.0
    %12640 = vmatpush2.msra.mxu0 0.0
    %12641 = vmatprep.subr.mxu0 0.0
    %12642 = vmatpush2.msra.mxu0 0.0
    %12643 = vmatprep.subr.mxu0 0.0
    %12644 = vmatpush2.msra.mxu0 0.0
    %12645 = vmatprep.subr.mxu0 0.0
    %12646 = vmatpush2.msra.mxu0 0.0
    %12647 = vmatprep.subr.mxu0 0.0
    %12648 = vmatpush2.msra.mxu0 0.0
    %12649 = vmatprep.subr.mxu0 0.0
    %12650 = vmatpush2.msra.mxu0 0.0
    %12651 = vmatprep.subr.mxu0 0.0
    %12652 = vmatpush2.msra.mxu0 0.0
    %12653 = vmatprep.subr.mxu0 0.0
    %12654 = vmatpush2.msra.mxu0 0.0
    %12655 = vmatprep.mubr.f32.mxu0 0.0
    %12656 = vmatmul.mubr.f32.gmra.mxu0 %v12589
    %v12657 = vpop.f32.mrf.mxu0
    %v12658 = vadd.f32 %v12585, %v12657
    %v12659 = vpop.f32.mrf.mxu0
    %12660 = vdwg.mxu0
    %v12661 = vld [vmem:[%s19] sm:$0x1]
    %v12663 = vlaneseq
    %v12664 = vshrl.u32 %v12663, 7
    %v12665 = vsub.s32 0, %v12664
    %v12666 = vrot.slane %v12661, %v12665
    %v12668 = vadd.f32 %v12658, %v12666
    %v12669 = vld [vmem:[%s20] sm:$0x1]
    %v12671 = vlaneseq
    %v12672 = vshrl.u32 %v12671, 7
    %v12673 = vsub.s32 0, %v12672
    %v12674 = vrot.slane %v12669, %v12673
    %v12676 = vmul.f32 %v12668, %v12674
    %v12677 = vld [vmem:[%s21] sm:$0x1]
    %v12679 = vlaneseq
    %v12680 = vshrl.u32 %v12679, 7
    %v12681 = vsub.s32 0, %v12680
    %v12682 = vrot.slane %v12677, %v12681
    %v12684 = vadd.f32 %v12676, %v12682
    %v12685 = vld [vmem:[%s22] sm:$0xff]
    %v12686 = vld [vmem:[%s22 + $0x8] sm:$0xff]
    %v12687 = vld [vmem:[%s22 + $0x10] sm:$0xff]
    %v12688 = vld [vmem:[%s22 + $0x18] sm:$0xff]
    %v12689 = vld [vmem:[%s23] sm:$0x1]
    %v12691 = vlaneseq
    %v12692 = vshrl.u32 %v12691, 7
    %v12693 = vsub.s32 0, %v12692
    %v12694 = vrot.slane %v12689, %v12693
    %v12697 = vsel %vm5761, %v12684, 0
    %12699 = vmatprep.subr.mxu0 0.0
    %12700 = vmatpush1.msra.mxu0 0.0
    %12701 = vmatprep.subr.mxu0 0.0
    %12702 = vmatpush1.msra.mxu0 0.0
    %12703 = vmatprep.subr.mxu0 0.0
    %12704 = vmatpush1.msra.mxu0 0.0
    %12705 = vmatprep.subr.mxu0 0.0
    %12706 = vmatpush1.msra.mxu0 0.0
    %12707 = vmatprep.subr.mxu0 0.0
    %12708 = vmatpush1.msra.mxu0 0.0
    %12709 = vmatprep.subr.mxu0 0.0
    %12710 = vmatpush1.msra.mxu0 0.0
    %12711 = vmatprep.subr.mxu0 0.0
    %12712 = vmatpush1.msra.mxu0 0.0
    %12713 = vmatprep.subr.mxu0 0.0
    %12714 = vmatpush1.msra.mxu0 0.0
    %12715 = vmatprep.subr.mxu0 0.0
    %12716 = vmatpush1.msra.mxu0 0.0
    %12717 = vmatprep.subr.mxu0 0.0
    %12718 = vmatpush1.msra.mxu0 0.0
    %12719 = vmatprep.subr.mxu0 0.0
    %12720 = vmatpush1.msra.mxu0 0.0
    %12721 = vmatprep.subr.mxu0 0.0
    %12722 = vmatpush1.msra.mxu0 0.0
    %12723 = vmatprep.subr.mxu0 0.0
    %12724 = vmatpush1.msra.mxu0 %v12688
    %12725 = vmatprep.subr.mxu0 0.0
    %12726 = vmatpush1.msra.mxu0 %v12687
    %12727 = vmatprep.subr.mxu0 0.0
    %12728 = vmatpush1.msra.mxu0 %v12686
    %12729 = vmatprep.subr.mxu0 0.0
    %12730 = vmatpush1.msra.mxu0 %v12685
    %12731 = vmatprep.subr.mxu0 0.0
    %12732 = vmatpush2.msra.mxu0 0.0
    %12733 = vmatprep.subr.mxu0 0.0
    %12734 = vmatpush2.msra.mxu0 0.0
    %12735 = vmatprep.subr.mxu0 0.0
    %12736 = vmatpush2.msra.mxu0 0.0
    %12737 = vmatprep.subr.mxu0 0.0
    %12738 = vmatpush2.msra.mxu0 0.0
    %12739 = vmatprep.subr.mxu0 0.0
    %12740 = vmatpush2.msra.mxu0 0.0
    %12741 = vmatprep.subr.mxu0 0.0
    %12742 = vmatpush2.msra.mxu0 0.0
    %12743 = vmatprep.subr.mxu0 0.0
    %12744 = vmatpush2.msra.mxu0 0.0
    %12745 = vmatprep.subr.mxu0 0.0
    %12746 = vmatpush2.msra.mxu0 0.0
    %12747 = vmatprep.subr.mxu0 0.0
    %12748 = vmatpush2.msra.mxu0 0.0
    %12749 = vmatprep.subr.mxu0 0.0
    %12750 = vmatpush2.msra.mxu0 0.0
    %12751 = vmatprep.subr.mxu0 0.0
    %12752 = vmatpush2.msra.mxu0 0.0
    %12753 = vmatprep.subr.mxu0 0.0
    %12754 = vmatpush2.msra.mxu0 0.0
    %12755 = vmatprep.subr.mxu0 0.0
    %12756 = vmatpush2.msra.mxu0 0.0
    %12757 = vmatprep.subr.mxu0 0.0
    %12758 = vmatpush2.msra.mxu0 0.0
    %12759 = vmatprep.subr.mxu0 0.0
    %12760 = vmatpush2.msra.mxu0 0.0
    %12761 = vmatprep.subr.mxu0 0.0
    %12762 = vmatpush2.msra.mxu0 0.0
    %12763 = vmatprep.mubr.f32.mxu0 0.0
    %12764 = vmatmul.mubr.f32.gmra.mxu0 %v12697
    %v12765 = vpop.f32.mrf.mxu0
    %v12766 = vadd.f32 %v12694, %v12765
    %v12767 = vpop.f32.mrf.mxu0
    %12768 = vdwg.mxu0
    %vm12769 = vcmask 58368
    %12770 = vst.msk [vmem:[#allocation3] sm:$0x3] %vm12769, %v12766
    // Predicated region
    $region98: #{ctran_forward.1} parent=1 // pred_check
      _
    $region99: #{ctran_forward.1} parent=1 // pred_check_branch
      %12772 = sbr.rel (0) target = $region101
    $region100: #{ctran_forward.1} parent=1 // pred_region
      %s12774 = ssub.s32 32, 32
      %12775 = vsyncadd [#allocation4], %s12774
      %s12777 = sshll.u32 [#allocation3], 4
      %s12778 = int_to_ptr.vmem [resolvable:$true] %s12777
      %12780 = dma.vmem_to_hbm [thread:$0]  %s12778, 32, %s24, [#allocation4]
    $region101: #{ctran_forward.1} parent=1 // pred_fallthru
      _
    // Predicated region
    $region102: #{ctran_forward.1} parent=1 // pred_check
      _
    $region103: #{ctran_forward.1} parent=1 // pred_check_branch
      %12782 = sbr.rel (0) target = $region105
    $region104: #{ctran_forward.1} parent=1 // pred_region
      %12783 = dma.done [#allocation4], 32
    $region105: #{ctran_forward.1} parent=1 // pred_fallthru
      _
    %12784 = vsyncpa [#allocation4], 1

</llo_original>
